<compile_context>
chip_gen: v7x
topology: tpu7x:2x2x1
jax: 0.10.0
libtpu: 0.0.40
codegen_flags: <defaults>
</compile_context>

<pallas_src>
import math

import jax
import jax.numpy as jnp
from jax.experimental import pallas as pl
from jax.experimental.pallas import tpu as pltpu

BN_EPS = 1e-5
COMPUTE_DTYPE = jnp.bfloat16            # MXU input / intermediate storage dtype

_VMEM_LIMIT_CACHE = None


def _vmem_limit_bytes():
    """~3/4 of physical VMEM (96 MiB on v5e/v6e, 48 MiB on v7x), with fallback."""
    global _VMEM_LIMIT_CACHE
    if _VMEM_LIMIT_CACHE is None:
        limit = 64 * 1024 * 1024
        try:
            cap = getattr(pltpu.get_tpu_info(), "vmem_capacity_bytes", None)
            if cap:
                limit = min(int(cap) * 3 // 4, 96 * 1024 * 1024)
        except Exception:
            pass
        _VMEM_LIMIT_CACHE = limit
    return _VMEM_LIMIT_CACHE


# ---------------------------------------------------------------------------
# in-kernel helpers
# ---------------------------------------------------------------------------

def _build_taps(slab_ref, taps_ref, H, W, Cin):
    """Pack the 9 shifted 3x3 taps of a padded (H+2, W+2, Cin) slab into a
    (H*W, 9*Cin) tap matrix so the conv becomes a single K=9*Cin matmul."""
    for k in range(9):
        kh, kw = divmod(k, 3)
        tap = slab_ref[kh:kh + H, kw:kw + W, :].reshape(H * W, Cin)
        taps_ref[:, k * Cin:(k + 1) * Cin] = tap


def _conv_from_taps(taps_ref, w_ref, b_ref):
    """One big MXU contraction: (H*W, 9*Cin) @ (9*Cin, Cout) + bias, f32 acc."""
    acc = jnp.dot(taps_ref[...], w_ref[...], preferred_element_type=jnp.float32)
    return acc + b_ref[...]


# ---------------------------------------------------------------------------
# kernel 1: conv1 (+bias) -> padded output, per-image BN partial stats
# ---------------------------------------------------------------------------

def _conv1_kernel(xpad_ref, w_ref, b_ref, out_ref, sum_ref, sq_ref, taps_ref):
    Hp2, Wp2, Cin = xpad_ref.shape
    H, W = Hp2 - 2, Wp2 - 2

    _build_taps(xpad_ref, taps_ref, H, W, Cin)
    acc = _conv_from_taps(taps_ref, w_ref, b_ref)            # (H*W, Cout) f32

    # per-image partial statistics (reduced across N in plain JAX afterwards)
    sum_ref[...] = jnp.sum(acc, axis=0, keepdims=True)
    sq_ref[...] = jnp.sum(acc * acc, axis=0, keepdims=True)

    # write directly into the pre-padded output: zero ring + interior.
    out_ref[...] = jnp.zeros_like(out_ref)
    out_ref[1:H + 1, 1:W + 1, :] = acc.reshape(H, W, -1).astype(out_ref.dtype)


# ---------------------------------------------------------------------------
# kernel 2: bn1-apply + relu (interior only) -> conv2 (+bias) + partial stats
# ---------------------------------------------------------------------------

def _conv2_kernel(ypad_ref, scale_ref, shift_ref, w_ref, b_ref,
                  out_ref, sum_ref, sq_ref, ybuf_ref, taps_ref):
    Hp2, Wp2, C = ypad_ref.shape
    H, W = Hp2 - 2, Wp2 - 2

    # zero-ring scratch slab: re-zeroed every step (parallel / megacore safe),
    # interior overwritten with relu(bn1(conv1)).  No iota ring-masking needed.
    ybuf_ref[...] = jnp.zeros_like(ybuf_ref)
    xin = ypad_ref[1:H + 1, 1:W + 1, :].astype(jnp.float32)
    s = scale_ref[...].reshape(1, 1, -1)
    t = shift_ref[...].reshape(1, 1, -1)
    y = jnp.maximum(xin * s + t, 0.0)
    ybuf_ref[1:H + 1, 1:W + 1, :] = y.astype(ybuf_ref.dtype)

    _build_taps(ybuf_ref, taps_ref, H, W, C)
    acc = _conv_from_taps(taps_ref, w_ref, b_ref)             # (H*W, Cout) f32

    sum_ref[...] = jnp.sum(acc, axis=0, keepdims=True)
    sq_ref[...] = jnp.sum(acc * acc, axis=0, keepdims=True)
    out_ref[...] = acc.astype(out_ref.dtype)                  # (H*W, Cout)


# ---------------------------------------------------------------------------
# kernel 3: bn2-apply + residual add + relu (lane-dense elementwise)
# ---------------------------------------------------------------------------

def _bn_add_relu_kernel(x_ref, ident_ref, scale_ref, shift_ref, out_ref):
    x = x_ref[...].astype(jnp.float32)
    y = x * scale_ref[...] + shift_ref[...] + ident_ref[...]
    out_ref[...] = jnp.maximum(y, 0.0).astype(out_ref.dtype)


# ---------------------------------------------------------------------------
# pallas_call wrappers
# ---------------------------------------------------------------------------

def _conv1_pass(xpad, w, b):
    N, Hp2, Wp2, Cin = xpad.shape
    H, W = Hp2 - 2, Wp2 - 2
    Cout = w.shape[-1]
    return pl.pallas_call(
        _conv1_kernel,
        out_shape=(jax.ShapeDtypeStruct((N, Hp2, Wp2, Cout), COMPUTE_DTYPE),
                   jax.ShapeDtypeStruct((N, 1, Cout), jnp.float32),
                   jax.ShapeDtypeStruct((N, 1, Cout), jnp.float32)),
        grid=(N,),
        in_specs=[pl.BlockSpec((None, Hp2, Wp2, Cin), lambda n: (n, 0, 0, 0)),
                  pl.BlockSpec((9 * Cin, Cout), lambda n: (0, 0)),
                  pl.BlockSpec((1, Cout), lambda n: (0, 0))],
        out_specs=(pl.BlockSpec((None, Hp2, Wp2, Cout), lambda n: (n, 0, 0, 0)),
                   pl.BlockSpec((None, 1, Cout), lambda n: (n, 0, 0)),
                   pl.BlockSpec((None, 1, Cout), lambda n: (n, 0, 0))),
        scratch_shapes=[pltpu.VMEM((H * W, 9 * Cin), COMPUTE_DTYPE)],
        compiler_params=pltpu.CompilerParams(
            dimension_semantics=("parallel",),
            vmem_limit_bytes=_vmem_limit_bytes()),
    )(xpad, w, b)


def _conv2_pass(ypad, scale, shift, w, b):
    N, Hp2, Wp2, C = ypad.shape
    H, W = Hp2 - 2, Wp2 - 2
    Cout = w.shape[-1]
    return pl.pallas_call(
        _conv2_kernel,
        out_shape=(jax.ShapeDtypeStruct((N, H * W, Cout), COMPUTE_DTYPE),
                   jax.ShapeDtypeStruct((N, 1, Cout), jnp.float32),
                   jax.ShapeDtypeStruct((N, 1, Cout), jnp.float32)),
        grid=(N,),
        in_specs=[pl.BlockSpec((None, Hp2, Wp2, C), lambda n: (n, 0, 0, 0)),
                  pl.BlockSpec((1, C), lambda n: (0, 0)),
                  pl.BlockSpec((1, C), lambda n: (0, 0)),
                  pl.BlockSpec((9 * C, Cout), lambda n: (0, 0)),
                  pl.BlockSpec((1, Cout), lambda n: (0, 0))],
        out_specs=(pl.BlockSpec((None, H * W, Cout), lambda n: (n, 0, 0)),
                   pl.BlockSpec((None, 1, Cout), lambda n: (n, 0, 0)),
                   pl.BlockSpec((None, 1, Cout), lambda n: (n, 0, 0))),
        scratch_shapes=[pltpu.VMEM((Hp2, Wp2, C), COMPUTE_DTYPE),
                        pltpu.VMEM((H * W, 9 * C), COMPUTE_DTYPE)],
        compiler_params=pltpu.CompilerParams(
            dimension_semantics=("parallel",),
            vmem_limit_bytes=_vmem_limit_bytes()),
    )(ypad, scale, shift, w, b)


def _bn_add_relu_pass(x_flat, ident_flat, scale_row, shift_row, row_tile):
    R, L = x_flat.shape
    return pl.pallas_call(
        _bn_add_relu_kernel,
        out_shape=jax.ShapeDtypeStruct((R, L), jnp.float32),
        grid=(R // row_tile,),
        in_specs=[pl.BlockSpec((row_tile, L), lambda i: (i, 0)),
                  pl.BlockSpec((row_tile, L), lambda i: (i, 0)),
                  pl.BlockSpec((1, L), lambda i: (0, 0)),
                  pl.BlockSpec((1, L), lambda i: (0, 0))],
        out_specs=pl.BlockSpec((row_tile, L), lambda i: (i, 0)),
        compiler_params=pltpu.CompilerParams(
            dimension_semantics=("parallel",),
            vmem_limit_bytes=_vmem_limit_bytes()),
    )(x_flat, ident_flat, scale_row, shift_row)


# ---------------------------------------------------------------------------
# layout helpers (lane-dense packing for the elementwise epilogue)
# ---------------------------------------------------------------------------

def _pick_lanes(total, c):
    """Lane width: a multiple of both C and 128 that divides total (prefers
    wide, up to 2048).  Falls back to C only if no 128-multiple divides."""
    base = c * (128 // math.gcd(c, 128))            # lcm(C, 128)
    if total % base != 0:
        return c                                    # rare: masked stores
    for cand in (2048, 1024, 512, 256):
        if cand % base == 0 and total % cand == 0:
            return cand
    return base


def _pick_row_tile(rows, lanes):
    """Largest divisor of `rows` within a ~2 MiB f32 block budget (v7x safe),
    preferring sublane-aligned (multiple-of-8) tiles."""
    budget_elems = 512 * 1024
    if rows * lanes <= budget_elems:
        return rows
    fallback = 1
    for tr in range(rows, 0, -1):
        if rows % tr == 0 and tr * lanes <= budget_elems:
            if tr % 8 == 0:
                return tr
            if fallback == 1:
                fallback = tr
    return fallback


# ---------------------------------------------------------------------------
# params + forward
# ---------------------------------------------------------------------------

def init_basic_block_params(key, in_channels, out_channels):
    """Parameter init matching the module (conv bias=True, kaiming fan_out)."""
    k1, k2, k3, k4 = jax.random.split(key, 4)
    fan_out = out_channels * 9
    std = (2.0 / fan_out) ** 0.5
    w1 = std * jax.random.normal(k1, (3, 3, in_channels, out_channels), jnp.float32)
    w2 = std * jax.random.normal(k2, (3, 3, out_channels, out_channels), jnp.float32)
    fan_in1 = in_channels * 9
    fan_in2 = out_channels * 9
    b1 = jax.random.uniform(k3, (1, out_channels), jnp.float32,
                            -1.0 / fan_in1 ** 0.5, 1.0 / fan_in1 ** 0.5)
    b2 = jax.random.uniform(k4, (1, out_channels), jnp.float32,
                            -1.0 / fan_in2 ** 0.5, 1.0 / fan_in2 ** 0.5)
    g1 = jnp.ones((1, out_channels), jnp.float32)
    be1 = jnp.zeros((1, out_channels), jnp.float32)
    g2 = jnp.ones((1, out_channels), jnp.float32)
    be2 = jnp.zeros((1, out_channels), jnp.float32)
    return dict(w1=w1, b1=b1, g1=g1, be1=be1, w2=w2, b2=b2, g2=g2, be2=be2)


def basic_block_forward(x_nchw, params):
    """BasicBlock forward (stride=1, downsample=None). Input/output NCHW f32.
    BatchNorm uses batch statistics (PyTorch training-mode default)."""
    N, C, H, W = x_nchw.shape
    Cout = params["w1"].shape[-1]
    assert C == Cout, "identity path requires in_channels == out_channels"
    M = N * H * W

    x_nhwc = jnp.transpose(x_nchw, (0, 2, 3, 1))                     # NCHW -> NHWC

    # ---- conv1 (+bias): writes a pre-padded output, emits partial BN stats --
    x_pad = jnp.pad(x_nhwc, ((0, 0), (1, 1), (1, 1), (0, 0))).astype(COMPUTE_DTYPE)
    w1 = params["w1"].reshape(9 * C, Cout).astype(COMPUTE_DTYPE)
    conv1_pad, s1, ss1 = _conv1_pass(x_pad, w1, params["b1"])

    s1 = jnp.sum(s1, axis=0)                                          # (1, Cout)
    ss1 = jnp.sum(ss1, axis=0)
    mean1 = s1 / M
    var1 = ss1 / M - mean1 * mean1           # biased var, training-mode BN
    scale1 = params["g1"] * jax.lax.rsqrt(var1 + BN_EPS)
    shift1 = params["be1"] - mean1 * scale1

    # ---- bn1 + relu fused into conv2 (+bias), partial BN stats --------------
    w2 = params["w2"].reshape(9 * Cout, Cout).astype(COMPUTE_DTYPE)
    conv2_raw, s2, ss2 = _conv2_pass(conv1_pad, scale1, shift1, w2, params["b2"])

    s2 = jnp.sum(s2, axis=0)
    ss2 = jnp.sum(ss2, axis=0)
    mean2 = s2 / M
    var2 = ss2 / M - mean2 * mean2
    scale2 = params["g2"] * jax.lax.rsqrt(var2 + BN_EPS)
    shift2 = params["be2"] - mean2 * scale2

    # ---- bn2 + residual + relu, lane-dense (rows, 128k) layout --------------
    total = M * Cout
    L = _pick_lanes(total, Cout)
    R = total // L
    TR = _pick_row_tile(R, L)
    conv2_flat = conv2_raw.reshape(R, L)             # free reshape (same order)
    ident_flat = x_nhwc.reshape(R, L)                # f32 residual
    rep = L // Cout                                  # channel period along lanes
    scale_row = jnp.tile(scale2.reshape(-1), rep).reshape(1, L)
    shift_row = jnp.tile(shift2.reshape(-1), rep).reshape(1, L)
    out_flat = _bn_add_relu_pass(conv2_flat, ident_flat, scale_row, shift_row, TR)

    out_nhwc = out_flat.reshape(N, H, W, Cout)
    return jnp.transpose(out_nhwc, (0, 3, 1, 2))                      # NHWC -> NCHW


if __name__ == "__main__":
    key = jax.random.PRNGKey(0)
    k_x, k_p = jax.random.split(key)

    N, C, H, W = 2, 4, 16, 16                                  # small test shapes
    x = jax.random.normal(k_x, (N, C, H, W), jnp.float32)      # NCHW like PyTorch
    params = init_basic_block_params(k_p, in_channels=C, out_channels=C)

    fwd = jax.jit(lambda xx: basic_block_forward(xx, params))
    y = fwd(x)
    jax.block_until_ready(y)

    assert y.shape == (N, C, H, W)
    assert bool(jnp.all(y >= 0.0))              # final ReLU
    assert bool(jnp.any(y > 0.0))               # not degenerate
    assert bool(jnp.all(jnp.isfinite(y)))
    print("KERNEL_OK")
</pallas_src>

<mosaic_0001>
module attributes {stable_mosaic.version = 11 : i64} {
  func.func @_conv1_kernel(%arg0: i32, %arg1: memref<1x18x18x4xbf16, #tpu.memory_space<vmem>>, %arg2: memref<36x4xbf16, #tpu.memory_space<vmem>>, %arg3: memref<1x4xf32, #tpu.memory_space<vmem>>, %arg4: memref<1x18x18x4xbf16, #tpu.memory_space<vmem>>, %arg5: memref<1x1x4xf32, #tpu.memory_space<vmem>>, %arg6: memref<1x1x4xf32, #tpu.memory_space<vmem>>, %arg7: memref<256x36xbf16, #tpu.memory_space<vmem>>) attributes {dimension_semantics = [#tpu.dimension_semantics<parallel>], iteration_bounds = array<i64: 2>, scalar_prefetch = 0 : i64, scratch_operands = 1 : i64, tpu.core_type = #tpu.core_type<tc>, window_params = [{transform_indices = @transform_0, window_bounds = array<i64: 1, 18, 18, 4>}, {pipeline_mode = #tpu.pipeline_mode<synchronous>, transform_indices = @transform_1, window_bounds = array<i64: 36, 4>}, {pipeline_mode = #tpu.pipeline_mode<synchronous>, transform_indices = @transform_2, window_bounds = array<i64: 1, 4>}, {transform_indices = @transform_3, window_bounds = array<i64: 1, 18, 18, 4>}, {transform_indices = @transform_4, window_bounds = array<i64: 1, 1, 4>}, {transform_indices = @transform_5, window_bounds = array<i64: 1, 1, 4>}]} {
    %c0 = arith.constant 0 : index
    %c0_0 = arith.constant 0 : index
    %c0_1 = arith.constant 0 : index
    %c0_2 = arith.constant 0 : index
    %0 = vector.load %arg1[%c0, %c0_0, %c0_1, %c0_2] : memref<1x18x18x4xbf16, #tpu.memory_space<vmem>>, vector<1x16x16x4xbf16>
    %1 = vector.shape_cast %0 : vector<1x16x16x4xbf16> to vector<16x16x4xbf16>
    %2 = vector.shape_cast %1 : vector<16x16x4xbf16> to vector<256x4xbf16>
    %c0_3 = arith.constant 0 : index
    %c0_4 = arith.constant 0 : index
    %3 = vector.load %arg7[%c0_3, %c0_4] : memref<256x36xbf16, #tpu.memory_space<vmem>>, vector<256x4xbf16>
    tpu.vector_store %arg7[%c0_3, %c0_4], %2 {strides = array<i32>} : memref<256x36xbf16, #tpu.memory_space<vmem>>, vector<256x4xbf16>,
    %c0_5 = arith.constant 0 : index
    %c0_6 = arith.constant 0 : index
    %c1 = arith.constant 1 : index
    %c0_7 = arith.constant 0 : index
    %4 = vector.load %arg1[%c0_5, %c0_6, %c1, %c0_7] : memref<1x18x18x4xbf16, #tpu.memory_space<vmem>>, vector<1x16x16x4xbf16>
    %5 = vector.shape_cast %4 : vector<1x16x16x4xbf16> to vector<16x16x4xbf16>
    %6 = vector.shape_cast %5 : vector<16x16x4xbf16> to vector<256x4xbf16>
    %c0_8 = arith.constant 0 : index
    %c4 = arith.constant 4 : index
    %7 = vector.load %arg7[%c0_8, %c4] : memref<256x36xbf16, #tpu.memory_space<vmem>>, vector<256x4xbf16>
    tpu.vector_store %arg7[%c0_8, %c4], %6 {strides = array<i32>} : memref<256x36xbf16, #tpu.memory_space<vmem>>, vector<256x4xbf16>,
    %c0_9 = arith.constant 0 : index
    %c0_10 = arith.constant 0 : index
    %c2 = arith.constant 2 : index
    %c0_11 = arith.constant 0 : index
    %8 = vector.load %arg1[%c0_9, %c0_10, %c2, %c0_11] : memref<1x18x18x4xbf16, #tpu.memory_space<vmem>>, vector<1x16x16x4xbf16>
    %9 = vector.shape_cast %8 : vector<1x16x16x4xbf16> to vector<16x16x4xbf16>
    %10 = vector.shape_cast %9 : vector<16x16x4xbf16> to vector<256x4xbf16>
    %c0_12 = arith.constant 0 : index
    %c8 = arith.constant 8 : index
    %11 = vector.load %arg7[%c0_12, %c8] : memref<256x36xbf16, #tpu.memory_space<vmem>>, vector<256x4xbf16>
    tpu.vector_store %arg7[%c0_12, %c8], %10 {strides = array<i32>} : memref<256x36xbf16, #tpu.memory_space<vmem>>, vector<256x4xbf16>,
    %c0_13 = arith.constant 0 : index
    %c1_14 = arith.constant 1 : index
    %c0_15 = arith.constant 0 : index
    %c0_16 = arith.constant 0 : index
    %12 = vector.load %arg1[%c0_13, %c1_14, %c0_15, %c0_16] : memref<1x18x18x4xbf16, #tpu.memory_space<vmem>>, vector<1x16x16x4xbf16>
    %13 = vector.shape_cast %12 : vector<1x16x16x4xbf16> to vector<16x16x4xbf16>
    %14 = vector.shape_cast %13 : vector<16x16x4xbf16> to vector<256x4xbf16>
    %c0_17 = arith.constant 0 : index
    %c12 = arith.constant 12 : index
    %15 = vector.load %arg7[%c0_17, %c12] : memref<256x36xbf16, #tpu.memory_space<vmem>>, vector<256x4xbf16>
    tpu.vector_store %arg7[%c0_17, %c12], %14 {strides = array<i32>} : memref<256x36xbf16, #tpu.memory_space<vmem>>, vector<256x4xbf16>,
    %c0_18 = arith.constant 0 : index
    %c1_19 = arith.constant 1 : index
    %c1_20 = arith.constant 1 : index
    %c0_21 = arith.constant 0 : index
    %16 = vector.load %arg1[%c0_18, %c1_19, %c1_20, %c0_21] : memref<1x18x18x4xbf16, #tpu.memory_space<vmem>>, vector<1x16x16x4xbf16>
    %17 = vector.shape_cast %16 : vector<1x16x16x4xbf16> to vector<16x16x4xbf16>
    %18 = vector.shape_cast %17 : vector<16x16x4xbf16> to vector<256x4xbf16>
    %c0_22 = arith.constant 0 : index
    %c16 = arith.constant 16 : index
    %19 = vector.load %arg7[%c0_22, %c16] : memref<256x36xbf16, #tpu.memory_space<vmem>>, vector<256x4xbf16>
    tpu.vector_store %arg7[%c0_22, %c16], %18 {strides = array<i32>} : memref<256x36xbf16, #tpu.memory_space<vmem>>, vector<256x4xbf16>,
    %c0_23 = arith.constant 0 : index
    %c1_24 = arith.constant 1 : index
    %c2_25 = arith.constant 2 : index
    %c0_26 = arith.constant 0 : index
    %20 = vector.load %arg1[%c0_23, %c1_24, %c2_25, %c0_26] : memref<1x18x18x4xbf16, #tpu.memory_space<vmem>>, vector<1x16x16x4xbf16>
    %21 = vector.shape_cast %20 : vector<1x16x16x4xbf16> to vector<16x16x4xbf16>
    %22 = vector.shape_cast %21 : vector<16x16x4xbf16> to vector<256x4xbf16>
    %c0_27 = arith.constant 0 : index
    %c20 = arith.constant 20 : index
    %23 = vector.load %arg7[%c0_27, %c20] : memref<256x36xbf16, #tpu.memory_space<vmem>>, vector<256x4xbf16>
    tpu.vector_store %arg7[%c0_27, %c20], %22 {strides = array<i32>} : memref<256x36xbf16, #tpu.memory_space<vmem>>, vector<256x4xbf16>,
    %c0_28 = arith.constant 0 : index
    %c2_29 = arith.constant 2 : index
    %c0_30 = arith.constant 0 : index
    %c0_31 = arith.constant 0 : index
    %24 = vector.load %arg1[%c0_28, %c2_29, %c0_30, %c0_31] : memref<1x18x18x4xbf16, #tpu.memory_space<vmem>>, vector<1x16x16x4xbf16>
    %25 = vector.shape_cast %24 : vector<1x16x16x4xbf16> to vector<16x16x4xbf16>
    %26 = vector.shape_cast %25 : vector<16x16x4xbf16> to vector<256x4xbf16>
    %c0_32 = arith.constant 0 : index
    %c24 = arith.constant 24 : index
    %27 = vector.load %arg7[%c0_32, %c24] : memref<256x36xbf16, #tpu.memory_space<vmem>>, vector<256x4xbf16>
    tpu.vector_store %arg7[%c0_32, %c24], %26 {strides = array<i32>} : memref<256x36xbf16, #tpu.memory_space<vmem>>, vector<256x4xbf16>,
    %c0_33 = arith.constant 0 : index
    %c2_34 = arith.constant 2 : index
    %c1_35 = arith.constant 1 : index
    %c0_36 = arith.constant 0 : index
    %28 = vector.load %arg1[%c0_33, %c2_34, %c1_35, %c0_36] : memref<1x18x18x4xbf16, #tpu.memory_space<vmem>>, vector<1x16x16x4xbf16>
    %29 = vector.shape_cast %28 : vector<1x16x16x4xbf16> to vector<16x16x4xbf16>
    %30 = vector.shape_cast %29 : vector<16x16x4xbf16> to vector<256x4xbf16>
    %c0_37 = arith.constant 0 : index
    %c28 = arith.constant 28 : index
    %31 = vector.load %arg7[%c0_37, %c28] : memref<256x36xbf16, #tpu.memory_space<vmem>>, vector<256x4xbf16>
    tpu.vector_store %arg7[%c0_37, %c28], %30 {strides = array<i32>} : memref<256x36xbf16, #tpu.memory_space<vmem>>, vector<256x4xbf16>,
    %c0_38 = arith.constant 0 : index
    %c2_39 = arith.constant 2 : index
    %c2_40 = arith.constant 2 : index
    %c0_41 = arith.constant 0 : index
    %32 = vector.load %arg1[%c0_38, %c2_39, %c2_40, %c0_41] : memref<1x18x18x4xbf16, #tpu.memory_space<vmem>>, vector<1x16x16x4xbf16>
    %33 = vector.shape_cast %32 : vector<1x16x16x4xbf16> to vector<16x16x4xbf16>
    %34 = vector.shape_cast %33 : vector<16x16x4xbf16> to vector<256x4xbf16>
    %c0_42 = arith.constant 0 : index
    %c32 = arith.constant 32 : index
    %35 = vector.load %arg7[%c0_42, %c32] : memref<256x36xbf16, #tpu.memory_space<vmem>>, vector<256x4xbf16>
    tpu.vector_store %arg7[%c0_42, %c32], %34 {strides = array<i32>} : memref<256x36xbf16, #tpu.memory_space<vmem>>, vector<256x4xbf16>,
    %c0_43 = arith.constant 0 : index
    %c0_44 = arith.constant 0 : index
    %36 = vector.load %arg7[%c0_43, %c0_44] : memref<256x36xbf16, #tpu.memory_space<vmem>>, vector<256x36xbf16>
    %c0_45 = arith.constant 0 : index
    %c0_46 = arith.constant 0 : index
    %37 = vector.load %arg2[%c0_45, %c0_46] : memref<36x4xbf16, #tpu.memory_space<vmem>>, vector<36x4xbf16>
    %cst = arith.constant dense<0.000000e+00> : vector<256x4xf32>
    %38 = tpu.matmul %36, %37, %cst {dimension_numbers = #tpu.dot_dimension_numbers<[1], [0], [0], [1], [0, 0, 1, 1], [], []>} : vector<256x36xbf16>, vector<36x4xbf16>, vector<256x4xf32> -> vector<256x4xf32>
    %c0_47 = arith.constant 0 : index
    %c0_48 = arith.constant 0 : index
    %39 = vector.load %arg3[%c0_47, %c0_48] : memref<1x4xf32, #tpu.memory_space<vmem>>, vector<1x4xf32>
    %40 = vector.broadcast %39 : vector<1x4xf32> to vector<256x4xf32>
    %41 = arith.addf %38, %40 : vector<256x4xf32>
    %cst_49 = arith.constant dense<0.000000e+00> : vector<4xf32>
    %42 = vector.multi_reduction <add>, %41, %cst_49 [0] : vector<256x4xf32> to vector<4xf32>
    %43 = vector.shape_cast %42 : vector<4xf32> to vector<1x4xf32>
    %c0_50 = arith.constant 0 : index
    %c0_51 = arith.constant 0 : index
    %c0_52 = arith.constant 0 : index
    %44 = vector.load %arg5[%c0_50, %c0_51, %c0_52] : memref<1x1x4xf32, #tpu.memory_space<vmem>>, vector<1x1x4xf32>
    %45 = vector.shape_cast %44 : vector<1x1x4xf32> to vector<1x4xf32>
    %46 = vector.shape_cast %43 : vector<1x4xf32> to vector<1x1x4xf32>
    tpu.vector_store %arg5[%c0_50, %c0_51, %c0_52], %46 {strides = array<i32>} : memref<1x1x4xf32, #tpu.memory_space<vmem>>, vector<1x1x4xf32>,
    %47 = arith.mulf %41, %41 : vector<256x4xf32>
    %cst_53 = arith.constant dense<0.000000e+00> : vector<4xf32>
    %48 = vector.multi_reduction <add>, %47, %cst_53 [0] : vector<256x4xf32> to vector<4xf32>
    %49 = vector.shape_cast %48 : vector<4xf32> to vector<1x4xf32>
    %c0_54 = arith.constant 0 : index
    %c0_55 = arith.constant 0 : index
    %c0_56 = arith.constant 0 : index
    %50 = vector.load %arg6[%c0_54, %c0_55, %c0_56] : memref<1x1x4xf32, #tpu.memory_space<vmem>>, vector<1x1x4xf32>
    %51 = vector.shape_cast %50 : vector<1x1x4xf32> to vector<1x4xf32>
    %52 = vector.shape_cast %49 : vector<1x4xf32> to vector<1x1x4xf32>
    tpu.vector_store %arg6[%c0_54, %c0_55, %c0_56], %52 {strides = array<i32>} : memref<1x1x4xf32, #tpu.memory_space<vmem>>, vector<1x1x4xf32>,
    %cst_57 = arith.constant 0.000000e+00 : bf16
    %53 = vector.broadcast %cst_57 : bf16 to vector<18x18x4xbf16>
    %c0_58 = arith.constant 0 : index
    %c0_59 = arith.constant 0 : index
    %c0_60 = arith.constant 0 : index
    %c0_61 = arith.constant 0 : index
    %54 = vector.load %arg4[%c0_58, %c0_59, %c0_60, %c0_61] : memref<1x18x18x4xbf16, #tpu.memory_space<vmem>>, vector<1x18x18x4xbf16>
    %55 = vector.shape_cast %54 : vector<1x18x18x4xbf16> to vector<18x18x4xbf16>
    %56 = vector.shape_cast %53 : vector<18x18x4xbf16> to vector<1x18x18x4xbf16>
    tpu.vector_store %arg4[%c0_58, %c0_59, %c0_60, %c0_61], %56 {strides = array<i32>} : memref<1x18x18x4xbf16, #tpu.memory_space<vmem>>, vector<1x18x18x4xbf16>,
    %57 = vector.shape_cast %41 : vector<256x4xf32> to vector<16x16x4xf32>
    %58 = arith.truncf %57 : vector<16x16x4xf32> to vector<16x16x4xbf16>
    %c0_62 = arith.constant 0 : index
    %c1_63 = arith.constant 1 : index
    %c1_64 = arith.constant 1 : index
    %c0_65 = arith.constant 0 : index
    %59 = vector.load %arg4[%c0_62, %c1_63, %c1_64, %c0_65] : memref<1x18x18x4xbf16, #tpu.memory_space<vmem>>, vector<1x16x16x4xbf16>
    %60 = vector.shape_cast %59 : vector<1x16x16x4xbf16> to vector<16x16x4xbf16>
    %61 = vector.shape_cast %58 : vector<16x16x4xbf16> to vector<1x16x16x4xbf16>
    tpu.vector_store %arg4[%c0_62, %c1_63, %c1_64, %c0_65], %61 {strides = array<i32>} : memref<1x18x18x4xbf16, #tpu.memory_space<vmem>>, vector<1x16x16x4xbf16>,
    return
  }
  func.func @transform_0(%arg0: i32) -> (i32, i32, i32, i32) {
    %c0_i32 = arith.constant 0 : i32
    %c0_i32_0 = arith.constant 0 : i32
    %c0_i32_1 = arith.constant 0 : i32
    %c0_i32_2 = arith.constant 0 : i32
    return %arg0, %c0_i32, %c0_i32_0, %c0_i32_1 : i32, i32, i32, i32
  }
  func.func @transform_1(%arg0: i32) -> (i32, i32) {
    %c0_i32 = arith.constant 0 : i32
    %c0_i32_0 = arith.constant 0 : i32
    %c0_i32_1 = arith.constant 0 : i32
    return %c0_i32, %c0_i32_0 : i32, i32
  }
  func.func @transform_2(%arg0: i32) -> (i32, i32) {
    %c0_i32 = arith.constant 0 : i32
    %c0_i32_0 = arith.constant 0 : i32
    %c0_i32_1 = arith.constant 0 : i32
    return %c0_i32, %c0_i32_0 : i32, i32
  }
  func.func @transform_3(%arg0: i32) -> (i32, i32, i32, i32) {
    %c0_i32 = arith.constant 0 : i32
    %c0_i32_0 = arith.constant 0 : i32
    %c0_i32_1 = arith.constant 0 : i32
    %c0_i32_2 = arith.constant 0 : i32
    return %arg0, %c0_i32, %c0_i32_0, %c0_i32_1 : i32, i32, i32, i32
  }
  func.func @transform_4(%arg0: i32) -> (i32, i32, i32) {
    %c0_i32 = arith.constant 0 : i32
    %c0_i32_0 = arith.constant 0 : i32
    %c0_i32_1 = arith.constant 0 : i32
    return %arg0, %c0_i32, %c0_i32_0 : i32, i32, i32
  }
  func.func @transform_5(%arg0: i32) -> (i32, i32, i32) {
    %c0_i32 = arith.constant 0 : i32
    %c0_i32_0 = arith.constant 0 : i32
    %c0_i32_1 = arith.constant 0 : i32
    return %arg0, %c0_i32, %c0_i32_0 : i32, i32, i32
  }
}

module attributes {stable_mosaic.version = 11 : i64} {
  func.func @_conv2_kernel(%arg0: i32, %arg1: memref<1x18x18x4xbf16, #tpu.memory_space<vmem>>, %arg2: memref<1x4xf32, #tpu.memory_space<vmem>>, %arg3: memref<1x4xf32, #tpu.memory_space<vmem>>, %arg4: memref<36x4xbf16, #tpu.memory_space<vmem>>, %arg5: memref<1x4xf32, #tpu.memory_space<vmem>>, %arg6: memref<1x256x4xbf16, #tpu.memory_space<vmem>>, %arg7: memref<1x1x4xf32, #tpu.memory_space<vmem>>, %arg8: memref<1x1x4xf32, #tpu.memory_space<vmem>>, %arg9: memref<18x18x4xbf16, #tpu.memory_space<vmem>>, %arg10: memref<256x36xbf16, #tpu.memory_space<vmem>>) attributes {dimension_semantics = [#tpu.dimension_semantics<parallel>], iteration_bounds = array<i64: 2>, scalar_prefetch = 0 : i64, scratch_operands = 2 : i64, tpu.core_type = #tpu.core_type<tc>, window_params = [{transform_indices = @transform_0, window_bounds = array<i64: 1, 18, 18, 4>}, {pipeline_mode = #tpu.pipeline_mode<synchronous>, transform_indices = @transform_1, window_bounds = array<i64: 1, 4>}, {pipeline_mode = #tpu.pipeline_mode<synchronous>, transform_indices = @transform_2, window_bounds = array<i64: 1, 4>}, {pipeline_mode = #tpu.pipeline_mode<synchronous>, transform_indices = @transform_3, window_bounds = array<i64: 36, 4>}, {pipeline_mode = #tpu.pipeline_mode<synchronous>, transform_indices = @transform_4, window_bounds = array<i64: 1, 4>}, {transform_indices = @transform_5, window_bounds = array<i64: 1, 256, 4>}, {transform_indices = @transform_6, window_bounds = array<i64: 1, 1, 4>}, {transform_indices = @transform_7, window_bounds = array<i64: 1, 1, 4>}]} {
    %cst = arith.constant 0.000000e+00 : bf16
    %0 = vector.broadcast %cst : bf16 to vector<18x18x4xbf16>
    %c0 = arith.constant 0 : index
    %c0_0 = arith.constant 0 : index
    %c0_1 = arith.constant 0 : index
    %1 = vector.load %arg9[%c0, %c0_0, %c0_1] : memref<18x18x4xbf16, #tpu.memory_space<vmem>>, vector<18x18x4xbf16>
    tpu.vector_store %arg9[%c0, %c0_0, %c0_1], %0 {strides = array<i32>} : memref<18x18x4xbf16, #tpu.memory_space<vmem>>, vector<18x18x4xbf16>,
    %c0_2 = arith.constant 0 : index
    %c1 = arith.constant 1 : index
    %c1_3 = arith.constant 1 : index
    %c0_4 = arith.constant 0 : index
    %2 = vector.load %arg1[%c0_2, %c1, %c1_3, %c0_4] : memref<1x18x18x4xbf16, #tpu.memory_space<vmem>>, vector<1x16x16x4xbf16>
    %3 = vector.shape_cast %2 : vector<1x16x16x4xbf16> to vector<16x16x4xbf16>
    %4 = arith.extf %3 : vector<16x16x4xbf16> to vector<16x16x4xf32>
    %c0_5 = arith.constant 0 : index
    %c0_6 = arith.constant 0 : index
    %5 = vector.load %arg2[%c0_5, %c0_6] : memref<1x4xf32, #tpu.memory_space<vmem>>, vector<1x4xf32>
    %6 = vector.shape_cast %5 : vector<1x4xf32> to vector<1x1x4xf32>
    %c0_7 = arith.constant 0 : index
    %c0_8 = arith.constant 0 : index
    %7 = vector.load %arg3[%c0_7, %c0_8] : memref<1x4xf32, #tpu.memory_space<vmem>>, vector<1x4xf32>
    %8 = vector.shape_cast %7 : vector<1x4xf32> to vector<1x1x4xf32>
    %9 = vector.broadcast %6 : vector<1x1x4xf32> to vector<16x16x4xf32>
    %10 = arith.mulf %4, %9 : vector<16x16x4xf32>
    %11 = vector.broadcast %8 : vector<1x1x4xf32> to vector<16x16x4xf32>
    %12 = arith.addf %10, %11 : vector<16x16x4xf32>
    %cst_9 = arith.constant 0.000000e+00 : f32
    %13 = vector.broadcast %cst_9 : f32 to vector<16x16x4xf32>
    %14 = arith.maximumf %12, %13 : vector<16x16x4xf32>
    %15 = arith.truncf %14 : vector<16x16x4xf32> to vector<16x16x4xbf16>
    %c1_10 = arith.constant 1 : index
    %c1_11 = arith.constant 1 : index
    %c0_12 = arith.constant 0 : index
    %16 = vector.load %arg9[%c1_10, %c1_11, %c0_12] : memref<18x18x4xbf16, #tpu.memory_space<vmem>>, vector<16x16x4xbf16>
    tpu.vector_store %arg9[%c1_10, %c1_11, %c0_12], %15 {strides = array<i32>} : memref<18x18x4xbf16, #tpu.memory_space<vmem>>, vector<16x16x4xbf16>,
    %c0_13 = arith.constant 0 : index
    %c0_14 = arith.constant 0 : index
    %c0_15 = arith.constant 0 : index
    %17 = vector.load %arg9[%c0_13, %c0_14, %c0_15] : memref<18x18x4xbf16, #tpu.memory_space<vmem>>, vector<16x16x4xbf16>
    %18 = vector.shape_cast %17 : vector<16x16x4xbf16> to vector<256x4xbf16>
    %c0_16 = arith.constant 0 : index
    %c0_17 = arith.constant 0 : index
    %19 = vector.load %arg10[%c0_16, %c0_17] : memref<256x36xbf16, #tpu.memory_space<vmem>>, vector<256x4xbf16>
    tpu.vector_store %arg10[%c0_16, %c0_17], %18 {strides = array<i32>} : memref<256x36xbf16, #tpu.memory_space<vmem>>, vector<256x4xbf16>,
    %c0_18 = arith.constant 0 : index
    %c1_19 = arith.constant 1 : index
    %c0_20 = arith.constant 0 : index
    %20 = vector.load %arg9[%c0_18, %c1_19, %c0_20] : memref<18x18x4xbf16, #tpu.memory_space<vmem>>, vector<16x16x4xbf16>
    %21 = vector.shape_cast %20 : vector<16x16x4xbf16> to vector<256x4xbf16>
    %c0_21 = arith.constant 0 : index
    %c4 = arith.constant 4 : index
    %22 = vector.load %arg10[%c0_21, %c4] : memref<256x36xbf16, #tpu.memory_space<vmem>>, vector<256x4xbf16>
    tpu.vector_store %arg10[%c0_21, %c4], %21 {strides = array<i32>} : memref<256x36xbf16, #tpu.memory_space<vmem>>, vector<256x4xbf16>,
    %c0_22 = arith.constant 0 : index
    %c2 = arith.constant 2 : index
    %c0_23 = arith.constant 0 : index
    %23 = vector.load %arg9[%c0_22, %c2, %c0_23] : memref<18x18x4xbf16, #tpu.memory_space<vmem>>, vector<16x16x4xbf16>
    %24 = vector.shape_cast %23 : vector<16x16x4xbf16> to vector<256x4xbf16>
    %c0_24 = arith.constant 0 : index
    %c8 = arith.constant 8 : index
    %25 = vector.load %arg10[%c0_24, %c8] : memref<256x36xbf16, #tpu.memory_space<vmem>>, vector<256x4xbf16>
    tpu.vector_store %arg10[%c0_24, %c8], %24 {strides = array<i32>} : memref<256x36xbf16, #tpu.memory_space<vmem>>, vector<256x4xbf16>,
    %c1_25 = arith.constant 1 : index
    %c0_26 = arith.constant 0 : index
    %c0_27 = arith.constant 0 : index
    %26 = vector.load %arg9[%c1_25, %c0_26, %c0_27] : memref<18x18x4xbf16, #tpu.memory_space<vmem>>, vector<16x16x4xbf16>
    %27 = vector.shape_cast %26 : vector<16x16x4xbf16> to vector<256x4xbf16>
    %c0_28 = arith.constant 0 : index
    %c12 = arith.constant 12 : index
    %28 = vector.load %arg10[%c0_28, %c12] : memref<256x36xbf16, #tpu.memory_space<vmem>>, vector<256x4xbf16>
    tpu.vector_store %arg10[%c0_28, %c12], %27 {strides = array<i32>} : memref<256x36xbf16, #tpu.memory_space<vmem>>, vector<256x4xbf16>,
    %c1_29 = arith.constant 1 : index
    %c1_30 = arith.constant 1 : index
    %c0_31 = arith.constant 0 : index
    %29 = vector.load %arg9[%c1_29, %c1_30, %c0_31] : memref<18x18x4xbf16, #tpu.memory_space<vmem>>, vector<16x16x4xbf16>
    %30 = vector.shape_cast %29 : vector<16x16x4xbf16> to vector<256x4xbf16>
    %c0_32 = arith.constant 0 : index
    %c16 = arith.constant 16 : index
    %31 = vector.load %arg10[%c0_32, %c16] : memref<256x36xbf16, #tpu.memory_space<vmem>>, vector<256x4xbf16>
    tpu.vector_store %arg10[%c0_32, %c16], %30 {strides = array<i32>} : memref<256x36xbf16, #tpu.memory_space<vmem>>, vector<256x4xbf16>,
    %c1_33 = arith.constant 1 : index
    %c2_34 = arith.constant 2 : index
    %c0_35 = arith.constant 0 : index
    %32 = vector.load %arg9[%c1_33, %c2_34, %c0_35] : memref<18x18x4xbf16, #tpu.memory_space<vmem>>, vector<16x16x4xbf16>
    %33 = vector.shape_cast %32 : vector<16x16x4xbf16> to vector<256x4xbf16>
    %c0_36 = arith.constant 0 : index
    %c20 = arith.constant 20 : index
    %34 = vector.load %arg10[%c0_36, %c20] : memref<256x36xbf16, #tpu.memory_space<vmem>>, vector<256x4xbf16>
    tpu.vector_store %arg10[%c0_36, %c20], %33 {strides = array<i32>} : memref<256x36xbf16, #tpu.memory_space<vmem>>, vector<256x4xbf16>,
    %c2_37 = arith.constant 2 : index
    %c0_38 = arith.constant 0 : index
    %c0_39 = arith.constant 0 : index
    %35 = vector.load %arg9[%c2_37, %c0_38, %c0_39] : memref<18x18x4xbf16, #tpu.memory_space<vmem>>, vector<16x16x4xbf16>
    %36 = vector.shape_cast %35 : vector<16x16x4xbf16> to vector<256x4xbf16>
    %c0_40 = arith.constant 0 : index
    %c24 = arith.constant 24 : index
    %37 = vector.load %arg10[%c0_40, %c24] : memref<256x36xbf16, #tpu.memory_space<vmem>>, vector<256x4xbf16>
    tpu.vector_store %arg10[%c0_40, %c24], %36 {strides = array<i32>} : memref<256x36xbf16, #tpu.memory_space<vmem>>, vector<256x4xbf16>,
    %c2_41 = arith.constant 2 : index
    %c1_42 = arith.constant 1 : index
    %c0_43 = arith.constant 0 : index
    %38 = vector.load %arg9[%c2_41, %c1_42, %c0_43] : memref<18x18x4xbf16, #tpu.memory_space<vmem>>, vector<16x16x4xbf16>
    %39 = vector.shape_cast %38 : vector<16x16x4xbf16> to vector<256x4xbf16>
    %c0_44 = arith.constant 0 : index
    %c28 = arith.constant 28 : index
    %40 = vector.load %arg10[%c0_44, %c28] : memref<256x36xbf16, #tpu.memory_space<vmem>>, vector<256x4xbf16>
    tpu.vector_store %arg10[%c0_44, %c28], %39 {strides = array<i32>} : memref<256x36xbf16, #tpu.memory_space<vmem>>, vector<256x4xbf16>,
    %c2_45 = arith.constant 2 : index
    %c2_46 = arith.constant 2 : index
    %c0_47 = arith.constant 0 : index
    %41 = vector.load %arg9[%c2_45, %c2_46, %c0_47] : memref<18x18x4xbf16, #tpu.memory_space<vmem>>, vector<16x16x4xbf16>
    %42 = vector.shape_cast %41 : vector<16x16x4xbf16> to vector<256x4xbf16>
    %c0_48 = arith.constant 0 : index
    %c32 = arith.constant 32 : index
    %43 = vector.load %arg10[%c0_48, %c32] : memref<256x36xbf16, #tpu.memory_space<vmem>>, vector<256x4xbf16>
    tpu.vector_store %arg10[%c0_48, %c32], %42 {strides = array<i32>} : memref<256x36xbf16, #tpu.memory_space<vmem>>, vector<256x4xbf16>,
    %c0_49 = arith.constant 0 : index
    %c0_50 = arith.constant 0 : index
    %44 = vector.load %arg10[%c0_49, %c0_50] : memref<256x36xbf16, #tpu.memory_space<vmem>>, vector<256x36xbf16>
    %c0_51 = arith.constant 0 : index
    %c0_52 = arith.constant 0 : index
    %45 = vector.load %arg4[%c0_51, %c0_52] : memref<36x4xbf16, #tpu.memory_space<vmem>>, vector<36x4xbf16>
    %cst_53 = arith.constant dense<0.000000e+00> : vector<256x4xf32>
    %46 = tpu.matmul %44, %45, %cst_53 {dimension_numbers = #tpu.dot_dimension_numbers<[1], [0], [0], [1], [0, 0, 1, 1], [], []>} : vector<256x36xbf16>, vector<36x4xbf16>, vector<256x4xf32> -> vector<256x4xf32>
    %c0_54 = arith.constant 0 : index
    %c0_55 = arith.constant 0 : index
    %47 = vector.load %arg5[%c0_54, %c0_55] : memref<1x4xf32, #tpu.memory_space<vmem>>, vector<1x4xf32>
    %48 = vector.broadcast %47 : vector<1x4xf32> to vector<256x4xf32>
    %49 = arith.addf %46, %48 : vector<256x4xf32>
    %cst_56 = arith.constant dense<0.000000e+00> : vector<4xf32>
    %50 = vector.multi_reduction <add>, %49, %cst_56 [0] : vector<256x4xf32> to vector<4xf32>
    %51 = vector.shape_cast %50 : vector<4xf32> to vector<1x4xf32>
    %c0_57 = arith.constant 0 : index
    %c0_58 = arith.constant 0 : index
    %c0_59 = arith.constant 0 : index
    %52 = vector.load %arg7[%c0_57, %c0_58, %c0_59] : memref<1x1x4xf32, #tpu.memory_space<vmem>>, vector<1x1x4xf32>
    %53 = vector.shape_cast %52 : vector<1x1x4xf32> to vector<1x4xf32>
    %54 = vector.shape_cast %51 : vector<1x4xf32> to vector<1x1x4xf32>
    tpu.vector_store %arg7[%c0_57, %c0_58, %c0_59], %54 {strides = array<i32>} : memref<1x1x4xf32, #tpu.memory_space<vmem>>, vector<1x1x4xf32>,
    %55 = arith.mulf %49, %49 : vector<256x4xf32>
    %cst_60 = arith.constant dense<0.000000e+00> : vector<4xf32>
    %56 = vector.multi_reduction <add>, %55, %cst_60 [0] : vector<256x4xf32> to vector<4xf32>
    %57 = vector.shape_cast %56 : vector<4xf32> to vector<1x4xf32>
    %c0_61 = arith.constant 0 : index
    %c0_62 = arith.constant 0 : index
    %c0_63 = arith.constant 0 : index
    %58 = vector.load %arg8[%c0_61, %c0_62, %c0_63] : memref<1x1x4xf32, #tpu.memory_space<vmem>>, vector<1x1x4xf32>
    %59 = vector.shape_cast %58 : vector<1x1x4xf32> to vector<1x4xf32>
    %60 = vector.shape_cast %57 : vector<1x4xf32> to vector<1x1x4xf32>
    tpu.vector_store %arg8[%c0_61, %c0_62, %c0_63], %60 {strides = array<i32>} : memref<1x1x4xf32, #tpu.memory_space<vmem>>, vector<1x1x4xf32>,
    %61 = arith.truncf %49 : vector<256x4xf32> to vector<256x4xbf16>
    %c0_64 = arith.constant 0 : index
    %c0_65 = arith.constant 0 : index
    %c0_66 = arith.constant 0 : index
    %62 = vector.load %arg6[%c0_64, %c0_65, %c0_66] : memref<1x256x4xbf16, #tpu.memory_space<vmem>>, vector<1x256x4xbf16>
    %63 = vector.shape_cast %62 : vector<1x256x4xbf16> to vector<256x4xbf16>
    %64 = vector.shape_cast %61 : vector<256x4xbf16> to vector<1x256x4xbf16>
    tpu.vector_store %arg6[%c0_64, %c0_65, %c0_66], %64 {strides = array<i32>} : memref<1x256x4xbf16, #tpu.memory_space<vmem>>, vector<1x256x4xbf16>,
    return
  }
  func.func @transform_0(%arg0: i32) -> (i32, i32, i32, i32) {
    %c0_i32 = arith.constant 0 : i32
    %c0_i32_0 = arith.constant 0 : i32
    %c0_i32_1 = arith.constant 0 : i32
    %c0_i32_2 = arith.constant 0 : i32
    return %arg0, %c0_i32, %c0_i32_0, %c0_i32_1 : i32, i32, i32, i32
  }
  func.func @transform_1(%arg0: i32) -> (i32, i32) {
    %c0_i32 = arith.constant 0 : i32
    %c0_i32_0 = arith.constant 0 : i32
    %c0_i32_1 = arith.constant 0 : i32
    return %c0_i32, %c0_i32_0 : i32, i32
  }
  func.func @transform_2(%arg0: i32) -> (i32, i32) {
    %c0_i32 = arith.constant 0 : i32
    %c0_i32_0 = arith.constant 0 : i32
    %c0_i32_1 = arith.constant 0 : i32
    return %c0_i32, %c0_i32_0 : i32, i32
  }
  func.func @transform_3(%arg0: i32) -> (i32, i32) {
    %c0_i32 = arith.constant 0 : i32
    %c0_i32_0 = arith.constant 0 : i32
    %c0_i32_1 = arith.constant 0 : i32
    return %c0_i32, %c0_i32_0 : i32, i32
  }
  func.func @transform_4(%arg0: i32) -> (i32, i32) {
    %c0_i32 = arith.constant 0 : i32
    %c0_i32_0 = arith.constant 0 : i32
    %c0_i32_1 = arith.constant 0 : i32
    return %c0_i32, %c0_i32_0 : i32, i32
  }
  func.func @transform_5(%arg0: i32) -> (i32, i32, i32) {
    %c0_i32 = arith.constant 0 : i32
    %c0_i32_0 = arith.constant 0 : i32
    %c0_i32_1 = arith.constant 0 : i32
    return %arg0, %c0_i32, %c0_i32_0 : i32, i32, i32
  }
  func.func @transform_6(%arg0: i32) -> (i32, i32, i32) {
    %c0_i32 = arith.constant 0 : i32
    %c0_i32_0 = arith.constant 0 : i32
    %c0_i32_1 = arith.constant 0 : i32
    return %arg0, %c0_i32, %c0_i32_0 : i32, i32, i32
  }
  func.func @transform_7(%arg0: i32) -> (i32, i32, i32) {
    %c0_i32 = arith.constant 0 : i32
    %c0_i32_0 = arith.constant 0 : i32
    %c0_i32_1 = arith.constant 0 : i32
    return %arg0, %c0_i32, %c0_i32_0 : i32, i32, i32
  }
}

module attributes {stable_mosaic.version = 11 : i64} {
  func.func @_bn_add_relu_kernel(%arg0: i32, %arg1: memref<1x2048xbf16, #tpu.memory_space<vmem>>, %arg2: memref<1x2048xf32, #tpu.memory_space<vmem>>, %arg3: memref<1x2048xf32, #tpu.memory_space<vmem>>, %arg4: memref<1x2048xf32, #tpu.memory_space<vmem>>, %arg5: memref<1x2048xf32, #tpu.memory_space<vmem>>) attributes {dimension_semantics = [#tpu.dimension_semantics<parallel>], iteration_bounds = array<i64: 1>, scalar_prefetch = 0 : i64, scratch_operands = 0 : i64, tpu.core_type = #tpu.core_type<tc>, window_params = [{transform_indices = @transform_0, window_bounds = array<i64: 1, 2048>}, {transform_indices = @transform_1, window_bounds = array<i64: 1, 2048>}, {pipeline_mode = #tpu.pipeline_mode<synchronous>, transform_indices = @transform_2, window_bounds = array<i64: 1, 2048>}, {pipeline_mode = #tpu.pipeline_mode<synchronous>, transform_indices = @transform_3, window_bounds = array<i64: 1, 2048>}, {transform_indices = @transform_4, window_bounds = array<i64: 1, 2048>}]} {
    %c0 = arith.constant 0 : index
    %c0_0 = arith.constant 0 : index
    %0 = vector.load %arg1[%c0, %c0_0] : memref<1x2048xbf16, #tpu.memory_space<vmem>>, vector<1x2048xbf16>
    %1 = arith.extf %0 : vector<1x2048xbf16> to vector<1x2048xf32>
    %c0_1 = arith.constant 0 : index
    %c0_2 = arith.constant 0 : index
    %2 = vector.load %arg3[%c0_1, %c0_2] : memref<1x2048xf32, #tpu.memory_space<vmem>>, vector<1x2048xf32>
    %3 = arith.mulf %1, %2 : vector<1x2048xf32>
    %c0_3 = arith.constant 0 : index
    %c0_4 = arith.constant 0 : index
    %4 = vector.load %arg4[%c0_3, %c0_4] : memref<1x2048xf32, #tpu.memory_space<vmem>>, vector<1x2048xf32>
    %5 = arith.addf %3, %4 : vector<1x2048xf32>
    %c0_5 = arith.constant 0 : index
    %c0_6 = arith.constant 0 : index
    %6 = vector.load %arg2[%c0_5, %c0_6] : memref<1x2048xf32, #tpu.memory_space<vmem>>, vector<1x2048xf32>
    %7 = arith.addf %5, %6 : vector<1x2048xf32>
    %cst = arith.constant 0.000000e+00 : f32
    %8 = vector.broadcast %cst : f32 to vector<1x2048xf32>
    %9 = arith.maximumf %7, %8 : vector<1x2048xf32>
    %c0_7 = arith.constant 0 : index
    %c0_8 = arith.constant 0 : index
    %10 = vector.load %arg5[%c0_7, %c0_8] : memref<1x2048xf32, #tpu.memory_space<vmem>>, vector<1x2048xf32>
    tpu.vector_store %arg5[%c0_7, %c0_8], %9 {strides = array<i32>} : memref<1x2048xf32, #tpu.memory_space<vmem>>, vector<1x2048xf32>,
    return
  }
  func.func @transform_0(%arg0: i32) -> (i32, i32) {
    %c0_i32 = arith.constant 0 : i32
    %c0_i32_0 = arith.constant 0 : i32
    return %arg0, %c0_i32 : i32, i32
  }
  func.func @transform_1(%arg0: i32) -> (i32, i32) {
    %c0_i32 = arith.constant 0 : i32
    %c0_i32_0 = arith.constant 0 : i32
    return %arg0, %c0_i32 : i32, i32
  }
  func.func @transform_2(%arg0: i32) -> (i32, i32) {
    %c0_i32 = arith.constant 0 : i32
    %c0_i32_0 = arith.constant 0 : i32
    %c0_i32_1 = arith.constant 0 : i32
    return %c0_i32, %c0_i32_0 : i32, i32
  }
  func.func @transform_3(%arg0: i32) -> (i32, i32) {
    %c0_i32 = arith.constant 0 : i32
    %c0_i32_0 = arith.constant 0 : i32
    %c0_i32_1 = arith.constant 0 : i32
    return %c0_i32, %c0_i32_0 : i32, i32
  }
  func.func @transform_4(%arg0: i32) -> (i32, i32) {
    %c0_i32 = arith.constant 0 : i32
    %c0_i32_0 = arith.constant 0 : i32
    return %arg0, %c0_i32 : i32, i32
  }
}

</mosaic_0001>

<llo_original>
// kernel: tile.14
$region0: #{tile.14}
  #allocation0 [shape = 's32[1]{0}', space=sflag, size = 0x4, scoped, tag = 'scoped memory for tile.14']
  %s0 = inlined_call_operand.vmem [shape: f32[4], index: 0, kind: input, shape index: {}]
  %s1 = inlined_call_operand.vmem [shape: f32[512,4], index: 1, kind: output, shape index: {}]
  // Predicated region
  $region2: #{tile.14} parent=0 // pred_check
    _
  $region3: #{tile.14} parent=0 // pred_check_branch
    %3 = sbr.rel (0) target = $region5
  $region4: #{tile.14} parent=0 // pred_region
    _
  $region5: #{tile.14} parent=0 // pred_fallthru
    _
  %v4 = vld [vmem:[%s0] ss:$0 sm:$0xff]
  %5 = vst [vmem:[%s1] sm:$0xff] %v4
  %s6 = scalar_lea.vmem %s1, 8
  %7 = vst [vmem:[%s6] sm:$0xff] %v4
  %s8 = scalar_lea.vmem %s1, 16
  %9 = vst [vmem:[%s8] sm:$0xff] %v4
  %s10 = scalar_lea.vmem %s1, 24
  %11 = vst [vmem:[%s10] sm:$0xff] %v4
  %s12 = scalar_lea.vmem %s1, 32
  %13 = vst [vmem:[%s12] sm:$0xff] %v4
  %s14 = scalar_lea.vmem %s1, 40
  %15 = vst [vmem:[%s14] sm:$0xff] %v4
  %s16 = scalar_lea.vmem %s1, 48
  %17 = vst [vmem:[%s16] sm:$0xff] %v4
  %s18 = scalar_lea.vmem %s1, 56
  %19 = vst [vmem:[%s18] sm:$0xff] %v4
  %s20 = scalar_lea.vmem %s1, 64
  %21 = vst [vmem:[%s20] sm:$0xff] %v4
  %s22 = scalar_lea.vmem %s1, 72
  %23 = vst [vmem:[%s22] sm:$0xff] %v4
  %s24 = scalar_lea.vmem %s1, 80
  %25 = vst [vmem:[%s24] sm:$0xff] %v4
  %s26 = scalar_lea.vmem %s1, 88
  %27 = vst [vmem:[%s26] sm:$0xff] %v4
  %s28 = scalar_lea.vmem %s1, 96
  %29 = vst [vmem:[%s28] sm:$0xff] %v4
  %s30 = scalar_lea.vmem %s1, 104
  %31 = vst [vmem:[%s30] sm:$0xff] %v4
  %s32 = scalar_lea.vmem %s1, 112
  %33 = vst [vmem:[%s32] sm:$0xff] %v4
  %s34 = scalar_lea.vmem %s1, 120
  %35 = vst [vmem:[%s34] sm:$0xff] %v4
  %s36 = scalar_lea.vmem %s1, 128
  %37 = vst [vmem:[%s36] sm:$0xff] %v4
  %s38 = scalar_lea.vmem %s1, 136
  %39 = vst [vmem:[%s38] sm:$0xff] %v4
  %s40 = scalar_lea.vmem %s1, 144
  %41 = vst [vmem:[%s40] sm:$0xff] %v4
  %s42 = scalar_lea.vmem %s1, 152
  %43 = vst [vmem:[%s42] sm:$0xff] %v4
  %s44 = scalar_lea.vmem %s1, 160
  %45 = vst [vmem:[%s44] sm:$0xff] %v4
  %s46 = scalar_lea.vmem %s1, 168
  %47 = vst [vmem:[%s46] sm:$0xff] %v4
  %s48 = scalar_lea.vmem %s1, 176
  %49 = vst [vmem:[%s48] sm:$0xff] %v4
  %s50 = scalar_lea.vmem %s1, 184
  %51 = vst [vmem:[%s50] sm:$0xff] %v4
  %s52 = scalar_lea.vmem %s1, 192
  %53 = vst [vmem:[%s52] sm:$0xff] %v4
  %s54 = scalar_lea.vmem %s1, 200
  %55 = vst [vmem:[%s54] sm:$0xff] %v4
  %s56 = scalar_lea.vmem %s1, 208
  %57 = vst [vmem:[%s56] sm:$0xff] %v4
  %s58 = scalar_lea.vmem %s1, 216
  %59 = vst [vmem:[%s58] sm:$0xff] %v4
  %s60 = scalar_lea.vmem %s1, 224
  %61 = vst [vmem:[%s60] sm:$0xff] %v4
  %s62 = scalar_lea.vmem %s1, 232
  %63 = vst [vmem:[%s62] sm:$0xff] %v4
  %s64 = scalar_lea.vmem %s1, 240
  %65 = vst [vmem:[%s64] sm:$0xff] %v4
  %s66 = scalar_lea.vmem %s1, 248
  %67 = vst [vmem:[%s66] sm:$0xff] %v4
  %s68 = scalar_lea.vmem %s1, 256
  %69 = vst [vmem:[%s68] sm:$0xff] %v4
  %s70 = scalar_lea.vmem %s1, 264
  %71 = vst [vmem:[%s70] sm:$0xff] %v4
  %s72 = scalar_lea.vmem %s1, 272
  %73 = vst [vmem:[%s72] sm:$0xff] %v4
  %s74 = scalar_lea.vmem %s1, 280
  %75 = vst [vmem:[%s74] sm:$0xff] %v4
  %s76 = scalar_lea.vmem %s1, 288
  %77 = vst [vmem:[%s76] sm:$0xff] %v4
  %s78 = scalar_lea.vmem %s1, 296
  %79 = vst [vmem:[%s78] sm:$0xff] %v4
  %s80 = scalar_lea.vmem %s1, 304
  %81 = vst [vmem:[%s80] sm:$0xff] %v4
  %s82 = scalar_lea.vmem %s1, 312
  %83 = vst [vmem:[%s82] sm:$0xff] %v4
  %s84 = scalar_lea.vmem %s1, 320
  %85 = vst [vmem:[%s84] sm:$0xff] %v4
  %s86 = scalar_lea.vmem %s1, 328
  %87 = vst [vmem:[%s86] sm:$0xff] %v4
  %s88 = scalar_lea.vmem %s1, 336
  %89 = vst [vmem:[%s88] sm:$0xff] %v4
  %s90 = scalar_lea.vmem %s1, 344
  %91 = vst [vmem:[%s90] sm:$0xff] %v4
  %s92 = scalar_lea.vmem %s1, 352
  %93 = vst [vmem:[%s92] sm:$0xff] %v4
  %s94 = scalar_lea.vmem %s1, 360
  %95 = vst [vmem:[%s94] sm:$0xff] %v4
  %s96 = scalar_lea.vmem %s1, 368
  %97 = vst [vmem:[%s96] sm:$0xff] %v4
  %s98 = scalar_lea.vmem %s1, 376
  %99 = vst [vmem:[%s98] sm:$0xff] %v4
  %s100 = scalar_lea.vmem %s1, 384
  %101 = vst [vmem:[%s100] sm:$0xff] %v4
  %s102 = scalar_lea.vmem %s1, 392
  %103 = vst [vmem:[%s102] sm:$0xff] %v4
  %s104 = scalar_lea.vmem %s1, 400
  %105 = vst [vmem:[%s104] sm:$0xff] %v4
  %s106 = scalar_lea.vmem %s1, 408
  %107 = vst [vmem:[%s106] sm:$0xff] %v4
  %s108 = scalar_lea.vmem %s1, 416
  %109 = vst [vmem:[%s108] sm:$0xff] %v4
  %s110 = scalar_lea.vmem %s1, 424
  %111 = vst [vmem:[%s110] sm:$0xff] %v4
  %s112 = scalar_lea.vmem %s1, 432
  %113 = vst [vmem:[%s112] sm:$0xff] %v4
  %s114 = scalar_lea.vmem %s1, 440
  %115 = vst [vmem:[%s114] sm:$0xff] %v4
  %s116 = scalar_lea.vmem %s1, 448
  %117 = vst [vmem:[%s116] sm:$0xff] %v4
  %s118 = scalar_lea.vmem %s1, 456
  %119 = vst [vmem:[%s118] sm:$0xff] %v4
  %s120 = scalar_lea.vmem %s1, 464
  %121 = vst [vmem:[%s120] sm:$0xff] %v4
  %s122 = scalar_lea.vmem %s1, 472
  %123 = vst [vmem:[%s122] sm:$0xff] %v4
  %s124 = scalar_lea.vmem %s1, 480
  %125 = vst [vmem:[%s124] sm:$0xff] %v4
  %s126 = scalar_lea.vmem %s1, 488
  %127 = vst [vmem:[%s126] sm:$0xff] %v4
  %s128 = scalar_lea.vmem %s1, 496
  %129 = vst [vmem:[%s128] sm:$0xff] %v4
  %s130 = scalar_lea.vmem %s1, 504
  %131 = vst [vmem:[%s130] sm:$0xff] %v4

// kernel: tile.15
$region0: #{tile.15}
  %s0 = inlined_call_operand.vmem [shape: f32[512,4], index: 0, kind: input, shape index: {}]
  %s1 = inlined_call_operand.hbm [shape: f32[1,2048], index: 1, kind: output, shape index: {}]
  $region1: #{tile.15} parent=0
    #allocation0 [shape = 'u8[8192]{0}', space=vmem, size = 0x2000, scoped, tag = 'operand span for operand 1']
    #allocation1 [shape = 's32[1]{0}', space=sflag, size = 0x4, scoped, tag = 'scoped memory for tile.15']
    #allocation2 [shape = 'u8[65536]{0}', space=vmem, size = 0x10000, scoped, tag = 'scoped mem for output reshape']
    %2 = vsyncpa [#allocation1], 0
    %v3 = vld [vmem:[%s0] sm:$0x1]
    %s4 = scalar_lea.vmem %s0, 31
    %v5 = vld [vmem:[%s4] sm:$0x2]
    %vm6 = vcmask 1041409
    %v7 = vsel %vm6, %v5, %v3
    %s8 = scalar_lea.vmem %s0, 62
    %v9 = vld [vmem:[%s8] sm:$0x4]
    %vm10 = vcmask 1042434
    %v11 = vsel %vm10, %v9, %v7
    %s12 = scalar_lea.vmem %s0, 93
    %v13 = vld [vmem:[%s12] sm:$0x8]
    %vm14 = vcmask 1043459
    %v15 = vsel %vm14, %v13, %v11
    %s16 = scalar_lea.vmem %s0, 124
    %v17 = vld [vmem:[%s16] sm:$0x10]
    %vm18 = vcmask 1044484
    %v19 = vsel %vm18, %v17, %v15
    %s20 = scalar_lea.vmem %s0, 155
    %v21 = vld [vmem:[%s20] sm:$0x20]
    %vm22 = vcmask 1045509
    %v23 = vsel %vm22, %v21, %v19
    %s24 = scalar_lea.vmem %s0, 186
    %v25 = vld [vmem:[%s24] sm:$0x40]
    %vm26 = vcmask 1046534
    %v27 = vsel %vm26, %v25, %v23
    %s28 = scalar_lea.vmem %s0, 217
    %v29 = vld [vmem:[%s28] sm:$0x80]
    %vm30 = vcmask 1047559
    %v31 = vsel %vm30, %v29, %v27
    %vm32 = vcmask 31744
    %33 = vst.msk [vmem:[#allocation2] ss:$8 sm:$0xf] %vm32, %v31
    %34 = vst.msk [vmem:[#allocation2] ss:$8 sm:$0xf0] %vm32, %v31
    %s35 = scalar_lea.vmem %s0, 256
    %v36 = vld [vmem:[%s35] sm:$0x1]
    %s37 = scalar_lea.vmem %s0, 287
    %v38 = vld [vmem:[%s37] sm:$0x2]
    %vm39 = vcmask 1041409
    %v40 = vsel %vm39, %v38, %v36
    %s41 = scalar_lea.vmem %s0, 318
    %v42 = vld [vmem:[%s41] sm:$0x4]
    %vm43 = vcmask 1042434
    %v44 = vsel %vm43, %v42, %v40
    %s45 = scalar_lea.vmem %s0, 349
    %v46 = vld [vmem:[%s45] sm:$0x8]
    %vm47 = vcmask 1043459
    %v48 = vsel %vm47, %v46, %v44
    %s49 = scalar_lea.vmem %s0, 380
    %v50 = vld [vmem:[%s49] sm:$0x10]
    %vm51 = vcmask 1044484
    %v52 = vsel %vm51, %v50, %v48
    %s53 = scalar_lea.vmem %s0, 411
    %v54 = vld [vmem:[%s53] sm:$0x20]
    %vm55 = vcmask 1045509
    %v56 = vsel %vm55, %v54, %v52
    %s57 = scalar_lea.vmem %s0, 442
    %v58 = vld [vmem:[%s57] sm:$0x40]
    %vm59 = vcmask 1046534
    %v60 = vsel %vm59, %v58, %v56
    %s61 = scalar_lea.vmem %s0, 473
    %v62 = vld [vmem:[%s61] sm:$0x80]
    %vm63 = vcmask 1047559
    %v64 = vsel %vm63, %v62, %v60
    %vm65 = vcmask 31744
    %s66 = scalar_lea.vmem [#allocation2], 64
    %67 = vst.msk [vmem:[%s66] ss:$8 sm:$0xf] %vm65, %v64
    %s68 = scalar_lea.vmem [#allocation2], 64
    %69 = vst.msk [vmem:[%s68] ss:$8 sm:$0xf0] %vm65, %v64
    %s70 = scalar_lea.vmem %s0, 31
    %v71 = vld [vmem:[%s70] sm:$0x1]
    %s72 = scalar_lea.vmem %s0, 62
    %v73 = vld [vmem:[%s72] sm:$0x2]
    %vm74 = vcmask 1041409
    %v75 = vsel %vm74, %v73, %v71
    %s76 = scalar_lea.vmem %s0, 93
    %v77 = vld [vmem:[%s76] sm:$0x4]
    %vm78 = vcmask 1042434
    %v79 = vsel %vm78, %v77, %v75
    %s80 = scalar_lea.vmem %s0, 124
    %v81 = vld [vmem:[%s80] sm:$0x8]
    %vm82 = vcmask 1043459
    %v83 = vsel %vm82, %v81, %v79
    %s84 = scalar_lea.vmem %s0, 155
    %v85 = vld [vmem:[%s84] sm:$0x10]
    %vm86 = vcmask 1044484
    %v87 = vsel %vm86, %v85, %v83
    %s88 = scalar_lea.vmem %s0, 186
    %v89 = vld [vmem:[%s88] sm:$0x20]
    %vm90 = vcmask 1045509
    %v91 = vsel %vm90, %v89, %v87
    %s92 = scalar_lea.vmem %s0, 217
    %v93 = vld [vmem:[%s92] sm:$0x40]
    %vm94 = vcmask 1046534
    %v95 = vsel %vm94, %v93, %v91
    %s96 = scalar_lea.vmem %s0, 248
    %v97 = vld [vmem:[%s96] sm:$0x80]
    %vm98 = vcmask 1047559
    %v99 = vsel %vm98, %v97, %v95
    %100 = vrot.lane.b32.xlu0 %v99, 124
    %v101 = vpop.permute.xlu0 %100
    %vm102 = vcmask 1048544
    %103 = vst.msk [vmem:[#allocation2] ss:$8 sm:$0xf] %vm102, %v101
    %104 = vst.msk [vmem:[#allocation2] ss:$8 sm:$0xf0] %vm102, %v101
    %s105 = scalar_lea.vmem %s0, 287
    %v106 = vld [vmem:[%s105] sm:$0x1]
    %s107 = scalar_lea.vmem %s0, 318
    %v108 = vld [vmem:[%s107] sm:$0x2]
    %vm109 = vcmask 1041409
    %v110 = vsel %vm109, %v108, %v106
    %s111 = scalar_lea.vmem %s0, 349
    %v112 = vld [vmem:[%s111] sm:$0x4]
    %vm113 = vcmask 1042434
    %v114 = vsel %vm113, %v112, %v110
    %s115 = scalar_lea.vmem %s0, 380
    %v116 = vld [vmem:[%s115] sm:$0x8]
    %vm117 = vcmask 1043459
    %v118 = vsel %vm117, %v116, %v114
    %s119 = scalar_lea.vmem %s0, 411
    %v120 = vld [vmem:[%s119] sm:$0x10]
    %vm121 = vcmask 1044484
    %v122 = vsel %vm121, %v120, %v118
    %s123 = scalar_lea.vmem %s0, 442
    %v124 = vld [vmem:[%s123] sm:$0x20]
    %vm125 = vcmask 1045509
    %v126 = vsel %vm125, %v124, %v122
    %s127 = scalar_lea.vmem %s0, 473
    %v128 = vld [vmem:[%s127] sm:$0x40]
    %vm129 = vcmask 1046534
    %v130 = vsel %vm129, %v128, %v126
    %s131 = scalar_lea.vmem %s0, 504
    %v132 = vld [vmem:[%s131] sm:$0x80]
    %vm133 = vcmask 1047559
    %v134 = vsel %vm133, %v132, %v130
    %135 = vrot.lane.b32.xlu0 %v134, 124
    %v136 = vpop.permute.xlu0 %135
    %vm137 = vcmask 1048544
    %s138 = scalar_lea.vmem [#allocation2], 64
    %139 = vst.msk [vmem:[%s138] ss:$8 sm:$0xf] %vm137, %v136
    %s140 = scalar_lea.vmem [#allocation2], 64
    %141 = vst.msk [vmem:[%s140] ss:$8 sm:$0xf0] %vm137, %v136
    %s142 = scalar_lea.vmem %s0, 30
    %v143 = vld [vmem:[%s142] sm:$0x1]
    %s144 = scalar_lea.vmem %s0, 61
    %v145 = vld [vmem:[%s144] sm:$0x2]
    %vm146 = vcmask 1041409
    %v147 = vsel %vm146, %v145, %v143
    %s148 = scalar_lea.vmem %s0, 92
    %v149 = vld [vmem:[%s148] sm:$0x4]
    %vm150 = vcmask 1042434
    %v151 = vsel %vm150, %v149, %v147
    %s152 = scalar_lea.vmem %s0, 123
    %v153 = vld [vmem:[%s152] sm:$0x8]
    %vm154 = vcmask 1043459
    %v155 = vsel %vm154, %v153, %v151
    %s156 = scalar_lea.vmem %s0, 154
    %v157 = vld [vmem:[%s156] sm:$0x10]
    %vm158 = vcmask 1044484
    %v159 = vsel %vm158, %v157, %v155
    %s160 = scalar_lea.vmem %s0, 185
    %v161 = vld [vmem:[%s160] sm:$0x20]
    %vm162 = vcmask 1045509
    %v163 = vsel %vm162, %v161, %v159
    %s164 = scalar_lea.vmem %s0, 216
    %v165 = vld [vmem:[%s164] sm:$0x40]
    %vm166 = vcmask 1046534
    %v167 = vsel %vm166, %v165, %v163
    %s168 = scalar_lea.vmem %s0, 247
    %v169 = vld [vmem:[%s168] sm:$0x80]
    %vm170 = vcmask 1047559
    %v171 = vsel %vm170, %v169, %v167
    %172 = vrot.lane.b32.xlu0 %v171, 120
    %v173 = vpop.permute.xlu0 %172
    %vm174 = vcmask 1015744
    %175 = vst.msk [vmem:[#allocation2] ss:$8 sm:$0xf] %vm174, %v173
    %176 = vst.msk [vmem:[#allocation2] ss:$8 sm:$0xf0] %vm174, %v173
    %s177 = scalar_lea.vmem %s0, 286
    %v178 = vld [vmem:[%s177] sm:$0x1]
    %s179 = scalar_lea.vmem %s0, 317
    %v180 = vld [vmem:[%s179] sm:$0x2]
    %vm181 = vcmask 1041409
    %v182 = vsel %vm181, %v180, %v178
    %s183 = scalar_lea.vmem %s0, 348
    %v184 = vld [vmem:[%s183] sm:$0x4]
    %vm185 = vcmask 1042434
    %v186 = vsel %vm185, %v184, %v182
    %s187 = scalar_lea.vmem %s0, 379
    %v188 = vld [vmem:[%s187] sm:$0x8]
    %vm189 = vcmask 1043459
    %v190 = vsel %vm189, %v188, %v186
    %s191 = scalar_lea.vmem %s0, 410
    %v192 = vld [vmem:[%s191] sm:$0x10]
    %vm193 = vcmask 1044484
    %v194 = vsel %vm193, %v192, %v190
    %s195 = scalar_lea.vmem %s0, 441
    %v196 = vld [vmem:[%s195] sm:$0x20]
    %vm197 = vcmask 1045509
    %v198 = vsel %vm197, %v196, %v194
    %s199 = scalar_lea.vmem %s0, 472
    %v200 = vld [vmem:[%s199] sm:$0x40]
    %vm201 = vcmask 1046534
    %v202 = vsel %vm201, %v200, %v198
    %s203 = scalar_lea.vmem %s0, 503
    %v204 = vld [vmem:[%s203] sm:$0x80]
    %vm205 = vcmask 1047559
    %v206 = vsel %vm205, %v204, %v202
    %207 = vrot.lane.b32.xlu0 %v206, 120
    %v208 = vpop.permute.xlu0 %207
    %vm209 = vcmask 1015744
    %s210 = scalar_lea.vmem [#allocation2], 64
    %211 = vst.msk [vmem:[%s210] ss:$8 sm:$0xf] %vm209, %v208
    %s212 = scalar_lea.vmem [#allocation2], 64
    %213 = vst.msk [vmem:[%s212] ss:$8 sm:$0xf0] %vm209, %v208
    %s214 = scalar_lea.vmem %s0, 29
    %v215 = vld [vmem:[%s214] sm:$0x1]
    %s216 = scalar_lea.vmem %s0, 60
    %v217 = vld [vmem:[%s216] sm:$0x2]
    %vm218 = vcmask 1041409
    %v219 = vsel %vm218, %v217, %v215
    %s220 = scalar_lea.vmem %s0, 91
    %v221 = vld [vmem:[%s220] sm:$0x4]
    %vm222 = vcmask 1042434
    %v223 = vsel %vm222, %v221, %v219
    %s224 = scalar_lea.vmem %s0, 122
    %v225 = vld [vmem:[%s224] sm:$0x8]
    %vm226 = vcmask 1043459
    %v227 = vsel %vm226, %v225, %v223
    %s228 = scalar_lea.vmem %s0, 153
    %v229 = vld [vmem:[%s228] sm:$0x10]
    %vm230 = vcmask 1044484
    %v231 = vsel %vm230, %v229, %v227
    %s232 = scalar_lea.vmem %s0, 184
    %v233 = vld [vmem:[%s232] sm:$0x20]
    %vm234 = vcmask 1045509
    %v235 = vsel %vm234, %v233, %v231
    %s236 = scalar_lea.vmem %s0, 215
    %v237 = vld [vmem:[%s236] sm:$0x40]
    %vm238 = vcmask 1046534
    %v239 = vsel %vm238, %v237, %v235
    %s240 = scalar_lea.vmem %s0, 246
    %v241 = vld [vmem:[%s240] sm:$0x80]
    %vm242 = vcmask 1047559
    %v243 = vsel %vm242, %v241, %v239
    %244 = vrot.lane.b32.xlu0 %v243, 116
    %v245 = vpop.permute.xlu0 %244
    %vm246 = vcmask 982944
    %247 = vst.msk [vmem:[#allocation2] ss:$8 sm:$0xf] %vm246, %v245
    %248 = vst.msk [vmem:[#allocation2] ss:$8 sm:$0xf0] %vm246, %v245
    %s249 = scalar_lea.vmem %s0, 285
    %v250 = vld [vmem:[%s249] sm:$0x1]
    %s251 = scalar_lea.vmem %s0, 316
    %v252 = vld [vmem:[%s251] sm:$0x2]
    %vm253 = vcmask 1041409
    %v254 = vsel %vm253, %v252, %v250
    %s255 = scalar_lea.vmem %s0, 347
    %v256 = vld [vmem:[%s255] sm:$0x4]
    %vm257 = vcmask 1042434
    %v258 = vsel %vm257, %v256, %v254
    %s259 = scalar_lea.vmem %s0, 378
    %v260 = vld [vmem:[%s259] sm:$0x8]
    %vm261 = vcmask 1043459
    %v262 = vsel %vm261, %v260, %v258
    %s263 = scalar_lea.vmem %s0, 409
    %v264 = vld [vmem:[%s263] sm:$0x10]
    %vm265 = vcmask 1044484
    %v266 = vsel %vm265, %v264, %v262
    %s267 = scalar_lea.vmem %s0, 440
    %v268 = vld [vmem:[%s267] sm:$0x20]
    %vm269 = vcmask 1045509
    %v270 = vsel %vm269, %v268, %v266
    %s271 = scalar_lea.vmem %s0, 471
    %v272 = vld [vmem:[%s271] sm:$0x40]
    %vm273 = vcmask 1046534
    %v274 = vsel %vm273, %v272, %v270
    %s275 = scalar_lea.vmem %s0, 502
    %v276 = vld [vmem:[%s275] sm:$0x80]
    %vm277 = vcmask 1047559
    %v278 = vsel %vm277, %v276, %v274
    %279 = vrot.lane.b32.xlu0 %v278, 116
    %v280 = vpop.permute.xlu0 %279
    %vm281 = vcmask 982944
    %s282 = scalar_lea.vmem [#allocation2], 64
    %283 = vst.msk [vmem:[%s282] ss:$8 sm:$0xf] %vm281, %v280
    %s284 = scalar_lea.vmem [#allocation2], 64
    %285 = vst.msk [vmem:[%s284] ss:$8 sm:$0xf0] %vm281, %v280
    %s286 = scalar_lea.vmem %s0, 28
    %v287 = vld [vmem:[%s286] sm:$0x1]
    %s288 = scalar_lea.vmem %s0, 59
    %v289 = vld [vmem:[%s288] sm:$0x2]
    %vm290 = vcmask 1041409
    %v291 = vsel %vm290, %v289, %v287
    %s292 = scalar_lea.vmem %s0, 90
    %v293 = vld [vmem:[%s292] sm:$0x4]
    %vm294 = vcmask 1042434
    %v295 = vsel %vm294, %v293, %v291
    %s296 = scalar_lea.vmem %s0, 121
    %v297 = vld [vmem:[%s296] sm:$0x8]
    %vm298 = vcmask 1043459
    %v299 = vsel %vm298, %v297, %v295
    %s300 = scalar_lea.vmem %s0, 152
    %v301 = vld [vmem:[%s300] sm:$0x10]
    %vm302 = vcmask 1044484
    %v303 = vsel %vm302, %v301, %v299
    %s304 = scalar_lea.vmem %s0, 183
    %v305 = vld [vmem:[%s304] sm:$0x20]
    %vm306 = vcmask 1045509
    %v307 = vsel %vm306, %v305, %v303
    %s308 = scalar_lea.vmem %s0, 214
    %v309 = vld [vmem:[%s308] sm:$0x40]
    %vm310 = vcmask 1046534
    %v311 = vsel %vm310, %v309, %v307
    %s312 = scalar_lea.vmem %s0, 245
    %v313 = vld [vmem:[%s312] sm:$0x80]
    %vm314 = vcmask 1047559
    %v315 = vsel %vm314, %v313, %v311
    %316 = vrot.lane.b32.xlu0 %v315, 112
    %v317 = vpop.permute.xlu0 %316
    %vm318 = vcmask 950144
    %319 = vst.msk [vmem:[#allocation2] ss:$8 sm:$0xf] %vm318, %v317
    %320 = vst.msk [vmem:[#allocation2] ss:$8 sm:$0xf0] %vm318, %v317
    %s321 = scalar_lea.vmem %s0, 284
    %v322 = vld [vmem:[%s321] sm:$0x1]
    %s323 = scalar_lea.vmem %s0, 315
    %v324 = vld [vmem:[%s323] sm:$0x2]
    %vm325 = vcmask 1041409
    %v326 = vsel %vm325, %v324, %v322
    %s327 = scalar_lea.vmem %s0, 346
    %v328 = vld [vmem:[%s327] sm:$0x4]
    %vm329 = vcmask 1042434
    %v330 = vsel %vm329, %v328, %v326
    %s331 = scalar_lea.vmem %s0, 377
    %v332 = vld [vmem:[%s331] sm:$0x8]
    %vm333 = vcmask 1043459
    %v334 = vsel %vm333, %v332, %v330
    %s335 = scalar_lea.vmem %s0, 408
    %v336 = vld [vmem:[%s335] sm:$0x10]
    %vm337 = vcmask 1044484
    %v338 = vsel %vm337, %v336, %v334
    %s339 = scalar_lea.vmem %s0, 439
    %v340 = vld [vmem:[%s339] sm:$0x20]
    %vm341 = vcmask 1045509
    %v342 = vsel %vm341, %v340, %v338
    %s343 = scalar_lea.vmem %s0, 470
    %v344 = vld [vmem:[%s343] sm:$0x40]
    %vm345 = vcmask 1046534
    %v346 = vsel %vm345, %v344, %v342
    %s347 = scalar_lea.vmem %s0, 501
    %v348 = vld [vmem:[%s347] sm:$0x80]
    %vm349 = vcmask 1047559
    %v350 = vsel %vm349, %v348, %v346
    %351 = vrot.lane.b32.xlu0 %v350, 112
    %v352 = vpop.permute.xlu0 %351
    %vm353 = vcmask 950144
    %s354 = scalar_lea.vmem [#allocation2], 64
    %355 = vst.msk [vmem:[%s354] ss:$8 sm:$0xf] %vm353, %v352
    %s356 = scalar_lea.vmem [#allocation2], 64
    %357 = vst.msk [vmem:[%s356] ss:$8 sm:$0xf0] %vm353, %v352
    %s358 = scalar_lea.vmem %s0, 27
    %v359 = vld [vmem:[%s358] sm:$0x1]
    %s360 = scalar_lea.vmem %s0, 58
    %v361 = vld [vmem:[%s360] sm:$0x2]
    %vm362 = vcmask 1041409
    %v363 = vsel %vm362, %v361, %v359
    %s364 = scalar_lea.vmem %s0, 89
    %v365 = vld [vmem:[%s364] sm:$0x4]
    %vm366 = vcmask 1042434
    %v367 = vsel %vm366, %v365, %v363
    %s368 = scalar_lea.vmem %s0, 120
    %v369 = vld [vmem:[%s368] sm:$0x8]
    %vm370 = vcmask 1043459
    %v371 = vsel %vm370, %v369, %v367
    %s372 = scalar_lea.vmem %s0, 151
    %v373 = vld [vmem:[%s372] sm:$0x10]
    %vm374 = vcmask 1044484
    %v375 = vsel %vm374, %v373, %v371
    %s376 = scalar_lea.vmem %s0, 182
    %v377 = vld [vmem:[%s376] sm:$0x20]
    %vm378 = vcmask 1045509
    %v379 = vsel %vm378, %v377, %v375
    %s380 = scalar_lea.vmem %s0, 213
    %v381 = vld [vmem:[%s380] sm:$0x40]
    %vm382 = vcmask 1046534
    %v383 = vsel %vm382, %v381, %v379
    %s384 = scalar_lea.vmem %s0, 244
    %v385 = vld [vmem:[%s384] sm:$0x80]
    %vm386 = vcmask 1047559
    %v387 = vsel %vm386, %v385, %v383
    %388 = vrot.lane.b32.xlu0 %v387, 108
    %v389 = vpop.permute.xlu0 %388
    %vm390 = vcmask 917344
    %391 = vst.msk [vmem:[#allocation2] ss:$8 sm:$0xf] %vm390, %v389
    %392 = vst.msk [vmem:[#allocation2] ss:$8 sm:$0xf0] %vm390, %v389
    %s393 = scalar_lea.vmem %s0, 283
    %v394 = vld [vmem:[%s393] sm:$0x1]
    %s395 = scalar_lea.vmem %s0, 314
    %v396 = vld [vmem:[%s395] sm:$0x2]
    %vm397 = vcmask 1041409
    %v398 = vsel %vm397, %v396, %v394
    %s399 = scalar_lea.vmem %s0, 345
    %v400 = vld [vmem:[%s399] sm:$0x4]
    %vm401 = vcmask 1042434
    %v402 = vsel %vm401, %v400, %v398
    %s403 = scalar_lea.vmem %s0, 376
    %v404 = vld [vmem:[%s403] sm:$0x8]
    %vm405 = vcmask 1043459
    %v406 = vsel %vm405, %v404, %v402
    %s407 = scalar_lea.vmem %s0, 407
    %v408 = vld [vmem:[%s407] sm:$0x10]
    %vm409 = vcmask 1044484
    %v410 = vsel %vm409, %v408, %v406
    %s411 = scalar_lea.vmem %s0, 438
    %v412 = vld [vmem:[%s411] sm:$0x20]
    %vm413 = vcmask 1045509
    %v414 = vsel %vm413, %v412, %v410
    %s415 = scalar_lea.vmem %s0, 469
    %v416 = vld [vmem:[%s415] sm:$0x40]
    %vm417 = vcmask 1046534
    %v418 = vsel %vm417, %v416, %v414
    %s419 = scalar_lea.vmem %s0, 500
    %v420 = vld [vmem:[%s419] sm:$0x80]
    %vm421 = vcmask 1047559
    %v422 = vsel %vm421, %v420, %v418
    %423 = vrot.lane.b32.xlu0 %v422, 108
    %v424 = vpop.permute.xlu0 %423
    %vm425 = vcmask 917344
    %s426 = scalar_lea.vmem [#allocation2], 64
    %427 = vst.msk [vmem:[%s426] ss:$8 sm:$0xf] %vm425, %v424
    %s428 = scalar_lea.vmem [#allocation2], 64
    %429 = vst.msk [vmem:[%s428] ss:$8 sm:$0xf0] %vm425, %v424
    %s430 = scalar_lea.vmem %s0, 26
    %v431 = vld [vmem:[%s430] sm:$0x1]
    %s432 = scalar_lea.vmem %s0, 57
    %v433 = vld [vmem:[%s432] sm:$0x2]
    %vm434 = vcmask 1041409
    %v435 = vsel %vm434, %v433, %v431
    %s436 = scalar_lea.vmem %s0, 88
    %v437 = vld [vmem:[%s436] sm:$0x4]
    %vm438 = vcmask 1042434
    %v439 = vsel %vm438, %v437, %v435
    %s440 = scalar_lea.vmem %s0, 119
    %v441 = vld [vmem:[%s440] sm:$0x8]
    %vm442 = vcmask 1043459
    %v443 = vsel %vm442, %v441, %v439
    %s444 = scalar_lea.vmem %s0, 150
    %v445 = vld [vmem:[%s444] sm:$0x10]
    %vm446 = vcmask 1044484
    %v447 = vsel %vm446, %v445, %v443
    %s448 = scalar_lea.vmem %s0, 181
    %v449 = vld [vmem:[%s448] sm:$0x20]
    %vm450 = vcmask 1045509
    %v451 = vsel %vm450, %v449, %v447
    %s452 = scalar_lea.vmem %s0, 212
    %v453 = vld [vmem:[%s452] sm:$0x40]
    %vm454 = vcmask 1046534
    %v455 = vsel %vm454, %v453, %v451
    %s456 = scalar_lea.vmem %s0, 243
    %v457 = vld [vmem:[%s456] sm:$0x80]
    %vm458 = vcmask 1047559
    %v459 = vsel %vm458, %v457, %v455
    %460 = vrot.lane.b32.xlu0 %v459, 104
    %v461 = vpop.permute.xlu0 %460
    %vm462 = vcmask 884544
    %463 = vst.msk [vmem:[#allocation2] ss:$8 sm:$0xf] %vm462, %v461
    %464 = vst.msk [vmem:[#allocation2] ss:$8 sm:$0xf0] %vm462, %v461
    %s465 = scalar_lea.vmem %s0, 282
    %v466 = vld [vmem:[%s465] sm:$0x1]
    %s467 = scalar_lea.vmem %s0, 313
    %v468 = vld [vmem:[%s467] sm:$0x2]
    %vm469 = vcmask 1041409
    %v470 = vsel %vm469, %v468, %v466
    %s471 = scalar_lea.vmem %s0, 344
    %v472 = vld [vmem:[%s471] sm:$0x4]
    %vm473 = vcmask 1042434
    %v474 = vsel %vm473, %v472, %v470
    %s475 = scalar_lea.vmem %s0, 375
    %v476 = vld [vmem:[%s475] sm:$0x8]
    %vm477 = vcmask 1043459
    %v478 = vsel %vm477, %v476, %v474
    %s479 = scalar_lea.vmem %s0, 406
    %v480 = vld [vmem:[%s479] sm:$0x10]
    %vm481 = vcmask 1044484
    %v482 = vsel %vm481, %v480, %v478
    %s483 = scalar_lea.vmem %s0, 437
    %v484 = vld [vmem:[%s483] sm:$0x20]
    %vm485 = vcmask 1045509
    %v486 = vsel %vm485, %v484, %v482
    %s487 = scalar_lea.vmem %s0, 468
    %v488 = vld [vmem:[%s487] sm:$0x40]
    %vm489 = vcmask 1046534
    %v490 = vsel %vm489, %v488, %v486
    %s491 = scalar_lea.vmem %s0, 499
    %v492 = vld [vmem:[%s491] sm:$0x80]
    %vm493 = vcmask 1047559
    %v494 = vsel %vm493, %v492, %v490
    %495 = vrot.lane.b32.xlu0 %v494, 104
    %v496 = vpop.permute.xlu0 %495
    %vm497 = vcmask 884544
    %s498 = scalar_lea.vmem [#allocation2], 64
    %499 = vst.msk [vmem:[%s498] ss:$8 sm:$0xf] %vm497, %v496
    %s500 = scalar_lea.vmem [#allocation2], 64
    %501 = vst.msk [vmem:[%s500] ss:$8 sm:$0xf0] %vm497, %v496
    %s502 = scalar_lea.vmem %s0, 25
    %v503 = vld [vmem:[%s502] sm:$0x1]
    %s504 = scalar_lea.vmem %s0, 56
    %v505 = vld [vmem:[%s504] sm:$0x2]
    %vm506 = vcmask 1041409
    %v507 = vsel %vm506, %v505, %v503
    %s508 = scalar_lea.vmem %s0, 87
    %v509 = vld [vmem:[%s508] sm:$0x4]
    %vm510 = vcmask 1042434
    %v511 = vsel %vm510, %v509, %v507
    %s512 = scalar_lea.vmem %s0, 118
    %v513 = vld [vmem:[%s512] sm:$0x8]
    %vm514 = vcmask 1043459
    %v515 = vsel %vm514, %v513, %v511
    %s516 = scalar_lea.vmem %s0, 149
    %v517 = vld [vmem:[%s516] sm:$0x10]
    %vm518 = vcmask 1044484
    %v519 = vsel %vm518, %v517, %v515
    %s520 = scalar_lea.vmem %s0, 180
    %v521 = vld [vmem:[%s520] sm:$0x20]
    %vm522 = vcmask 1045509
    %v523 = vsel %vm522, %v521, %v519
    %s524 = scalar_lea.vmem %s0, 211
    %v525 = vld [vmem:[%s524] sm:$0x40]
    %vm526 = vcmask 1046534
    %v527 = vsel %vm526, %v525, %v523
    %s528 = scalar_lea.vmem %s0, 242
    %v529 = vld [vmem:[%s528] sm:$0x80]
    %vm530 = vcmask 1047559
    %v531 = vsel %vm530, %v529, %v527
    %532 = vrot.lane.b32.xlu0 %v531, 100
    %v533 = vpop.permute.xlu0 %532
    %vm534 = vcmask 851744
    %535 = vst.msk [vmem:[#allocation2] ss:$8 sm:$0xf] %vm534, %v533
    %536 = vst.msk [vmem:[#allocation2] ss:$8 sm:$0xf0] %vm534, %v533
    %s537 = scalar_lea.vmem %s0, 281
    %v538 = vld [vmem:[%s537] sm:$0x1]
    %s539 = scalar_lea.vmem %s0, 312
    %v540 = vld [vmem:[%s539] sm:$0x2]
    %vm541 = vcmask 1041409
    %v542 = vsel %vm541, %v540, %v538
    %s543 = scalar_lea.vmem %s0, 343
    %v544 = vld [vmem:[%s543] sm:$0x4]
    %vm545 = vcmask 1042434
    %v546 = vsel %vm545, %v544, %v542
    %s547 = scalar_lea.vmem %s0, 374
    %v548 = vld [vmem:[%s547] sm:$0x8]
    %vm549 = vcmask 1043459
    %v550 = vsel %vm549, %v548, %v546
    %s551 = scalar_lea.vmem %s0, 405
    %v552 = vld [vmem:[%s551] sm:$0x10]
    %vm553 = vcmask 1044484
    %v554 = vsel %vm553, %v552, %v550
    %s555 = scalar_lea.vmem %s0, 436
    %v556 = vld [vmem:[%s555] sm:$0x20]
    %vm557 = vcmask 1045509
    %v558 = vsel %vm557, %v556, %v554
    %s559 = scalar_lea.vmem %s0, 467
    %v560 = vld [vmem:[%s559] sm:$0x40]
    %vm561 = vcmask 1046534
    %v562 = vsel %vm561, %v560, %v558
    %s563 = scalar_lea.vmem %s0, 498
    %v564 = vld [vmem:[%s563] sm:$0x80]
    %vm565 = vcmask 1047559
    %v566 = vsel %vm565, %v564, %v562
    %567 = vrot.lane.b32.xlu0 %v566, 100
    %v568 = vpop.permute.xlu0 %567
    %vm569 = vcmask 851744
    %s570 = scalar_lea.vmem [#allocation2], 64
    %571 = vst.msk [vmem:[%s570] ss:$8 sm:$0xf] %vm569, %v568
    %s572 = scalar_lea.vmem [#allocation2], 64
    %573 = vst.msk [vmem:[%s572] ss:$8 sm:$0xf0] %vm569, %v568
    %s574 = scalar_lea.vmem %s0, 24
    %v575 = vld [vmem:[%s574] sm:$0x1]
    %s576 = scalar_lea.vmem %s0, 55
    %v577 = vld [vmem:[%s576] sm:$0x2]
    %vm578 = vcmask 1041409
    %v579 = vsel %vm578, %v577, %v575
    %s580 = scalar_lea.vmem %s0, 86
    %v581 = vld [vmem:[%s580] sm:$0x4]
    %vm582 = vcmask 1042434
    %v583 = vsel %vm582, %v581, %v579
    %s584 = scalar_lea.vmem %s0, 117
    %v585 = vld [vmem:[%s584] sm:$0x8]
    %vm586 = vcmask 1043459
    %v587 = vsel %vm586, %v585, %v583
    %s588 = scalar_lea.vmem %s0, 148
    %v589 = vld [vmem:[%s588] sm:$0x10]
    %vm590 = vcmask 1044484
    %v591 = vsel %vm590, %v589, %v587
    %s592 = scalar_lea.vmem %s0, 179
    %v593 = vld [vmem:[%s592] sm:$0x20]
    %vm594 = vcmask 1045509
    %v595 = vsel %vm594, %v593, %v591
    %s596 = scalar_lea.vmem %s0, 210
    %v597 = vld [vmem:[%s596] sm:$0x40]
    %vm598 = vcmask 1046534
    %v599 = vsel %vm598, %v597, %v595
    %s600 = scalar_lea.vmem %s0, 241
    %v601 = vld [vmem:[%s600] sm:$0x80]
    %vm602 = vcmask 1047559
    %v603 = vsel %vm602, %v601, %v599
    %604 = vrot.lane.b32.xlu0 %v603, 96
    %v605 = vpop.permute.xlu0 %604
    %vm606 = vcmask 818944
    %607 = vst.msk [vmem:[#allocation2] ss:$8 sm:$0xf] %vm606, %v605
    %608 = vst.msk [vmem:[#allocation2] ss:$8 sm:$0xf0] %vm606, %v605
    %s609 = scalar_lea.vmem %s0, 280
    %v610 = vld [vmem:[%s609] sm:$0x1]
    %s611 = scalar_lea.vmem %s0, 311
    %v612 = vld [vmem:[%s611] sm:$0x2]
    %vm613 = vcmask 1041409
    %v614 = vsel %vm613, %v612, %v610
    %s615 = scalar_lea.vmem %s0, 342
    %v616 = vld [vmem:[%s615] sm:$0x4]
    %vm617 = vcmask 1042434
    %v618 = vsel %vm617, %v616, %v614
    %s619 = scalar_lea.vmem %s0, 373
    %v620 = vld [vmem:[%s619] sm:$0x8]
    %vm621 = vcmask 1043459
    %v622 = vsel %vm621, %v620, %v618
    %s623 = scalar_lea.vmem %s0, 404
    %v624 = vld [vmem:[%s623] sm:$0x10]
    %vm625 = vcmask 1044484
    %v626 = vsel %vm625, %v624, %v622
    %s627 = scalar_lea.vmem %s0, 435
    %v628 = vld [vmem:[%s627] sm:$0x20]
    %vm629 = vcmask 1045509
    %v630 = vsel %vm629, %v628, %v626
    %s631 = scalar_lea.vmem %s0, 466
    %v632 = vld [vmem:[%s631] sm:$0x40]
    %vm633 = vcmask 1046534
    %v634 = vsel %vm633, %v632, %v630
    %s635 = scalar_lea.vmem %s0, 497
    %v636 = vld [vmem:[%s635] sm:$0x80]
    %vm637 = vcmask 1047559
    %v638 = vsel %vm637, %v636, %v634
    %639 = vrot.lane.b32.xlu0 %v638, 96
    %v640 = vpop.permute.xlu0 %639
    %vm641 = vcmask 818944
    %s642 = scalar_lea.vmem [#allocation2], 64
    %643 = vst.msk [vmem:[%s642] ss:$8 sm:$0xf] %vm641, %v640
    %s644 = scalar_lea.vmem [#allocation2], 64
    %645 = vst.msk [vmem:[%s644] ss:$8 sm:$0xf0] %vm641, %v640
    %s646 = scalar_lea.vmem %s0, 23
    %v647 = vld [vmem:[%s646] sm:$0x1]
    %s648 = scalar_lea.vmem %s0, 54
    %v649 = vld [vmem:[%s648] sm:$0x2]
    %vm650 = vcmask 1041409
    %v651 = vsel %vm650, %v649, %v647
    %s652 = scalar_lea.vmem %s0, 85
    %v653 = vld [vmem:[%s652] sm:$0x4]
    %vm654 = vcmask 1042434
    %v655 = vsel %vm654, %v653, %v651
    %s656 = scalar_lea.vmem %s0, 116
    %v657 = vld [vmem:[%s656] sm:$0x8]
    %vm658 = vcmask 1043459
    %v659 = vsel %vm658, %v657, %v655
    %s660 = scalar_lea.vmem %s0, 147
    %v661 = vld [vmem:[%s660] sm:$0x10]
    %vm662 = vcmask 1044484
    %v663 = vsel %vm662, %v661, %v659
    %s664 = scalar_lea.vmem %s0, 178
    %v665 = vld [vmem:[%s664] sm:$0x20]
    %vm666 = vcmask 1045509
    %v667 = vsel %vm666, %v665, %v663
    %s668 = scalar_lea.vmem %s0, 209
    %v669 = vld [vmem:[%s668] sm:$0x40]
    %vm670 = vcmask 1046534
    %v671 = vsel %vm670, %v669, %v667
    %s672 = scalar_lea.vmem %s0, 240
    %v673 = vld [vmem:[%s672] sm:$0x80]
    %vm674 = vcmask 1047559
    %v675 = vsel %vm674, %v673, %v671
    %676 = vrot.lane.b32.xlu0 %v675, 92
    %v677 = vpop.permute.xlu0 %676
    %vm678 = vcmask 786144
    %679 = vst.msk [vmem:[#allocation2] ss:$8 sm:$0xf] %vm678, %v677
    %680 = vst.msk [vmem:[#allocation2] ss:$8 sm:$0xf0] %vm678, %v677
    %s681 = scalar_lea.vmem %s0, 279
    %v682 = vld [vmem:[%s681] sm:$0x1]
    %s683 = scalar_lea.vmem %s0, 310
    %v684 = vld [vmem:[%s683] sm:$0x2]
    %vm685 = vcmask 1041409
    %v686 = vsel %vm685, %v684, %v682
    %s687 = scalar_lea.vmem %s0, 341
    %v688 = vld [vmem:[%s687] sm:$0x4]
    %vm689 = vcmask 1042434
    %v690 = vsel %vm689, %v688, %v686
    %s691 = scalar_lea.vmem %s0, 372
    %v692 = vld [vmem:[%s691] sm:$0x8]
    %vm693 = vcmask 1043459
    %v694 = vsel %vm693, %v692, %v690
    %s695 = scalar_lea.vmem %s0, 403
    %v696 = vld [vmem:[%s695] sm:$0x10]
    %vm697 = vcmask 1044484
    %v698 = vsel %vm697, %v696, %v694
    %s699 = scalar_lea.vmem %s0, 434
    %v700 = vld [vmem:[%s699] sm:$0x20]
    %vm701 = vcmask 1045509
    %v702 = vsel %vm701, %v700, %v698
    %s703 = scalar_lea.vmem %s0, 465
    %v704 = vld [vmem:[%s703] sm:$0x40]
    %vm705 = vcmask 1046534
    %v706 = vsel %vm705, %v704, %v702
    %s707 = scalar_lea.vmem %s0, 496
    %v708 = vld [vmem:[%s707] sm:$0x80]
    %vm709 = vcmask 1047559
    %v710 = vsel %vm709, %v708, %v706
    %711 = vrot.lane.b32.xlu0 %v710, 92
    %v712 = vpop.permute.xlu0 %711
    %vm713 = vcmask 786144
    %s714 = scalar_lea.vmem [#allocation2], 64
    %715 = vst.msk [vmem:[%s714] ss:$8 sm:$0xf] %vm713, %v712
    %s716 = scalar_lea.vmem [#allocation2], 64
    %717 = vst.msk [vmem:[%s716] ss:$8 sm:$0xf0] %vm713, %v712
    %s718 = scalar_lea.vmem %s0, 22
    %v719 = vld [vmem:[%s718] sm:$0x1]
    %s720 = scalar_lea.vmem %s0, 53
    %v721 = vld [vmem:[%s720] sm:$0x2]
    %vm722 = vcmask 1041409
    %v723 = vsel %vm722, %v721, %v719
    %s724 = scalar_lea.vmem %s0, 84
    %v725 = vld [vmem:[%s724] sm:$0x4]
    %vm726 = vcmask 1042434
    %v727 = vsel %vm726, %v725, %v723
    %s728 = scalar_lea.vmem %s0, 115
    %v729 = vld [vmem:[%s728] sm:$0x8]
    %vm730 = vcmask 1043459
    %v731 = vsel %vm730, %v729, %v727
    %s732 = scalar_lea.vmem %s0, 146
    %v733 = vld [vmem:[%s732] sm:$0x10]
    %vm734 = vcmask 1044484
    %v735 = vsel %vm734, %v733, %v731
    %s736 = scalar_lea.vmem %s0, 177
    %v737 = vld [vmem:[%s736] sm:$0x20]
    %vm738 = vcmask 1045509
    %v739 = vsel %vm738, %v737, %v735
    %s740 = scalar_lea.vmem %s0, 208
    %v741 = vld [vmem:[%s740] sm:$0x40]
    %vm742 = vcmask 1046534
    %v743 = vsel %vm742, %v741, %v739
    %s744 = scalar_lea.vmem %s0, 239
    %v745 = vld [vmem:[%s744] sm:$0x80]
    %vm746 = vcmask 1047559
    %v747 = vsel %vm746, %v745, %v743
    %748 = vrot.lane.b32.xlu0 %v747, 88
    %v749 = vpop.permute.xlu0 %748
    %vm750 = vcmask 753344
    %751 = vst.msk [vmem:[#allocation2] ss:$8 sm:$0xf] %vm750, %v749
    %752 = vst.msk [vmem:[#allocation2] ss:$8 sm:$0xf0] %vm750, %v749
    %s753 = scalar_lea.vmem %s0, 278
    %v754 = vld [vmem:[%s753] sm:$0x1]
    %s755 = scalar_lea.vmem %s0, 309
    %v756 = vld [vmem:[%s755] sm:$0x2]
    %vm757 = vcmask 1041409
    %v758 = vsel %vm757, %v756, %v754
    %s759 = scalar_lea.vmem %s0, 340
    %v760 = vld [vmem:[%s759] sm:$0x4]
    %vm761 = vcmask 1042434
    %v762 = vsel %vm761, %v760, %v758
    %s763 = scalar_lea.vmem %s0, 371
    %v764 = vld [vmem:[%s763] sm:$0x8]
    %vm765 = vcmask 1043459
    %v766 = vsel %vm765, %v764, %v762
    %s767 = scalar_lea.vmem %s0, 402
    %v768 = vld [vmem:[%s767] sm:$0x10]
    %vm769 = vcmask 1044484
    %v770 = vsel %vm769, %v768, %v766
    %s771 = scalar_lea.vmem %s0, 433
    %v772 = vld [vmem:[%s771] sm:$0x20]
    %vm773 = vcmask 1045509
    %v774 = vsel %vm773, %v772, %v770
    %s775 = scalar_lea.vmem %s0, 464
    %v776 = vld [vmem:[%s775] sm:$0x40]
    %vm777 = vcmask 1046534
    %v778 = vsel %vm777, %v776, %v774
    %s779 = scalar_lea.vmem %s0, 495
    %v780 = vld [vmem:[%s779] sm:$0x80]
    %vm781 = vcmask 1047559
    %v782 = vsel %vm781, %v780, %v778
    %783 = vrot.lane.b32.xlu0 %v782, 88
    %v784 = vpop.permute.xlu0 %783
    %vm785 = vcmask 753344
    %s786 = scalar_lea.vmem [#allocation2], 64
    %787 = vst.msk [vmem:[%s786] ss:$8 sm:$0xf] %vm785, %v784
    %s788 = scalar_lea.vmem [#allocation2], 64
    %789 = vst.msk [vmem:[%s788] ss:$8 sm:$0xf0] %vm785, %v784
    %s790 = scalar_lea.vmem %s0, 21
    %v791 = vld [vmem:[%s790] sm:$0x1]
    %s792 = scalar_lea.vmem %s0, 52
    %v793 = vld [vmem:[%s792] sm:$0x2]
    %vm794 = vcmask 1041409
    %v795 = vsel %vm794, %v793, %v791
    %s796 = scalar_lea.vmem %s0, 83
    %v797 = vld [vmem:[%s796] sm:$0x4]
    %vm798 = vcmask 1042434
    %v799 = vsel %vm798, %v797, %v795
    %s800 = scalar_lea.vmem %s0, 114
    %v801 = vld [vmem:[%s800] sm:$0x8]
    %vm802 = vcmask 1043459
    %v803 = vsel %vm802, %v801, %v799
    %s804 = scalar_lea.vmem %s0, 145
    %v805 = vld [vmem:[%s804] sm:$0x10]
    %vm806 = vcmask 1044484
    %v807 = vsel %vm806, %v805, %v803
    %s808 = scalar_lea.vmem %s0, 176
    %v809 = vld [vmem:[%s808] sm:$0x20]
    %vm810 = vcmask 1045509
    %v811 = vsel %vm810, %v809, %v807
    %s812 = scalar_lea.vmem %s0, 207
    %v813 = vld [vmem:[%s812] sm:$0x40]
    %vm814 = vcmask 1046534
    %v815 = vsel %vm814, %v813, %v811
    %s816 = scalar_lea.vmem %s0, 238
    %v817 = vld [vmem:[%s816] sm:$0x80]
    %vm818 = vcmask 1047559
    %v819 = vsel %vm818, %v817, %v815
    %820 = vrot.lane.b32.xlu0 %v819, 84
    %v821 = vpop.permute.xlu0 %820
    %vm822 = vcmask 720544
    %823 = vst.msk [vmem:[#allocation2] ss:$8 sm:$0xf] %vm822, %v821
    %824 = vst.msk [vmem:[#allocation2] ss:$8 sm:$0xf0] %vm822, %v821
    %s825 = scalar_lea.vmem %s0, 277
    %v826 = vld [vmem:[%s825] sm:$0x1]
    %s827 = scalar_lea.vmem %s0, 308
    %v828 = vld [vmem:[%s827] sm:$0x2]
    %vm829 = vcmask 1041409
    %v830 = vsel %vm829, %v828, %v826
    %s831 = scalar_lea.vmem %s0, 339
    %v832 = vld [vmem:[%s831] sm:$0x4]
    %vm833 = vcmask 1042434
    %v834 = vsel %vm833, %v832, %v830
    %s835 = scalar_lea.vmem %s0, 370
    %v836 = vld [vmem:[%s835] sm:$0x8]
    %vm837 = vcmask 1043459
    %v838 = vsel %vm837, %v836, %v834
    %s839 = scalar_lea.vmem %s0, 401
    %v840 = vld [vmem:[%s839] sm:$0x10]
    %vm841 = vcmask 1044484
    %v842 = vsel %vm841, %v840, %v838
    %s843 = scalar_lea.vmem %s0, 432
    %v844 = vld [vmem:[%s843] sm:$0x20]
    %vm845 = vcmask 1045509
    %v846 = vsel %vm845, %v844, %v842
    %s847 = scalar_lea.vmem %s0, 463
    %v848 = vld [vmem:[%s847] sm:$0x40]
    %vm849 = vcmask 1046534
    %v850 = vsel %vm849, %v848, %v846
    %s851 = scalar_lea.vmem %s0, 494
    %v852 = vld [vmem:[%s851] sm:$0x80]
    %vm853 = vcmask 1047559
    %v854 = vsel %vm853, %v852, %v850
    %855 = vrot.lane.b32.xlu0 %v854, 84
    %v856 = vpop.permute.xlu0 %855
    %vm857 = vcmask 720544
    %s858 = scalar_lea.vmem [#allocation2], 64
    %859 = vst.msk [vmem:[%s858] ss:$8 sm:$0xf] %vm857, %v856
    %s860 = scalar_lea.vmem [#allocation2], 64
    %861 = vst.msk [vmem:[%s860] ss:$8 sm:$0xf0] %vm857, %v856
    %s862 = scalar_lea.vmem %s0, 20
    %v863 = vld [vmem:[%s862] sm:$0x1]
    %s864 = scalar_lea.vmem %s0, 51
    %v865 = vld [vmem:[%s864] sm:$0x2]
    %vm866 = vcmask 1041409
    %v867 = vsel %vm866, %v865, %v863
    %s868 = scalar_lea.vmem %s0, 82
    %v869 = vld [vmem:[%s868] sm:$0x4]
    %vm870 = vcmask 1042434
    %v871 = vsel %vm870, %v869, %v867
    %s872 = scalar_lea.vmem %s0, 113
    %v873 = vld [vmem:[%s872] sm:$0x8]
    %vm874 = vcmask 1043459
    %v875 = vsel %vm874, %v873, %v871
    %s876 = scalar_lea.vmem %s0, 144
    %v877 = vld [vmem:[%s876] sm:$0x10]
    %vm878 = vcmask 1044484
    %v879 = vsel %vm878, %v877, %v875
    %s880 = scalar_lea.vmem %s0, 175
    %v881 = vld [vmem:[%s880] sm:$0x20]
    %vm882 = vcmask 1045509
    %v883 = vsel %vm882, %v881, %v879
    %s884 = scalar_lea.vmem %s0, 206
    %v885 = vld [vmem:[%s884] sm:$0x40]
    %vm886 = vcmask 1046534
    %v887 = vsel %vm886, %v885, %v883
    %s888 = scalar_lea.vmem %s0, 237
    %v889 = vld [vmem:[%s888] sm:$0x80]
    %vm890 = vcmask 1047559
    %v891 = vsel %vm890, %v889, %v887
    %892 = vrot.lane.b32.xlu0 %v891, 80
    %v893 = vpop.permute.xlu0 %892
    %vm894 = vcmask 687744
    %895 = vst.msk [vmem:[#allocation2] ss:$8 sm:$0xf] %vm894, %v893
    %896 = vst.msk [vmem:[#allocation2] ss:$8 sm:$0xf0] %vm894, %v893
    %s897 = scalar_lea.vmem %s0, 276
    %v898 = vld [vmem:[%s897] sm:$0x1]
    %s899 = scalar_lea.vmem %s0, 307
    %v900 = vld [vmem:[%s899] sm:$0x2]
    %vm901 = vcmask 1041409
    %v902 = vsel %vm901, %v900, %v898
    %s903 = scalar_lea.vmem %s0, 338
    %v904 = vld [vmem:[%s903] sm:$0x4]
    %vm905 = vcmask 1042434
    %v906 = vsel %vm905, %v904, %v902
    %s907 = scalar_lea.vmem %s0, 369
    %v908 = vld [vmem:[%s907] sm:$0x8]
    %vm909 = vcmask 1043459
    %v910 = vsel %vm909, %v908, %v906
    %s911 = scalar_lea.vmem %s0, 400
    %v912 = vld [vmem:[%s911] sm:$0x10]
    %vm913 = vcmask 1044484
    %v914 = vsel %vm913, %v912, %v910
    %s915 = scalar_lea.vmem %s0, 431
    %v916 = vld [vmem:[%s915] sm:$0x20]
    %vm917 = vcmask 1045509
    %v918 = vsel %vm917, %v916, %v914
    %s919 = scalar_lea.vmem %s0, 462
    %v920 = vld [vmem:[%s919] sm:$0x40]
    %vm921 = vcmask 1046534
    %v922 = vsel %vm921, %v920, %v918
    %s923 = scalar_lea.vmem %s0, 493
    %v924 = vld [vmem:[%s923] sm:$0x80]
    %vm925 = vcmask 1047559
    %v926 = vsel %vm925, %v924, %v922
    %927 = vrot.lane.b32.xlu0 %v926, 80
    %v928 = vpop.permute.xlu0 %927
    %vm929 = vcmask 687744
    %s930 = scalar_lea.vmem [#allocation2], 64
    %931 = vst.msk [vmem:[%s930] ss:$8 sm:$0xf] %vm929, %v928
    %s932 = scalar_lea.vmem [#allocation2], 64
    %933 = vst.msk [vmem:[%s932] ss:$8 sm:$0xf0] %vm929, %v928
    %s934 = scalar_lea.vmem %s0, 19
    %v935 = vld [vmem:[%s934] sm:$0x1]
    %s936 = scalar_lea.vmem %s0, 50
    %v937 = vld [vmem:[%s936] sm:$0x2]
    %vm938 = vcmask 1041409
    %v939 = vsel %vm938, %v937, %v935
    %s940 = scalar_lea.vmem %s0, 81
    %v941 = vld [vmem:[%s940] sm:$0x4]
    %vm942 = vcmask 1042434
    %v943 = vsel %vm942, %v941, %v939
    %s944 = scalar_lea.vmem %s0, 112
    %v945 = vld [vmem:[%s944] sm:$0x8]
    %vm946 = vcmask 1043459
    %v947 = vsel %vm946, %v945, %v943
    %s948 = scalar_lea.vmem %s0, 143
    %v949 = vld [vmem:[%s948] sm:$0x10]
    %vm950 = vcmask 1044484
    %v951 = vsel %vm950, %v949, %v947
    %s952 = scalar_lea.vmem %s0, 174
    %v953 = vld [vmem:[%s952] sm:$0x20]
    %vm954 = vcmask 1045509
    %v955 = vsel %vm954, %v953, %v951
    %s956 = scalar_lea.vmem %s0, 205
    %v957 = vld [vmem:[%s956] sm:$0x40]
    %vm958 = vcmask 1046534
    %v959 = vsel %vm958, %v957, %v955
    %s960 = scalar_lea.vmem %s0, 236
    %v961 = vld [vmem:[%s960] sm:$0x80]
    %vm962 = vcmask 1047559
    %v963 = vsel %vm962, %v961, %v959
    %964 = vrot.lane.b32.xlu0 %v963, 76
    %v965 = vpop.permute.xlu0 %964
    %vm966 = vcmask 654944
    %967 = vst.msk [vmem:[#allocation2] ss:$8 sm:$0xf] %vm966, %v965
    %968 = vst.msk [vmem:[#allocation2] ss:$8 sm:$0xf0] %vm966, %v965
    %s969 = scalar_lea.vmem %s0, 275
    %v970 = vld [vmem:[%s969] sm:$0x1]
    %s971 = scalar_lea.vmem %s0, 306
    %v972 = vld [vmem:[%s971] sm:$0x2]
    %vm973 = vcmask 1041409
    %v974 = vsel %vm973, %v972, %v970
    %s975 = scalar_lea.vmem %s0, 337
    %v976 = vld [vmem:[%s975] sm:$0x4]
    %vm977 = vcmask 1042434
    %v978 = vsel %vm977, %v976, %v974
    %s979 = scalar_lea.vmem %s0, 368
    %v980 = vld [vmem:[%s979] sm:$0x8]
    %vm981 = vcmask 1043459
    %v982 = vsel %vm981, %v980, %v978
    %s983 = scalar_lea.vmem %s0, 399
    %v984 = vld [vmem:[%s983] sm:$0x10]
    %vm985 = vcmask 1044484
    %v986 = vsel %vm985, %v984, %v982
    %s987 = scalar_lea.vmem %s0, 430
    %v988 = vld [vmem:[%s987] sm:$0x20]
    %vm989 = vcmask 1045509
    %v990 = vsel %vm989, %v988, %v986
    %s991 = scalar_lea.vmem %s0, 461
    %v992 = vld [vmem:[%s991] sm:$0x40]
    %vm993 = vcmask 1046534
    %v994 = vsel %vm993, %v992, %v990
    %s995 = scalar_lea.vmem %s0, 492
    %v996 = vld [vmem:[%s995] sm:$0x80]
    %vm997 = vcmask 1047559
    %v998 = vsel %vm997, %v996, %v994
    %999 = vrot.lane.b32.xlu0 %v998, 76
    %v1000 = vpop.permute.xlu0 %999
    %vm1001 = vcmask 654944
    %s1002 = scalar_lea.vmem [#allocation2], 64
    %1003 = vst.msk [vmem:[%s1002] ss:$8 sm:$0xf] %vm1001, %v1000
    %s1004 = scalar_lea.vmem [#allocation2], 64
    %1005 = vst.msk [vmem:[%s1004] ss:$8 sm:$0xf0] %vm1001, %v1000
    %s1006 = scalar_lea.vmem %s0, 18
    %v1007 = vld [vmem:[%s1006] sm:$0x1]
    %s1008 = scalar_lea.vmem %s0, 49
    %v1009 = vld [vmem:[%s1008] sm:$0x2]
    %vm1010 = vcmask 1041409
    %v1011 = vsel %vm1010, %v1009, %v1007
    %s1012 = scalar_lea.vmem %s0, 80
    %v1013 = vld [vmem:[%s1012] sm:$0x4]
    %vm1014 = vcmask 1042434
    %v1015 = vsel %vm1014, %v1013, %v1011
    %s1016 = scalar_lea.vmem %s0, 111
    %v1017 = vld [vmem:[%s1016] sm:$0x8]
    %vm1018 = vcmask 1043459
    %v1019 = vsel %vm1018, %v1017, %v1015
    %s1020 = scalar_lea.vmem %s0, 142
    %v1021 = vld [vmem:[%s1020] sm:$0x10]
    %vm1022 = vcmask 1044484
    %v1023 = vsel %vm1022, %v1021, %v1019
    %s1024 = scalar_lea.vmem %s0, 173
    %v1025 = vld [vmem:[%s1024] sm:$0x20]
    %vm1026 = vcmask 1045509
    %v1027 = vsel %vm1026, %v1025, %v1023
    %s1028 = scalar_lea.vmem %s0, 204
    %v1029 = vld [vmem:[%s1028] sm:$0x40]
    %vm1030 = vcmask 1046534
    %v1031 = vsel %vm1030, %v1029, %v1027
    %s1032 = scalar_lea.vmem %s0, 235
    %v1033 = vld [vmem:[%s1032] sm:$0x80]
    %vm1034 = vcmask 1047559
    %v1035 = vsel %vm1034, %v1033, %v1031
    %1036 = vrot.lane.b32.xlu0 %v1035, 72
    %v1037 = vpop.permute.xlu0 %1036
    %vm1038 = vcmask 622144
    %1039 = vst.msk [vmem:[#allocation2] ss:$8 sm:$0xf] %vm1038, %v1037
    %1040 = vst.msk [vmem:[#allocation2] ss:$8 sm:$0xf0] %vm1038, %v1037
    %s1041 = scalar_lea.vmem %s0, 274
    %v1042 = vld [vmem:[%s1041] sm:$0x1]
    %s1043 = scalar_lea.vmem %s0, 305
    %v1044 = vld [vmem:[%s1043] sm:$0x2]
    %vm1045 = vcmask 1041409
    %v1046 = vsel %vm1045, %v1044, %v1042
    %s1047 = scalar_lea.vmem %s0, 336
    %v1048 = vld [vmem:[%s1047] sm:$0x4]
    %vm1049 = vcmask 1042434
    %v1050 = vsel %vm1049, %v1048, %v1046
    %s1051 = scalar_lea.vmem %s0, 367
    %v1052 = vld [vmem:[%s1051] sm:$0x8]
    %vm1053 = vcmask 1043459
    %v1054 = vsel %vm1053, %v1052, %v1050
    %s1055 = scalar_lea.vmem %s0, 398
    %v1056 = vld [vmem:[%s1055] sm:$0x10]
    %vm1057 = vcmask 1044484
    %v1058 = vsel %vm1057, %v1056, %v1054
    %s1059 = scalar_lea.vmem %s0, 429
    %v1060 = vld [vmem:[%s1059] sm:$0x20]
    %vm1061 = vcmask 1045509
    %v1062 = vsel %vm1061, %v1060, %v1058
    %s1063 = scalar_lea.vmem %s0, 460
    %v1064 = vld [vmem:[%s1063] sm:$0x40]
    %vm1065 = vcmask 1046534
    %v1066 = vsel %vm1065, %v1064, %v1062
    %s1067 = scalar_lea.vmem %s0, 491
    %v1068 = vld [vmem:[%s1067] sm:$0x80]
    %vm1069 = vcmask 1047559
    %v1070 = vsel %vm1069, %v1068, %v1066
    %1071 = vrot.lane.b32.xlu0 %v1070, 72
    %v1072 = vpop.permute.xlu0 %1071
    %vm1073 = vcmask 622144
    %s1074 = scalar_lea.vmem [#allocation2], 64
    %1075 = vst.msk [vmem:[%s1074] ss:$8 sm:$0xf] %vm1073, %v1072
    %s1076 = scalar_lea.vmem [#allocation2], 64
    %1077 = vst.msk [vmem:[%s1076] ss:$8 sm:$0xf0] %vm1073, %v1072
    %s1078 = scalar_lea.vmem %s0, 17
    %v1079 = vld [vmem:[%s1078] sm:$0x1]
    %s1080 = scalar_lea.vmem %s0, 48
    %v1081 = vld [vmem:[%s1080] sm:$0x2]
    %vm1082 = vcmask 1041409
    %v1083 = vsel %vm1082, %v1081, %v1079
    %s1084 = scalar_lea.vmem %s0, 79
    %v1085 = vld [vmem:[%s1084] sm:$0x4]
    %vm1086 = vcmask 1042434
    %v1087 = vsel %vm1086, %v1085, %v1083
    %s1088 = scalar_lea.vmem %s0, 110
    %v1089 = vld [vmem:[%s1088] sm:$0x8]
    %vm1090 = vcmask 1043459
    %v1091 = vsel %vm1090, %v1089, %v1087
    %s1092 = scalar_lea.vmem %s0, 141
    %v1093 = vld [vmem:[%s1092] sm:$0x10]
    %vm1094 = vcmask 1044484
    %v1095 = vsel %vm1094, %v1093, %v1091
    %s1096 = scalar_lea.vmem %s0, 172
    %v1097 = vld [vmem:[%s1096] sm:$0x20]
    %vm1098 = vcmask 1045509
    %v1099 = vsel %vm1098, %v1097, %v1095
    %s1100 = scalar_lea.vmem %s0, 203
    %v1101 = vld [vmem:[%s1100] sm:$0x40]
    %vm1102 = vcmask 1046534
    %v1103 = vsel %vm1102, %v1101, %v1099
    %s1104 = scalar_lea.vmem %s0, 234
    %v1105 = vld [vmem:[%s1104] sm:$0x80]
    %vm1106 = vcmask 1047559
    %v1107 = vsel %vm1106, %v1105, %v1103
    %1108 = vrot.lane.b32.xlu0 %v1107, 68
    %v1109 = vpop.permute.xlu0 %1108
    %vm1110 = vcmask 589344
    %1111 = vst.msk [vmem:[#allocation2] ss:$8 sm:$0xf] %vm1110, %v1109
    %1112 = vst.msk [vmem:[#allocation2] ss:$8 sm:$0xf0] %vm1110, %v1109
    %s1113 = scalar_lea.vmem %s0, 273
    %v1114 = vld [vmem:[%s1113] sm:$0x1]
    %s1115 = scalar_lea.vmem %s0, 304
    %v1116 = vld [vmem:[%s1115] sm:$0x2]
    %vm1117 = vcmask 1041409
    %v1118 = vsel %vm1117, %v1116, %v1114
    %s1119 = scalar_lea.vmem %s0, 335
    %v1120 = vld [vmem:[%s1119] sm:$0x4]
    %vm1121 = vcmask 1042434
    %v1122 = vsel %vm1121, %v1120, %v1118
    %s1123 = scalar_lea.vmem %s0, 366
    %v1124 = vld [vmem:[%s1123] sm:$0x8]
    %vm1125 = vcmask 1043459
    %v1126 = vsel %vm1125, %v1124, %v1122
    %s1127 = scalar_lea.vmem %s0, 397
    %v1128 = vld [vmem:[%s1127] sm:$0x10]
    %vm1129 = vcmask 1044484
    %v1130 = vsel %vm1129, %v1128, %v1126
    %s1131 = scalar_lea.vmem %s0, 428
    %v1132 = vld [vmem:[%s1131] sm:$0x20]
    %vm1133 = vcmask 1045509
    %v1134 = vsel %vm1133, %v1132, %v1130
    %s1135 = scalar_lea.vmem %s0, 459
    %v1136 = vld [vmem:[%s1135] sm:$0x40]
    %vm1137 = vcmask 1046534
    %v1138 = vsel %vm1137, %v1136, %v1134
    %s1139 = scalar_lea.vmem %s0, 490
    %v1140 = vld [vmem:[%s1139] sm:$0x80]
    %vm1141 = vcmask 1047559
    %v1142 = vsel %vm1141, %v1140, %v1138
    %1143 = vrot.lane.b32.xlu0 %v1142, 68
    %v1144 = vpop.permute.xlu0 %1143
    %vm1145 = vcmask 589344
    %s1146 = scalar_lea.vmem [#allocation2], 64
    %1147 = vst.msk [vmem:[%s1146] ss:$8 sm:$0xf] %vm1145, %v1144
    %s1148 = scalar_lea.vmem [#allocation2], 64
    %1149 = vst.msk [vmem:[%s1148] ss:$8 sm:$0xf0] %vm1145, %v1144
    %s1150 = scalar_lea.vmem %s0, 16
    %v1151 = vld [vmem:[%s1150] sm:$0x1]
    %s1152 = scalar_lea.vmem %s0, 47
    %v1153 = vld [vmem:[%s1152] sm:$0x2]
    %vm1154 = vcmask 1041409
    %v1155 = vsel %vm1154, %v1153, %v1151
    %s1156 = scalar_lea.vmem %s0, 78
    %v1157 = vld [vmem:[%s1156] sm:$0x4]
    %vm1158 = vcmask 1042434
    %v1159 = vsel %vm1158, %v1157, %v1155
    %s1160 = scalar_lea.vmem %s0, 109
    %v1161 = vld [vmem:[%s1160] sm:$0x8]
    %vm1162 = vcmask 1043459
    %v1163 = vsel %vm1162, %v1161, %v1159
    %s1164 = scalar_lea.vmem %s0, 140
    %v1165 = vld [vmem:[%s1164] sm:$0x10]
    %vm1166 = vcmask 1044484
    %v1167 = vsel %vm1166, %v1165, %v1163
    %s1168 = scalar_lea.vmem %s0, 171
    %v1169 = vld [vmem:[%s1168] sm:$0x20]
    %vm1170 = vcmask 1045509
    %v1171 = vsel %vm1170, %v1169, %v1167
    %s1172 = scalar_lea.vmem %s0, 202
    %v1173 = vld [vmem:[%s1172] sm:$0x40]
    %vm1174 = vcmask 1046534
    %v1175 = vsel %vm1174, %v1173, %v1171
    %s1176 = scalar_lea.vmem %s0, 233
    %v1177 = vld [vmem:[%s1176] sm:$0x80]
    %vm1178 = vcmask 1047559
    %v1179 = vsel %vm1178, %v1177, %v1175
    %1180 = vrot.lane.b32.xlu0 %v1179, 64
    %v1181 = vpop.permute.xlu0 %1180
    %vm1182 = vcmask 556544
    %1183 = vst.msk [vmem:[#allocation2] ss:$8 sm:$0xf] %vm1182, %v1181
    %1184 = vst.msk [vmem:[#allocation2] ss:$8 sm:$0xf0] %vm1182, %v1181
    %s1185 = scalar_lea.vmem %s0, 272
    %v1186 = vld [vmem:[%s1185] sm:$0x1]
    %s1187 = scalar_lea.vmem %s0, 303
    %v1188 = vld [vmem:[%s1187] sm:$0x2]
    %vm1189 = vcmask 1041409
    %v1190 = vsel %vm1189, %v1188, %v1186
    %s1191 = scalar_lea.vmem %s0, 334
    %v1192 = vld [vmem:[%s1191] sm:$0x4]
    %vm1193 = vcmask 1042434
    %v1194 = vsel %vm1193, %v1192, %v1190
    %s1195 = scalar_lea.vmem %s0, 365
    %v1196 = vld [vmem:[%s1195] sm:$0x8]
    %vm1197 = vcmask 1043459
    %v1198 = vsel %vm1197, %v1196, %v1194
    %s1199 = scalar_lea.vmem %s0, 396
    %v1200 = vld [vmem:[%s1199] sm:$0x10]
    %vm1201 = vcmask 1044484
    %v1202 = vsel %vm1201, %v1200, %v1198
    %s1203 = scalar_lea.vmem %s0, 427
    %v1204 = vld [vmem:[%s1203] sm:$0x20]
    %vm1205 = vcmask 1045509
    %v1206 = vsel %vm1205, %v1204, %v1202
    %s1207 = scalar_lea.vmem %s0, 458
    %v1208 = vld [vmem:[%s1207] sm:$0x40]
    %vm1209 = vcmask 1046534
    %v1210 = vsel %vm1209, %v1208, %v1206
    %s1211 = scalar_lea.vmem %s0, 489
    %v1212 = vld [vmem:[%s1211] sm:$0x80]
    %vm1213 = vcmask 1047559
    %v1214 = vsel %vm1213, %v1212, %v1210
    %1215 = vrot.lane.b32.xlu0 %v1214, 64
    %v1216 = vpop.permute.xlu0 %1215
    %vm1217 = vcmask 556544
    %s1218 = scalar_lea.vmem [#allocation2], 64
    %1219 = vst.msk [vmem:[%s1218] ss:$8 sm:$0xf] %vm1217, %v1216
    %s1220 = scalar_lea.vmem [#allocation2], 64
    %1221 = vst.msk [vmem:[%s1220] ss:$8 sm:$0xf0] %vm1217, %v1216
    %s1222 = scalar_lea.vmem %s0, 15
    %v1223 = vld [vmem:[%s1222] sm:$0x1]
    %s1224 = scalar_lea.vmem %s0, 46
    %v1225 = vld [vmem:[%s1224] sm:$0x2]
    %vm1226 = vcmask 1041409
    %v1227 = vsel %vm1226, %v1225, %v1223
    %s1228 = scalar_lea.vmem %s0, 77
    %v1229 = vld [vmem:[%s1228] sm:$0x4]
    %vm1230 = vcmask 1042434
    %v1231 = vsel %vm1230, %v1229, %v1227
    %s1232 = scalar_lea.vmem %s0, 108
    %v1233 = vld [vmem:[%s1232] sm:$0x8]
    %vm1234 = vcmask 1043459
    %v1235 = vsel %vm1234, %v1233, %v1231
    %s1236 = scalar_lea.vmem %s0, 139
    %v1237 = vld [vmem:[%s1236] sm:$0x10]
    %vm1238 = vcmask 1044484
    %v1239 = vsel %vm1238, %v1237, %v1235
    %s1240 = scalar_lea.vmem %s0, 170
    %v1241 = vld [vmem:[%s1240] sm:$0x20]
    %vm1242 = vcmask 1045509
    %v1243 = vsel %vm1242, %v1241, %v1239
    %s1244 = scalar_lea.vmem %s0, 201
    %v1245 = vld [vmem:[%s1244] sm:$0x40]
    %vm1246 = vcmask 1046534
    %v1247 = vsel %vm1246, %v1245, %v1243
    %s1248 = scalar_lea.vmem %s0, 232
    %v1249 = vld [vmem:[%s1248] sm:$0x80]
    %vm1250 = vcmask 1047559
    %v1251 = vsel %vm1250, %v1249, %v1247
    %1252 = vrot.lane.b32.xlu0 %v1251, 60
    %v1253 = vpop.permute.xlu0 %1252
    %vm1254 = vcmask 523744
    %1255 = vst.msk [vmem:[#allocation2] ss:$8 sm:$0xf] %vm1254, %v1253
    %1256 = vst.msk [vmem:[#allocation2] ss:$8 sm:$0xf0] %vm1254, %v1253
    %s1257 = scalar_lea.vmem %s0, 271
    %v1258 = vld [vmem:[%s1257] sm:$0x1]
    %s1259 = scalar_lea.vmem %s0, 302
    %v1260 = vld [vmem:[%s1259] sm:$0x2]
    %vm1261 = vcmask 1041409
    %v1262 = vsel %vm1261, %v1260, %v1258
    %s1263 = scalar_lea.vmem %s0, 333
    %v1264 = vld [vmem:[%s1263] sm:$0x4]
    %vm1265 = vcmask 1042434
    %v1266 = vsel %vm1265, %v1264, %v1262
    %s1267 = scalar_lea.vmem %s0, 364
    %v1268 = vld [vmem:[%s1267] sm:$0x8]
    %vm1269 = vcmask 1043459
    %v1270 = vsel %vm1269, %v1268, %v1266
    %s1271 = scalar_lea.vmem %s0, 395
    %v1272 = vld [vmem:[%s1271] sm:$0x10]
    %vm1273 = vcmask 1044484
    %v1274 = vsel %vm1273, %v1272, %v1270
    %s1275 = scalar_lea.vmem %s0, 426
    %v1276 = vld [vmem:[%s1275] sm:$0x20]
    %vm1277 = vcmask 1045509
    %v1278 = vsel %vm1277, %v1276, %v1274
    %s1279 = scalar_lea.vmem %s0, 457
    %v1280 = vld [vmem:[%s1279] sm:$0x40]
    %vm1281 = vcmask 1046534
    %v1282 = vsel %vm1281, %v1280, %v1278
    %s1283 = scalar_lea.vmem %s0, 488
    %v1284 = vld [vmem:[%s1283] sm:$0x80]
    %vm1285 = vcmask 1047559
    %v1286 = vsel %vm1285, %v1284, %v1282
    %1287 = vrot.lane.b32.xlu0 %v1286, 60
    %v1288 = vpop.permute.xlu0 %1287
    %vm1289 = vcmask 523744
    %s1290 = scalar_lea.vmem [#allocation2], 64
    %1291 = vst.msk [vmem:[%s1290] ss:$8 sm:$0xf] %vm1289, %v1288
    %s1292 = scalar_lea.vmem [#allocation2], 64
    %1293 = vst.msk [vmem:[%s1292] ss:$8 sm:$0xf0] %vm1289, %v1288
    %s1294 = scalar_lea.vmem %s0, 14
    %v1295 = vld [vmem:[%s1294] sm:$0x1]
    %s1296 = scalar_lea.vmem %s0, 45
    %v1297 = vld [vmem:[%s1296] sm:$0x2]
    %vm1298 = vcmask 1041409
    %v1299 = vsel %vm1298, %v1297, %v1295
    %s1300 = scalar_lea.vmem %s0, 76
    %v1301 = vld [vmem:[%s1300] sm:$0x4]
    %vm1302 = vcmask 1042434
    %v1303 = vsel %vm1302, %v1301, %v1299
    %s1304 = scalar_lea.vmem %s0, 107
    %v1305 = vld [vmem:[%s1304] sm:$0x8]
    %vm1306 = vcmask 1043459
    %v1307 = vsel %vm1306, %v1305, %v1303
    %s1308 = scalar_lea.vmem %s0, 138
    %v1309 = vld [vmem:[%s1308] sm:$0x10]
    %vm1310 = vcmask 1044484
    %v1311 = vsel %vm1310, %v1309, %v1307
    %s1312 = scalar_lea.vmem %s0, 169
    %v1313 = vld [vmem:[%s1312] sm:$0x20]
    %vm1314 = vcmask 1045509
    %v1315 = vsel %vm1314, %v1313, %v1311
    %s1316 = scalar_lea.vmem %s0, 200
    %v1317 = vld [vmem:[%s1316] sm:$0x40]
    %vm1318 = vcmask 1046534
    %v1319 = vsel %vm1318, %v1317, %v1315
    %s1320 = scalar_lea.vmem %s0, 231
    %v1321 = vld [vmem:[%s1320] sm:$0x80]
    %vm1322 = vcmask 1047559
    %v1323 = vsel %vm1322, %v1321, %v1319
    %1324 = vrot.lane.b32.xlu0 %v1323, 56
    %v1325 = vpop.permute.xlu0 %1324
    %vm1326 = vcmask 490944
    %1327 = vst.msk [vmem:[#allocation2] ss:$8 sm:$0xf] %vm1326, %v1325
    %1328 = vst.msk [vmem:[#allocation2] ss:$8 sm:$0xf0] %vm1326, %v1325
    %s1329 = scalar_lea.vmem %s0, 270
    %v1330 = vld [vmem:[%s1329] sm:$0x1]
    %s1331 = scalar_lea.vmem %s0, 301
    %v1332 = vld [vmem:[%s1331] sm:$0x2]
    %vm1333 = vcmask 1041409
    %v1334 = vsel %vm1333, %v1332, %v1330
    %s1335 = scalar_lea.vmem %s0, 332
    %v1336 = vld [vmem:[%s1335] sm:$0x4]
    %vm1337 = vcmask 1042434
    %v1338 = vsel %vm1337, %v1336, %v1334
    %s1339 = scalar_lea.vmem %s0, 363
    %v1340 = vld [vmem:[%s1339] sm:$0x8]
    %vm1341 = vcmask 1043459
    %v1342 = vsel %vm1341, %v1340, %v1338
    %s1343 = scalar_lea.vmem %s0, 394
    %v1344 = vld [vmem:[%s1343] sm:$0x10]
    %vm1345 = vcmask 1044484
    %v1346 = vsel %vm1345, %v1344, %v1342
    %s1347 = scalar_lea.vmem %s0, 425
    %v1348 = vld [vmem:[%s1347] sm:$0x20]
    %vm1349 = vcmask 1045509
    %v1350 = vsel %vm1349, %v1348, %v1346
    %s1351 = scalar_lea.vmem %s0, 456
    %v1352 = vld [vmem:[%s1351] sm:$0x40]
    %vm1353 = vcmask 1046534
    %v1354 = vsel %vm1353, %v1352, %v1350
    %s1355 = scalar_lea.vmem %s0, 487
    %v1356 = vld [vmem:[%s1355] sm:$0x80]
    %vm1357 = vcmask 1047559
    %v1358 = vsel %vm1357, %v1356, %v1354
    %1359 = vrot.lane.b32.xlu0 %v1358, 56
    %v1360 = vpop.permute.xlu0 %1359
    %vm1361 = vcmask 490944
    %s1362 = scalar_lea.vmem [#allocation2], 64
    %1363 = vst.msk [vmem:[%s1362] ss:$8 sm:$0xf] %vm1361, %v1360
    %s1364 = scalar_lea.vmem [#allocation2], 64
    %1365 = vst.msk [vmem:[%s1364] ss:$8 sm:$0xf0] %vm1361, %v1360
    %s1366 = scalar_lea.vmem %s0, 13
    %v1367 = vld [vmem:[%s1366] sm:$0x1]
    %s1368 = scalar_lea.vmem %s0, 44
    %v1369 = vld [vmem:[%s1368] sm:$0x2]
    %vm1370 = vcmask 1041409
    %v1371 = vsel %vm1370, %v1369, %v1367
    %s1372 = scalar_lea.vmem %s0, 75
    %v1373 = vld [vmem:[%s1372] sm:$0x4]
    %vm1374 = vcmask 1042434
    %v1375 = vsel %vm1374, %v1373, %v1371
    %s1376 = scalar_lea.vmem %s0, 106
    %v1377 = vld [vmem:[%s1376] sm:$0x8]
    %vm1378 = vcmask 1043459
    %v1379 = vsel %vm1378, %v1377, %v1375
    %s1380 = scalar_lea.vmem %s0, 137
    %v1381 = vld [vmem:[%s1380] sm:$0x10]
    %vm1382 = vcmask 1044484
    %v1383 = vsel %vm1382, %v1381, %v1379
    %s1384 = scalar_lea.vmem %s0, 168
    %v1385 = vld [vmem:[%s1384] sm:$0x20]
    %vm1386 = vcmask 1045509
    %v1387 = vsel %vm1386, %v1385, %v1383
    %s1388 = scalar_lea.vmem %s0, 199
    %v1389 = vld [vmem:[%s1388] sm:$0x40]
    %vm1390 = vcmask 1046534
    %v1391 = vsel %vm1390, %v1389, %v1387
    %s1392 = scalar_lea.vmem %s0, 230
    %v1393 = vld [vmem:[%s1392] sm:$0x80]
    %vm1394 = vcmask 1047559
    %v1395 = vsel %vm1394, %v1393, %v1391
    %1396 = vrot.lane.b32.xlu0 %v1395, 52
    %v1397 = vpop.permute.xlu0 %1396
    %vm1398 = vcmask 458144
    %1399 = vst.msk [vmem:[#allocation2] ss:$8 sm:$0xf] %vm1398, %v1397
    %1400 = vst.msk [vmem:[#allocation2] ss:$8 sm:$0xf0] %vm1398, %v1397
    %s1401 = scalar_lea.vmem %s0, 269
    %v1402 = vld [vmem:[%s1401] sm:$0x1]
    %s1403 = scalar_lea.vmem %s0, 300
    %v1404 = vld [vmem:[%s1403] sm:$0x2]
    %vm1405 = vcmask 1041409
    %v1406 = vsel %vm1405, %v1404, %v1402
    %s1407 = scalar_lea.vmem %s0, 331
    %v1408 = vld [vmem:[%s1407] sm:$0x4]
    %vm1409 = vcmask 1042434
    %v1410 = vsel %vm1409, %v1408, %v1406
    %s1411 = scalar_lea.vmem %s0, 362
    %v1412 = vld [vmem:[%s1411] sm:$0x8]
    %vm1413 = vcmask 1043459
    %v1414 = vsel %vm1413, %v1412, %v1410
    %s1415 = scalar_lea.vmem %s0, 393
    %v1416 = vld [vmem:[%s1415] sm:$0x10]
    %vm1417 = vcmask 1044484
    %v1418 = vsel %vm1417, %v1416, %v1414
    %s1419 = scalar_lea.vmem %s0, 424
    %v1420 = vld [vmem:[%s1419] sm:$0x20]
    %vm1421 = vcmask 1045509
    %v1422 = vsel %vm1421, %v1420, %v1418
    %s1423 = scalar_lea.vmem %s0, 455
    %v1424 = vld [vmem:[%s1423] sm:$0x40]
    %vm1425 = vcmask 1046534
    %v1426 = vsel %vm1425, %v1424, %v1422
    %s1427 = scalar_lea.vmem %s0, 486
    %v1428 = vld [vmem:[%s1427] sm:$0x80]
    %vm1429 = vcmask 1047559
    %v1430 = vsel %vm1429, %v1428, %v1426
    %1431 = vrot.lane.b32.xlu0 %v1430, 52
    %v1432 = vpop.permute.xlu0 %1431
    %vm1433 = vcmask 458144
    %s1434 = scalar_lea.vmem [#allocation2], 64
    %1435 = vst.msk [vmem:[%s1434] ss:$8 sm:$0xf] %vm1433, %v1432
    %s1436 = scalar_lea.vmem [#allocation2], 64
    %1437 = vst.msk [vmem:[%s1436] ss:$8 sm:$0xf0] %vm1433, %v1432
    %s1438 = scalar_lea.vmem %s0, 12
    %v1439 = vld [vmem:[%s1438] sm:$0x1]
    %s1440 = scalar_lea.vmem %s0, 43
    %v1441 = vld [vmem:[%s1440] sm:$0x2]
    %vm1442 = vcmask 1041409
    %v1443 = vsel %vm1442, %v1441, %v1439
    %s1444 = scalar_lea.vmem %s0, 74
    %v1445 = vld [vmem:[%s1444] sm:$0x4]
    %vm1446 = vcmask 1042434
    %v1447 = vsel %vm1446, %v1445, %v1443
    %s1448 = scalar_lea.vmem %s0, 105
    %v1449 = vld [vmem:[%s1448] sm:$0x8]
    %vm1450 = vcmask 1043459
    %v1451 = vsel %vm1450, %v1449, %v1447
    %s1452 = scalar_lea.vmem %s0, 136
    %v1453 = vld [vmem:[%s1452] sm:$0x10]
    %vm1454 = vcmask 1044484
    %v1455 = vsel %vm1454, %v1453, %v1451
    %s1456 = scalar_lea.vmem %s0, 167
    %v1457 = vld [vmem:[%s1456] sm:$0x20]
    %vm1458 = vcmask 1045509
    %v1459 = vsel %vm1458, %v1457, %v1455
    %s1460 = scalar_lea.vmem %s0, 198
    %v1461 = vld [vmem:[%s1460] sm:$0x40]
    %vm1462 = vcmask 1046534
    %v1463 = vsel %vm1462, %v1461, %v1459
    %s1464 = scalar_lea.vmem %s0, 229
    %v1465 = vld [vmem:[%s1464] sm:$0x80]
    %vm1466 = vcmask 1047559
    %v1467 = vsel %vm1466, %v1465, %v1463
    %1468 = vrot.lane.b32.xlu0 %v1467, 48
    %v1469 = vpop.permute.xlu0 %1468
    %vm1470 = vcmask 425344
    %1471 = vst.msk [vmem:[#allocation2] ss:$8 sm:$0xf] %vm1470, %v1469
    %1472 = vst.msk [vmem:[#allocation2] ss:$8 sm:$0xf0] %vm1470, %v1469
    %s1473 = scalar_lea.vmem %s0, 268
    %v1474 = vld [vmem:[%s1473] sm:$0x1]
    %s1475 = scalar_lea.vmem %s0, 299
    %v1476 = vld [vmem:[%s1475] sm:$0x2]
    %vm1477 = vcmask 1041409
    %v1478 = vsel %vm1477, %v1476, %v1474
    %s1479 = scalar_lea.vmem %s0, 330
    %v1480 = vld [vmem:[%s1479] sm:$0x4]
    %vm1481 = vcmask 1042434
    %v1482 = vsel %vm1481, %v1480, %v1478
    %s1483 = scalar_lea.vmem %s0, 361
    %v1484 = vld [vmem:[%s1483] sm:$0x8]
    %vm1485 = vcmask 1043459
    %v1486 = vsel %vm1485, %v1484, %v1482
    %s1487 = scalar_lea.vmem %s0, 392
    %v1488 = vld [vmem:[%s1487] sm:$0x10]
    %vm1489 = vcmask 1044484
    %v1490 = vsel %vm1489, %v1488, %v1486
    %s1491 = scalar_lea.vmem %s0, 423
    %v1492 = vld [vmem:[%s1491] sm:$0x20]
    %vm1493 = vcmask 1045509
    %v1494 = vsel %vm1493, %v1492, %v1490
    %s1495 = scalar_lea.vmem %s0, 454
    %v1496 = vld [vmem:[%s1495] sm:$0x40]
    %vm1497 = vcmask 1046534
    %v1498 = vsel %vm1497, %v1496, %v1494
    %s1499 = scalar_lea.vmem %s0, 485
    %v1500 = vld [vmem:[%s1499] sm:$0x80]
    %vm1501 = vcmask 1047559
    %v1502 = vsel %vm1501, %v1500, %v1498
    %1503 = vrot.lane.b32.xlu0 %v1502, 48
    %v1504 = vpop.permute.xlu0 %1503
    %vm1505 = vcmask 425344
    %s1506 = scalar_lea.vmem [#allocation2], 64
    %1507 = vst.msk [vmem:[%s1506] ss:$8 sm:$0xf] %vm1505, %v1504
    %s1508 = scalar_lea.vmem [#allocation2], 64
    %1509 = vst.msk [vmem:[%s1508] ss:$8 sm:$0xf0] %vm1505, %v1504
    %s1510 = scalar_lea.vmem %s0, 11
    %v1511 = vld [vmem:[%s1510] sm:$0x1]
    %s1512 = scalar_lea.vmem %s0, 42
    %v1513 = vld [vmem:[%s1512] sm:$0x2]
    %vm1514 = vcmask 1041409
    %v1515 = vsel %vm1514, %v1513, %v1511
    %s1516 = scalar_lea.vmem %s0, 73
    %v1517 = vld [vmem:[%s1516] sm:$0x4]
    %vm1518 = vcmask 1042434
    %v1519 = vsel %vm1518, %v1517, %v1515
    %s1520 = scalar_lea.vmem %s0, 104
    %v1521 = vld [vmem:[%s1520] sm:$0x8]
    %vm1522 = vcmask 1043459
    %v1523 = vsel %vm1522, %v1521, %v1519
    %s1524 = scalar_lea.vmem %s0, 135
    %v1525 = vld [vmem:[%s1524] sm:$0x10]
    %vm1526 = vcmask 1044484
    %v1527 = vsel %vm1526, %v1525, %v1523
    %s1528 = scalar_lea.vmem %s0, 166
    %v1529 = vld [vmem:[%s1528] sm:$0x20]
    %vm1530 = vcmask 1045509
    %v1531 = vsel %vm1530, %v1529, %v1527
    %s1532 = scalar_lea.vmem %s0, 197
    %v1533 = vld [vmem:[%s1532] sm:$0x40]
    %vm1534 = vcmask 1046534
    %v1535 = vsel %vm1534, %v1533, %v1531
    %s1536 = scalar_lea.vmem %s0, 228
    %v1537 = vld [vmem:[%s1536] sm:$0x80]
    %vm1538 = vcmask 1047559
    %v1539 = vsel %vm1538, %v1537, %v1535
    %1540 = vrot.lane.b32.xlu0 %v1539, 44
    %v1541 = vpop.permute.xlu0 %1540
    %vm1542 = vcmask 392544
    %1543 = vst.msk [vmem:[#allocation2] ss:$8 sm:$0xf] %vm1542, %v1541
    %1544 = vst.msk [vmem:[#allocation2] ss:$8 sm:$0xf0] %vm1542, %v1541
    %s1545 = scalar_lea.vmem %s0, 267
    %v1546 = vld [vmem:[%s1545] sm:$0x1]
    %s1547 = scalar_lea.vmem %s0, 298
    %v1548 = vld [vmem:[%s1547] sm:$0x2]
    %vm1549 = vcmask 1041409
    %v1550 = vsel %vm1549, %v1548, %v1546
    %s1551 = scalar_lea.vmem %s0, 329
    %v1552 = vld [vmem:[%s1551] sm:$0x4]
    %vm1553 = vcmask 1042434
    %v1554 = vsel %vm1553, %v1552, %v1550
    %s1555 = scalar_lea.vmem %s0, 360
    %v1556 = vld [vmem:[%s1555] sm:$0x8]
    %vm1557 = vcmask 1043459
    %v1558 = vsel %vm1557, %v1556, %v1554
    %s1559 = scalar_lea.vmem %s0, 391
    %v1560 = vld [vmem:[%s1559] sm:$0x10]
    %vm1561 = vcmask 1044484
    %v1562 = vsel %vm1561, %v1560, %v1558
    %s1563 = scalar_lea.vmem %s0, 422
    %v1564 = vld [vmem:[%s1563] sm:$0x20]
    %vm1565 = vcmask 1045509
    %v1566 = vsel %vm1565, %v1564, %v1562
    %s1567 = scalar_lea.vmem %s0, 453
    %v1568 = vld [vmem:[%s1567] sm:$0x40]
    %vm1569 = vcmask 1046534
    %v1570 = vsel %vm1569, %v1568, %v1566
    %s1571 = scalar_lea.vmem %s0, 484
    %v1572 = vld [vmem:[%s1571] sm:$0x80]
    %vm1573 = vcmask 1047559
    %v1574 = vsel %vm1573, %v1572, %v1570
    %1575 = vrot.lane.b32.xlu0 %v1574, 44
    %v1576 = vpop.permute.xlu0 %1575
    %vm1577 = vcmask 392544
    %s1578 = scalar_lea.vmem [#allocation2], 64
    %1579 = vst.msk [vmem:[%s1578] ss:$8 sm:$0xf] %vm1577, %v1576
    %s1580 = scalar_lea.vmem [#allocation2], 64
    %1581 = vst.msk [vmem:[%s1580] ss:$8 sm:$0xf0] %vm1577, %v1576
    %s1582 = scalar_lea.vmem %s0, 10
    %v1583 = vld [vmem:[%s1582] sm:$0x1]
    %s1584 = scalar_lea.vmem %s0, 41
    %v1585 = vld [vmem:[%s1584] sm:$0x2]
    %vm1586 = vcmask 1041409
    %v1587 = vsel %vm1586, %v1585, %v1583
    %s1588 = scalar_lea.vmem %s0, 72
    %v1589 = vld [vmem:[%s1588] sm:$0x4]
    %vm1590 = vcmask 1042434
    %v1591 = vsel %vm1590, %v1589, %v1587
    %s1592 = scalar_lea.vmem %s0, 103
    %v1593 = vld [vmem:[%s1592] sm:$0x8]
    %vm1594 = vcmask 1043459
    %v1595 = vsel %vm1594, %v1593, %v1591
    %s1596 = scalar_lea.vmem %s0, 134
    %v1597 = vld [vmem:[%s1596] sm:$0x10]
    %vm1598 = vcmask 1044484
    %v1599 = vsel %vm1598, %v1597, %v1595
    %s1600 = scalar_lea.vmem %s0, 165
    %v1601 = vld [vmem:[%s1600] sm:$0x20]
    %vm1602 = vcmask 1045509
    %v1603 = vsel %vm1602, %v1601, %v1599
    %s1604 = scalar_lea.vmem %s0, 196
    %v1605 = vld [vmem:[%s1604] sm:$0x40]
    %vm1606 = vcmask 1046534
    %v1607 = vsel %vm1606, %v1605, %v1603
    %s1608 = scalar_lea.vmem %s0, 227
    %v1609 = vld [vmem:[%s1608] sm:$0x80]
    %vm1610 = vcmask 1047559
    %v1611 = vsel %vm1610, %v1609, %v1607
    %1612 = vrot.lane.b32.xlu0 %v1611, 40
    %v1613 = vpop.permute.xlu0 %1612
    %vm1614 = vcmask 359744
    %1615 = vst.msk [vmem:[#allocation2] ss:$8 sm:$0xf] %vm1614, %v1613
    %1616 = vst.msk [vmem:[#allocation2] ss:$8 sm:$0xf0] %vm1614, %v1613
    %s1617 = scalar_lea.vmem %s0, 266
    %v1618 = vld [vmem:[%s1617] sm:$0x1]
    %s1619 = scalar_lea.vmem %s0, 297
    %v1620 = vld [vmem:[%s1619] sm:$0x2]
    %vm1621 = vcmask 1041409
    %v1622 = vsel %vm1621, %v1620, %v1618
    %s1623 = scalar_lea.vmem %s0, 328
    %v1624 = vld [vmem:[%s1623] sm:$0x4]
    %vm1625 = vcmask 1042434
    %v1626 = vsel %vm1625, %v1624, %v1622
    %s1627 = scalar_lea.vmem %s0, 359
    %v1628 = vld [vmem:[%s1627] sm:$0x8]
    %vm1629 = vcmask 1043459
    %v1630 = vsel %vm1629, %v1628, %v1626
    %s1631 = scalar_lea.vmem %s0, 390
    %v1632 = vld [vmem:[%s1631] sm:$0x10]
    %vm1633 = vcmask 1044484
    %v1634 = vsel %vm1633, %v1632, %v1630
    %s1635 = scalar_lea.vmem %s0, 421
    %v1636 = vld [vmem:[%s1635] sm:$0x20]
    %vm1637 = vcmask 1045509
    %v1638 = vsel %vm1637, %v1636, %v1634
    %s1639 = scalar_lea.vmem %s0, 452
    %v1640 = vld [vmem:[%s1639] sm:$0x40]
    %vm1641 = vcmask 1046534
    %v1642 = vsel %vm1641, %v1640, %v1638
    %s1643 = scalar_lea.vmem %s0, 483
    %v1644 = vld [vmem:[%s1643] sm:$0x80]
    %vm1645 = vcmask 1047559
    %v1646 = vsel %vm1645, %v1644, %v1642
    %1647 = vrot.lane.b32.xlu0 %v1646, 40
    %v1648 = vpop.permute.xlu0 %1647
    %vm1649 = vcmask 359744
    %s1650 = scalar_lea.vmem [#allocation2], 64
    %1651 = vst.msk [vmem:[%s1650] ss:$8 sm:$0xf] %vm1649, %v1648
    %s1652 = scalar_lea.vmem [#allocation2], 64
    %1653 = vst.msk [vmem:[%s1652] ss:$8 sm:$0xf0] %vm1649, %v1648
    %s1654 = scalar_lea.vmem %s0, 9
    %v1655 = vld [vmem:[%s1654] sm:$0x1]
    %s1656 = scalar_lea.vmem %s0, 40
    %v1657 = vld [vmem:[%s1656] sm:$0x2]
    %vm1658 = vcmask 1041409
    %v1659 = vsel %vm1658, %v1657, %v1655
    %s1660 = scalar_lea.vmem %s0, 71
    %v1661 = vld [vmem:[%s1660] sm:$0x4]
    %vm1662 = vcmask 1042434
    %v1663 = vsel %vm1662, %v1661, %v1659
    %s1664 = scalar_lea.vmem %s0, 102
    %v1665 = vld [vmem:[%s1664] sm:$0x8]
    %vm1666 = vcmask 1043459
    %v1667 = vsel %vm1666, %v1665, %v1663
    %s1668 = scalar_lea.vmem %s0, 133
    %v1669 = vld [vmem:[%s1668] sm:$0x10]
    %vm1670 = vcmask 1044484
    %v1671 = vsel %vm1670, %v1669, %v1667
    %s1672 = scalar_lea.vmem %s0, 164
    %v1673 = vld [vmem:[%s1672] sm:$0x20]
    %vm1674 = vcmask 1045509
    %v1675 = vsel %vm1674, %v1673, %v1671
    %s1676 = scalar_lea.vmem %s0, 195
    %v1677 = vld [vmem:[%s1676] sm:$0x40]
    %vm1678 = vcmask 1046534
    %v1679 = vsel %vm1678, %v1677, %v1675
    %s1680 = scalar_lea.vmem %s0, 226
    %v1681 = vld [vmem:[%s1680] sm:$0x80]
    %vm1682 = vcmask 1047559
    %v1683 = vsel %vm1682, %v1681, %v1679
    %1684 = vrot.lane.b32.xlu0 %v1683, 36
    %v1685 = vpop.permute.xlu0 %1684
    %vm1686 = vcmask 326944
    %1687 = vst.msk [vmem:[#allocation2] ss:$8 sm:$0xf] %vm1686, %v1685
    %1688 = vst.msk [vmem:[#allocation2] ss:$8 sm:$0xf0] %vm1686, %v1685
    %s1689 = scalar_lea.vmem %s0, 265
    %v1690 = vld [vmem:[%s1689] sm:$0x1]
    %s1691 = scalar_lea.vmem %s0, 296
    %v1692 = vld [vmem:[%s1691] sm:$0x2]
    %vm1693 = vcmask 1041409
    %v1694 = vsel %vm1693, %v1692, %v1690
    %s1695 = scalar_lea.vmem %s0, 327
    %v1696 = vld [vmem:[%s1695] sm:$0x4]
    %vm1697 = vcmask 1042434
    %v1698 = vsel %vm1697, %v1696, %v1694
    %s1699 = scalar_lea.vmem %s0, 358
    %v1700 = vld [vmem:[%s1699] sm:$0x8]
    %vm1701 = vcmask 1043459
    %v1702 = vsel %vm1701, %v1700, %v1698
    %s1703 = scalar_lea.vmem %s0, 389
    %v1704 = vld [vmem:[%s1703] sm:$0x10]
    %vm1705 = vcmask 1044484
    %v1706 = vsel %vm1705, %v1704, %v1702
    %s1707 = scalar_lea.vmem %s0, 420
    %v1708 = vld [vmem:[%s1707] sm:$0x20]
    %vm1709 = vcmask 1045509
    %v1710 = vsel %vm1709, %v1708, %v1706
    %s1711 = scalar_lea.vmem %s0, 451
    %v1712 = vld [vmem:[%s1711] sm:$0x40]
    %vm1713 = vcmask 1046534
    %v1714 = vsel %vm1713, %v1712, %v1710
    %s1715 = scalar_lea.vmem %s0, 482
    %v1716 = vld [vmem:[%s1715] sm:$0x80]
    %vm1717 = vcmask 1047559
    %v1718 = vsel %vm1717, %v1716, %v1714
    %1719 = vrot.lane.b32.xlu0 %v1718, 36
    %v1720 = vpop.permute.xlu0 %1719
    %vm1721 = vcmask 326944
    %s1722 = scalar_lea.vmem [#allocation2], 64
    %1723 = vst.msk [vmem:[%s1722] ss:$8 sm:$0xf] %vm1721, %v1720
    %s1724 = scalar_lea.vmem [#allocation2], 64
    %1725 = vst.msk [vmem:[%s1724] ss:$8 sm:$0xf0] %vm1721, %v1720
    %s1726 = scalar_lea.vmem %s0, 8
    %v1727 = vld [vmem:[%s1726] sm:$0x1]
    %s1728 = scalar_lea.vmem %s0, 39
    %v1729 = vld [vmem:[%s1728] sm:$0x2]
    %vm1730 = vcmask 1041409
    %v1731 = vsel %vm1730, %v1729, %v1727
    %s1732 = scalar_lea.vmem %s0, 70
    %v1733 = vld [vmem:[%s1732] sm:$0x4]
    %vm1734 = vcmask 1042434
    %v1735 = vsel %vm1734, %v1733, %v1731
    %s1736 = scalar_lea.vmem %s0, 101
    %v1737 = vld [vmem:[%s1736] sm:$0x8]
    %vm1738 = vcmask 1043459
    %v1739 = vsel %vm1738, %v1737, %v1735
    %s1740 = scalar_lea.vmem %s0, 132
    %v1741 = vld [vmem:[%s1740] sm:$0x10]
    %vm1742 = vcmask 1044484
    %v1743 = vsel %vm1742, %v1741, %v1739
    %s1744 = scalar_lea.vmem %s0, 163
    %v1745 = vld [vmem:[%s1744] sm:$0x20]
    %vm1746 = vcmask 1045509
    %v1747 = vsel %vm1746, %v1745, %v1743
    %s1748 = scalar_lea.vmem %s0, 194
    %v1749 = vld [vmem:[%s1748] sm:$0x40]
    %vm1750 = vcmask 1046534
    %v1751 = vsel %vm1750, %v1749, %v1747
    %s1752 = scalar_lea.vmem %s0, 225
    %v1753 = vld [vmem:[%s1752] sm:$0x80]
    %vm1754 = vcmask 1047559
    %v1755 = vsel %vm1754, %v1753, %v1751
    %1756 = vrot.lane.b32.xlu0 %v1755, 32
    %v1757 = vpop.permute.xlu0 %1756
    %vm1758 = vcmask 294144
    %1759 = vst.msk [vmem:[#allocation2] ss:$8 sm:$0xf] %vm1758, %v1757
    %1760 = vst.msk [vmem:[#allocation2] ss:$8 sm:$0xf0] %vm1758, %v1757
    %s1761 = scalar_lea.vmem %s0, 264
    %v1762 = vld [vmem:[%s1761] sm:$0x1]
    %s1763 = scalar_lea.vmem %s0, 295
    %v1764 = vld [vmem:[%s1763] sm:$0x2]
    %vm1765 = vcmask 1041409
    %v1766 = vsel %vm1765, %v1764, %v1762
    %s1767 = scalar_lea.vmem %s0, 326
    %v1768 = vld [vmem:[%s1767] sm:$0x4]
    %vm1769 = vcmask 1042434
    %v1770 = vsel %vm1769, %v1768, %v1766
    %s1771 = scalar_lea.vmem %s0, 357
    %v1772 = vld [vmem:[%s1771] sm:$0x8]
    %vm1773 = vcmask 1043459
    %v1774 = vsel %vm1773, %v1772, %v1770
    %s1775 = scalar_lea.vmem %s0, 388
    %v1776 = vld [vmem:[%s1775] sm:$0x10]
    %vm1777 = vcmask 1044484
    %v1778 = vsel %vm1777, %v1776, %v1774
    %s1779 = scalar_lea.vmem %s0, 419
    %v1780 = vld [vmem:[%s1779] sm:$0x20]
    %vm1781 = vcmask 1045509
    %v1782 = vsel %vm1781, %v1780, %v1778
    %s1783 = scalar_lea.vmem %s0, 450
    %v1784 = vld [vmem:[%s1783] sm:$0x40]
    %vm1785 = vcmask 1046534
    %v1786 = vsel %vm1785, %v1784, %v1782
    %s1787 = scalar_lea.vmem %s0, 481
    %v1788 = vld [vmem:[%s1787] sm:$0x80]
    %vm1789 = vcmask 1047559
    %v1790 = vsel %vm1789, %v1788, %v1786
    %1791 = vrot.lane.b32.xlu0 %v1790, 32
    %v1792 = vpop.permute.xlu0 %1791
    %vm1793 = vcmask 294144
    %s1794 = scalar_lea.vmem [#allocation2], 64
    %1795 = vst.msk [vmem:[%s1794] ss:$8 sm:$0xf] %vm1793, %v1792
    %s1796 = scalar_lea.vmem [#allocation2], 64
    %1797 = vst.msk [vmem:[%s1796] ss:$8 sm:$0xf0] %vm1793, %v1792
    %s1798 = scalar_lea.vmem %s0, 7
    %v1799 = vld [vmem:[%s1798] sm:$0x1]
    %s1800 = scalar_lea.vmem %s0, 38
    %v1801 = vld [vmem:[%s1800] sm:$0x2]
    %vm1802 = vcmask 1041409
    %v1803 = vsel %vm1802, %v1801, %v1799
    %s1804 = scalar_lea.vmem %s0, 69
    %v1805 = vld [vmem:[%s1804] sm:$0x4]
    %vm1806 = vcmask 1042434
    %v1807 = vsel %vm1806, %v1805, %v1803
    %s1808 = scalar_lea.vmem %s0, 100
    %v1809 = vld [vmem:[%s1808] sm:$0x8]
    %vm1810 = vcmask 1043459
    %v1811 = vsel %vm1810, %v1809, %v1807
    %s1812 = scalar_lea.vmem %s0, 131
    %v1813 = vld [vmem:[%s1812] sm:$0x10]
    %vm1814 = vcmask 1044484
    %v1815 = vsel %vm1814, %v1813, %v1811
    %s1816 = scalar_lea.vmem %s0, 162
    %v1817 = vld [vmem:[%s1816] sm:$0x20]
    %vm1818 = vcmask 1045509
    %v1819 = vsel %vm1818, %v1817, %v1815
    %s1820 = scalar_lea.vmem %s0, 193
    %v1821 = vld [vmem:[%s1820] sm:$0x40]
    %vm1822 = vcmask 1046534
    %v1823 = vsel %vm1822, %v1821, %v1819
    %s1824 = scalar_lea.vmem %s0, 224
    %v1825 = vld [vmem:[%s1824] sm:$0x80]
    %vm1826 = vcmask 1047559
    %v1827 = vsel %vm1826, %v1825, %v1823
    %1828 = vrot.lane.b32.xlu0 %v1827, 28
    %v1829 = vpop.permute.xlu0 %1828
    %vm1830 = vcmask 261344
    %1831 = vst.msk [vmem:[#allocation2] ss:$8 sm:$0xf] %vm1830, %v1829
    %1832 = vst.msk [vmem:[#allocation2] ss:$8 sm:$0xf0] %vm1830, %v1829
    %s1833 = scalar_lea.vmem %s0, 263
    %v1834 = vld [vmem:[%s1833] sm:$0x1]
    %s1835 = scalar_lea.vmem %s0, 294
    %v1836 = vld [vmem:[%s1835] sm:$0x2]
    %vm1837 = vcmask 1041409
    %v1838 = vsel %vm1837, %v1836, %v1834
    %s1839 = scalar_lea.vmem %s0, 325
    %v1840 = vld [vmem:[%s1839] sm:$0x4]
    %vm1841 = vcmask 1042434
    %v1842 = vsel %vm1841, %v1840, %v1838
    %s1843 = scalar_lea.vmem %s0, 356
    %v1844 = vld [vmem:[%s1843] sm:$0x8]
    %vm1845 = vcmask 1043459
    %v1846 = vsel %vm1845, %v1844, %v1842
    %s1847 = scalar_lea.vmem %s0, 387
    %v1848 = vld [vmem:[%s1847] sm:$0x10]
    %vm1849 = vcmask 1044484
    %v1850 = vsel %vm1849, %v1848, %v1846
    %s1851 = scalar_lea.vmem %s0, 418
    %v1852 = vld [vmem:[%s1851] sm:$0x20]
    %vm1853 = vcmask 1045509
    %v1854 = vsel %vm1853, %v1852, %v1850
    %s1855 = scalar_lea.vmem %s0, 449
    %v1856 = vld [vmem:[%s1855] sm:$0x40]
    %vm1857 = vcmask 1046534
    %v1858 = vsel %vm1857, %v1856, %v1854
    %s1859 = scalar_lea.vmem %s0, 480
    %v1860 = vld [vmem:[%s1859] sm:$0x80]
    %vm1861 = vcmask 1047559
    %v1862 = vsel %vm1861, %v1860, %v1858
    %1863 = vrot.lane.b32.xlu0 %v1862, 28
    %v1864 = vpop.permute.xlu0 %1863
    %vm1865 = vcmask 261344
    %s1866 = scalar_lea.vmem [#allocation2], 64
    %1867 = vst.msk [vmem:[%s1866] ss:$8 sm:$0xf] %vm1865, %v1864
    %s1868 = scalar_lea.vmem [#allocation2], 64
    %1869 = vst.msk [vmem:[%s1868] ss:$8 sm:$0xf0] %vm1865, %v1864
    %s1870 = scalar_lea.vmem %s0, 6
    %v1871 = vld [vmem:[%s1870] sm:$0x1]
    %s1872 = scalar_lea.vmem %s0, 37
    %v1873 = vld [vmem:[%s1872] sm:$0x2]
    %vm1874 = vcmask 1041409
    %v1875 = vsel %vm1874, %v1873, %v1871
    %s1876 = scalar_lea.vmem %s0, 68
    %v1877 = vld [vmem:[%s1876] sm:$0x4]
    %vm1878 = vcmask 1042434
    %v1879 = vsel %vm1878, %v1877, %v1875
    %s1880 = scalar_lea.vmem %s0, 99
    %v1881 = vld [vmem:[%s1880] sm:$0x8]
    %vm1882 = vcmask 1043459
    %v1883 = vsel %vm1882, %v1881, %v1879
    %s1884 = scalar_lea.vmem %s0, 130
    %v1885 = vld [vmem:[%s1884] sm:$0x10]
    %vm1886 = vcmask 1044484
    %v1887 = vsel %vm1886, %v1885, %v1883
    %s1888 = scalar_lea.vmem %s0, 161
    %v1889 = vld [vmem:[%s1888] sm:$0x20]
    %vm1890 = vcmask 1045509
    %v1891 = vsel %vm1890, %v1889, %v1887
    %s1892 = scalar_lea.vmem %s0, 192
    %v1893 = vld [vmem:[%s1892] sm:$0x40]
    %vm1894 = vcmask 1046534
    %v1895 = vsel %vm1894, %v1893, %v1891
    %s1896 = scalar_lea.vmem %s0, 223
    %v1897 = vld [vmem:[%s1896] sm:$0x80]
    %vm1898 = vcmask 1047559
    %v1899 = vsel %vm1898, %v1897, %v1895
    %1900 = vrot.lane.b32.xlu0 %v1899, 24
    %v1901 = vpop.permute.xlu0 %1900
    %vm1902 = vcmask 228544
    %1903 = vst.msk [vmem:[#allocation2] ss:$8 sm:$0xf] %vm1902, %v1901
    %1904 = vst.msk [vmem:[#allocation2] ss:$8 sm:$0xf0] %vm1902, %v1901
    %s1905 = scalar_lea.vmem %s0, 262
    %v1906 = vld [vmem:[%s1905] sm:$0x1]
    %s1907 = scalar_lea.vmem %s0, 293
    %v1908 = vld [vmem:[%s1907] sm:$0x2]
    %vm1909 = vcmask 1041409
    %v1910 = vsel %vm1909, %v1908, %v1906
    %s1911 = scalar_lea.vmem %s0, 324
    %v1912 = vld [vmem:[%s1911] sm:$0x4]
    %vm1913 = vcmask 1042434
    %v1914 = vsel %vm1913, %v1912, %v1910
    %s1915 = scalar_lea.vmem %s0, 355
    %v1916 = vld [vmem:[%s1915] sm:$0x8]
    %vm1917 = vcmask 1043459
    %v1918 = vsel %vm1917, %v1916, %v1914
    %s1919 = scalar_lea.vmem %s0, 386
    %v1920 = vld [vmem:[%s1919] sm:$0x10]
    %vm1921 = vcmask 1044484
    %v1922 = vsel %vm1921, %v1920, %v1918
    %s1923 = scalar_lea.vmem %s0, 417
    %v1924 = vld [vmem:[%s1923] sm:$0x20]
    %vm1925 = vcmask 1045509
    %v1926 = vsel %vm1925, %v1924, %v1922
    %s1927 = scalar_lea.vmem %s0, 448
    %v1928 = vld [vmem:[%s1927] sm:$0x40]
    %vm1929 = vcmask 1046534
    %v1930 = vsel %vm1929, %v1928, %v1926
    %s1931 = scalar_lea.vmem %s0, 479
    %v1932 = vld [vmem:[%s1931] sm:$0x80]
    %vm1933 = vcmask 1047559
    %v1934 = vsel %vm1933, %v1932, %v1930
    %1935 = vrot.lane.b32.xlu0 %v1934, 24
    %v1936 = vpop.permute.xlu0 %1935
    %vm1937 = vcmask 228544
    %s1938 = scalar_lea.vmem [#allocation2], 64
    %1939 = vst.msk [vmem:[%s1938] ss:$8 sm:$0xf] %vm1937, %v1936
    %s1940 = scalar_lea.vmem [#allocation2], 64
    %1941 = vst.msk [vmem:[%s1940] ss:$8 sm:$0xf0] %vm1937, %v1936
    %s1942 = scalar_lea.vmem %s0, 5
    %v1943 = vld [vmem:[%s1942] sm:$0x1]
    %s1944 = scalar_lea.vmem %s0, 36
    %v1945 = vld [vmem:[%s1944] sm:$0x2]
    %vm1946 = vcmask 1041409
    %v1947 = vsel %vm1946, %v1945, %v1943
    %s1948 = scalar_lea.vmem %s0, 67
    %v1949 = vld [vmem:[%s1948] sm:$0x4]
    %vm1950 = vcmask 1042434
    %v1951 = vsel %vm1950, %v1949, %v1947
    %s1952 = scalar_lea.vmem %s0, 98
    %v1953 = vld [vmem:[%s1952] sm:$0x8]
    %vm1954 = vcmask 1043459
    %v1955 = vsel %vm1954, %v1953, %v1951
    %s1956 = scalar_lea.vmem %s0, 129
    %v1957 = vld [vmem:[%s1956] sm:$0x10]
    %vm1958 = vcmask 1044484
    %v1959 = vsel %vm1958, %v1957, %v1955
    %s1960 = scalar_lea.vmem %s0, 160
    %v1961 = vld [vmem:[%s1960] sm:$0x20]
    %vm1962 = vcmask 1045509
    %v1963 = vsel %vm1962, %v1961, %v1959
    %s1964 = scalar_lea.vmem %s0, 191
    %v1965 = vld [vmem:[%s1964] sm:$0x40]
    %vm1966 = vcmask 1046534
    %v1967 = vsel %vm1966, %v1965, %v1963
    %s1968 = scalar_lea.vmem %s0, 222
    %v1969 = vld [vmem:[%s1968] sm:$0x80]
    %vm1970 = vcmask 1047559
    %v1971 = vsel %vm1970, %v1969, %v1967
    %1972 = vrot.lane.b32.xlu0 %v1971, 20
    %v1973 = vpop.permute.xlu0 %1972
    %vm1974 = vcmask 195744
    %1975 = vst.msk [vmem:[#allocation2] ss:$8 sm:$0xf] %vm1974, %v1973
    %1976 = vst.msk [vmem:[#allocation2] ss:$8 sm:$0xf0] %vm1974, %v1973
    %s1977 = scalar_lea.vmem %s0, 261
    %v1978 = vld [vmem:[%s1977] sm:$0x1]
    %s1979 = scalar_lea.vmem %s0, 292
    %v1980 = vld [vmem:[%s1979] sm:$0x2]
    %vm1981 = vcmask 1041409
    %v1982 = vsel %vm1981, %v1980, %v1978
    %s1983 = scalar_lea.vmem %s0, 323
    %v1984 = vld [vmem:[%s1983] sm:$0x4]
    %vm1985 = vcmask 1042434
    %v1986 = vsel %vm1985, %v1984, %v1982
    %s1987 = scalar_lea.vmem %s0, 354
    %v1988 = vld [vmem:[%s1987] sm:$0x8]
    %vm1989 = vcmask 1043459
    %v1990 = vsel %vm1989, %v1988, %v1986
    %s1991 = scalar_lea.vmem %s0, 385
    %v1992 = vld [vmem:[%s1991] sm:$0x10]
    %vm1993 = vcmask 1044484
    %v1994 = vsel %vm1993, %v1992, %v1990
    %s1995 = scalar_lea.vmem %s0, 416
    %v1996 = vld [vmem:[%s1995] sm:$0x20]
    %vm1997 = vcmask 1045509
    %v1998 = vsel %vm1997, %v1996, %v1994
    %s1999 = scalar_lea.vmem %s0, 447
    %v2000 = vld [vmem:[%s1999] sm:$0x40]
    %vm2001 = vcmask 1046534
    %v2002 = vsel %vm2001, %v2000, %v1998
    %s2003 = scalar_lea.vmem %s0, 478
    %v2004 = vld [vmem:[%s2003] sm:$0x80]
    %vm2005 = vcmask 1047559
    %v2006 = vsel %vm2005, %v2004, %v2002
    %2007 = vrot.lane.b32.xlu0 %v2006, 20
    %v2008 = vpop.permute.xlu0 %2007
    %vm2009 = vcmask 195744
    %s2010 = scalar_lea.vmem [#allocation2], 64
    %2011 = vst.msk [vmem:[%s2010] ss:$8 sm:$0xf] %vm2009, %v2008
    %s2012 = scalar_lea.vmem [#allocation2], 64
    %2013 = vst.msk [vmem:[%s2012] ss:$8 sm:$0xf0] %vm2009, %v2008
    %s2014 = scalar_lea.vmem %s0, 4
    %v2015 = vld [vmem:[%s2014] sm:$0x1]
    %s2016 = scalar_lea.vmem %s0, 35
    %v2017 = vld [vmem:[%s2016] sm:$0x2]
    %vm2018 = vcmask 1041409
    %v2019 = vsel %vm2018, %v2017, %v2015
    %s2020 = scalar_lea.vmem %s0, 66
    %v2021 = vld [vmem:[%s2020] sm:$0x4]
    %vm2022 = vcmask 1042434
    %v2023 = vsel %vm2022, %v2021, %v2019
    %s2024 = scalar_lea.vmem %s0, 97
    %v2025 = vld [vmem:[%s2024] sm:$0x8]
    %vm2026 = vcmask 1043459
    %v2027 = vsel %vm2026, %v2025, %v2023
    %s2028 = scalar_lea.vmem %s0, 128
    %v2029 = vld [vmem:[%s2028] sm:$0x10]
    %vm2030 = vcmask 1044484
    %v2031 = vsel %vm2030, %v2029, %v2027
    %s2032 = scalar_lea.vmem %s0, 159
    %v2033 = vld [vmem:[%s2032] sm:$0x20]
    %vm2034 = vcmask 1045509
    %v2035 = vsel %vm2034, %v2033, %v2031
    %s2036 = scalar_lea.vmem %s0, 190
    %v2037 = vld [vmem:[%s2036] sm:$0x40]
    %vm2038 = vcmask 1046534
    %v2039 = vsel %vm2038, %v2037, %v2035
    %s2040 = scalar_lea.vmem %s0, 221
    %v2041 = vld [vmem:[%s2040] sm:$0x80]
    %vm2042 = vcmask 1047559
    %v2043 = vsel %vm2042, %v2041, %v2039
    %2044 = vrot.lane.b32.xlu0 %v2043, 16
    %v2045 = vpop.permute.xlu0 %2044
    %vm2046 = vcmask 162944
    %2047 = vst.msk [vmem:[#allocation2] ss:$8 sm:$0xf] %vm2046, %v2045
    %2048 = vst.msk [vmem:[#allocation2] ss:$8 sm:$0xf0] %vm2046, %v2045
    %s2049 = scalar_lea.vmem %s0, 260
    %v2050 = vld [vmem:[%s2049] sm:$0x1]
    %s2051 = scalar_lea.vmem %s0, 291
    %v2052 = vld [vmem:[%s2051] sm:$0x2]
    %vm2053 = vcmask 1041409
    %v2054 = vsel %vm2053, %v2052, %v2050
    %s2055 = scalar_lea.vmem %s0, 322
    %v2056 = vld [vmem:[%s2055] sm:$0x4]
    %vm2057 = vcmask 1042434
    %v2058 = vsel %vm2057, %v2056, %v2054
    %s2059 = scalar_lea.vmem %s0, 353
    %v2060 = vld [vmem:[%s2059] sm:$0x8]
    %vm2061 = vcmask 1043459
    %v2062 = vsel %vm2061, %v2060, %v2058
    %s2063 = scalar_lea.vmem %s0, 384
    %v2064 = vld [vmem:[%s2063] sm:$0x10]
    %vm2065 = vcmask 1044484
    %v2066 = vsel %vm2065, %v2064, %v2062
    %s2067 = scalar_lea.vmem %s0, 415
    %v2068 = vld [vmem:[%s2067] sm:$0x20]
    %vm2069 = vcmask 1045509
    %v2070 = vsel %vm2069, %v2068, %v2066
    %s2071 = scalar_lea.vmem %s0, 446
    %v2072 = vld [vmem:[%s2071] sm:$0x40]
    %vm2073 = vcmask 1046534
    %v2074 = vsel %vm2073, %v2072, %v2070
    %s2075 = scalar_lea.vmem %s0, 477
    %v2076 = vld [vmem:[%s2075] sm:$0x80]
    %vm2077 = vcmask 1047559
    %v2078 = vsel %vm2077, %v2076, %v2074
    %2079 = vrot.lane.b32.xlu0 %v2078, 16
    %v2080 = vpop.permute.xlu0 %2079
    %vm2081 = vcmask 162944
    %s2082 = scalar_lea.vmem [#allocation2], 64
    %2083 = vst.msk [vmem:[%s2082] ss:$8 sm:$0xf] %vm2081, %v2080
    %s2084 = scalar_lea.vmem [#allocation2], 64
    %2085 = vst.msk [vmem:[%s2084] ss:$8 sm:$0xf0] %vm2081, %v2080
    %s2086 = scalar_lea.vmem %s0, 3
    %v2087 = vld [vmem:[%s2086] sm:$0x1]
    %s2088 = scalar_lea.vmem %s0, 34
    %v2089 = vld [vmem:[%s2088] sm:$0x2]
    %vm2090 = vcmask 1041409
    %v2091 = vsel %vm2090, %v2089, %v2087
    %s2092 = scalar_lea.vmem %s0, 65
    %v2093 = vld [vmem:[%s2092] sm:$0x4]
    %vm2094 = vcmask 1042434
    %v2095 = vsel %vm2094, %v2093, %v2091
    %s2096 = scalar_lea.vmem %s0, 96
    %v2097 = vld [vmem:[%s2096] sm:$0x8]
    %vm2098 = vcmask 1043459
    %v2099 = vsel %vm2098, %v2097, %v2095
    %s2100 = scalar_lea.vmem %s0, 127
    %v2101 = vld [vmem:[%s2100] sm:$0x10]
    %vm2102 = vcmask 1044484
    %v2103 = vsel %vm2102, %v2101, %v2099
    %s2104 = scalar_lea.vmem %s0, 158
    %v2105 = vld [vmem:[%s2104] sm:$0x20]
    %vm2106 = vcmask 1045509
    %v2107 = vsel %vm2106, %v2105, %v2103
    %s2108 = scalar_lea.vmem %s0, 189
    %v2109 = vld [vmem:[%s2108] sm:$0x40]
    %vm2110 = vcmask 1046534
    %v2111 = vsel %vm2110, %v2109, %v2107
    %s2112 = scalar_lea.vmem %s0, 220
    %v2113 = vld [vmem:[%s2112] sm:$0x80]
    %vm2114 = vcmask 1047559
    %v2115 = vsel %vm2114, %v2113, %v2111
    %2116 = vrot.lane.b32.xlu0 %v2115, 12
    %v2117 = vpop.permute.xlu0 %2116
    %vm2118 = vcmask 130144
    %2119 = vst.msk [vmem:[#allocation2] ss:$8 sm:$0xf] %vm2118, %v2117
    %2120 = vst.msk [vmem:[#allocation2] ss:$8 sm:$0xf0] %vm2118, %v2117
    %s2121 = scalar_lea.vmem %s0, 259
    %v2122 = vld [vmem:[%s2121] sm:$0x1]
    %s2123 = scalar_lea.vmem %s0, 290
    %v2124 = vld [vmem:[%s2123] sm:$0x2]
    %vm2125 = vcmask 1041409
    %v2126 = vsel %vm2125, %v2124, %v2122
    %s2127 = scalar_lea.vmem %s0, 321
    %v2128 = vld [vmem:[%s2127] sm:$0x4]
    %vm2129 = vcmask 1042434
    %v2130 = vsel %vm2129, %v2128, %v2126
    %s2131 = scalar_lea.vmem %s0, 352
    %v2132 = vld [vmem:[%s2131] sm:$0x8]
    %vm2133 = vcmask 1043459
    %v2134 = vsel %vm2133, %v2132, %v2130
    %s2135 = scalar_lea.vmem %s0, 383
    %v2136 = vld [vmem:[%s2135] sm:$0x10]
    %vm2137 = vcmask 1044484
    %v2138 = vsel %vm2137, %v2136, %v2134
    %s2139 = scalar_lea.vmem %s0, 414
    %v2140 = vld [vmem:[%s2139] sm:$0x20]
    %vm2141 = vcmask 1045509
    %v2142 = vsel %vm2141, %v2140, %v2138
    %s2143 = scalar_lea.vmem %s0, 445
    %v2144 = vld [vmem:[%s2143] sm:$0x40]
    %vm2145 = vcmask 1046534
    %v2146 = vsel %vm2145, %v2144, %v2142
    %s2147 = scalar_lea.vmem %s0, 476
    %v2148 = vld [vmem:[%s2147] sm:$0x80]
    %vm2149 = vcmask 1047559
    %v2150 = vsel %vm2149, %v2148, %v2146
    %2151 = vrot.lane.b32.xlu0 %v2150, 12
    %v2152 = vpop.permute.xlu0 %2151
    %vm2153 = vcmask 130144
    %s2154 = scalar_lea.vmem [#allocation2], 64
    %2155 = vst.msk [vmem:[%s2154] ss:$8 sm:$0xf] %vm2153, %v2152
    %s2156 = scalar_lea.vmem [#allocation2], 64
    %2157 = vst.msk [vmem:[%s2156] ss:$8 sm:$0xf0] %vm2153, %v2152
    %s2158 = scalar_lea.vmem %s0, 2
    %v2159 = vld [vmem:[%s2158] sm:$0x1]
    %s2160 = scalar_lea.vmem %s0, 33
    %v2161 = vld [vmem:[%s2160] sm:$0x2]
    %vm2162 = vcmask 1041409
    %v2163 = vsel %vm2162, %v2161, %v2159
    %s2164 = scalar_lea.vmem %s0, 64
    %v2165 = vld [vmem:[%s2164] sm:$0x4]
    %vm2166 = vcmask 1042434
    %v2167 = vsel %vm2166, %v2165, %v2163
    %s2168 = scalar_lea.vmem %s0, 95
    %v2169 = vld [vmem:[%s2168] sm:$0x8]
    %vm2170 = vcmask 1043459
    %v2171 = vsel %vm2170, %v2169, %v2167
    %s2172 = scalar_lea.vmem %s0, 126
    %v2173 = vld [vmem:[%s2172] sm:$0x10]
    %vm2174 = vcmask 1044484
    %v2175 = vsel %vm2174, %v2173, %v2171
    %s2176 = scalar_lea.vmem %s0, 157
    %v2177 = vld [vmem:[%s2176] sm:$0x20]
    %vm2178 = vcmask 1045509
    %v2179 = vsel %vm2178, %v2177, %v2175
    %s2180 = scalar_lea.vmem %s0, 188
    %v2181 = vld [vmem:[%s2180] sm:$0x40]
    %vm2182 = vcmask 1046534
    %v2183 = vsel %vm2182, %v2181, %v2179
    %s2184 = scalar_lea.vmem %s0, 219
    %v2185 = vld [vmem:[%s2184] sm:$0x80]
    %vm2186 = vcmask 1047559
    %v2187 = vsel %vm2186, %v2185, %v2183
    %2188 = vrot.lane.b32.xlu0 %v2187, 8
    %v2189 = vpop.permute.xlu0 %2188
    %vm2190 = vcmask 97344
    %2191 = vst.msk [vmem:[#allocation2] ss:$8 sm:$0xf] %vm2190, %v2189
    %2192 = vst.msk [vmem:[#allocation2] ss:$8 sm:$0xf0] %vm2190, %v2189
    %s2193 = scalar_lea.vmem %s0, 258
    %v2194 = vld [vmem:[%s2193] sm:$0x1]
    %s2195 = scalar_lea.vmem %s0, 289
    %v2196 = vld [vmem:[%s2195] sm:$0x2]
    %vm2197 = vcmask 1041409
    %v2198 = vsel %vm2197, %v2196, %v2194
    %s2199 = scalar_lea.vmem %s0, 320
    %v2200 = vld [vmem:[%s2199] sm:$0x4]
    %vm2201 = vcmask 1042434
    %v2202 = vsel %vm2201, %v2200, %v2198
    %s2203 = scalar_lea.vmem %s0, 351
    %v2204 = vld [vmem:[%s2203] sm:$0x8]
    %vm2205 = vcmask 1043459
    %v2206 = vsel %vm2205, %v2204, %v2202
    %s2207 = scalar_lea.vmem %s0, 382
    %v2208 = vld [vmem:[%s2207] sm:$0x10]
    %vm2209 = vcmask 1044484
    %v2210 = vsel %vm2209, %v2208, %v2206
    %s2211 = scalar_lea.vmem %s0, 413
    %v2212 = vld [vmem:[%s2211] sm:$0x20]
    %vm2213 = vcmask 1045509
    %v2214 = vsel %vm2213, %v2212, %v2210
    %s2215 = scalar_lea.vmem %s0, 444
    %v2216 = vld [vmem:[%s2215] sm:$0x40]
    %vm2217 = vcmask 1046534
    %v2218 = vsel %vm2217, %v2216, %v2214
    %s2219 = scalar_lea.vmem %s0, 475
    %v2220 = vld [vmem:[%s2219] sm:$0x80]
    %vm2221 = vcmask 1047559
    %v2222 = vsel %vm2221, %v2220, %v2218
    %2223 = vrot.lane.b32.xlu0 %v2222, 8
    %v2224 = vpop.permute.xlu0 %2223
    %vm2225 = vcmask 97344
    %s2226 = scalar_lea.vmem [#allocation2], 64
    %2227 = vst.msk [vmem:[%s2226] ss:$8 sm:$0xf] %vm2225, %v2224
    %s2228 = scalar_lea.vmem [#allocation2], 64
    %2229 = vst.msk [vmem:[%s2228] ss:$8 sm:$0xf0] %vm2225, %v2224
    %s2230 = scalar_lea.vmem %s0, 1
    %v2231 = vld [vmem:[%s2230] sm:$0x1]
    %s2232 = scalar_lea.vmem %s0, 32
    %v2233 = vld [vmem:[%s2232] sm:$0x2]
    %vm2234 = vcmask 1041409
    %v2235 = vsel %vm2234, %v2233, %v2231
    %s2236 = scalar_lea.vmem %s0, 63
    %v2237 = vld [vmem:[%s2236] sm:$0x4]
    %vm2238 = vcmask 1042434
    %v2239 = vsel %vm2238, %v2237, %v2235
    %s2240 = scalar_lea.vmem %s0, 94
    %v2241 = vld [vmem:[%s2240] sm:$0x8]
    %vm2242 = vcmask 1043459
    %v2243 = vsel %vm2242, %v2241, %v2239
    %s2244 = scalar_lea.vmem %s0, 125
    %v2245 = vld [vmem:[%s2244] sm:$0x10]
    %vm2246 = vcmask 1044484
    %v2247 = vsel %vm2246, %v2245, %v2243
    %s2248 = scalar_lea.vmem %s0, 156
    %v2249 = vld [vmem:[%s2248] sm:$0x20]
    %vm2250 = vcmask 1045509
    %v2251 = vsel %vm2250, %v2249, %v2247
    %s2252 = scalar_lea.vmem %s0, 187
    %v2253 = vld [vmem:[%s2252] sm:$0x40]
    %vm2254 = vcmask 1046534
    %v2255 = vsel %vm2254, %v2253, %v2251
    %s2256 = scalar_lea.vmem %s0, 218
    %v2257 = vld [vmem:[%s2256] sm:$0x80]
    %vm2258 = vcmask 1047559
    %v2259 = vsel %vm2258, %v2257, %v2255
    %2260 = vrot.lane.b32.xlu0 %v2259, 4
    %v2261 = vpop.permute.xlu0 %2260
    %vm2262 = vcmask 64544
    %2263 = vst.msk [vmem:[#allocation2] ss:$8 sm:$0xf] %vm2262, %v2261
    %2264 = vst.msk [vmem:[#allocation2] ss:$8 sm:$0xf0] %vm2262, %v2261
    %s2265 = scalar_lea.vmem %s0, 257
    %v2266 = vld [vmem:[%s2265] sm:$0x1]
    %s2267 = scalar_lea.vmem %s0, 288
    %v2268 = vld [vmem:[%s2267] sm:$0x2]
    %vm2269 = vcmask 1041409
    %v2270 = vsel %vm2269, %v2268, %v2266
    %s2271 = scalar_lea.vmem %s0, 319
    %v2272 = vld [vmem:[%s2271] sm:$0x4]
    %vm2273 = vcmask 1042434
    %v2274 = vsel %vm2273, %v2272, %v2270
    %s2275 = scalar_lea.vmem %s0, 350
    %v2276 = vld [vmem:[%s2275] sm:$0x8]
    %vm2277 = vcmask 1043459
    %v2278 = vsel %vm2277, %v2276, %v2274
    %s2279 = scalar_lea.vmem %s0, 381
    %v2280 = vld [vmem:[%s2279] sm:$0x10]
    %vm2281 = vcmask 1044484
    %v2282 = vsel %vm2281, %v2280, %v2278
    %s2283 = scalar_lea.vmem %s0, 412
    %v2284 = vld [vmem:[%s2283] sm:$0x20]
    %vm2285 = vcmask 1045509
    %v2286 = vsel %vm2285, %v2284, %v2282
    %s2287 = scalar_lea.vmem %s0, 443
    %v2288 = vld [vmem:[%s2287] sm:$0x40]
    %vm2289 = vcmask 1046534
    %v2290 = vsel %vm2289, %v2288, %v2286
    %s2291 = scalar_lea.vmem %s0, 474
    %v2292 = vld [vmem:[%s2291] sm:$0x80]
    %vm2293 = vcmask 1047559
    %v2294 = vsel %vm2293, %v2292, %v2290
    %2295 = vrot.lane.b32.xlu0 %v2294, 4
    %v2296 = vpop.permute.xlu0 %2295
    %vm2297 = vcmask 64544
    %s2298 = scalar_lea.vmem [#allocation2], 64
    %2299 = vst.msk [vmem:[%s2298] ss:$8 sm:$0xf] %vm2297, %v2296
    %s2300 = scalar_lea.vmem [#allocation2], 64
    %2301 = vst.msk [vmem:[%s2300] ss:$8 sm:$0xf0] %vm2297, %v2296
    %s2303 = sshllo.u32 0, 1
    %v2305 = vld [vmem:[#allocation2] sm:%s2303]
    %s2306 = sshllo.u32 0, 1
    %2307 = vst [vmem:[#allocation0] sm:%s2306] %v2305
    %s2308 = scalar_lea.vmem [#allocation2], 8
    %v2309 = vld [vmem:[%s2308] sm:%s2303]
    %s2310 = sshllo.u32 0, 1
    %s2311 = scalar_lea.vmem [#allocation0], 1
    %2312 = vst [vmem:[%s2311] sm:%s2310] %v2309
    %s2313 = scalar_lea.vmem [#allocation2], 16
    %v2314 = vld [vmem:[%s2313] sm:%s2303]
    %s2315 = sshllo.u32 0, 1
    %s2316 = smul.addr 1, 2
    %s2317 = scalar_lea.vmem [#allocation0], %s2316
    %2318 = vst [vmem:[%s2317] sm:%s2315] %v2314
    %s2319 = scalar_lea.vmem [#allocation2], 24
    %v2320 = vld [vmem:[%s2319] sm:%s2303]
    %s2321 = sshllo.u32 0, 1
    %s2322 = smul.addr 1, 3
    %s2323 = scalar_lea.vmem [#allocation0], %s2322
    %2324 = vst [vmem:[%s2323] sm:%s2321] %v2320
    %s2325 = scalar_lea.vmem [#allocation2], 32
    %v2326 = vld [vmem:[%s2325] sm:%s2303]
    %s2327 = sshllo.u32 0, 1
    %s2328 = smul.addr 1, 4
    %s2329 = scalar_lea.vmem [#allocation0], %s2328
    %2330 = vst [vmem:[%s2329] sm:%s2327] %v2326
    %s2331 = scalar_lea.vmem [#allocation2], 40
    %v2332 = vld [vmem:[%s2331] sm:%s2303]
    %s2333 = sshllo.u32 0, 1
    %s2334 = smul.addr 1, 5
    %s2335 = scalar_lea.vmem [#allocation0], %s2334
    %2336 = vst [vmem:[%s2335] sm:%s2333] %v2332
    %s2337 = scalar_lea.vmem [#allocation2], 48
    %v2338 = vld [vmem:[%s2337] sm:%s2303]
    %s2339 = sshllo.u32 0, 1
    %s2340 = smul.addr 1, 6
    %s2341 = scalar_lea.vmem [#allocation0], %s2340
    %2342 = vst [vmem:[%s2341] sm:%s2339] %v2338
    %s2343 = scalar_lea.vmem [#allocation2], 56
    %v2344 = vld [vmem:[%s2343] sm:%s2303]
    %s2345 = sshllo.u32 0, 1
    %s2346 = smul.addr 1, 7
    %s2347 = scalar_lea.vmem [#allocation0], %s2346
    %2348 = vst [vmem:[%s2347] sm:%s2345] %v2344
    %s2349 = scalar_lea.vmem [#allocation2], 64
    %v2350 = vld [vmem:[%s2349] sm:%s2303]
    %s2351 = sshllo.u32 0, 1
    %s2352 = smul.addr 1, 8
    %s2353 = scalar_lea.vmem [#allocation0], %s2352
    %2354 = vst [vmem:[%s2353] sm:%s2351] %v2350
    %s2355 = scalar_lea.vmem [#allocation2], 72
    %v2356 = vld [vmem:[%s2355] sm:%s2303]
    %s2357 = sshllo.u32 0, 1
    %s2358 = smul.addr 1, 9
    %s2359 = scalar_lea.vmem [#allocation0], %s2358
    %2360 = vst [vmem:[%s2359] sm:%s2357] %v2356
    %s2361 = scalar_lea.vmem [#allocation2], 80
    %v2362 = vld [vmem:[%s2361] sm:%s2303]
    %s2363 = sshllo.u32 0, 1
    %s2364 = smul.addr 1, 10
    %s2365 = scalar_lea.vmem [#allocation0], %s2364
    %2366 = vst [vmem:[%s2365] sm:%s2363] %v2362
    %s2367 = scalar_lea.vmem [#allocation2], 88
    %v2368 = vld [vmem:[%s2367] sm:%s2303]
    %s2369 = sshllo.u32 0, 1
    %s2370 = smul.addr 1, 11
    %s2371 = scalar_lea.vmem [#allocation0], %s2370
    %2372 = vst [vmem:[%s2371] sm:%s2369] %v2368
    %s2373 = scalar_lea.vmem [#allocation2], 96
    %v2374 = vld [vmem:[%s2373] sm:%s2303]
    %s2375 = sshllo.u32 0, 1
    %s2376 = smul.addr 1, 12
    %s2377 = scalar_lea.vmem [#allocation0], %s2376
    %2378 = vst [vmem:[%s2377] sm:%s2375] %v2374
    %s2379 = scalar_lea.vmem [#allocation2], 104
    %v2380 = vld [vmem:[%s2379] sm:%s2303]
    %s2381 = sshllo.u32 0, 1
    %s2382 = smul.addr 1, 13
    %s2383 = scalar_lea.vmem [#allocation0], %s2382
    %2384 = vst [vmem:[%s2383] sm:%s2381] %v2380
    %s2385 = scalar_lea.vmem [#allocation2], 112
    %v2386 = vld [vmem:[%s2385] sm:%s2303]
    %s2387 = sshllo.u32 0, 1
    %s2388 = smul.addr 1, 14
    %s2389 = scalar_lea.vmem [#allocation0], %s2388
    %2390 = vst [vmem:[%s2389] sm:%s2387] %v2386
    %s2391 = scalar_lea.vmem [#allocation2], 120
    %v2392 = vld [vmem:[%s2391] sm:%s2303]
    %s2393 = sshllo.u32 0, 1
    %s2394 = smul.addr 1, 15
    %s2395 = scalar_lea.vmem [#allocation0], %s2394
    %2396 = vst [vmem:[%s2395] sm:%s2393] %v2392
    %s2398 = ssub.s32 256, 256
    %2399 = vsyncadd [#allocation1], %s2398
    %s2401 = sshll.u32 [#allocation0], 4
    %s2402 = int_to_ptr.vmem [resolvable:$true] %s2401
    %2404 = dma.vmem_to_hbm [thread:$0]  %s2402, 256, %s1, [#allocation1]
    %2405 = dma.done [#allocation1], 256
    %2406 = vsyncpa [#allocation1], 1

// kernel: _lambda_.5
$region0: #{_lambda_.5}
  #allocation0 [shape = 'u32[]', space=smem, size = 0x4, offset = 0x4, fixed_abs, tag = 'smem constant byte address 0x4 - core index']
  #allocation1 [shape = 'u32[144,128]{1,0:T(1,128)}', space=vmem, size = 0x12000, scoped, tag = 'internal scratch']
  %s0 = inlined_call_operand.hbm [shape: bf16[1,2048], index: 0, kind: input, shape index: {}]
  %s1 = inlined_call_operand.hbm [shape: f32[1,2048], index: 1, kind: input, shape index: {}]
  %s2 = inlined_call_operand.hbm [shape: f32[1,2048], index: 2, kind: input, shape index: {}]
  %s3 = inlined_call_operand.hbm [shape: f32[1,2048], index: 3, kind: input, shape index: {}]
  %s4 = inlined_call_operand.hbm [shape: f32[1,2048], index: 4, kind: output, shape index: {}]
  %s5 = sld [smem:[#allocation0]]
  $region42: #{_lambda_.5} parent=0
    _
  %s7 = ssub.s32 1, %s5
  %s8 = scalar_select 0, %s7, %s5
  $region1: #{_lambda_.5} parent=0
    #allocation2 [shape = 'u8[8192]{0}', space=vmem, size = 0x2000, scoped, tag = 'input window, operand 0, single buffered']
    #allocation3 [shape = 's32[1]{0}', space=sflag, size = 0x4, scoped, tag = 'scoped memory for _lambda_.5']
    #allocation4 [shape = 's32[1]{0}', space=sflag, size = 0x4, scoped, tag = 'scoped memory for _lambda_.5']
    #allocation5 [shape = 'u8[8192]{0}', space=vmem, size = 0x2000, scoped, tag = 'input window, operand 1, single buffered']
    #allocation6 [shape = 's32[1]{0}', space=sflag, size = 0x4, scoped, tag = 'scoped memory for _lambda_.5']
    #allocation7 [shape = 'u8[8192]{0}', space=vmem, size = 0x2000, scoped, tag = 'input window, operand 2, single buffered']
    #allocation8 [shape = 'u8[8192]{0}', space=vmem, size = 0x2000, scoped, tag = 'input window, operand 3, single buffered']
    #allocation9 [shape = 's32[1]{0}', space=sflag, size = 0x4, scoped, tag = 'scoped memory for _lambda_.5']
    #allocation10 [shape = 'u8[8192]{0}', space=vmem, size = 0x2000, scoped, tag = 'output window, operand 0, single buffered']
    %9 = vsyncpa [#allocation3], 0
    %10 = vsyncpa [#allocation6], 0
    %11 = vsyncpa [#allocation9], 0
    %12 = vsyncpa [#allocation4], 0
    // Predicated region
    $region2: #{_lambda_.5} parent=1 // pred_check
      _
    $region3: #{_lambda_.5} parent=1 // pred_check_branch
      %14 = sbr.rel (0) target = $region5
    $region4: #{_lambda_.5} parent=1 // pred_region
      %s16 = ssub.s32 256, 256
      %17 = vsyncadd [#allocation3], %s16
      %s19 = sshll.u32 [#allocation2], 4
      %s20 = int_to_ptr.vmem [resolvable:$true] %s19
      %22 = dma.hbm_to_vmem [thread:$0]  %s0, 256, %s20, [#allocation3]
    $region5: #{_lambda_.5} parent=1 // pred_fallthru
      _
    // Predicated region
    $region6: #{_lambda_.5} parent=1 // pred_check
      _
    $region7: #{_lambda_.5} parent=1 // pred_check_branch
      %24 = sbr.rel (0) target = $region9
    $region8: #{_lambda_.5} parent=1 // pred_region
      %s26 = ssub.s32 256, 256
      %27 = vsyncadd [#allocation6], %s26
      %s29 = sshll.u32 [#allocation5], 4
      %s30 = int_to_ptr.vmem [resolvable:$true] %s29
      %32 = dma.hbm_to_vmem [thread:$0]  %s1, 256, %s30, [#allocation6]
    $region9: #{_lambda_.5} parent=1 // pred_fallthru
      _
    // Predicated region
    $region10: #{_lambda_.5} parent=1 // pred_check
      _
    $region11: #{_lambda_.5} parent=1 // pred_check_branch
      %34 = sbr.rel (0) target = $region13
    $region12: #{_lambda_.5} parent=1 // pred_region
      %s36 = ssub.s32 256, 256
      %37 = vsyncadd [#allocation6], %s36
      %s39 = sshll.u32 [#allocation7], 4
      %s40 = int_to_ptr.vmem [resolvable:$true] %s39
      %42 = dma.hbm_to_vmem [thread:$0]  %s2, 256, %s40, [#allocation6]
    $region13: #{_lambda_.5} parent=1 // pred_fallthru
      _
    // Predicated region
    $region14: #{_lambda_.5} parent=1 // pred_check
      _
    $region15: #{_lambda_.5} parent=1 // pred_check_branch
      %44 = sbr.rel (0) target = $region17
    $region16: #{_lambda_.5} parent=1 // pred_region
      %s46 = ssub.s32 256, 256
      %47 = vsyncadd [#allocation9], %s46
      %s49 = sshll.u32 [#allocation8], 4
      %s50 = int_to_ptr.vmem [resolvable:$true] %s49
      %52 = dma.hbm_to_vmem [thread:$0]  %s3, 256, %s50, [#allocation9]
    $region17: #{_lambda_.5} parent=1 // pred_fallthru
      _
    // Predicated region
    $region18: #{_lambda_.5} parent=1 // pred_check
      _
    $region19: #{_lambda_.5} parent=1 // pred_check_branch
      %54 = sbr.rel (0) target = $region21
    $region20: #{_lambda_.5} parent=1 // pred_region
      %55 = dma.done [#allocation3], 256
    $region21: #{_lambda_.5} parent=1 // pred_fallthru
      _
    // Predicated region
    $region22: #{_lambda_.5} parent=1 // pred_check
      _
    $region23: #{_lambda_.5} parent=1 // pred_check_branch
      %57 = sbr.rel (0) target = $region25
    $region24: #{_lambda_.5} parent=1 // pred_region
      %58 = dma.done [#allocation6], 256
    $region25: #{_lambda_.5} parent=1 // pred_fallthru
      _
    // Predicated region
    $region26: #{_lambda_.5} parent=1 // pred_check
      _
    $region27: #{_lambda_.5} parent=1 // pred_check_branch
      %60 = sbr.rel (0) target = $region29
    $region28: #{_lambda_.5} parent=1 // pred_region
      %61 = dma.done [#allocation6], 256
    $region29: #{_lambda_.5} parent=1 // pred_fallthru
      _
    // Predicated region
    $region30: #{_lambda_.5} parent=1 // pred_check
      _
    $region31: #{_lambda_.5} parent=1 // pred_check_branch
      %63 = sbr.rel (0) target = $region33
    $region32: #{_lambda_.5} parent=1 // pred_region
      %64 = dma.done [#allocation9], 256
    $region33: #{_lambda_.5} parent=1 // pred_fallthru
      _
    %v65 = vld [vmem:[#allocation2] sm:$0xff]
    %v66 = vld [vmem:[#allocation2 + $0x8] sm:$0xff]
    %v67 = vunpack.c.l.bf16 %v65
    %v68 = vunpack.c.h.bf16 %v65
    %v69 = vunpack.c.l.bf16 %v66
    %v70 = vunpack.c.h.bf16 %v66
    %v71 = vld [vmem:[#allocation7] sm:$0xff]
    %v72 = vld [vmem:[#allocation7 + $0x8] sm:$0xff]
    %v76 = vunpack.c.l.s4 857870592
    %v77 = vunpack.c.0.s8 %v76
    %v78 = vlaneseq
    %v79 = vshrl.u32 %v78, 7
    %v80 = vsub.s32 %v77, %v79
    %v81 = vrot.slane %v71, %v80
    %v83 = vunpack.c.l.s4 2003195204
    %v84 = vunpack.c.0.s8 %v83
    %v85 = vlaneseq
    %v86 = vshrl.u32 %v85, 7
    %v87 = vsub.s32 %v84, %v86
    %v88 = vrot.slane %v71, %v87
    %v90 = vunpack.c.l.s4 857870592
    %v91 = vunpack.c.0.s8 %v90
    %v92 = vlaneseq
    %v93 = vshrl.u32 %v92, 7
    %v94 = vsub.s32 %v91, %v93
    %v95 = vrot.slane %v72, %v94
    %v97 = vunpack.c.l.s4 2003195204
    %v98 = vunpack.c.0.s8 %v97
    %v99 = vlaneseq
    %v100 = vshrl.u32 %v99, 7
    %v101 = vsub.s32 %v98, %v100
    %v102 = vrot.slane %v72, %v101
    %v107 = vmul.f32 %v67, %v81
    %v108 = vmul.f32 %v68, %v88
    %v109 = vmul.f32 %v69, %v95
    %v110 = vmul.f32 %v70, %v102
    %v111 = vld [vmem:[#allocation8] sm:$0xff]
    %v112 = vld [vmem:[#allocation8 + $0x8] sm:$0xff]
    %v116 = vunpack.c.l.s4 857870592
    %v117 = vunpack.c.0.s8 %v116
    %v118 = vlaneseq
    %v119 = vshrl.u32 %v118, 7
    %v120 = vsub.s32 %v117, %v119
    %v121 = vrot.slane %v111, %v120
    %v123 = vunpack.c.l.s4 2003195204
    %v124 = vunpack.c.0.s8 %v123
    %v125 = vlaneseq
    %v126 = vshrl.u32 %v125, 7
    %v127 = vsub.s32 %v124, %v126
    %v128 = vrot.slane %v111, %v127
    %v130 = vunpack.c.l.s4 857870592
    %v131 = vunpack.c.0.s8 %v130
    %v132 = vlaneseq
    %v133 = vshrl.u32 %v132, 7
    %v134 = vsub.s32 %v131, %v133
    %v135 = vrot.slane %v112, %v134
    %v137 = vunpack.c.l.s4 2003195204
    %v138 = vunpack.c.0.s8 %v137
    %v139 = vlaneseq
    %v140 = vshrl.u32 %v139, 7
    %v141 = vsub.s32 %v138, %v140
    %v142 = vrot.slane %v112, %v141
    %v147 = vadd.f32 %v107, %v121
    %v148 = vadd.f32 %v108, %v128
    %v149 = vadd.f32 %v109, %v135
    %v150 = vadd.f32 %v110, %v142
    %v151 = vld [vmem:[#allocation5] sm:$0xff]
    %v152 = vld [vmem:[#allocation5 + $0x8] sm:$0xff]
    %v156 = vunpack.c.l.s4 857870592
    %v157 = vunpack.c.0.s8 %v156
    %v158 = vlaneseq
    %v159 = vshrl.u32 %v158, 7
    %v160 = vsub.s32 %v157, %v159
    %v161 = vrot.slane %v151, %v160
    %v163 = vunpack.c.l.s4 2003195204
    %v164 = vunpack.c.0.s8 %v163
    %v165 = vlaneseq
    %v166 = vshrl.u32 %v165, 7
    %v167 = vsub.s32 %v164, %v166
    %v168 = vrot.slane %v151, %v167
    %v170 = vunpack.c.l.s4 857870592
    %v171 = vunpack.c.0.s8 %v170
    %v172 = vlaneseq
    %v173 = vshrl.u32 %v172, 7
    %v174 = vsub.s32 %v171, %v173
    %v175 = vrot.slane %v152, %v174
    %v177 = vunpack.c.l.s4 2003195204
    %v178 = vunpack.c.0.s8 %v177
    %v179 = vlaneseq
    %v180 = vshrl.u32 %v179, 7
    %v181 = vsub.s32 %v178, %v180
    %v182 = vrot.slane %v152, %v181
    %v187 = vadd.f32 %v147, %v161
    %v188 = vadd.f32 %v148, %v168
    %v189 = vadd.f32 %v149, %v175
    %v190 = vadd.f32 %v150, %v182
    %v191 = vmax.f32 %v187, 0.0
    %v192 = vmax.f32 %v188, 0.0
    %v193 = vmax.f32 %v189, 0.0
    %v194 = vmax.f32 %v190, 0.0
    %v200 = vunpack.c.l.s4 1966171168
    %v201 = vunpack.c.0.s8 %v200
    %v202 = vlaneseq
    %v203 = vshrl.u32 %v202, 7
    %v204 = vsub.s32 %v201, %v203
    %v205 = vrot.slane %v191, %v204
    %v207 = vunpack.c.l.s4 1966171168
    %v208 = vunpack.c.0.s8 %v207
    %v209 = vlaneseq
    %v210 = vshrl.u32 %v209, 7
    %v211 = vsub.s32 %v208, %v210
    %v212 = vrot.slane %v192, %v211
    %v213 = vcombine.low %v205, %v212
    %v215 = vunpack.c.l.s4 1966171168
    %v216 = vunpack.c.0.s8 %v215
    %v217 = vlaneseq
    %v218 = vshrl.u32 %v217, 7
    %v219 = vsub.s32 %v216, %v218
    %v220 = vrot.slane %v193, %v219
    %v222 = vunpack.c.l.s4 1966171168
    %v223 = vunpack.c.0.s8 %v222
    %v224 = vlaneseq
    %v225 = vshrl.u32 %v224, 7
    %v226 = vsub.s32 %v223, %v225
    %v227 = vrot.slane %v194, %v226
    %v228 = vcombine.low %v220, %v227
    %231 = vst [vmem:[#allocation10] sm:$0xff] %v213
    %232 = vst [vmem:[#allocation10 + $0x8] sm:$0xff] %v228
    // Predicated region
    $region34: #{_lambda_.5} parent=1 // pred_check
      _
    $region35: #{_lambda_.5} parent=1 // pred_check_branch
      %234 = sbr.rel (0) target = $region37
    $region36: #{_lambda_.5} parent=1 // pred_region
      %s236 = ssub.s32 256, 256
      %237 = vsyncadd [#allocation4], %s236
      %s239 = sshll.u32 [#allocation10], 4
      %s240 = int_to_ptr.vmem [resolvable:$true] %s239
      %242 = dma.vmem_to_hbm [thread:$0]  %s240, 256, %s4, [#allocation4]
    $region37: #{_lambda_.5} parent=1 // pred_fallthru
      _
    // Predicated region
    $region38: #{_lambda_.5} parent=1 // pred_check
      _
    $region39: #{_lambda_.5} parent=1 // pred_check_branch
      %244 = sbr.rel (0) target = $region41
    $region40: #{_lambda_.5} parent=1 // pred_region
      %245 = dma.done [#allocation4], 256
    $region41: #{_lambda_.5} parent=1 // pred_fallthru
      _
    %246 = vsyncpa [#allocation3], 1
    %247 = vsyncpa [#allocation6], 1
    %248 = vsyncpa [#allocation9], 1
    %249 = vsyncpa [#allocation4], 1

// kernel: _lambda_.3
$region0: #{_lambda_.3}
  #allocation0 [shape = 'u32[]', space=smem, size = 0x4, offset = 0x4, fixed_abs, tag = 'smem constant byte address 0x4 - core index']
  #allocation1 [shape = 'u32[144,128]{1,0:T(1,128)}', space=vmem, size = 0x12000, scoped, tag = 'internal scratch']
  #allocation2 [shape = 'bf16[256,36]{1,0:T(16,128)(2,1)}', space=vmem, size = 0x10000, scoped, tag = 'scratch operand']
  %s0 = inlined_call_operand.hbm [shape: bf16[2,18,18,4], index: 0, kind: input, shape index: {}]
  %s1 = inlined_call_operand.hbm [shape: bf16[36,4], index: 1, kind: input, shape index: {}]
  %s2 = inlined_call_operand.hbm [shape: f32[1,4], index: 2, kind: input, shape index: {}]
  %s3 = inlined_call_operand.hbm [shape: bf16[2,18,18,4], index: 3, kind: output, shape index: {0}]
  %s4 = inlined_call_operand.hbm [shape: f32[2,1,4], index: 4, kind: output, shape index: {1}]
  %s5 = inlined_call_operand.hbm [shape: f32[2,1,4], index: 5, kind: output, shape index: {2}]
  %6 = xla_tuple %s3, %s4, %s5
  %s7 = sld [smem:[#allocation0]]
  $region73: #{_lambda_.3} parent=0
    _
  %s9 = ssub.s32 1, %s7
  %s10 = scalar_select 0, %s9, %s7
  $region1: #{_lambda_.3} parent=0
    #allocation3 [shape = 'u8[221184]{0}', space=vmem, size = 0x36000, scoped, tag = 'input window, operand 0']
    #allocation4 [shape = 's32[2]{0}', space=sflag, size = 0x8, scoped, tag = 'scoped memory for _lambda_.3']
    #allocation5 [shape = 's32[2]{0}', space=sflag, size = 0x8, scoped, tag = 'scoped memory for _lambda_.3']
    #allocation6 [shape = 'u8[10240]{0}', space=vmem, size = 0x2800, scoped, tag = 'input window, operand 1, single buffered']
    #allocation7 [shape = 's32[1]{0}', space=sflag, size = 0x4, scoped, tag = 'scoped memory for _lambda_.3']
    #allocation8 [shape = 'u8[512]{0}', space=vmem, size = 0x400, scoped, tag = 'input window, operand 2, single buffered']
    #allocation9 [shape = 'u8[221184]{0}', space=vmem, size = 0x36000, scoped, tag = 'output window, operand 0']
    #allocation10 [shape = 'u8[1024]{0}', space=vmem, size = 0x400, scoped, tag = 'output window, operand 1']
    #allocation11 [shape = 's32[2]{0}', space=sflag, size = 0x8, scoped, tag = 'scoped memory for _lambda_.3']
    #allocation12 [shape = 'u8[1024]{0}', space=vmem, size = 0x400, scoped, tag = 'output window, operand 2']
    %11 = vsyncpa [#allocation4], 0
    %s12 = scalar_lea.sflag [#allocation4], 1
    %13 = vsyncpa %s12, 0
    %14 = vsyncpa [#allocation7], 0
    %15 = vsyncpa [#allocation5], 0
    %s16 = scalar_lea.sflag [#allocation5], 1
    %17 = vsyncpa %s16, 0
    %18 = vsyncpa [#allocation11], 0
    %s19 = scalar_lea.sflag [#allocation11], 1
    %20 = vsyncpa %s19, 0
    loop: start=0, step=1, limit=4
    $region2: #{_lambda_.3} parent=1 // loop_pre_header
      _
    $region3: #{_lambda_.3} parent=1 // loop_header
      %s22 = sphi 0, %s26
      %p23 = scmp.ge.s32.totalorder %s22, 4
      %s32 = sphi 0, %s34
      %s35 = sphi 0, %s32
      %s36 = sphi 0, %s35
      %s52 = sphi 0, %s36
      %s56 = sphi 0, %s56
      %s58 = sphi 0, %s56
      %s59 = sphi 0, %s58
      %s73 = sphi 0, %s59
      %s77 = sphi 0, %s77
      %s79 = sphi 0, %s77
      %s80 = sphi 0, %s79
      %s94 = sphi 0, %s80
      %s100 = sphi 0, %s102
      %s103 = sphi 0, %s100
      %s104 = sphi 0, %s103
      %s120 = sphi 0, %s104
      %s126 = sphi 0, %s128
      %s129 = sphi 0, %s126
      %s130 = sphi 0, %s129
      %s146 = sphi 0, %s130
      %s152 = sphi 0, %s154
      %s155 = sphi 0, %s152
      %s156 = sphi 0, %s155
      %s172 = sphi 0, %s156
    $region4: #{_lambda_.3} parent=1 // loop_header_branch
      %25 = sbr.rel (%p23) target = $region8
    $region5: #{_lambda_.3} parent=1 // loop_body
      %s27 = ssub.s32 %s22, 1
      %s28 = ssub.s32 %s22, 2
      %s29 = sadd.s32 %s22, 1
      %s30 = ssub.s32 %s22, %s29
      %p31 = scmp.eq.s32.totalorder %s30, 0
      %s33 = sadd.s32 %s32, 1
      %s34 = scalar_select %p31, %s32, %s33
      %p37 = pneg %p31
      %p38 = scmp.eq.s32.totalorder %s22, 1
      %p39 = por %p37, %p38
      %p40 = scmp.ne.s32.totalorder %s32, %s35
      %p41 = scmp.eq.s32.totalorder %s22, 0
      %p42 = por %p40, %p41
      %p43 = scmp.ne.s32.totalorder %s32, %s35
      %p44 = scmp.eq.s32.totalorder %s27, 1
      %p45 = por %p43, %p44
      %p46 = scmp.ne.s32.totalorder %s35, %s36
      %p47 = scmp.eq.s32.totalorder %s27, 0
      %p48 = por %p46, %p47
      %p49 = scmp.ne.s32.totalorder %s35, %s36
      %p50 = scmp.eq.s32.totalorder %s28, 1
      %p51 = por %p49, %p50
      %p53 = scmp.ne.s32.totalorder %s36, %s52
      %p54 = scmp.eq.s32.totalorder %s28, 0
      %p55 = por %p53, %p54
      %s57 = sadd.s32 %s56, 1
      %p60 = scmp.eq.s32.totalorder %s22, 1
      %p61 = scmp.ne.s32.totalorder %s56, %s58
      %p62 = scmp.eq.s32.totalorder %s22, 0
      %p63 = por %p61, %p62
      %p64 = scmp.ne.s32.totalorder %s56, %s58
      %p65 = scmp.eq.s32.totalorder %s27, 1
      %p66 = por %p64, %p65
      %p67 = scmp.ne.s32.totalorder %s58, %s59
      %p68 = scmp.eq.s32.totalorder %s27, 0
      %p69 = por %p67, %p68
      %p70 = scmp.ne.s32.totalorder %s58, %s59
      %p71 = scmp.eq.s32.totalorder %s28, 1
      %p72 = por %p70, %p71
      %p74 = scmp.ne.s32.totalorder %s59, %s73
      %p75 = scmp.eq.s32.totalorder %s28, 0
      %p76 = por %p74, %p75
      %s78 = sadd.s32 %s77, 1
      %p81 = scmp.eq.s32.totalorder %s22, 1
      %p82 = scmp.ne.s32.totalorder %s77, %s79
      %p83 = scmp.eq.s32.totalorder %s22, 0
      %p84 = por %p82, %p83
      %p85 = scmp.ne.s32.totalorder %s77, %s79
      %p86 = scmp.eq.s32.totalorder %s27, 1
      %p87 = por %p85, %p86
      %p88 = scmp.ne.s32.totalorder %s79, %s80
      %p89 = scmp.eq.s32.totalorder %s27, 0
      %p90 = por %p88, %p89
      %p91 = scmp.ne.s32.totalorder %s79, %s80
      %p92 = scmp.eq.s32.totalorder %s28, 1
      %p93 = por %p91, %p92
      %p95 = scmp.ne.s32.totalorder %s80, %s94
      %p96 = scmp.eq.s32.totalorder %s28, 0
      %p97 = por %p95, %p96
      %s98 = ssub.s32 %s22, %s29
      %p99 = scmp.eq.s32.totalorder %s98, 0
      %s101 = sadd.s32 %s100, 1
      %s102 = scalar_select %p99, %s100, %s101
      %p105 = pneg %p99
      %p106 = scmp.eq.s32.totalorder %s22, 1
      %p107 = por %p105, %p106
      %p108 = scmp.ne.s32.totalorder %s100, %s103
      %p109 = scmp.eq.s32.totalorder %s22, 0
      %p110 = por %p108, %p109
      %p111 = scmp.ne.s32.totalorder %s100, %s103
      %p112 = scmp.eq.s32.totalorder %s27, 1
      %p113 = por %p111, %p112
      %p114 = scmp.ne.s32.totalorder %s103, %s104
      %p115 = scmp.eq.s32.totalorder %s27, 0
      %p116 = por %p114, %p115
      %p117 = scmp.ne.s32.totalorder %s103, %s104
      %p118 = scmp.eq.s32.totalorder %s28, 1
      %p119 = por %p117, %p118
      %p121 = scmp.ne.s32.totalorder %s104, %s120
      %p122 = scmp.eq.s32.totalorder %s28, 0
      %p123 = por %p121, %p122
      %s124 = ssub.s32 %s22, %s29
      %p125 = scmp.eq.s32.totalorder %s124, 0
      %s127 = sadd.s32 %s126, 1
      %s128 = scalar_select %p125, %s126, %s127
      %p131 = pneg %p125
      %p132 = scmp.eq.s32.totalorder %s22, 1
      %p133 = por %p131, %p132
      %p134 = scmp.ne.s32.totalorder %s126, %s129
      %p135 = scmp.eq.s32.totalorder %s22, 0
      %p136 = por %p134, %p135
      %p137 = scmp.ne.s32.totalorder %s126, %s129
      %p138 = scmp.eq.s32.totalorder %s27, 1
      %p139 = por %p137, %p138
      %p140 = scmp.ne.s32.totalorder %s129, %s130
      %p141 = scmp.eq.s32.totalorder %s27, 0
      %p142 = por %p140, %p141
      %p143 = scmp.ne.s32.totalorder %s129, %s130
      %p144 = scmp.eq.s32.totalorder %s28, 1
      %p145 = por %p143, %p144
      %p147 = scmp.ne.s32.totalorder %s130, %s146
      %p148 = scmp.eq.s32.totalorder %s28, 0
      %p149 = por %p147, %p148
      %s150 = ssub.s32 %s22, %s29
      %p151 = scmp.eq.s32.totalorder %s150, 0
      %s153 = sadd.s32 %s152, 1
      %s154 = scalar_select %p151, %s152, %s153
      %p157 = pneg %p151
      %p158 = scmp.eq.s32.totalorder %s22, 1
      %p159 = por %p157, %p158
      %p160 = scmp.ne.s32.totalorder %s152, %s155
      %p161 = scmp.eq.s32.totalorder %s22, 0
      %p162 = por %p160, %p161
      %p163 = scmp.ne.s32.totalorder %s152, %s155
      %p164 = scmp.eq.s32.totalorder %s27, 1
      %p165 = por %p163, %p164
      %p166 = scmp.ne.s32.totalorder %s155, %s156
      %p167 = scmp.eq.s32.totalorder %s27, 0
      %p168 = por %p166, %p167
      %p169 = scmp.ne.s32.totalorder %s155, %s156
      %p170 = scmp.eq.s32.totalorder %s28, 1
      %p171 = por %p169, %p170
      %p173 = scmp.ne.s32.totalorder %s156, %s172
      %p174 = scmp.eq.s32.totalorder %s28, 0
      %p175 = por %p173, %p174
      %p176 = scmp.le.s32.totalorder 1, %s22
      %p177 = scmp.lt.s32.totalorder %s22, 3
      %p178 = pnand %p176, %p177
      %p179 = pneg %p178
      // Predicated region
      $region9: #{_lambda_.3} parent=5 // pred_check
        _
      $region10: #{_lambda_.3} parent=5 // pred_check_branch
        %181 = sbr.rel (%p178) target = $region12
      $region11: #{_lambda_.3} parent=5 // pred_region
        %s182 = ssub.s32 %s22, 1
        // Predicated region
        $region13: #{_lambda_.3} parent=11 // pred_check
          %p183 = pneg %p69
        $region14: #{_lambda_.3} parent=11 // pred_check_branch
          %185 = sbr.rel (%p183) target = $region16
        $region15: #{_lambda_.3} parent=11 // pred_region
          %s187 = ssub.s32 320, 320
          %188 = vsyncadd [#allocation7], %s187
          %s189 = sshll.u32 [#allocation6], 4
          %s190 = int_to_ptr.vmem [resolvable:$true] %s189
          %195 = dma.hbm_to_vmem [thread:$0]  %s1, 320, %s190, [#allocation7], 64, 64, 4
        $region16: #{_lambda_.3} parent=11 // pred_fallthru
          _
        // Predicated region
        $region17: #{_lambda_.3} parent=11 // pred_check
          %p196 = pneg %p90
        $region18: #{_lambda_.3} parent=11 // pred_check_branch
          %198 = sbr.rel (%p196) target = $region20
        $region19: #{_lambda_.3} parent=11 // pred_region
          %s200 = ssub.s32 16, 16
          %201 = vsyncadd [#allocation7], %s200
          %s203 = sshll.u32 [#allocation8], 4
          %s204 = int_to_ptr.vmem [resolvable:$true] %s203
          %206 = dma.hbm_to_vmem [thread:$0]  %s2, 16, %s204, [#allocation7]
        $region20: #{_lambda_.3} parent=11 // pred_fallthru
          _
      $region12: #{_lambda_.3} parent=5 // pred_fallthru
        _
      %p207 = scmp.lt.s32.totalorder %s22, 2
      // Predicated region
      $region21: #{_lambda_.3} parent=5 // pred_check
        %p208 = pneg %p207
      $region22: #{_lambda_.3} parent=5 // pred_check_branch
        %210 = sbr.rel (%p208) target = $region24
      $region23: #{_lambda_.3} parent=5 // pred_region
        // Predicated region
        $region25: #{_lambda_.3} parent=23 // pred_check
          %p211 = pneg %p42
        $region26: #{_lambda_.3} parent=23 // pred_check_branch
          %213 = sbr.rel (%p211) target = $region28
        $region27: #{_lambda_.3} parent=23 // pred_region
          %s214 = sand.u32 %s32, 1
          %s215 = scalar_lea.sflag [#allocation4], %s214
          %s216 = sand.u32 %s32, 1
          %s217 = smul.addr %s216, 216
          %s218 = scalar_lea.vmem [#allocation3], %s217
          %s220 = ssub.s32 3456, 3456
          %221 = vsyncadd %s215, %s220
          %s222 = smul.addr %s22, 54
          %s223 = smul.addr %s222, 64
          %s224 = scalar_lea.hbm %s0, %s223
          %s225 = sshll.u32 %s218, 4
          %s226 = int_to_ptr.vmem [resolvable:$true] %s225
          %231 = dma.hbm_to_vmem [thread:$0]  %s224, 3456, %s226, %s215, 64, 64, 4
        $region28: #{_lambda_.3} parent=23 // pred_fallthru
          _
      $region24: #{_lambda_.3} parent=5 // pred_fallthru
        _
      %p232 = scmp.le.s32.totalorder 1, %s22
      %p233 = scmp.lt.s32.totalorder %s22, 3
      %p234 = pnand %p232, %p233
      %p235 = pneg %p234
      // Predicated region
      $region29: #{_lambda_.3} parent=5 // pred_check
        _
      $region30: #{_lambda_.3} parent=5 // pred_check_branch
        %237 = sbr.rel (%p234) target = $region32
      $region31: #{_lambda_.3} parent=5 // pred_region
        %s238 = ssub.s32 %s22, 1
        %s239 = sand.u32 %s35, 1
        %s240 = scalar_lea.sflag [#allocation4], %s239
        %s241 = sand.u32 %s35, 1
        %s242 = smul.addr %s241, 216
        %s243 = scalar_lea.vmem [#allocation3], %s242
        // Predicated region
        $region33: #{_lambda_.3} parent=31 // pred_check
          %p244 = pneg %p48
        $region34: #{_lambda_.3} parent=31 // pred_check_branch
          %246 = sbr.rel (%p244) target = $region36
        $region35: #{_lambda_.3} parent=31 // pred_region
          %247 = dma.done %s240, 3456
        $region36: #{_lambda_.3} parent=31 // pred_fallthru
          _
        // Predicated region
        $region37: #{_lambda_.3} parent=31 // pred_check
          %p248 = pneg %p69
        $region38: #{_lambda_.3} parent=31 // pred_check_branch
          %250 = sbr.rel (%p248) target = $region40
        $region39: #{_lambda_.3} parent=31 // pred_region
          %251 = dma.done [#allocation7], 320
        $region40: #{_lambda_.3} parent=31 // pred_fallthru
          _
        // Predicated region
        $region41: #{_lambda_.3} parent=31 // pred_check
          %p252 = pneg %p90
        $region42: #{_lambda_.3} parent=31 // pred_check_branch
          %254 = sbr.rel (%p252) target = $region44
        $region43: #{_lambda_.3} parent=31 // pred_region
          %255 = dma.done [#allocation7], 16
        $region44: #{_lambda_.3} parent=31 // pred_fallthru
          _
        %s256 = sand.u32 %s35, 1
        %s257 = scalar_lea.sflag [#allocation4], %s256
        %s258 = sand.u32 %s35, 1
        %s259 = smul.addr %s258, 216
        %s260 = scalar_lea.vmem [#allocation3], %s259
        %p261 = pneg %p48
        %p262 = pneg %p45
        %p263 = pneg %p69
        %p264 = pneg %p66
        %p265 = pneg %p90
        %p266 = pneg %p87
        %p267 = pneg %p116
        %p268 = pneg %p113
        %s269 = sand.u32 %s103, 1
        %s270 = scalar_lea.sflag [#allocation5], %s269
        %s271 = sand.u32 %s103, 1
        %s272 = smul.addr %s271, 216
        %s273 = scalar_lea.vmem [#allocation9], %s272
        %p274 = pneg %p142
        %p275 = pneg %p139
        %s276 = sand.u32 %s27, 1
        %s277 = scalar_lea.sflag [#allocation11], %s276
        %s278 = sand.u32 %s129, 1
        %s279 = scalar_lea.vmem [#allocation10], %s278
        %p280 = pneg %p168
        %p281 = pneg %p165
        %s282 = sand.u32 %s27, 1
        %s283 = scalar_lea.sflag [#allocation11], %s282
        %s284 = sand.u32 %s155, 1
        %s285 = scalar_lea.vmem [#allocation12], %s284
        %v287 = vld [vmem:[%s243] sm:$0xf]
        %v288 = vld [vmem:[%s243 + $0x4] sm:$0xf]
        %v289 = vld [vmem:[%s243 + $0xc] sm:$0xf]
        %v290 = vld [vmem:[%s243 + $0x10] sm:$0xf]
        %v291 = vld [vmem:[%s243 + $0x18] sm:$0xf]
        %v292 = vld [vmem:[%s243 + $0x1c] sm:$0xf]
        %v293 = vld [vmem:[%s243 + $0x24] sm:$0xf]
        %v294 = vld [vmem:[%s243 + $0x28] sm:$0xf]
        %v295 = vld [vmem:[%s243 + $0x30] sm:$0xf]
        %v296 = vld [vmem:[%s243 + $0x34] sm:$0xf]
        %v297 = vld [vmem:[%s243 + $0x3c] sm:$0xf]
        %v298 = vld [vmem:[%s243 + $0x40] sm:$0xf]
        %v299 = vld [vmem:[%s243 + $0x48] sm:$0xf]
        %v300 = vld [vmem:[%s243 + $0x4c] sm:$0xf]
        %v301 = vld [vmem:[%s243 + $0x54] sm:$0xf]
        %v302 = vld [vmem:[%s243 + $0x58] sm:$0xf]
        %v303 = vld [vmem:[%s243 + $0x60] sm:$0xf]
        %v304 = vld [vmem:[%s243 + $0x64] sm:$0xf]
        %v305 = vld [vmem:[%s243 + $0x6c] sm:$0xf]
        %v306 = vld [vmem:[%s243 + $0x70] sm:$0xf]
        %v307 = vld [vmem:[%s243 + $0x78] sm:$0xf]
        %v308 = vld [vmem:[%s243 + $0x7c] sm:$0xf]
        %v309 = vld [vmem:[%s243 + $0x84] sm:$0xf]
        %v310 = vld [vmem:[%s243 + $0x88] sm:$0xf]
        %v311 = vld [vmem:[%s243 + $0x90] sm:$0xf]
        %v312 = vld [vmem:[%s243 + $0x94] sm:$0xf]
        %v313 = vld [vmem:[%s243 + $0x9c] sm:$0xf]
        %v314 = vld [vmem:[%s243 + $0xa0] sm:$0xf]
        %v315 = vld [vmem:[%s243 + $0xa8] sm:$0xf]
        %v316 = vld [vmem:[%s243 + $0xac] sm:$0xf]
        %v317 = vld [vmem:[%s243 + $0xb4] sm:$0xf]
        %v318 = vld [vmem:[%s243 + $0xb8] sm:$0xf]
        %v351 = vunpack.c.l.b16 %v287
        %v352 = vunpack.c.l.b16 %v288
        %v353 = vunpack.c.l.b16 %v289
        %v354 = vunpack.c.l.b16 %v290
        %v355 = vunpack.c.l.b16 %v291
        %v356 = vunpack.c.l.b16 %v292
        %v357 = vunpack.c.l.b16 %v293
        %v358 = vunpack.c.l.b16 %v294
        %v359 = vunpack.c.l.b16 %v295
        %v360 = vunpack.c.l.b16 %v296
        %v361 = vunpack.c.l.b16 %v297
        %v362 = vunpack.c.l.b16 %v298
        %v363 = vunpack.c.l.b16 %v299
        %v364 = vunpack.c.l.b16 %v300
        %v365 = vunpack.c.l.b16 %v301
        %v366 = vunpack.c.l.b16 %v302
        %v367 = vunpack.c.l.b16 %v303
        %v368 = vunpack.c.l.b16 %v304
        %v369 = vunpack.c.l.b16 %v305
        %v370 = vunpack.c.l.b16 %v306
        %v371 = vunpack.c.l.b16 %v307
        %v372 = vunpack.c.l.b16 %v308
        %v373 = vunpack.c.l.b16 %v309
        %v374 = vunpack.c.l.b16 %v310
        %v375 = vunpack.c.l.b16 %v311
        %v376 = vunpack.c.l.b16 %v312
        %v377 = vunpack.c.l.b16 %v313
        %v378 = vunpack.c.l.b16 %v314
        %v379 = vunpack.c.l.b16 %v315
        %v380 = vunpack.c.l.b16 %v316
        %v381 = vunpack.c.l.b16 %v317
        %v382 = vunpack.c.l.b16 %v318
        %v383 = vpack.c.b16 %v352, %v351
        %v384 = vpack.c.b16 %v354, %v353
        %v385 = vpack.c.b16 %v356, %v355
        %v386 = vpack.c.b16 %v358, %v357
        %v387 = vpack.c.b16 %v360, %v359
        %v388 = vpack.c.b16 %v362, %v361
        %v389 = vpack.c.b16 %v364, %v363
        %v390 = vpack.c.b16 %v366, %v365
        %v391 = vpack.c.b16 %v368, %v367
        %v392 = vpack.c.b16 %v370, %v369
        %v393 = vpack.c.b16 %v372, %v371
        %v394 = vpack.c.b16 %v374, %v373
        %v395 = vpack.c.b16 %v376, %v375
        %v396 = vpack.c.b16 %v378, %v377
        %v397 = vpack.c.b16 %v380, %v379
        %v398 = vpack.c.b16 %v382, %v381
        %vm415 = vcmask 31744
        %416 = vst.msk [vmem:[#allocation2] sm:$0xff] %vm415, %v383
        %417 = vst.msk [vmem:[#allocation2 + $0x8] sm:$0xff] %vm415, %v384
        %418 = vst.msk [vmem:[#allocation2 + $0x10] sm:$0xff] %vm415, %v385
        %419 = vst.msk [vmem:[#allocation2 + $0x18] sm:$0xff] %vm415, %v386
        %420 = vst.msk [vmem:[#allocation2 + $0x20] sm:$0xff] %vm415, %v387
        %421 = vst.msk [vmem:[#allocation2 + $0x28] sm:$0xff] %vm415, %v388
        %422 = vst.msk [vmem:[#allocation2 + $0x30] sm:$0xff] %vm415, %v389
        %423 = vst.msk [vmem:[#allocation2 + $0x38] sm:$0xff] %vm415, %v390
        %424 = vst.msk [vmem:[#allocation2 + $0x40] sm:$0xff] %vm415, %v391
        %425 = vst.msk [vmem:[#allocation2 + $0x48] sm:$0xff] %vm415, %v392
        %426 = vst.msk [vmem:[#allocation2 + $0x50] sm:$0xff] %vm415, %v393
        %427 = vst.msk [vmem:[#allocation2 + $0x58] sm:$0xff] %vm415, %v394
        %428 = vst.msk [vmem:[#allocation2 + $0x60] sm:$0xff] %vm415, %v395
        %429 = vst.msk [vmem:[#allocation2 + $0x68] sm:$0xff] %vm415, %v396
        %430 = vst.msk [vmem:[#allocation2 + $0x70] sm:$0xff] %vm415, %v397
        %431 = vst.msk [vmem:[#allocation2 + $0x78] sm:$0xff] %vm415, %v398
        %v432 = vld [vmem:[%s243] sm:$0xf]
        %v433 = vld [vmem:[%s243 + $0x4] sm:$0xf]
        %v434 = vld [vmem:[%s243 + $0x8] sm:$0x1]
        %v435 = vld [vmem:[%s243 + $0xc] sm:$0xf]
        %v436 = vld [vmem:[%s243 + $0x10] sm:$0xf]
        %v437 = vld [vmem:[%s243 + $0x14] sm:$0x1]
        %v438 = vld [vmem:[%s243 + $0x18] sm:$0xf]
        %v439 = vld [vmem:[%s243 + $0x1c] sm:$0xf]
        %v440 = vld [vmem:[%s243 + $0x20] sm:$0x1]
        %v441 = vld [vmem:[%s243 + $0x24] sm:$0xf]
        %v442 = vld [vmem:[%s243 + $0x28] sm:$0xf]
        %v443 = vld [vmem:[%s243 + $0x2c] sm:$0x1]
        %v444 = vld [vmem:[%s243 + $0x30] sm:$0xf]
        %v445 = vld [vmem:[%s243 + $0x34] sm:$0xf]
        %v446 = vld [vmem:[%s243 + $0x38] sm:$0x1]
        %v447 = vld [vmem:[%s243 + $0x3c] sm:$0xf]
        %v448 = vld [vmem:[%s243 + $0x40] sm:$0xf]
        %v449 = vld [vmem:[%s243 + $0x44] sm:$0x1]
        %v450 = vld [vmem:[%s243 + $0x48] sm:$0xf]
        %v451 = vld [vmem:[%s243 + $0x4c] sm:$0xf]
        %v452 = vld [vmem:[%s243 + $0x50] sm:$0x1]
        %v453 = vld [vmem:[%s243 + $0x54] sm:$0xf]
        %v454 = vld [vmem:[%s243 + $0x58] sm:$0xf]
        %v455 = vld [vmem:[%s243 + $0x5c] sm:$0x1]
        %v456 = vld [vmem:[%s243 + $0x60] sm:$0xf]
        %v457 = vld [vmem:[%s243 + $0x64] sm:$0xf]
        %v458 = vld [vmem:[%s243 + $0x68] sm:$0x1]
        %v459 = vld [vmem:[%s243 + $0x6c] sm:$0xf]
        %v460 = vld [vmem:[%s243 + $0x70] sm:$0xf]
        %v461 = vld [vmem:[%s243 + $0x74] sm:$0x1]
        %v462 = vld [vmem:[%s243 + $0x78] sm:$0xf]
        %v463 = vld [vmem:[%s243 + $0x7c] sm:$0xf]
        %v464 = vld [vmem:[%s243 + $0x80] sm:$0x1]
        %v465 = vld [vmem:[%s243 + $0x84] sm:$0xf]
        %v466 = vld [vmem:[%s243 + $0x88] sm:$0xf]
        %v467 = vld [vmem:[%s243 + $0x8c] sm:$0x1]
        %v468 = vld [vmem:[%s243 + $0x90] sm:$0xf]
        %v469 = vld [vmem:[%s243 + $0x94] sm:$0xf]
        %v470 = vld [vmem:[%s243 + $0x98] sm:$0x1]
        %v471 = vld [vmem:[%s243 + $0x9c] sm:$0xf]
        %v472 = vld [vmem:[%s243 + $0xa0] sm:$0xf]
        %v473 = vld [vmem:[%s243 + $0xa4] sm:$0x1]
        %v474 = vld [vmem:[%s243 + $0xa8] sm:$0xf]
        %v475 = vld [vmem:[%s243 + $0xac] sm:$0xf]
        %v476 = vld [vmem:[%s243 + $0xb0] sm:$0x1]
        %v477 = vld [vmem:[%s243 + $0xb4] sm:$0xf]
        %v478 = vld [vmem:[%s243 + $0xb8] sm:$0xf]
        %v479 = vld [vmem:[%s243 + $0xbc] sm:$0x1]
        %vm480 = vsmask.f32 3328
        %vm481 = vsmask.f32 7440
        %vm482 = vmor %vm480, %vm481
        %v484 = vshrl.u32 %v432, 16
        %v486 = vrot.slane %v484, 4
        %v487 = vshll.u32 %v432, 16
        %v489 = vrot.slane %v487, 5
        %v490 = vor.u32 %v486, %v489
        %v491 = vrot.slane %v490, 4
        %v493 = vshll.u32 %v433, 16
        %v495 = vrot.slane %v493, 5
        %v496 = vsel %vm482, %v491, %v495
        %v497 = vshrl.u32 %v433, 16
        %v499 = vrot.slane %v497, 4
        %v500 = vor.u32 %v499, %v495
        %v501 = vrot.slane %v500, 4
        %v503 = vshll.u32 %v434, 16
        %v505 = vrot.slane %v503, 5
        %v506 = vsel %vm482, %v501, %v505
        %v508 = vshrl.u32 %v435, 16
        %v510 = vrot.slane %v508, 4
        %v511 = vshll.u32 %v435, 16
        %v513 = vrot.slane %v511, 5
        %v514 = vor.u32 %v510, %v513
        %v515 = vrot.slane %v514, 4
        %v517 = vshll.u32 %v436, 16
        %v519 = vrot.slane %v517, 5
        %v520 = vsel %vm482, %v515, %v519
        %v521 = vshrl.u32 %v436, 16
        %v523 = vrot.slane %v521, 4
        %v524 = vor.u32 %v523, %v519
        %v525 = vrot.slane %v524, 4
        %v527 = vshll.u32 %v437, 16
        %v529 = vrot.slane %v527, 5
        %v530 = vsel %vm482, %v525, %v529
        %v532 = vshrl.u32 %v438, 16
        %v534 = vrot.slane %v532, 4
        %v535 = vshll.u32 %v438, 16
        %v537 = vrot.slane %v535, 5
        %v538 = vor.u32 %v534, %v537
        %v539 = vrot.slane %v538, 4
        %v541 = vshll.u32 %v439, 16
        %v543 = vrot.slane %v541, 5
        %v544 = vsel %vm482, %v539, %v543
        %v545 = vshrl.u32 %v439, 16
        %v547 = vrot.slane %v545, 4
        %v548 = vor.u32 %v547, %v543
        %v549 = vrot.slane %v548, 4
        %v551 = vshll.u32 %v440, 16
        %v553 = vrot.slane %v551, 5
        %v554 = vsel %vm482, %v549, %v553
        %v556 = vshrl.u32 %v441, 16
        %v558 = vrot.slane %v556, 4
        %v559 = vshll.u32 %v441, 16
        %v561 = vrot.slane %v559, 5
        %v562 = vor.u32 %v558, %v561
        %v563 = vrot.slane %v562, 4
        %v565 = vshll.u32 %v442, 16
        %v567 = vrot.slane %v565, 5
        %v568 = vsel %vm482, %v563, %v567
        %v569 = vshrl.u32 %v442, 16
        %v571 = vrot.slane %v569, 4
        %v572 = vor.u32 %v571, %v567
        %v573 = vrot.slane %v572, 4
        %v575 = vshll.u32 %v443, 16
        %v577 = vrot.slane %v575, 5
        %v578 = vsel %vm482, %v573, %v577
        %v580 = vshrl.u32 %v444, 16
        %v582 = vrot.slane %v580, 4
        %v583 = vshll.u32 %v444, 16
        %v585 = vrot.slane %v583, 5
        %v586 = vor.u32 %v582, %v585
        %v587 = vrot.slane %v586, 4
        %v589 = vshll.u32 %v445, 16
        %v591 = vrot.slane %v589, 5
        %v592 = vsel %vm482, %v587, %v591
        %v593 = vshrl.u32 %v445, 16
        %v595 = vrot.slane %v593, 4
        %v596 = vor.u32 %v595, %v591
        %v597 = vrot.slane %v596, 4
        %v599 = vshll.u32 %v446, 16
        %v601 = vrot.slane %v599, 5
        %v602 = vsel %vm482, %v597, %v601
        %v604 = vshrl.u32 %v447, 16
        %v606 = vrot.slane %v604, 4
        %v607 = vshll.u32 %v447, 16
        %v609 = vrot.slane %v607, 5
        %v610 = vor.u32 %v606, %v609
        %v611 = vrot.slane %v610, 4
        %v613 = vshll.u32 %v448, 16
        %v615 = vrot.slane %v613, 5
        %v616 = vsel %vm482, %v611, %v615
        %v617 = vshrl.u32 %v448, 16
        %v619 = vrot.slane %v617, 4
        %v620 = vor.u32 %v619, %v615
        %v621 = vrot.slane %v620, 4
        %v623 = vshll.u32 %v449, 16
        %v625 = vrot.slane %v623, 5
        %v626 = vsel %vm482, %v621, %v625
        %v628 = vshrl.u32 %v450, 16
        %v630 = vrot.slane %v628, 4
        %v631 = vshll.u32 %v450, 16
        %v633 = vrot.slane %v631, 5
        %v634 = vor.u32 %v630, %v633
        %v635 = vrot.slane %v634, 4
        %v637 = vshll.u32 %v451, 16
        %v639 = vrot.slane %v637, 5
        %v640 = vsel %vm482, %v635, %v639
        %v641 = vshrl.u32 %v451, 16
        %v643 = vrot.slane %v641, 4
        %v644 = vor.u32 %v643, %v639
        %v645 = vrot.slane %v644, 4
        %v647 = vshll.u32 %v452, 16
        %v649 = vrot.slane %v647, 5
        %v650 = vsel %vm482, %v645, %v649
        %v652 = vshrl.u32 %v453, 16
        %v654 = vrot.slane %v652, 4
        %v655 = vshll.u32 %v453, 16
        %v657 = vrot.slane %v655, 5
        %v658 = vor.u32 %v654, %v657
        %v659 = vrot.slane %v658, 4
        %v661 = vshll.u32 %v454, 16
        %v663 = vrot.slane %v661, 5
        %v664 = vsel %vm482, %v659, %v663
        %v665 = vshrl.u32 %v454, 16
        %v667 = vrot.slane %v665, 4
        %v668 = vor.u32 %v667, %v663
        %v669 = vrot.slane %v668, 4
        %v671 = vshll.u32 %v455, 16
        %v673 = vrot.slane %v671, 5
        %v674 = vsel %vm482, %v669, %v673
        %v676 = vshrl.u32 %v456, 16
        %v678 = vrot.slane %v676, 4
        %v679 = vshll.u32 %v456, 16
        %v681 = vrot.slane %v679, 5
        %v682 = vor.u32 %v678, %v681
        %v683 = vrot.slane %v682, 4
        %v685 = vshll.u32 %v457, 16
        %v687 = vrot.slane %v685, 5
        %v688 = vsel %vm482, %v683, %v687
        %v689 = vshrl.u32 %v457, 16
        %v691 = vrot.slane %v689, 4
        %v692 = vor.u32 %v691, %v687
        %v693 = vrot.slane %v692, 4
        %v695 = vshll.u32 %v458, 16
        %v697 = vrot.slane %v695, 5
        %v698 = vsel %vm482, %v693, %v697
        %v700 = vshrl.u32 %v459, 16
        %v702 = vrot.slane %v700, 4
        %v703 = vshll.u32 %v459, 16
        %v705 = vrot.slane %v703, 5
        %v706 = vor.u32 %v702, %v705
        %v707 = vrot.slane %v706, 4
        %v709 = vshll.u32 %v460, 16
        %v711 = vrot.slane %v709, 5
        %v712 = vsel %vm482, %v707, %v711
        %v713 = vshrl.u32 %v460, 16
        %v715 = vrot.slane %v713, 4
        %v716 = vor.u32 %v715, %v711
        %v717 = vrot.slane %v716, 4
        %v719 = vshll.u32 %v461, 16
        %v721 = vrot.slane %v719, 5
        %v722 = vsel %vm482, %v717, %v721
        %v724 = vshrl.u32 %v462, 16
        %v726 = vrot.slane %v724, 4
        %v727 = vshll.u32 %v462, 16
        %v729 = vrot.slane %v727, 5
        %v730 = vor.u32 %v726, %v729
        %v731 = vrot.slane %v730, 4
        %v733 = vshll.u32 %v463, 16
        %v735 = vrot.slane %v733, 5
        %v736 = vsel %vm482, %v731, %v735
        %v737 = vshrl.u32 %v463, 16
        %v739 = vrot.slane %v737, 4
        %v740 = vor.u32 %v739, %v735
        %v741 = vrot.slane %v740, 4
        %v743 = vshll.u32 %v464, 16
        %v745 = vrot.slane %v743, 5
        %v746 = vsel %vm482, %v741, %v745
        %v748 = vshrl.u32 %v465, 16
        %v750 = vrot.slane %v748, 4
        %v751 = vshll.u32 %v465, 16
        %v753 = vrot.slane %v751, 5
        %v754 = vor.u32 %v750, %v753
        %v755 = vrot.slane %v754, 4
        %v757 = vshll.u32 %v466, 16
        %v759 = vrot.slane %v757, 5
        %v760 = vsel %vm482, %v755, %v759
        %v761 = vshrl.u32 %v466, 16
        %v763 = vrot.slane %v761, 4
        %v764 = vor.u32 %v763, %v759
        %v765 = vrot.slane %v764, 4
        %v767 = vshll.u32 %v467, 16
        %v769 = vrot.slane %v767, 5
        %v770 = vsel %vm482, %v765, %v769
        %v772 = vshrl.u32 %v468, 16
        %v774 = vrot.slane %v772, 4
        %v775 = vshll.u32 %v468, 16
        %v777 = vrot.slane %v775, 5
        %v778 = vor.u32 %v774, %v777
        %v779 = vrot.slane %v778, 4
        %v781 = vshll.u32 %v469, 16
        %v783 = vrot.slane %v781, 5
        %v784 = vsel %vm482, %v779, %v783
        %v785 = vshrl.u32 %v469, 16
        %v787 = vrot.slane %v785, 4
        %v788 = vor.u32 %v787, %v783
        %v789 = vrot.slane %v788, 4
        %v791 = vshll.u32 %v470, 16
        %v793 = vrot.slane %v791, 5
        %v794 = vsel %vm482, %v789, %v793
        %v796 = vshrl.u32 %v471, 16
        %v798 = vrot.slane %v796, 4
        %v799 = vshll.u32 %v471, 16
        %v801 = vrot.slane %v799, 5
        %v802 = vor.u32 %v798, %v801
        %v803 = vrot.slane %v802, 4
        %v805 = vshll.u32 %v472, 16
        %v807 = vrot.slane %v805, 5
        %v808 = vsel %vm482, %v803, %v807
        %v809 = vshrl.u32 %v472, 16
        %v811 = vrot.slane %v809, 4
        %v812 = vor.u32 %v811, %v807
        %v813 = vrot.slane %v812, 4
        %v815 = vshll.u32 %v473, 16
        %v817 = vrot.slane %v815, 5
        %v818 = vsel %vm482, %v813, %v817
        %v820 = vshrl.u32 %v474, 16
        %v822 = vrot.slane %v820, 4
        %v823 = vshll.u32 %v474, 16
        %v825 = vrot.slane %v823, 5
        %v826 = vor.u32 %v822, %v825
        %v827 = vrot.slane %v826, 4
        %v829 = vshll.u32 %v475, 16
        %v831 = vrot.slane %v829, 5
        %v832 = vsel %vm482, %v827, %v831
        %v833 = vshrl.u32 %v475, 16
        %v835 = vrot.slane %v833, 4
        %v836 = vor.u32 %v835, %v831
        %v837 = vrot.slane %v836, 4
        %v839 = vshll.u32 %v476, 16
        %v841 = vrot.slane %v839, 5
        %v842 = vsel %vm482, %v837, %v841
        %v844 = vshrl.u32 %v477, 16
        %v846 = vrot.slane %v844, 4
        %v847 = vshll.u32 %v477, 16
        %v849 = vrot.slane %v847, 5
        %v850 = vor.u32 %v846, %v849
        %v851 = vrot.slane %v850, 4
        %v853 = vshll.u32 %v478, 16
        %v855 = vrot.slane %v853, 5
        %v856 = vsel %vm482, %v851, %v855
        %v857 = vshrl.u32 %v478, 16
        %v859 = vrot.slane %v857, 4
        %v860 = vor.u32 %v859, %v855
        %v861 = vrot.slane %v860, 4
        %v863 = vshll.u32 %v479, 16
        %v865 = vrot.slane %v863, 5
        %v866 = vsel %vm482, %v861, %v865
        %v867 = vunpack.c.l.b16 %v496
        %v868 = vunpack.c.l.b16 %v506
        %v869 = vunpack.c.l.b16 %v520
        %v870 = vunpack.c.l.b16 %v530
        %v871 = vunpack.c.l.b16 %v544
        %v872 = vunpack.c.l.b16 %v554
        %v873 = vunpack.c.l.b16 %v568
        %v874 = vunpack.c.l.b16 %v578
        %v875 = vunpack.c.l.b16 %v592
        %v876 = vunpack.c.l.b16 %v602
        %v877 = vunpack.c.l.b16 %v616
        %v878 = vunpack.c.l.b16 %v626
        %v879 = vunpack.c.l.b16 %v640
        %v880 = vunpack.c.l.b16 %v650
        %v881 = vunpack.c.l.b16 %v664
        %v882 = vunpack.c.l.b16 %v674
        %v883 = vunpack.c.l.b16 %v688
        %v884 = vunpack.c.l.b16 %v698
        %v885 = vunpack.c.l.b16 %v712
        %v886 = vunpack.c.l.b16 %v722
        %v887 = vunpack.c.l.b16 %v736
        %v888 = vunpack.c.l.b16 %v746
        %v889 = vunpack.c.l.b16 %v760
        %v890 = vunpack.c.l.b16 %v770
        %v891 = vunpack.c.l.b16 %v784
        %v892 = vunpack.c.l.b16 %v794
        %v893 = vunpack.c.l.b16 %v808
        %v894 = vunpack.c.l.b16 %v818
        %v895 = vunpack.c.l.b16 %v832
        %v896 = vunpack.c.l.b16 %v842
        %v897 = vunpack.c.l.b16 %v856
        %v898 = vunpack.c.l.b16 %v866
        %v899 = vpack.c.b16 %v868, %v867
        %v900 = vpack.c.b16 %v870, %v869
        %v901 = vpack.c.b16 %v872, %v871
        %v902 = vpack.c.b16 %v874, %v873
        %v903 = vpack.c.b16 %v876, %v875
        %v904 = vpack.c.b16 %v878, %v877
        %v905 = vpack.c.b16 %v880, %v879
        %v906 = vpack.c.b16 %v882, %v881
        %v907 = vpack.c.b16 %v884, %v883
        %v908 = vpack.c.b16 %v886, %v885
        %v909 = vpack.c.b16 %v888, %v887
        %v910 = vpack.c.b16 %v890, %v889
        %v911 = vpack.c.b16 %v892, %v891
        %v912 = vpack.c.b16 %v894, %v893
        %v913 = vpack.c.b16 %v896, %v895
        %v914 = vpack.c.b16 %v898, %v897
        %915 = vrot.lane.b32.xlu0 %v899, 4
        %v916 = vpop.permute.xlu0 %915
        %917 = vrot.lane.b32.xlu0 %v900, 4
        %v918 = vpop.permute.xlu0 %917
        %919 = vrot.lane.b32.xlu0 %v901, 4
        %v920 = vpop.permute.xlu0 %919
        %921 = vrot.lane.b32.xlu0 %v902, 4
        %v922 = vpop.permute.xlu0 %921
        %923 = vrot.lane.b32.xlu0 %v903, 4
        %v924 = vpop.permute.xlu0 %923
        %925 = vrot.lane.b32.xlu0 %v904, 4
        %v926 = vpop.permute.xlu0 %925
        %927 = vrot.lane.b32.xlu0 %v905, 4
        %v928 = vpop.permute.xlu0 %927
        %929 = vrot.lane.b32.xlu0 %v906, 4
        %v930 = vpop.permute.xlu0 %929
        %931 = vrot.lane.b32.xlu0 %v907, 4
        %v932 = vpop.permute.xlu0 %931
        %933 = vrot.lane.b32.xlu0 %v908, 4
        %v934 = vpop.permute.xlu0 %933
        %935 = vrot.lane.b32.xlu0 %v909, 4
        %v936 = vpop.permute.xlu0 %935
        %937 = vrot.lane.b32.xlu0 %v910, 4
        %v938 = vpop.permute.xlu0 %937
        %939 = vrot.lane.b32.xlu0 %v911, 4
        %v940 = vpop.permute.xlu0 %939
        %941 = vrot.lane.b32.xlu0 %v912, 4
        %v942 = vpop.permute.xlu0 %941
        %943 = vrot.lane.b32.xlu0 %v913, 4
        %v944 = vpop.permute.xlu0 %943
        %945 = vrot.lane.b32.xlu0 %v914, 4
        %v946 = vpop.permute.xlu0 %945
        %vm963 = vcmask 64544
        %964 = vst.msk [vmem:[#allocation2] sm:$0xff] %vm963, %v916
        %965 = vst.msk [vmem:[#allocation2 + $0x8] sm:$0xff] %vm963, %v918
        %966 = vst.msk [vmem:[#allocation2 + $0x10] sm:$0xff] %vm963, %v920
        %967 = vst.msk [vmem:[#allocation2 + $0x18] sm:$0xff] %vm963, %v922
        %968 = vst.msk [vmem:[#allocation2 + $0x20] sm:$0xff] %vm963, %v924
        %969 = vst.msk [vmem:[#allocation2 + $0x28] sm:$0xff] %vm963, %v926
        %970 = vst.msk [vmem:[#allocation2 + $0x30] sm:$0xff] %vm963, %v928
        %971 = vst.msk [vmem:[#allocation2 + $0x38] sm:$0xff] %vm963, %v930
        %972 = vst.msk [vmem:[#allocation2 + $0x40] sm:$0xff] %vm963, %v932
        %973 = vst.msk [vmem:[#allocation2 + $0x48] sm:$0xff] %vm963, %v934
        %974 = vst.msk [vmem:[#allocation2 + $0x50] sm:$0xff] %vm963, %v936
        %975 = vst.msk [vmem:[#allocation2 + $0x58] sm:$0xff] %vm963, %v938
        %976 = vst.msk [vmem:[#allocation2 + $0x60] sm:$0xff] %vm963, %v940
        %977 = vst.msk [vmem:[#allocation2 + $0x68] sm:$0xff] %vm963, %v942
        %978 = vst.msk [vmem:[#allocation2 + $0x70] sm:$0xff] %vm963, %v944
        %979 = vst.msk [vmem:[#allocation2 + $0x78] sm:$0xff] %vm963, %v946
        %v980 = vld [vmem:[%s243] sm:$0xe]
        %v981 = vld [vmem:[%s243 + $0x4] sm:$0xf]
        %v982 = vld [vmem:[%s243 + $0x8] sm:$0x1]
        %v983 = vld [vmem:[%s243 + $0xc] sm:$0xe]
        %v984 = vld [vmem:[%s243 + $0x10] sm:$0xf]
        %v985 = vld [vmem:[%s243 + $0x14] sm:$0x1]
        %v986 = vld [vmem:[%s243 + $0x18] sm:$0xe]
        %v987 = vld [vmem:[%s243 + $0x1c] sm:$0xf]
        %v988 = vld [vmem:[%s243 + $0x20] sm:$0x1]
        %v989 = vld [vmem:[%s243 + $0x24] sm:$0xe]
        %v990 = vld [vmem:[%s243 + $0x28] sm:$0xf]
        %v991 = vld [vmem:[%s243 + $0x2c] sm:$0x1]
        %v992 = vld [vmem:[%s243 + $0x30] sm:$0xe]
        %v993 = vld [vmem:[%s243 + $0x34] sm:$0xf]
        %v994 = vld [vmem:[%s243 + $0x38] sm:$0x1]
        %v995 = vld [vmem:[%s243 + $0x3c] sm:$0xe]
        %v996 = vld [vmem:[%s243 + $0x40] sm:$0xf]
        %v997 = vld [vmem:[%s243 + $0x44] sm:$0x1]
        %v998 = vld [vmem:[%s243 + $0x48] sm:$0xe]
        %v999 = vld [vmem:[%s243 + $0x4c] sm:$0xf]
        %v1000 = vld [vmem:[%s243 + $0x50] sm:$0x1]
        %v1001 = vld [vmem:[%s243 + $0x54] sm:$0xe]
        %v1002 = vld [vmem:[%s243 + $0x58] sm:$0xf]
        %v1003 = vld [vmem:[%s243 + $0x5c] sm:$0x1]
        %v1004 = vld [vmem:[%s243 + $0x60] sm:$0xe]
        %v1005 = vld [vmem:[%s243 + $0x64] sm:$0xf]
        %v1006 = vld [vmem:[%s243 + $0x68] sm:$0x1]
        %v1007 = vld [vmem:[%s243 + $0x6c] sm:$0xe]
        %v1008 = vld [vmem:[%s243 + $0x70] sm:$0xf]
        %v1009 = vld [vmem:[%s243 + $0x74] sm:$0x1]
        %v1010 = vld [vmem:[%s243 + $0x78] sm:$0xe]
        %v1011 = vld [vmem:[%s243 + $0x7c] sm:$0xf]
        %v1012 = vld [vmem:[%s243 + $0x80] sm:$0x1]
        %v1013 = vld [vmem:[%s243 + $0x84] sm:$0xe]
        %v1014 = vld [vmem:[%s243 + $0x88] sm:$0xf]
        %v1015 = vld [vmem:[%s243 + $0x8c] sm:$0x1]
        %v1016 = vld [vmem:[%s243 + $0x90] sm:$0xe]
        %v1017 = vld [vmem:[%s243 + $0x94] sm:$0xf]
        %v1018 = vld [vmem:[%s243 + $0x98] sm:$0x1]
        %v1019 = vld [vmem:[%s243 + $0x9c] sm:$0xe]
        %v1020 = vld [vmem:[%s243 + $0xa0] sm:$0xf]
        %v1021 = vld [vmem:[%s243 + $0xa4] sm:$0x1]
        %v1022 = vld [vmem:[%s243 + $0xa8] sm:$0xe]
        %v1023 = vld [vmem:[%s243 + $0xac] sm:$0xf]
        %v1024 = vld [vmem:[%s243 + $0xb0] sm:$0x1]
        %v1025 = vld [vmem:[%s243 + $0xb4] sm:$0xe]
        %v1026 = vld [vmem:[%s243 + $0xb8] sm:$0xf]
        %v1027 = vld [vmem:[%s243 + $0xbc] sm:$0x1]
        %vm1076 = vcmask 1042432
        %vm1077 = vcmask 1046532
        %vm1078 = vmor %vm1076, %vm1077
        %v1079 = vrot.slane %v980, 5
        %v1080 = vrot.slane %v1079, 4
        %v1081 = vrot.slane %v981, 5
        %v1082 = vsel %vm1078, %v1080, %v1081
        %v1083 = vrot.slane %v1081, 4
        %v1084 = vrot.slane %v982, 5
        %v1085 = vsel %vm1078, %v1083, %v1084
        %v1086 = vrot.slane %v983, 5
        %v1087 = vrot.slane %v1086, 4
        %v1088 = vrot.slane %v984, 5
        %v1089 = vsel %vm1078, %v1087, %v1088
        %v1090 = vrot.slane %v1088, 4
        %v1091 = vrot.slane %v985, 5
        %v1092 = vsel %vm1078, %v1090, %v1091
        %v1093 = vrot.slane %v986, 5
        %v1094 = vrot.slane %v1093, 4
        %v1095 = vrot.slane %v987, 5
        %v1096 = vsel %vm1078, %v1094, %v1095
        %v1097 = vrot.slane %v1095, 4
        %v1098 = vrot.slane %v988, 5
        %v1099 = vsel %vm1078, %v1097, %v1098
        %v1100 = vrot.slane %v989, 5
        %v1101 = vrot.slane %v1100, 4
        %v1102 = vrot.slane %v990, 5
        %v1103 = vsel %vm1078, %v1101, %v1102
        %v1104 = vrot.slane %v1102, 4
        %v1105 = vrot.slane %v991, 5
        %v1106 = vsel %vm1078, %v1104, %v1105
        %v1107 = vrot.slane %v992, 5
        %v1108 = vrot.slane %v1107, 4
        %v1109 = vrot.slane %v993, 5
        %v1110 = vsel %vm1078, %v1108, %v1109
        %v1111 = vrot.slane %v1109, 4
        %v1112 = vrot.slane %v994, 5
        %v1113 = vsel %vm1078, %v1111, %v1112
        %v1114 = vrot.slane %v995, 5
        %v1115 = vrot.slane %v1114, 4
        %v1116 = vrot.slane %v996, 5
        %v1117 = vsel %vm1078, %v1115, %v1116
        %v1118 = vrot.slane %v1116, 4
        %v1119 = vrot.slane %v997, 5
        %v1120 = vsel %vm1078, %v1118, %v1119
        %v1121 = vrot.slane %v998, 5
        %v1122 = vrot.slane %v1121, 4
        %v1123 = vrot.slane %v999, 5
        %v1124 = vsel %vm1078, %v1122, %v1123
        %v1125 = vrot.slane %v1123, 4
        %v1126 = vrot.slane %v1000, 5
        %v1127 = vsel %vm1078, %v1125, %v1126
        %v1128 = vrot.slane %v1001, 5
        %v1129 = vrot.slane %v1128, 4
        %v1130 = vrot.slane %v1002, 5
        %v1131 = vsel %vm1078, %v1129, %v1130
        %v1132 = vrot.slane %v1130, 4
        %v1133 = vrot.slane %v1003, 5
        %v1134 = vsel %vm1078, %v1132, %v1133
        %v1135 = vrot.slane %v1004, 5
        %v1136 = vrot.slane %v1135, 4
        %v1137 = vrot.slane %v1005, 5
        %v1138 = vsel %vm1078, %v1136, %v1137
        %v1139 = vrot.slane %v1137, 4
        %v1140 = vrot.slane %v1006, 5
        %v1141 = vsel %vm1078, %v1139, %v1140
        %v1142 = vrot.slane %v1007, 5
        %v1143 = vrot.slane %v1142, 4
        %v1144 = vrot.slane %v1008, 5
        %v1145 = vsel %vm1078, %v1143, %v1144
        %v1146 = vrot.slane %v1144, 4
        %v1147 = vrot.slane %v1009, 5
        %v1148 = vsel %vm1078, %v1146, %v1147
        %v1149 = vrot.slane %v1010, 5
        %v1150 = vrot.slane %v1149, 4
        %v1151 = vrot.slane %v1011, 5
        %v1152 = vsel %vm1078, %v1150, %v1151
        %v1153 = vrot.slane %v1151, 4
        %v1154 = vrot.slane %v1012, 5
        %v1155 = vsel %vm1078, %v1153, %v1154
        %v1156 = vrot.slane %v1013, 5
        %v1157 = vrot.slane %v1156, 4
        %v1158 = vrot.slane %v1014, 5
        %v1159 = vsel %vm1078, %v1157, %v1158
        %v1160 = vrot.slane %v1158, 4
        %v1161 = vrot.slane %v1015, 5
        %v1162 = vsel %vm1078, %v1160, %v1161
        %v1163 = vrot.slane %v1016, 5
        %v1164 = vrot.slane %v1163, 4
        %v1165 = vrot.slane %v1017, 5
        %v1166 = vsel %vm1078, %v1164, %v1165
        %v1167 = vrot.slane %v1165, 4
        %v1168 = vrot.slane %v1018, 5
        %v1169 = vsel %vm1078, %v1167, %v1168
        %v1170 = vrot.slane %v1019, 5
        %v1171 = vrot.slane %v1170, 4
        %v1172 = vrot.slane %v1020, 5
        %v1173 = vsel %vm1078, %v1171, %v1172
        %v1174 = vrot.slane %v1172, 4
        %v1175 = vrot.slane %v1021, 5
        %v1176 = vsel %vm1078, %v1174, %v1175
        %v1177 = vrot.slane %v1022, 5
        %v1178 = vrot.slane %v1177, 4
        %v1179 = vrot.slane %v1023, 5
        %v1180 = vsel %vm1078, %v1178, %v1179
        %v1181 = vrot.slane %v1179, 4
        %v1182 = vrot.slane %v1024, 5
        %v1183 = vsel %vm1078, %v1181, %v1182
        %v1184 = vrot.slane %v1025, 5
        %v1185 = vrot.slane %v1184, 4
        %v1186 = vrot.slane %v1026, 5
        %v1187 = vsel %vm1078, %v1185, %v1186
        %v1188 = vrot.slane %v1186, 4
        %v1189 = vrot.slane %v1027, 5
        %v1190 = vsel %vm1078, %v1188, %v1189
        %v1191 = vunpack.c.l.b16 %v1082
        %v1192 = vunpack.c.l.b16 %v1085
        %v1193 = vunpack.c.l.b16 %v1089
        %v1194 = vunpack.c.l.b16 %v1092
        %v1195 = vunpack.c.l.b16 %v1096
        %v1196 = vunpack.c.l.b16 %v1099
        %v1197 = vunpack.c.l.b16 %v1103
        %v1198 = vunpack.c.l.b16 %v1106
        %v1199 = vunpack.c.l.b16 %v1110
        %v1200 = vunpack.c.l.b16 %v1113
        %v1201 = vunpack.c.l.b16 %v1117
        %v1202 = vunpack.c.l.b16 %v1120
        %v1203 = vunpack.c.l.b16 %v1124
        %v1204 = vunpack.c.l.b16 %v1127
        %v1205 = vunpack.c.l.b16 %v1131
        %v1206 = vunpack.c.l.b16 %v1134
        %v1207 = vunpack.c.l.b16 %v1138
        %v1208 = vunpack.c.l.b16 %v1141
        %v1209 = vunpack.c.l.b16 %v1145
        %v1210 = vunpack.c.l.b16 %v1148
        %v1211 = vunpack.c.l.b16 %v1152
        %v1212 = vunpack.c.l.b16 %v1155
        %v1213 = vunpack.c.l.b16 %v1159
        %v1214 = vunpack.c.l.b16 %v1162
        %v1215 = vunpack.c.l.b16 %v1166
        %v1216 = vunpack.c.l.b16 %v1169
        %v1217 = vunpack.c.l.b16 %v1173
        %v1218 = vunpack.c.l.b16 %v1176
        %v1219 = vunpack.c.l.b16 %v1180
        %v1220 = vunpack.c.l.b16 %v1183
        %v1221 = vunpack.c.l.b16 %v1187
        %v1222 = vunpack.c.l.b16 %v1190
        %v1223 = vpack.c.b16 %v1192, %v1191
        %v1224 = vpack.c.b16 %v1194, %v1193
        %v1225 = vpack.c.b16 %v1196, %v1195
        %v1226 = vpack.c.b16 %v1198, %v1197
        %v1227 = vpack.c.b16 %v1200, %v1199
        %v1228 = vpack.c.b16 %v1202, %v1201
        %v1229 = vpack.c.b16 %v1204, %v1203
        %v1230 = vpack.c.b16 %v1206, %v1205
        %v1231 = vpack.c.b16 %v1208, %v1207
        %v1232 = vpack.c.b16 %v1210, %v1209
        %v1233 = vpack.c.b16 %v1212, %v1211
        %v1234 = vpack.c.b16 %v1214, %v1213
        %v1235 = vpack.c.b16 %v1216, %v1215
        %v1236 = vpack.c.b16 %v1218, %v1217
        %v1237 = vpack.c.b16 %v1220, %v1219
        %v1238 = vpack.c.b16 %v1222, %v1221
        %1239 = vrot.lane.b32.xlu0 %v1223, 8
        %v1240 = vpop.permute.xlu0 %1239
        %1241 = vrot.lane.b32.xlu0 %v1224, 8
        %v1242 = vpop.permute.xlu0 %1241
        %1243 = vrot.lane.b32.xlu0 %v1225, 8
        %v1244 = vpop.permute.xlu0 %1243
        %1245 = vrot.lane.b32.xlu0 %v1226, 8
        %v1246 = vpop.permute.xlu0 %1245
        %1247 = vrot.lane.b32.xlu0 %v1227, 8
        %v1248 = vpop.permute.xlu0 %1247
        %1249 = vrot.lane.b32.xlu0 %v1228, 8
        %v1250 = vpop.permute.xlu0 %1249
        %1251 = vrot.lane.b32.xlu0 %v1229, 8
        %v1252 = vpop.permute.xlu0 %1251
        %1253 = vrot.lane.b32.xlu0 %v1230, 8
        %v1254 = vpop.permute.xlu0 %1253
        %1255 = vrot.lane.b32.xlu0 %v1231, 8
        %v1256 = vpop.permute.xlu0 %1255
        %1257 = vrot.lane.b32.xlu0 %v1232, 8
        %v1258 = vpop.permute.xlu0 %1257
        %1259 = vrot.lane.b32.xlu0 %v1233, 8
        %v1260 = vpop.permute.xlu0 %1259
        %1261 = vrot.lane.b32.xlu0 %v1234, 8
        %v1262 = vpop.permute.xlu0 %1261
        %1263 = vrot.lane.b32.xlu0 %v1235, 8
        %v1264 = vpop.permute.xlu0 %1263
        %1265 = vrot.lane.b32.xlu0 %v1236, 8
        %v1266 = vpop.permute.xlu0 %1265
        %1267 = vrot.lane.b32.xlu0 %v1237, 8
        %v1268 = vpop.permute.xlu0 %1267
        %1269 = vrot.lane.b32.xlu0 %v1238, 8
        %v1270 = vpop.permute.xlu0 %1269
        %vm1287 = vcmask 97344
        %1288 = vst.msk [vmem:[#allocation2] sm:$0xff] %vm1287, %v1240
        %1289 = vst.msk [vmem:[#allocation2 + $0x8] sm:$0xff] %vm1287, %v1242
        %1290 = vst.msk [vmem:[#allocation2 + $0x10] sm:$0xff] %vm1287, %v1244
        %1291 = vst.msk [vmem:[#allocation2 + $0x18] sm:$0xff] %vm1287, %v1246
        %1292 = vst.msk [vmem:[#allocation2 + $0x20] sm:$0xff] %vm1287, %v1248
        %1293 = vst.msk [vmem:[#allocation2 + $0x28] sm:$0xff] %vm1287, %v1250
        %1294 = vst.msk [vmem:[#allocation2 + $0x30] sm:$0xff] %vm1287, %v1252
        %1295 = vst.msk [vmem:[#allocation2 + $0x38] sm:$0xff] %vm1287, %v1254
        %1296 = vst.msk [vmem:[#allocation2 + $0x40] sm:$0xff] %vm1287, %v1256
        %1297 = vst.msk [vmem:[#allocation2 + $0x48] sm:$0xff] %vm1287, %v1258
        %1298 = vst.msk [vmem:[#allocation2 + $0x50] sm:$0xff] %vm1287, %v1260
        %1299 = vst.msk [vmem:[#allocation2 + $0x58] sm:$0xff] %vm1287, %v1262
        %1300 = vst.msk [vmem:[#allocation2 + $0x60] sm:$0xff] %vm1287, %v1264
        %1301 = vst.msk [vmem:[#allocation2 + $0x68] sm:$0xff] %vm1287, %v1266
        %1302 = vst.msk [vmem:[#allocation2 + $0x70] sm:$0xff] %vm1287, %v1268
        %1303 = vst.msk [vmem:[#allocation2 + $0x78] sm:$0xff] %vm1287, %v1270
        %s1304 = scalar_lea.vmem %s243, 12 [#allocation3]
        %v1305 = vld [vmem:[%s1304] sm:$0xf]
        %v1306 = vld [vmem:[%s1304 + $0x4] sm:$0xf]
        %v1307 = vld [vmem:[%s1304 + $0xc] sm:$0xf]
        %v1308 = vld [vmem:[%s1304 + $0x10] sm:$0xf]
        %v1309 = vld [vmem:[%s1304 + $0x18] sm:$0xf]
        %v1310 = vld [vmem:[%s1304 + $0x1c] sm:$0xf]
        %v1311 = vld [vmem:[%s1304 + $0x24] sm:$0xf]
        %v1312 = vld [vmem:[%s1304 + $0x28] sm:$0xf]
        %v1313 = vld [vmem:[%s1304 + $0x30] sm:$0xf]
        %v1314 = vld [vmem:[%s1304 + $0x34] sm:$0xf]
        %v1315 = vld [vmem:[%s1304 + $0x3c] sm:$0xf]
        %v1316 = vld [vmem:[%s1304 + $0x40] sm:$0xf]
        %v1317 = vld [vmem:[%s1304 + $0x48] sm:$0xf]
        %v1318 = vld [vmem:[%s1304 + $0x4c] sm:$0xf]
        %v1319 = vld [vmem:[%s1304 + $0x54] sm:$0xf]
        %v1320 = vld [vmem:[%s1304 + $0x58] sm:$0xf]
        %v1321 = vld [vmem:[%s1304 + $0x60] sm:$0xf]
        %v1322 = vld [vmem:[%s1304 + $0x64] sm:$0xf]
        %v1323 = vld [vmem:[%s1304 + $0x6c] sm:$0xf]
        %v1324 = vld [vmem:[%s1304 + $0x70] sm:$0xf]
        %v1325 = vld [vmem:[%s1304 + $0x78] sm:$0xf]
        %v1326 = vld [vmem:[%s1304 + $0x7c] sm:$0xf]
        %v1327 = vld [vmem:[%s1304 + $0x84] sm:$0xf]
        %v1328 = vld [vmem:[%s1304 + $0x88] sm:$0xf]
        %v1329 = vld [vmem:[%s1304 + $0x90] sm:$0xf]
        %v1330 = vld [vmem:[%s1304 + $0x94] sm:$0xf]
        %v1331 = vld [vmem:[%s1304 + $0x9c] sm:$0xf]
        %v1332 = vld [vmem:[%s1304 + $0xa0] sm:$0xf]
        %v1333 = vld [vmem:[%s1304 + $0xa8] sm:$0xf]
        %v1334 = vld [vmem:[%s1304 + $0xac] sm:$0xf]
        %v1335 = vld [vmem:[%s1304 + $0xb4] sm:$0xf]
        %v1336 = vld [vmem:[%s1304 + $0xb8] sm:$0xf]
        %v1369 = vunpack.c.l.b16 %v1305
        %v1370 = vunpack.c.l.b16 %v1306
        %v1371 = vunpack.c.l.b16 %v1307
        %v1372 = vunpack.c.l.b16 %v1308
        %v1373 = vunpack.c.l.b16 %v1309
        %v1374 = vunpack.c.l.b16 %v1310
        %v1375 = vunpack.c.l.b16 %v1311
        %v1376 = vunpack.c.l.b16 %v1312
        %v1377 = vunpack.c.l.b16 %v1313
        %v1378 = vunpack.c.l.b16 %v1314
        %v1379 = vunpack.c.l.b16 %v1315
        %v1380 = vunpack.c.l.b16 %v1316
        %v1381 = vunpack.c.l.b16 %v1317
        %v1382 = vunpack.c.l.b16 %v1318
        %v1383 = vunpack.c.l.b16 %v1319
        %v1384 = vunpack.c.l.b16 %v1320
        %v1385 = vunpack.c.l.b16 %v1321
        %v1386 = vunpack.c.l.b16 %v1322
        %v1387 = vunpack.c.l.b16 %v1323
        %v1388 = vunpack.c.l.b16 %v1324
        %v1389 = vunpack.c.l.b16 %v1325
        %v1390 = vunpack.c.l.b16 %v1326
        %v1391 = vunpack.c.l.b16 %v1327
        %v1392 = vunpack.c.l.b16 %v1328
        %v1393 = vunpack.c.l.b16 %v1329
        %v1394 = vunpack.c.l.b16 %v1330
        %v1395 = vunpack.c.l.b16 %v1331
        %v1396 = vunpack.c.l.b16 %v1332
        %v1397 = vunpack.c.l.b16 %v1333
        %v1398 = vunpack.c.l.b16 %v1334
        %v1399 = vunpack.c.l.b16 %v1335
        %v1400 = vunpack.c.l.b16 %v1336
        %v1401 = vpack.c.b16 %v1370, %v1369
        %v1402 = vpack.c.b16 %v1372, %v1371
        %v1403 = vpack.c.b16 %v1374, %v1373
        %v1404 = vpack.c.b16 %v1376, %v1375
        %v1405 = vpack.c.b16 %v1378, %v1377
        %v1406 = vpack.c.b16 %v1380, %v1379
        %v1407 = vpack.c.b16 %v1382, %v1381
        %v1408 = vpack.c.b16 %v1384, %v1383
        %v1409 = vpack.c.b16 %v1386, %v1385
        %v1410 = vpack.c.b16 %v1388, %v1387
        %v1411 = vpack.c.b16 %v1390, %v1389
        %v1412 = vpack.c.b16 %v1392, %v1391
        %v1413 = vpack.c.b16 %v1394, %v1393
        %v1414 = vpack.c.b16 %v1396, %v1395
        %v1415 = vpack.c.b16 %v1398, %v1397
        %v1416 = vpack.c.b16 %v1400, %v1399
        %1417 = vrot.lane.b32.xlu0 %v1401, 12
        %v1418 = vpop.permute.xlu0 %1417
        %1419 = vrot.lane.b32.xlu0 %v1402, 12
        %v1420 = vpop.permute.xlu0 %1419
        %1421 = vrot.lane.b32.xlu0 %v1403, 12
        %v1422 = vpop.permute.xlu0 %1421
        %1423 = vrot.lane.b32.xlu0 %v1404, 12
        %v1424 = vpop.permute.xlu0 %1423
        %1425 = vrot.lane.b32.xlu0 %v1405, 12
        %v1426 = vpop.permute.xlu0 %1425
        %1427 = vrot.lane.b32.xlu0 %v1406, 12
        %v1428 = vpop.permute.xlu0 %1427
        %1429 = vrot.lane.b32.xlu0 %v1407, 12
        %v1430 = vpop.permute.xlu0 %1429
        %1431 = vrot.lane.b32.xlu0 %v1408, 12
        %v1432 = vpop.permute.xlu0 %1431
        %1433 = vrot.lane.b32.xlu0 %v1409, 12
        %v1434 = vpop.permute.xlu0 %1433
        %1435 = vrot.lane.b32.xlu0 %v1410, 12
        %v1436 = vpop.permute.xlu0 %1435
        %1437 = vrot.lane.b32.xlu0 %v1411, 12
        %v1438 = vpop.permute.xlu0 %1437
        %1439 = vrot.lane.b32.xlu0 %v1412, 12
        %v1440 = vpop.permute.xlu0 %1439
        %1441 = vrot.lane.b32.xlu0 %v1413, 12
        %v1442 = vpop.permute.xlu0 %1441
        %1443 = vrot.lane.b32.xlu0 %v1414, 12
        %v1444 = vpop.permute.xlu0 %1443
        %1445 = vrot.lane.b32.xlu0 %v1415, 12
        %v1446 = vpop.permute.xlu0 %1445
        %1447 = vrot.lane.b32.xlu0 %v1416, 12
        %v1448 = vpop.permute.xlu0 %1447
        %vm1465 = vcmask 130144
        %1466 = vst.msk [vmem:[#allocation2] sm:$0xff] %vm1465, %v1418
        %1467 = vst.msk [vmem:[#allocation2 + $0x8] sm:$0xff] %vm1465, %v1420
        %1468 = vst.msk [vmem:[#allocation2 + $0x10] sm:$0xff] %vm1465, %v1422
        %1469 = vst.msk [vmem:[#allocation2 + $0x18] sm:$0xff] %vm1465, %v1424
        %1470 = vst.msk [vmem:[#allocation2 + $0x20] sm:$0xff] %vm1465, %v1426
        %1471 = vst.msk [vmem:[#allocation2 + $0x28] sm:$0xff] %vm1465, %v1428
        %1472 = vst.msk [vmem:[#allocation2 + $0x30] sm:$0xff] %vm1465, %v1430
        %1473 = vst.msk [vmem:[#allocation2 + $0x38] sm:$0xff] %vm1465, %v1432
        %1474 = vst.msk [vmem:[#allocation2 + $0x40] sm:$0xff] %vm1465, %v1434
        %1475 = vst.msk [vmem:[#allocation2 + $0x48] sm:$0xff] %vm1465, %v1436
        %1476 = vst.msk [vmem:[#allocation2 + $0x50] sm:$0xff] %vm1465, %v1438
        %1477 = vst.msk [vmem:[#allocation2 + $0x58] sm:$0xff] %vm1465, %v1440
        %1478 = vst.msk [vmem:[#allocation2 + $0x60] sm:$0xff] %vm1465, %v1442
        %1479 = vst.msk [vmem:[#allocation2 + $0x68] sm:$0xff] %vm1465, %v1444
        %1480 = vst.msk [vmem:[#allocation2 + $0x70] sm:$0xff] %vm1465, %v1446
        %1481 = vst.msk [vmem:[#allocation2 + $0x78] sm:$0xff] %vm1465, %v1448
        %v1482 = vld [vmem:[%s1304] sm:$0xf]
        %v1483 = vld [vmem:[%s1304 + $0x4] sm:$0xf]
        %v1484 = vld [vmem:[%s1304 + $0x8] sm:$0x1]
        %v1485 = vld [vmem:[%s1304 + $0xc] sm:$0xf]
        %v1486 = vld [vmem:[%s1304 + $0x10] sm:$0xf]
        %v1487 = vld [vmem:[%s1304 + $0x14] sm:$0x1]
        %v1488 = vld [vmem:[%s1304 + $0x18] sm:$0xf]
        %v1489 = vld [vmem:[%s1304 + $0x1c] sm:$0xf]
        %v1490 = vld [vmem:[%s1304 + $0x20] sm:$0x1]
        %v1491 = vld [vmem:[%s1304 + $0x24] sm:$0xf]
        %v1492 = vld [vmem:[%s1304 + $0x28] sm:$0xf]
        %v1493 = vld [vmem:[%s1304 + $0x2c] sm:$0x1]
        %v1494 = vld [vmem:[%s1304 + $0x30] sm:$0xf]
        %v1495 = vld [vmem:[%s1304 + $0x34] sm:$0xf]
        %v1496 = vld [vmem:[%s1304 + $0x38] sm:$0x1]
        %v1497 = vld [vmem:[%s1304 + $0x3c] sm:$0xf]
        %v1498 = vld [vmem:[%s1304 + $0x40] sm:$0xf]
        %v1499 = vld [vmem:[%s1304 + $0x44] sm:$0x1]
        %v1500 = vld [vmem:[%s1304 + $0x48] sm:$0xf]
        %v1501 = vld [vmem:[%s1304 + $0x4c] sm:$0xf]
        %v1502 = vld [vmem:[%s1304 + $0x50] sm:$0x1]
        %v1503 = vld [vmem:[%s1304 + $0x54] sm:$0xf]
        %v1504 = vld [vmem:[%s1304 + $0x58] sm:$0xf]
        %v1505 = vld [vmem:[%s1304 + $0x5c] sm:$0x1]
        %v1506 = vld [vmem:[%s1304 + $0x60] sm:$0xf]
        %v1507 = vld [vmem:[%s1304 + $0x64] sm:$0xf]
        %v1508 = vld [vmem:[%s1304 + $0x68] sm:$0x1]
        %v1509 = vld [vmem:[%s1304 + $0x6c] sm:$0xf]
        %v1510 = vld [vmem:[%s1304 + $0x70] sm:$0xf]
        %v1511 = vld [vmem:[%s1304 + $0x74] sm:$0x1]
        %v1512 = vld [vmem:[%s1304 + $0x78] sm:$0xf]
        %v1513 = vld [vmem:[%s1304 + $0x7c] sm:$0xf]
        %v1514 = vld [vmem:[%s1304 + $0x80] sm:$0x1]
        %v1515 = vld [vmem:[%s1304 + $0x84] sm:$0xf]
        %v1516 = vld [vmem:[%s1304 + $0x88] sm:$0xf]
        %v1517 = vld [vmem:[%s1304 + $0x8c] sm:$0x1]
        %v1518 = vld [vmem:[%s1304 + $0x90] sm:$0xf]
        %v1519 = vld [vmem:[%s1304 + $0x94] sm:$0xf]
        %v1520 = vld [vmem:[%s1304 + $0x98] sm:$0x1]
        %v1521 = vld [vmem:[%s1304 + $0x9c] sm:$0xf]
        %v1522 = vld [vmem:[%s1304 + $0xa0] sm:$0xf]
        %v1523 = vld [vmem:[%s1304 + $0xa4] sm:$0x1]
        %v1524 = vld [vmem:[%s1304 + $0xa8] sm:$0xf]
        %v1525 = vld [vmem:[%s1304 + $0xac] sm:$0xf]
        %v1526 = vld [vmem:[%s1304 + $0xb0] sm:$0x1]
        %v1527 = vld [vmem:[%s1304 + $0xb4] sm:$0xf]
        %v1528 = vld [vmem:[%s1304 + $0xb8] sm:$0xf]
        %v1529 = vld [vmem:[%s1304 + $0xbc] sm:$0x1]
        %v1531 = vshrl.u32 %v1482, 16
        %v1533 = vrot.slane %v1531, 4
        %v1534 = vshll.u32 %v1482, 16
        %v1536 = vrot.slane %v1534, 5
        %v1537 = vor.u32 %v1533, %v1536
        %v1538 = vrot.slane %v1537, 4
        %v1540 = vshll.u32 %v1483, 16
        %v1542 = vrot.slane %v1540, 5
        %v1543 = vsel %vm482, %v1538, %v1542
        %v1544 = vshrl.u32 %v1483, 16
        %v1546 = vrot.slane %v1544, 4
        %v1547 = vor.u32 %v1546, %v1542
        %v1548 = vrot.slane %v1547, 4
        %v1550 = vshll.u32 %v1484, 16
        %v1552 = vrot.slane %v1550, 5
        %v1553 = vsel %vm482, %v1548, %v1552
        %v1555 = vshrl.u32 %v1485, 16
        %v1557 = vrot.slane %v1555, 4
        %v1558 = vshll.u32 %v1485, 16
        %v1560 = vrot.slane %v1558, 5
        %v1561 = vor.u32 %v1557, %v1560
        %v1562 = vrot.slane %v1561, 4
        %v1564 = vshll.u32 %v1486, 16
        %v1566 = vrot.slane %v1564, 5
        %v1567 = vsel %vm482, %v1562, %v1566
        %v1568 = vshrl.u32 %v1486, 16
        %v1570 = vrot.slane %v1568, 4
        %v1571 = vor.u32 %v1570, %v1566
        %v1572 = vrot.slane %v1571, 4
        %v1574 = vshll.u32 %v1487, 16
        %v1576 = vrot.slane %v1574, 5
        %v1577 = vsel %vm482, %v1572, %v1576
        %v1579 = vshrl.u32 %v1488, 16
        %v1581 = vrot.slane %v1579, 4
        %v1582 = vshll.u32 %v1488, 16
        %v1584 = vrot.slane %v1582, 5
        %v1585 = vor.u32 %v1581, %v1584
        %v1586 = vrot.slane %v1585, 4
        %v1588 = vshll.u32 %v1489, 16
        %v1590 = vrot.slane %v1588, 5
        %v1591 = vsel %vm482, %v1586, %v1590
        %v1592 = vshrl.u32 %v1489, 16
        %v1594 = vrot.slane %v1592, 4
        %v1595 = vor.u32 %v1594, %v1590
        %v1596 = vrot.slane %v1595, 4
        %v1598 = vshll.u32 %v1490, 16
        %v1600 = vrot.slane %v1598, 5
        %v1601 = vsel %vm482, %v1596, %v1600
        %v1603 = vshrl.u32 %v1491, 16
        %v1605 = vrot.slane %v1603, 4
        %v1606 = vshll.u32 %v1491, 16
        %v1608 = vrot.slane %v1606, 5
        %v1609 = vor.u32 %v1605, %v1608
        %v1610 = vrot.slane %v1609, 4
        %v1612 = vshll.u32 %v1492, 16
        %v1614 = vrot.slane %v1612, 5
        %v1615 = vsel %vm482, %v1610, %v1614
        %v1616 = vshrl.u32 %v1492, 16
        %v1618 = vrot.slane %v1616, 4
        %v1619 = vor.u32 %v1618, %v1614
        %v1620 = vrot.slane %v1619, 4
        %v1622 = vshll.u32 %v1493, 16
        %v1624 = vrot.slane %v1622, 5
        %v1625 = vsel %vm482, %v1620, %v1624
        %v1627 = vshrl.u32 %v1494, 16
        %v1629 = vrot.slane %v1627, 4
        %v1630 = vshll.u32 %v1494, 16
        %v1632 = vrot.slane %v1630, 5
        %v1633 = vor.u32 %v1629, %v1632
        %v1634 = vrot.slane %v1633, 4
        %v1636 = vshll.u32 %v1495, 16
        %v1638 = vrot.slane %v1636, 5
        %v1639 = vsel %vm482, %v1634, %v1638
        %v1640 = vshrl.u32 %v1495, 16
        %v1642 = vrot.slane %v1640, 4
        %v1643 = vor.u32 %v1642, %v1638
        %v1644 = vrot.slane %v1643, 4
        %v1646 = vshll.u32 %v1496, 16
        %v1648 = vrot.slane %v1646, 5
        %v1649 = vsel %vm482, %v1644, %v1648
        %v1651 = vshrl.u32 %v1497, 16
        %v1653 = vrot.slane %v1651, 4
        %v1654 = vshll.u32 %v1497, 16
        %v1656 = vrot.slane %v1654, 5
        %v1657 = vor.u32 %v1653, %v1656
        %v1658 = vrot.slane %v1657, 4
        %v1660 = vshll.u32 %v1498, 16
        %v1662 = vrot.slane %v1660, 5
        %v1663 = vsel %vm482, %v1658, %v1662
        %v1664 = vshrl.u32 %v1498, 16
        %v1666 = vrot.slane %v1664, 4
        %v1667 = vor.u32 %v1666, %v1662
        %v1668 = vrot.slane %v1667, 4
        %v1670 = vshll.u32 %v1499, 16
        %v1672 = vrot.slane %v1670, 5
        %v1673 = vsel %vm482, %v1668, %v1672
        %v1675 = vshrl.u32 %v1500, 16
        %v1677 = vrot.slane %v1675, 4
        %v1678 = vshll.u32 %v1500, 16
        %v1680 = vrot.slane %v1678, 5
        %v1681 = vor.u32 %v1677, %v1680
        %v1682 = vrot.slane %v1681, 4
        %v1684 = vshll.u32 %v1501, 16
        %v1686 = vrot.slane %v1684, 5
        %v1687 = vsel %vm482, %v1682, %v1686
        %v1688 = vshrl.u32 %v1501, 16
        %v1690 = vrot.slane %v1688, 4
        %v1691 = vor.u32 %v1690, %v1686
        %v1692 = vrot.slane %v1691, 4
        %v1694 = vshll.u32 %v1502, 16
        %v1696 = vrot.slane %v1694, 5
        %v1697 = vsel %vm482, %v1692, %v1696
        %v1699 = vshrl.u32 %v1503, 16
        %v1701 = vrot.slane %v1699, 4
        %v1702 = vshll.u32 %v1503, 16
        %v1704 = vrot.slane %v1702, 5
        %v1705 = vor.u32 %v1701, %v1704
        %v1706 = vrot.slane %v1705, 4
        %v1708 = vshll.u32 %v1504, 16
        %v1710 = vrot.slane %v1708, 5
        %v1711 = vsel %vm482, %v1706, %v1710
        %v1712 = vshrl.u32 %v1504, 16
        %v1714 = vrot.slane %v1712, 4
        %v1715 = vor.u32 %v1714, %v1710
        %v1716 = vrot.slane %v1715, 4
        %v1718 = vshll.u32 %v1505, 16
        %v1720 = vrot.slane %v1718, 5
        %v1721 = vsel %vm482, %v1716, %v1720
        %v1723 = vshrl.u32 %v1506, 16
        %v1725 = vrot.slane %v1723, 4
        %v1726 = vshll.u32 %v1506, 16
        %v1728 = vrot.slane %v1726, 5
        %v1729 = vor.u32 %v1725, %v1728
        %v1730 = vrot.slane %v1729, 4
        %v1732 = vshll.u32 %v1507, 16
        %v1734 = vrot.slane %v1732, 5
        %v1735 = vsel %vm482, %v1730, %v1734
        %v1736 = vshrl.u32 %v1507, 16
        %v1738 = vrot.slane %v1736, 4
        %v1739 = vor.u32 %v1738, %v1734
        %v1740 = vrot.slane %v1739, 4
        %v1742 = vshll.u32 %v1508, 16
        %v1744 = vrot.slane %v1742, 5
        %v1745 = vsel %vm482, %v1740, %v1744
        %v1747 = vshrl.u32 %v1509, 16
        %v1749 = vrot.slane %v1747, 4
        %v1750 = vshll.u32 %v1509, 16
        %v1752 = vrot.slane %v1750, 5
        %v1753 = vor.u32 %v1749, %v1752
        %v1754 = vrot.slane %v1753, 4
        %v1756 = vshll.u32 %v1510, 16
        %v1758 = vrot.slane %v1756, 5
        %v1759 = vsel %vm482, %v1754, %v1758
        %v1760 = vshrl.u32 %v1510, 16
        %v1762 = vrot.slane %v1760, 4
        %v1763 = vor.u32 %v1762, %v1758
        %v1764 = vrot.slane %v1763, 4
        %v1766 = vshll.u32 %v1511, 16
        %v1768 = vrot.slane %v1766, 5
        %v1769 = vsel %vm482, %v1764, %v1768
        %v1771 = vshrl.u32 %v1512, 16
        %v1773 = vrot.slane %v1771, 4
        %v1774 = vshll.u32 %v1512, 16
        %v1776 = vrot.slane %v1774, 5
        %v1777 = vor.u32 %v1773, %v1776
        %v1778 = vrot.slane %v1777, 4
        %v1780 = vshll.u32 %v1513, 16
        %v1782 = vrot.slane %v1780, 5
        %v1783 = vsel %vm482, %v1778, %v1782
        %v1784 = vshrl.u32 %v1513, 16
        %v1786 = vrot.slane %v1784, 4
        %v1787 = vor.u32 %v1786, %v1782
        %v1788 = vrot.slane %v1787, 4
        %v1790 = vshll.u32 %v1514, 16
        %v1792 = vrot.slane %v1790, 5
        %v1793 = vsel %vm482, %v1788, %v1792
        %v1795 = vshrl.u32 %v1515, 16
        %v1797 = vrot.slane %v1795, 4
        %v1798 = vshll.u32 %v1515, 16
        %v1800 = vrot.slane %v1798, 5
        %v1801 = vor.u32 %v1797, %v1800
        %v1802 = vrot.slane %v1801, 4
        %v1804 = vshll.u32 %v1516, 16
        %v1806 = vrot.slane %v1804, 5
        %v1807 = vsel %vm482, %v1802, %v1806
        %v1808 = vshrl.u32 %v1516, 16
        %v1810 = vrot.slane %v1808, 4
        %v1811 = vor.u32 %v1810, %v1806
        %v1812 = vrot.slane %v1811, 4
        %v1814 = vshll.u32 %v1517, 16
        %v1816 = vrot.slane %v1814, 5
        %v1817 = vsel %vm482, %v1812, %v1816
        %v1819 = vshrl.u32 %v1518, 16
        %v1821 = vrot.slane %v1819, 4
        %v1822 = vshll.u32 %v1518, 16
        %v1824 = vrot.slane %v1822, 5
        %v1825 = vor.u32 %v1821, %v1824
        %v1826 = vrot.slane %v1825, 4
        %v1828 = vshll.u32 %v1519, 16
        %v1830 = vrot.slane %v1828, 5
        %v1831 = vsel %vm482, %v1826, %v1830
        %v1832 = vshrl.u32 %v1519, 16
        %v1834 = vrot.slane %v1832, 4
        %v1835 = vor.u32 %v1834, %v1830
        %v1836 = vrot.slane %v1835, 4
        %v1838 = vshll.u32 %v1520, 16
        %v1840 = vrot.slane %v1838, 5
        %v1841 = vsel %vm482, %v1836, %v1840
        %v1843 = vshrl.u32 %v1521, 16
        %v1845 = vrot.slane %v1843, 4
        %v1846 = vshll.u32 %v1521, 16
        %v1848 = vrot.slane %v1846, 5
        %v1849 = vor.u32 %v1845, %v1848
        %v1850 = vrot.slane %v1849, 4
        %v1852 = vshll.u32 %v1522, 16
        %v1854 = vrot.slane %v1852, 5
        %v1855 = vsel %vm482, %v1850, %v1854
        %v1856 = vshrl.u32 %v1522, 16
        %v1858 = vrot.slane %v1856, 4
        %v1859 = vor.u32 %v1858, %v1854
        %v1860 = vrot.slane %v1859, 4
        %v1862 = vshll.u32 %v1523, 16
        %v1864 = vrot.slane %v1862, 5
        %v1865 = vsel %vm482, %v1860, %v1864
        %v1867 = vshrl.u32 %v1524, 16
        %v1869 = vrot.slane %v1867, 4
        %v1870 = vshll.u32 %v1524, 16
        %v1872 = vrot.slane %v1870, 5
        %v1873 = vor.u32 %v1869, %v1872
        %v1874 = vrot.slane %v1873, 4
        %v1876 = vshll.u32 %v1525, 16
        %v1878 = vrot.slane %v1876, 5
        %v1879 = vsel %vm482, %v1874, %v1878
        %v1880 = vshrl.u32 %v1525, 16
        %v1882 = vrot.slane %v1880, 4
        %v1883 = vor.u32 %v1882, %v1878
        %v1884 = vrot.slane %v1883, 4
        %v1886 = vshll.u32 %v1526, 16
        %v1888 = vrot.slane %v1886, 5
        %v1889 = vsel %vm482, %v1884, %v1888
        %v1891 = vshrl.u32 %v1527, 16
        %v1893 = vrot.slane %v1891, 4
        %v1894 = vshll.u32 %v1527, 16
        %v1896 = vrot.slane %v1894, 5
        %v1897 = vor.u32 %v1893, %v1896
        %v1898 = vrot.slane %v1897, 4
        %v1900 = vshll.u32 %v1528, 16
        %v1902 = vrot.slane %v1900, 5
        %v1903 = vsel %vm482, %v1898, %v1902
        %v1904 = vshrl.u32 %v1528, 16
        %v1906 = vrot.slane %v1904, 4
        %v1907 = vor.u32 %v1906, %v1902
        %v1908 = vrot.slane %v1907, 4
        %v1910 = vshll.u32 %v1529, 16
        %v1912 = vrot.slane %v1910, 5
        %v1913 = vsel %vm482, %v1908, %v1912
        %v1914 = vunpack.c.l.b16 %v1543
        %v1915 = vunpack.c.l.b16 %v1553
        %v1916 = vunpack.c.l.b16 %v1567
        %v1917 = vunpack.c.l.b16 %v1577
        %v1918 = vunpack.c.l.b16 %v1591
        %v1919 = vunpack.c.l.b16 %v1601
        %v1920 = vunpack.c.l.b16 %v1615
        %v1921 = vunpack.c.l.b16 %v1625
        %v1922 = vunpack.c.l.b16 %v1639
        %v1923 = vunpack.c.l.b16 %v1649
        %v1924 = vunpack.c.l.b16 %v1663
        %v1925 = vunpack.c.l.b16 %v1673
        %v1926 = vunpack.c.l.b16 %v1687
        %v1927 = vunpack.c.l.b16 %v1697
        %v1928 = vunpack.c.l.b16 %v1711
        %v1929 = vunpack.c.l.b16 %v1721
        %v1930 = vunpack.c.l.b16 %v1735
        %v1931 = vunpack.c.l.b16 %v1745
        %v1932 = vunpack.c.l.b16 %v1759
        %v1933 = vunpack.c.l.b16 %v1769
        %v1934 = vunpack.c.l.b16 %v1783
        %v1935 = vunpack.c.l.b16 %v1793
        %v1936 = vunpack.c.l.b16 %v1807
        %v1937 = vunpack.c.l.b16 %v1817
        %v1938 = vunpack.c.l.b16 %v1831
        %v1939 = vunpack.c.l.b16 %v1841
        %v1940 = vunpack.c.l.b16 %v1855
        %v1941 = vunpack.c.l.b16 %v1865
        %v1942 = vunpack.c.l.b16 %v1879
        %v1943 = vunpack.c.l.b16 %v1889
        %v1944 = vunpack.c.l.b16 %v1903
        %v1945 = vunpack.c.l.b16 %v1913
        %v1946 = vpack.c.b16 %v1915, %v1914
        %v1947 = vpack.c.b16 %v1917, %v1916
        %v1948 = vpack.c.b16 %v1919, %v1918
        %v1949 = vpack.c.b16 %v1921, %v1920
        %v1950 = vpack.c.b16 %v1923, %v1922
        %v1951 = vpack.c.b16 %v1925, %v1924
        %v1952 = vpack.c.b16 %v1927, %v1926
        %v1953 = vpack.c.b16 %v1929, %v1928
        %v1954 = vpack.c.b16 %v1931, %v1930
        %v1955 = vpack.c.b16 %v1933, %v1932
        %v1956 = vpack.c.b16 %v1935, %v1934
        %v1957 = vpack.c.b16 %v1937, %v1936
        %v1958 = vpack.c.b16 %v1939, %v1938
        %v1959 = vpack.c.b16 %v1941, %v1940
        %v1960 = vpack.c.b16 %v1943, %v1942
        %v1961 = vpack.c.b16 %v1945, %v1944
        %1962 = vrot.lane.b32.xlu0 %v1946, 16
        %v1963 = vpop.permute.xlu0 %1962
        %1964 = vrot.lane.b32.xlu0 %v1947, 16
        %v1965 = vpop.permute.xlu0 %1964
        %1966 = vrot.lane.b32.xlu0 %v1948, 16
        %v1967 = vpop.permute.xlu0 %1966
        %1968 = vrot.lane.b32.xlu0 %v1949, 16
        %v1969 = vpop.permute.xlu0 %1968
        %1970 = vrot.lane.b32.xlu0 %v1950, 16
        %v1971 = vpop.permute.xlu0 %1970
        %1972 = vrot.lane.b32.xlu0 %v1951, 16
        %v1973 = vpop.permute.xlu0 %1972
        %1974 = vrot.lane.b32.xlu0 %v1952, 16
        %v1975 = vpop.permute.xlu0 %1974
        %1976 = vrot.lane.b32.xlu0 %v1953, 16
        %v1977 = vpop.permute.xlu0 %1976
        %1978 = vrot.lane.b32.xlu0 %v1954, 16
        %v1979 = vpop.permute.xlu0 %1978
        %1980 = vrot.lane.b32.xlu0 %v1955, 16
        %v1981 = vpop.permute.xlu0 %1980
        %1982 = vrot.lane.b32.xlu0 %v1956, 16
        %v1983 = vpop.permute.xlu0 %1982
        %1984 = vrot.lane.b32.xlu0 %v1957, 16
        %v1985 = vpop.permute.xlu0 %1984
        %1986 = vrot.lane.b32.xlu0 %v1958, 16
        %v1987 = vpop.permute.xlu0 %1986
        %1988 = vrot.lane.b32.xlu0 %v1959, 16
        %v1989 = vpop.permute.xlu0 %1988
        %1990 = vrot.lane.b32.xlu0 %v1960, 16
        %v1991 = vpop.permute.xlu0 %1990
        %1992 = vrot.lane.b32.xlu0 %v1961, 16
        %v1993 = vpop.permute.xlu0 %1992
        %vm2010 = vcmask 162944
        %2011 = vst.msk [vmem:[#allocation2] sm:$0xff] %vm2010, %v1963
        %2012 = vst.msk [vmem:[#allocation2 + $0x8] sm:$0xff] %vm2010, %v1965
        %2013 = vst.msk [vmem:[#allocation2 + $0x10] sm:$0xff] %vm2010, %v1967
        %2014 = vst.msk [vmem:[#allocation2 + $0x18] sm:$0xff] %vm2010, %v1969
        %2015 = vst.msk [vmem:[#allocation2 + $0x20] sm:$0xff] %vm2010, %v1971
        %2016 = vst.msk [vmem:[#allocation2 + $0x28] sm:$0xff] %vm2010, %v1973
        %2017 = vst.msk [vmem:[#allocation2 + $0x30] sm:$0xff] %vm2010, %v1975
        %2018 = vst.msk [vmem:[#allocation2 + $0x38] sm:$0xff] %vm2010, %v1977
        %2019 = vst.msk [vmem:[#allocation2 + $0x40] sm:$0xff] %vm2010, %v1979
        %2020 = vst.msk [vmem:[#allocation2 + $0x48] sm:$0xff] %vm2010, %v1981
        %2021 = vst.msk [vmem:[#allocation2 + $0x50] sm:$0xff] %vm2010, %v1983
        %2022 = vst.msk [vmem:[#allocation2 + $0x58] sm:$0xff] %vm2010, %v1985
        %2023 = vst.msk [vmem:[#allocation2 + $0x60] sm:$0xff] %vm2010, %v1987
        %2024 = vst.msk [vmem:[#allocation2 + $0x68] sm:$0xff] %vm2010, %v1989
        %2025 = vst.msk [vmem:[#allocation2 + $0x70] sm:$0xff] %vm2010, %v1991
        %2026 = vst.msk [vmem:[#allocation2 + $0x78] sm:$0xff] %vm2010, %v1993
        %v2027 = vld [vmem:[%s1304] sm:$0xe]
        %v2028 = vld [vmem:[%s1304 + $0x4] sm:$0xf]
        %v2029 = vld [vmem:[%s1304 + $0x8] sm:$0x1]
        %v2030 = vld [vmem:[%s1304 + $0xc] sm:$0xe]
        %v2031 = vld [vmem:[%s1304 + $0x10] sm:$0xf]
        %v2032 = vld [vmem:[%s1304 + $0x14] sm:$0x1]
        %v2033 = vld [vmem:[%s1304 + $0x18] sm:$0xe]
        %v2034 = vld [vmem:[%s1304 + $0x1c] sm:$0xf]
        %v2035 = vld [vmem:[%s1304 + $0x20] sm:$0x1]
        %v2036 = vld [vmem:[%s1304 + $0x24] sm:$0xe]
        %v2037 = vld [vmem:[%s1304 + $0x28] sm:$0xf]
        %v2038 = vld [vmem:[%s1304 + $0x2c] sm:$0x1]
        %v2039 = vld [vmem:[%s1304 + $0x30] sm:$0xe]
        %v2040 = vld [vmem:[%s1304 + $0x34] sm:$0xf]
        %v2041 = vld [vmem:[%s1304 + $0x38] sm:$0x1]
        %v2042 = vld [vmem:[%s1304 + $0x3c] sm:$0xe]
        %v2043 = vld [vmem:[%s1304 + $0x40] sm:$0xf]
        %v2044 = vld [vmem:[%s1304 + $0x44] sm:$0x1]
        %v2045 = vld [vmem:[%s1304 + $0x48] sm:$0xe]
        %v2046 = vld [vmem:[%s1304 + $0x4c] sm:$0xf]
        %v2047 = vld [vmem:[%s1304 + $0x50] sm:$0x1]
        %v2048 = vld [vmem:[%s1304 + $0x54] sm:$0xe]
        %v2049 = vld [vmem:[%s1304 + $0x58] sm:$0xf]
        %v2050 = vld [vmem:[%s1304 + $0x5c] sm:$0x1]
        %v2051 = vld [vmem:[%s1304 + $0x60] sm:$0xe]
        %v2052 = vld [vmem:[%s1304 + $0x64] sm:$0xf]
        %v2053 = vld [vmem:[%s1304 + $0x68] sm:$0x1]
        %v2054 = vld [vmem:[%s1304 + $0x6c] sm:$0xe]
        %v2055 = vld [vmem:[%s1304 + $0x70] sm:$0xf]
        %v2056 = vld [vmem:[%s1304 + $0x74] sm:$0x1]
        %v2057 = vld [vmem:[%s1304 + $0x78] sm:$0xe]
        %v2058 = vld [vmem:[%s1304 + $0x7c] sm:$0xf]
        %v2059 = vld [vmem:[%s1304 + $0x80] sm:$0x1]
        %v2060 = vld [vmem:[%s1304 + $0x84] sm:$0xe]
        %v2061 = vld [vmem:[%s1304 + $0x88] sm:$0xf]
        %v2062 = vld [vmem:[%s1304 + $0x8c] sm:$0x1]
        %v2063 = vld [vmem:[%s1304 + $0x90] sm:$0xe]
        %v2064 = vld [vmem:[%s1304 + $0x94] sm:$0xf]
        %v2065 = vld [vmem:[%s1304 + $0x98] sm:$0x1]
        %v2066 = vld [vmem:[%s1304 + $0x9c] sm:$0xe]
        %v2067 = vld [vmem:[%s1304 + $0xa0] sm:$0xf]
        %v2068 = vld [vmem:[%s1304 + $0xa4] sm:$0x1]
        %v2069 = vld [vmem:[%s1304 + $0xa8] sm:$0xe]
        %v2070 = vld [vmem:[%s1304 + $0xac] sm:$0xf]
        %v2071 = vld [vmem:[%s1304 + $0xb0] sm:$0x1]
        %v2072 = vld [vmem:[%s1304 + $0xb4] sm:$0xe]
        %v2073 = vld [vmem:[%s1304 + $0xb8] sm:$0xf]
        %v2074 = vld [vmem:[%s1304 + $0xbc] sm:$0x1]
        %v2123 = vrot.slane %v2027, 5
        %v2124 = vrot.slane %v2123, 4
        %v2125 = vrot.slane %v2028, 5
        %v2126 = vsel %vm1078, %v2124, %v2125
        %v2127 = vrot.slane %v2125, 4
        %v2128 = vrot.slane %v2029, 5
        %v2129 = vsel %vm1078, %v2127, %v2128
        %v2130 = vrot.slane %v2030, 5
        %v2131 = vrot.slane %v2130, 4
        %v2132 = vrot.slane %v2031, 5
        %v2133 = vsel %vm1078, %v2131, %v2132
        %v2134 = vrot.slane %v2132, 4
        %v2135 = vrot.slane %v2032, 5
        %v2136 = vsel %vm1078, %v2134, %v2135
        %v2137 = vrot.slane %v2033, 5
        %v2138 = vrot.slane %v2137, 4
        %v2139 = vrot.slane %v2034, 5
        %v2140 = vsel %vm1078, %v2138, %v2139
        %v2141 = vrot.slane %v2139, 4
        %v2142 = vrot.slane %v2035, 5
        %v2143 = vsel %vm1078, %v2141, %v2142
        %v2144 = vrot.slane %v2036, 5
        %v2145 = vrot.slane %v2144, 4
        %v2146 = vrot.slane %v2037, 5
        %v2147 = vsel %vm1078, %v2145, %v2146
        %v2148 = vrot.slane %v2146, 4
        %v2149 = vrot.slane %v2038, 5
        %v2150 = vsel %vm1078, %v2148, %v2149
        %v2151 = vrot.slane %v2039, 5
        %v2152 = vrot.slane %v2151, 4
        %v2153 = vrot.slane %v2040, 5
        %v2154 = vsel %vm1078, %v2152, %v2153
        %v2155 = vrot.slane %v2153, 4
        %v2156 = vrot.slane %v2041, 5
        %v2157 = vsel %vm1078, %v2155, %v2156
        %v2158 = vrot.slane %v2042, 5
        %v2159 = vrot.slane %v2158, 4
        %v2160 = vrot.slane %v2043, 5
        %v2161 = vsel %vm1078, %v2159, %v2160
        %v2162 = vrot.slane %v2160, 4
        %v2163 = vrot.slane %v2044, 5
        %v2164 = vsel %vm1078, %v2162, %v2163
        %v2165 = vrot.slane %v2045, 5
        %v2166 = vrot.slane %v2165, 4
        %v2167 = vrot.slane %v2046, 5
        %v2168 = vsel %vm1078, %v2166, %v2167
        %v2169 = vrot.slane %v2167, 4
        %v2170 = vrot.slane %v2047, 5
        %v2171 = vsel %vm1078, %v2169, %v2170
        %v2172 = vrot.slane %v2048, 5
        %v2173 = vrot.slane %v2172, 4
        %v2174 = vrot.slane %v2049, 5
        %v2175 = vsel %vm1078, %v2173, %v2174
        %v2176 = vrot.slane %v2174, 4
        %v2177 = vrot.slane %v2050, 5
        %v2178 = vsel %vm1078, %v2176, %v2177
        %v2179 = vrot.slane %v2051, 5
        %v2180 = vrot.slane %v2179, 4
        %v2181 = vrot.slane %v2052, 5
        %v2182 = vsel %vm1078, %v2180, %v2181
        %v2183 = vrot.slane %v2181, 4
        %v2184 = vrot.slane %v2053, 5
        %v2185 = vsel %vm1078, %v2183, %v2184
        %v2186 = vrot.slane %v2054, 5
        %v2187 = vrot.slane %v2186, 4
        %v2188 = vrot.slane %v2055, 5
        %v2189 = vsel %vm1078, %v2187, %v2188
        %v2190 = vrot.slane %v2188, 4
        %v2191 = vrot.slane %v2056, 5
        %v2192 = vsel %vm1078, %v2190, %v2191
        %v2193 = vrot.slane %v2057, 5
        %v2194 = vrot.slane %v2193, 4
        %v2195 = vrot.slane %v2058, 5
        %v2196 = vsel %vm1078, %v2194, %v2195
        %v2197 = vrot.slane %v2195, 4
        %v2198 = vrot.slane %v2059, 5
        %v2199 = vsel %vm1078, %v2197, %v2198
        %v2200 = vrot.slane %v2060, 5
        %v2201 = vrot.slane %v2200, 4
        %v2202 = vrot.slane %v2061, 5
        %v2203 = vsel %vm1078, %v2201, %v2202
        %v2204 = vrot.slane %v2202, 4
        %v2205 = vrot.slane %v2062, 5
        %v2206 = vsel %vm1078, %v2204, %v2205
        %v2207 = vrot.slane %v2063, 5
        %v2208 = vrot.slane %v2207, 4
        %v2209 = vrot.slane %v2064, 5
        %v2210 = vsel %vm1078, %v2208, %v2209
        %v2211 = vrot.slane %v2209, 4
        %v2212 = vrot.slane %v2065, 5
        %v2213 = vsel %vm1078, %v2211, %v2212
        %v2214 = vrot.slane %v2066, 5
        %v2215 = vrot.slane %v2214, 4
        %v2216 = vrot.slane %v2067, 5
        %v2217 = vsel %vm1078, %v2215, %v2216
        %v2218 = vrot.slane %v2216, 4
        %v2219 = vrot.slane %v2068, 5
        %v2220 = vsel %vm1078, %v2218, %v2219
        %v2221 = vrot.slane %v2069, 5
        %v2222 = vrot.slane %v2221, 4
        %v2223 = vrot.slane %v2070, 5
        %v2224 = vsel %vm1078, %v2222, %v2223
        %v2225 = vrot.slane %v2223, 4
        %v2226 = vrot.slane %v2071, 5
        %v2227 = vsel %vm1078, %v2225, %v2226
        %v2228 = vrot.slane %v2072, 5
        %v2229 = vrot.slane %v2228, 4
        %v2230 = vrot.slane %v2073, 5
        %v2231 = vsel %vm1078, %v2229, %v2230
        %v2232 = vrot.slane %v2230, 4
        %v2233 = vrot.slane %v2074, 5
        %v2234 = vsel %vm1078, %v2232, %v2233
        %v2235 = vunpack.c.l.b16 %v2126
        %v2236 = vunpack.c.l.b16 %v2129
        %v2237 = vunpack.c.l.b16 %v2133
        %v2238 = vunpack.c.l.b16 %v2136
        %v2239 = vunpack.c.l.b16 %v2140
        %v2240 = vunpack.c.l.b16 %v2143
        %v2241 = vunpack.c.l.b16 %v2147
        %v2242 = vunpack.c.l.b16 %v2150
        %v2243 = vunpack.c.l.b16 %v2154
        %v2244 = vunpack.c.l.b16 %v2157
        %v2245 = vunpack.c.l.b16 %v2161
        %v2246 = vunpack.c.l.b16 %v2164
        %v2247 = vunpack.c.l.b16 %v2168
        %v2248 = vunpack.c.l.b16 %v2171
        %v2249 = vunpack.c.l.b16 %v2175
        %v2250 = vunpack.c.l.b16 %v2178
        %v2251 = vunpack.c.l.b16 %v2182
        %v2252 = vunpack.c.l.b16 %v2185
        %v2253 = vunpack.c.l.b16 %v2189
        %v2254 = vunpack.c.l.b16 %v2192
        %v2255 = vunpack.c.l.b16 %v2196
        %v2256 = vunpack.c.l.b16 %v2199
        %v2257 = vunpack.c.l.b16 %v2203
        %v2258 = vunpack.c.l.b16 %v2206
        %v2259 = vunpack.c.l.b16 %v2210
        %v2260 = vunpack.c.l.b16 %v2213
        %v2261 = vunpack.c.l.b16 %v2217
        %v2262 = vunpack.c.l.b16 %v2220
        %v2263 = vunpack.c.l.b16 %v2224
        %v2264 = vunpack.c.l.b16 %v2227
        %v2265 = vunpack.c.l.b16 %v2231
        %v2266 = vunpack.c.l.b16 %v2234
        %v2267 = vpack.c.b16 %v2236, %v2235
        %v2268 = vpack.c.b16 %v2238, %v2237
        %v2269 = vpack.c.b16 %v2240, %v2239
        %v2270 = vpack.c.b16 %v2242, %v2241
        %v2271 = vpack.c.b16 %v2244, %v2243
        %v2272 = vpack.c.b16 %v2246, %v2245
        %v2273 = vpack.c.b16 %v2248, %v2247
        %v2274 = vpack.c.b16 %v2250, %v2249
        %v2275 = vpack.c.b16 %v2252, %v2251
        %v2276 = vpack.c.b16 %v2254, %v2253
        %v2277 = vpack.c.b16 %v2256, %v2255
        %v2278 = vpack.c.b16 %v2258, %v2257
        %v2279 = vpack.c.b16 %v2260, %v2259
        %v2280 = vpack.c.b16 %v2262, %v2261
        %v2281 = vpack.c.b16 %v2264, %v2263
        %v2282 = vpack.c.b16 %v2266, %v2265
        %2283 = vrot.lane.b32.xlu0 %v2267, 20
        %v2284 = vpop.permute.xlu0 %2283
        %2285 = vrot.lane.b32.xlu0 %v2268, 20
        %v2286 = vpop.permute.xlu0 %2285
        %2287 = vrot.lane.b32.xlu0 %v2269, 20
        %v2288 = vpop.permute.xlu0 %2287
        %2289 = vrot.lane.b32.xlu0 %v2270, 20
        %v2290 = vpop.permute.xlu0 %2289
        %2291 = vrot.lane.b32.xlu0 %v2271, 20
        %v2292 = vpop.permute.xlu0 %2291
        %2293 = vrot.lane.b32.xlu0 %v2272, 20
        %v2294 = vpop.permute.xlu0 %2293
        %2295 = vrot.lane.b32.xlu0 %v2273, 20
        %v2296 = vpop.permute.xlu0 %2295
        %2297 = vrot.lane.b32.xlu0 %v2274, 20
        %v2298 = vpop.permute.xlu0 %2297
        %2299 = vrot.lane.b32.xlu0 %v2275, 20
        %v2300 = vpop.permute.xlu0 %2299
        %2301 = vrot.lane.b32.xlu0 %v2276, 20
        %v2302 = vpop.permute.xlu0 %2301
        %2303 = vrot.lane.b32.xlu0 %v2277, 20
        %v2304 = vpop.permute.xlu0 %2303
        %2305 = vrot.lane.b32.xlu0 %v2278, 20
        %v2306 = vpop.permute.xlu0 %2305
        %2307 = vrot.lane.b32.xlu0 %v2279, 20
        %v2308 = vpop.permute.xlu0 %2307
        %2309 = vrot.lane.b32.xlu0 %v2280, 20
        %v2310 = vpop.permute.xlu0 %2309
        %2311 = vrot.lane.b32.xlu0 %v2281, 20
        %v2312 = vpop.permute.xlu0 %2311
        %2313 = vrot.lane.b32.xlu0 %v2282, 20
        %v2314 = vpop.permute.xlu0 %2313
        %vm2331 = vcmask 195744
        %2332 = vst.msk [vmem:[#allocation2] sm:$0xff] %vm2331, %v2284
        %2333 = vst.msk [vmem:[#allocation2 + $0x8] sm:$0xff] %vm2331, %v2286
        %2334 = vst.msk [vmem:[#allocation2 + $0x10] sm:$0xff] %vm2331, %v2288
        %2335 = vst.msk [vmem:[#allocation2 + $0x18] sm:$0xff] %vm2331, %v2290
        %2336 = vst.msk [vmem:[#allocation2 + $0x20] sm:$0xff] %vm2331, %v2292
        %2337 = vst.msk [vmem:[#allocation2 + $0x28] sm:$0xff] %vm2331, %v2294
        %2338 = vst.msk [vmem:[#allocation2 + $0x30] sm:$0xff] %vm2331, %v2296
        %2339 = vst.msk [vmem:[#allocation2 + $0x38] sm:$0xff] %vm2331, %v2298
        %2340 = vst.msk [vmem:[#allocation2 + $0x40] sm:$0xff] %vm2331, %v2300
        %2341 = vst.msk [vmem:[#allocation2 + $0x48] sm:$0xff] %vm2331, %v2302
        %2342 = vst.msk [vmem:[#allocation2 + $0x50] sm:$0xff] %vm2331, %v2304
        %2343 = vst.msk [vmem:[#allocation2 + $0x58] sm:$0xff] %vm2331, %v2306
        %2344 = vst.msk [vmem:[#allocation2 + $0x60] sm:$0xff] %vm2331, %v2308
        %2345 = vst.msk [vmem:[#allocation2 + $0x68] sm:$0xff] %vm2331, %v2310
        %2346 = vst.msk [vmem:[#allocation2 + $0x70] sm:$0xff] %vm2331, %v2312
        %2347 = vst.msk [vmem:[#allocation2 + $0x78] sm:$0xff] %vm2331, %v2314
        %s2348 = scalar_lea.vmem %s243, 24 [#allocation3]
        %v2349 = vld [vmem:[%s2348] sm:$0xf]
        %v2350 = vld [vmem:[%s2348 + $0x4] sm:$0xf]
        %v2351 = vld [vmem:[%s2348 + $0xc] sm:$0xf]
        %v2352 = vld [vmem:[%s2348 + $0x10] sm:$0xf]
        %v2353 = vld [vmem:[%s2348 + $0x18] sm:$0xf]
        %v2354 = vld [vmem:[%s2348 + $0x1c] sm:$0xf]
        %v2355 = vld [vmem:[%s2348 + $0x24] sm:$0xf]
        %v2356 = vld [vmem:[%s2348 + $0x28] sm:$0xf]
        %v2357 = vld [vmem:[%s2348 + $0x30] sm:$0xf]
        %v2358 = vld [vmem:[%s2348 + $0x34] sm:$0xf]
        %v2359 = vld [vmem:[%s2348 + $0x3c] sm:$0xf]
        %v2360 = vld [vmem:[%s2348 + $0x40] sm:$0xf]
        %v2361 = vld [vmem:[%s2348 + $0x48] sm:$0xf]
        %v2362 = vld [vmem:[%s2348 + $0x4c] sm:$0xf]
        %v2363 = vld [vmem:[%s2348 + $0x54] sm:$0xf]
        %v2364 = vld [vmem:[%s2348 + $0x58] sm:$0xf]
        %v2365 = vld [vmem:[%s2348 + $0x60] sm:$0xf]
        %v2366 = vld [vmem:[%s2348 + $0x64] sm:$0xf]
        %v2367 = vld [vmem:[%s2348 + $0x6c] sm:$0xf]
        %v2368 = vld [vmem:[%s2348 + $0x70] sm:$0xf]
        %v2369 = vld [vmem:[%s2348 + $0x78] sm:$0xf]
        %v2370 = vld [vmem:[%s2348 + $0x7c] sm:$0xf]
        %v2371 = vld [vmem:[%s2348 + $0x84] sm:$0xf]
        %v2372 = vld [vmem:[%s2348 + $0x88] sm:$0xf]
        %v2373 = vld [vmem:[%s2348 + $0x90] sm:$0xf]
        %v2374 = vld [vmem:[%s2348 + $0x94] sm:$0xf]
        %v2375 = vld [vmem:[%s2348 + $0x9c] sm:$0xf]
        %v2376 = vld [vmem:[%s2348 + $0xa0] sm:$0xf]
        %v2377 = vld [vmem:[%s2348 + $0xa8] sm:$0xf]
        %v2378 = vld [vmem:[%s2348 + $0xac] sm:$0xf]
        %v2379 = vld [vmem:[%s2348 + $0xb4] sm:$0xf]
        %v2380 = vld [vmem:[%s2348 + $0xb8] sm:$0xf]
        %v2413 = vunpack.c.l.b16 %v2349
        %v2414 = vunpack.c.l.b16 %v2350
        %v2415 = vunpack.c.l.b16 %v2351
        %v2416 = vunpack.c.l.b16 %v2352
        %v2417 = vunpack.c.l.b16 %v2353
        %v2418 = vunpack.c.l.b16 %v2354
        %v2419 = vunpack.c.l.b16 %v2355
        %v2420 = vunpack.c.l.b16 %v2356
        %v2421 = vunpack.c.l.b16 %v2357
        %v2422 = vunpack.c.l.b16 %v2358
        %v2423 = vunpack.c.l.b16 %v2359
        %v2424 = vunpack.c.l.b16 %v2360
        %v2425 = vunpack.c.l.b16 %v2361
        %v2426 = vunpack.c.l.b16 %v2362
        %v2427 = vunpack.c.l.b16 %v2363
        %v2428 = vunpack.c.l.b16 %v2364
        %v2429 = vunpack.c.l.b16 %v2365
        %v2430 = vunpack.c.l.b16 %v2366
        %v2431 = vunpack.c.l.b16 %v2367
        %v2432 = vunpack.c.l.b16 %v2368
        %v2433 = vunpack.c.l.b16 %v2369
        %v2434 = vunpack.c.l.b16 %v2370
        %v2435 = vunpack.c.l.b16 %v2371
        %v2436 = vunpack.c.l.b16 %v2372
        %v2437 = vunpack.c.l.b16 %v2373
        %v2438 = vunpack.c.l.b16 %v2374
        %v2439 = vunpack.c.l.b16 %v2375
        %v2440 = vunpack.c.l.b16 %v2376
        %v2441 = vunpack.c.l.b16 %v2377
        %v2442 = vunpack.c.l.b16 %v2378
        %v2443 = vunpack.c.l.b16 %v2379
        %v2444 = vunpack.c.l.b16 %v2380
        %v2445 = vpack.c.b16 %v2414, %v2413
        %v2446 = vpack.c.b16 %v2416, %v2415
        %v2447 = vpack.c.b16 %v2418, %v2417
        %v2448 = vpack.c.b16 %v2420, %v2419
        %v2449 = vpack.c.b16 %v2422, %v2421
        %v2450 = vpack.c.b16 %v2424, %v2423
        %v2451 = vpack.c.b16 %v2426, %v2425
        %v2452 = vpack.c.b16 %v2428, %v2427
        %v2453 = vpack.c.b16 %v2430, %v2429
        %v2454 = vpack.c.b16 %v2432, %v2431
        %v2455 = vpack.c.b16 %v2434, %v2433
        %v2456 = vpack.c.b16 %v2436, %v2435
        %v2457 = vpack.c.b16 %v2438, %v2437
        %v2458 = vpack.c.b16 %v2440, %v2439
        %v2459 = vpack.c.b16 %v2442, %v2441
        %v2460 = vpack.c.b16 %v2444, %v2443
        %2461 = vrot.lane.b32.xlu0 %v2445, 24
        %v2462 = vpop.permute.xlu0 %2461
        %2463 = vrot.lane.b32.xlu0 %v2446, 24
        %v2464 = vpop.permute.xlu0 %2463
        %2465 = vrot.lane.b32.xlu0 %v2447, 24
        %v2466 = vpop.permute.xlu0 %2465
        %2467 = vrot.lane.b32.xlu0 %v2448, 24
        %v2468 = vpop.permute.xlu0 %2467
        %2469 = vrot.lane.b32.xlu0 %v2449, 24
        %v2470 = vpop.permute.xlu0 %2469
        %2471 = vrot.lane.b32.xlu0 %v2450, 24
        %v2472 = vpop.permute.xlu0 %2471
        %2473 = vrot.lane.b32.xlu0 %v2451, 24
        %v2474 = vpop.permute.xlu0 %2473
        %2475 = vrot.lane.b32.xlu0 %v2452, 24
        %v2476 = vpop.permute.xlu0 %2475
        %2477 = vrot.lane.b32.xlu0 %v2453, 24
        %v2478 = vpop.permute.xlu0 %2477
        %2479 = vrot.lane.b32.xlu0 %v2454, 24
        %v2480 = vpop.permute.xlu0 %2479
        %2481 = vrot.lane.b32.xlu0 %v2455, 24
        %v2482 = vpop.permute.xlu0 %2481
        %2483 = vrot.lane.b32.xlu0 %v2456, 24
        %v2484 = vpop.permute.xlu0 %2483
        %2485 = vrot.lane.b32.xlu0 %v2457, 24
        %v2486 = vpop.permute.xlu0 %2485
        %2487 = vrot.lane.b32.xlu0 %v2458, 24
        %v2488 = vpop.permute.xlu0 %2487
        %2489 = vrot.lane.b32.xlu0 %v2459, 24
        %v2490 = vpop.permute.xlu0 %2489
        %2491 = vrot.lane.b32.xlu0 %v2460, 24
        %v2492 = vpop.permute.xlu0 %2491
        %vm2509 = vcmask 228544
        %2510 = vst.msk [vmem:[#allocation2] sm:$0xff] %vm2509, %v2462
        %2511 = vst.msk [vmem:[#allocation2 + $0x8] sm:$0xff] %vm2509, %v2464
        %2512 = vst.msk [vmem:[#allocation2 + $0x10] sm:$0xff] %vm2509, %v2466
        %2513 = vst.msk [vmem:[#allocation2 + $0x18] sm:$0xff] %vm2509, %v2468
        %2514 = vst.msk [vmem:[#allocation2 + $0x20] sm:$0xff] %vm2509, %v2470
        %2515 = vst.msk [vmem:[#allocation2 + $0x28] sm:$0xff] %vm2509, %v2472
        %2516 = vst.msk [vmem:[#allocation2 + $0x30] sm:$0xff] %vm2509, %v2474
        %2517 = vst.msk [vmem:[#allocation2 + $0x38] sm:$0xff] %vm2509, %v2476
        %2518 = vst.msk [vmem:[#allocation2 + $0x40] sm:$0xff] %vm2509, %v2478
        %2519 = vst.msk [vmem:[#allocation2 + $0x48] sm:$0xff] %vm2509, %v2480
        %2520 = vst.msk [vmem:[#allocation2 + $0x50] sm:$0xff] %vm2509, %v2482
        %2521 = vst.msk [vmem:[#allocation2 + $0x58] sm:$0xff] %vm2509, %v2484
        %2522 = vst.msk [vmem:[#allocation2 + $0x60] sm:$0xff] %vm2509, %v2486
        %2523 = vst.msk [vmem:[#allocation2 + $0x68] sm:$0xff] %vm2509, %v2488
        %2524 = vst.msk [vmem:[#allocation2 + $0x70] sm:$0xff] %vm2509, %v2490
        %2525 = vst.msk [vmem:[#allocation2 + $0x78] sm:$0xff] %vm2509, %v2492
        %v2526 = vld [vmem:[%s2348] sm:$0xf]
        %v2527 = vld [vmem:[%s2348 + $0x4] sm:$0xf]
        %v2528 = vld [vmem:[%s2348 + $0x8] sm:$0x1]
        %v2529 = vld [vmem:[%s2348 + $0xc] sm:$0xf]
        %v2530 = vld [vmem:[%s2348 + $0x10] sm:$0xf]
        %v2531 = vld [vmem:[%s2348 + $0x14] sm:$0x1]
        %v2532 = vld [vmem:[%s2348 + $0x18] sm:$0xf]
        %v2533 = vld [vmem:[%s2348 + $0x1c] sm:$0xf]
        %v2534 = vld [vmem:[%s2348 + $0x20] sm:$0x1]
        %v2535 = vld [vmem:[%s2348 + $0x24] sm:$0xf]
        %v2536 = vld [vmem:[%s2348 + $0x28] sm:$0xf]
        %v2537 = vld [vmem:[%s2348 + $0x2c] sm:$0x1]
        %v2538 = vld [vmem:[%s2348 + $0x30] sm:$0xf]
        %v2539 = vld [vmem:[%s2348 + $0x34] sm:$0xf]
        %v2540 = vld [vmem:[%s2348 + $0x38] sm:$0x1]
        %v2541 = vld [vmem:[%s2348 + $0x3c] sm:$0xf]
        %v2542 = vld [vmem:[%s2348 + $0x40] sm:$0xf]
        %v2543 = vld [vmem:[%s2348 + $0x44] sm:$0x1]
        %v2544 = vld [vmem:[%s2348 + $0x48] sm:$0xf]
        %v2545 = vld [vmem:[%s2348 + $0x4c] sm:$0xf]
        %v2546 = vld [vmem:[%s2348 + $0x50] sm:$0x1]
        %v2547 = vld [vmem:[%s2348 + $0x54] sm:$0xf]
        %v2548 = vld [vmem:[%s2348 + $0x58] sm:$0xf]
        %v2549 = vld [vmem:[%s2348 + $0x5c] sm:$0x1]
        %v2550 = vld [vmem:[%s2348 + $0x60] sm:$0xf]
        %v2551 = vld [vmem:[%s2348 + $0x64] sm:$0xf]
        %v2552 = vld [vmem:[%s2348 + $0x68] sm:$0x1]
        %v2553 = vld [vmem:[%s2348 + $0x6c] sm:$0xf]
        %v2554 = vld [vmem:[%s2348 + $0x70] sm:$0xf]
        %v2555 = vld [vmem:[%s2348 + $0x74] sm:$0x1]
        %v2556 = vld [vmem:[%s2348 + $0x78] sm:$0xf]
        %v2557 = vld [vmem:[%s2348 + $0x7c] sm:$0xf]
        %v2558 = vld [vmem:[%s2348 + $0x80] sm:$0x1]
        %v2559 = vld [vmem:[%s2348 + $0x84] sm:$0xf]
        %v2560 = vld [vmem:[%s2348 + $0x88] sm:$0xf]
        %v2561 = vld [vmem:[%s2348 + $0x8c] sm:$0x1]
        %v2562 = vld [vmem:[%s2348 + $0x90] sm:$0xf]
        %v2563 = vld [vmem:[%s2348 + $0x94] sm:$0xf]
        %v2564 = vld [vmem:[%s2348 + $0x98] sm:$0x1]
        %v2565 = vld [vmem:[%s2348 + $0x9c] sm:$0xf]
        %v2566 = vld [vmem:[%s2348 + $0xa0] sm:$0xf]
        %v2567 = vld [vmem:[%s2348 + $0xa4] sm:$0x1]
        %v2568 = vld [vmem:[%s2348 + $0xa8] sm:$0xf]
        %v2569 = vld [vmem:[%s2348 + $0xac] sm:$0xf]
        %v2570 = vld [vmem:[%s2348 + $0xb0] sm:$0x1]
        %v2571 = vld [vmem:[%s2348 + $0xb4] sm:$0xf]
        %v2572 = vld [vmem:[%s2348 + $0xb8] sm:$0xf]
        %v2573 = vld [vmem:[%s2348 + $0xbc] sm:$0x1]
        %v2575 = vshrl.u32 %v2526, 16
        %v2577 = vrot.slane %v2575, 4
        %v2578 = vshll.u32 %v2526, 16
        %v2580 = vrot.slane %v2578, 5
        %v2581 = vor.u32 %v2577, %v2580
        %v2582 = vrot.slane %v2581, 4
        %v2584 = vshll.u32 %v2527, 16
        %v2586 = vrot.slane %v2584, 5
        %v2587 = vsel %vm482, %v2582, %v2586
        %v2588 = vshrl.u32 %v2527, 16
        %v2590 = vrot.slane %v2588, 4
        %v2591 = vor.u32 %v2590, %v2586
        %v2592 = vrot.slane %v2591, 4
        %v2594 = vshll.u32 %v2528, 16
        %v2596 = vrot.slane %v2594, 5
        %v2597 = vsel %vm482, %v2592, %v2596
        %v2599 = vshrl.u32 %v2529, 16
        %v2601 = vrot.slane %v2599, 4
        %v2602 = vshll.u32 %v2529, 16
        %v2604 = vrot.slane %v2602, 5
        %v2605 = vor.u32 %v2601, %v2604
        %v2606 = vrot.slane %v2605, 4
        %v2608 = vshll.u32 %v2530, 16
        %v2610 = vrot.slane %v2608, 5
        %v2611 = vsel %vm482, %v2606, %v2610
        %v2612 = vshrl.u32 %v2530, 16
        %v2614 = vrot.slane %v2612, 4
        %v2615 = vor.u32 %v2614, %v2610
        %v2616 = vrot.slane %v2615, 4
        %v2618 = vshll.u32 %v2531, 16
        %v2620 = vrot.slane %v2618, 5
        %v2621 = vsel %vm482, %v2616, %v2620
        %v2623 = vshrl.u32 %v2532, 16
        %v2625 = vrot.slane %v2623, 4
        %v2626 = vshll.u32 %v2532, 16
        %v2628 = vrot.slane %v2626, 5
        %v2629 = vor.u32 %v2625, %v2628
        %v2630 = vrot.slane %v2629, 4
        %v2632 = vshll.u32 %v2533, 16
        %v2634 = vrot.slane %v2632, 5
        %v2635 = vsel %vm482, %v2630, %v2634
        %v2636 = vshrl.u32 %v2533, 16
        %v2638 = vrot.slane %v2636, 4
        %v2639 = vor.u32 %v2638, %v2634
        %v2640 = vrot.slane %v2639, 4
        %v2642 = vshll.u32 %v2534, 16
        %v2644 = vrot.slane %v2642, 5
        %v2645 = vsel %vm482, %v2640, %v2644
        %v2647 = vshrl.u32 %v2535, 16
        %v2649 = vrot.slane %v2647, 4
        %v2650 = vshll.u32 %v2535, 16
        %v2652 = vrot.slane %v2650, 5
        %v2653 = vor.u32 %v2649, %v2652
        %v2654 = vrot.slane %v2653, 4
        %v2656 = vshll.u32 %v2536, 16
        %v2658 = vrot.slane %v2656, 5
        %v2659 = vsel %vm482, %v2654, %v2658
        %v2660 = vshrl.u32 %v2536, 16
        %v2662 = vrot.slane %v2660, 4
        %v2663 = vor.u32 %v2662, %v2658
        %v2664 = vrot.slane %v2663, 4
        %v2666 = vshll.u32 %v2537, 16
        %v2668 = vrot.slane %v2666, 5
        %v2669 = vsel %vm482, %v2664, %v2668
        %v2671 = vshrl.u32 %v2538, 16
        %v2673 = vrot.slane %v2671, 4
        %v2674 = vshll.u32 %v2538, 16
        %v2676 = vrot.slane %v2674, 5
        %v2677 = vor.u32 %v2673, %v2676
        %v2678 = vrot.slane %v2677, 4
        %v2680 = vshll.u32 %v2539, 16
        %v2682 = vrot.slane %v2680, 5
        %v2683 = vsel %vm482, %v2678, %v2682
        %v2684 = vshrl.u32 %v2539, 16
        %v2686 = vrot.slane %v2684, 4
        %v2687 = vor.u32 %v2686, %v2682
        %v2688 = vrot.slane %v2687, 4
        %v2690 = vshll.u32 %v2540, 16
        %v2692 = vrot.slane %v2690, 5
        %v2693 = vsel %vm482, %v2688, %v2692
        %v2695 = vshrl.u32 %v2541, 16
        %v2697 = vrot.slane %v2695, 4
        %v2698 = vshll.u32 %v2541, 16
        %v2700 = vrot.slane %v2698, 5
        %v2701 = vor.u32 %v2697, %v2700
        %v2702 = vrot.slane %v2701, 4
        %v2704 = vshll.u32 %v2542, 16
        %v2706 = vrot.slane %v2704, 5
        %v2707 = vsel %vm482, %v2702, %v2706
        %v2708 = vshrl.u32 %v2542, 16
        %v2710 = vrot.slane %v2708, 4
        %v2711 = vor.u32 %v2710, %v2706
        %v2712 = vrot.slane %v2711, 4
        %v2714 = vshll.u32 %v2543, 16
        %v2716 = vrot.slane %v2714, 5
        %v2717 = vsel %vm482, %v2712, %v2716
        %v2719 = vshrl.u32 %v2544, 16
        %v2721 = vrot.slane %v2719, 4
        %v2722 = vshll.u32 %v2544, 16
        %v2724 = vrot.slane %v2722, 5
        %v2725 = vor.u32 %v2721, %v2724
        %v2726 = vrot.slane %v2725, 4
        %v2728 = vshll.u32 %v2545, 16
        %v2730 = vrot.slane %v2728, 5
        %v2731 = vsel %vm482, %v2726, %v2730
        %v2732 = vshrl.u32 %v2545, 16
        %v2734 = vrot.slane %v2732, 4
        %v2735 = vor.u32 %v2734, %v2730
        %v2736 = vrot.slane %v2735, 4
        %v2738 = vshll.u32 %v2546, 16
        %v2740 = vrot.slane %v2738, 5
        %v2741 = vsel %vm482, %v2736, %v2740
        %v2743 = vshrl.u32 %v2547, 16
        %v2745 = vrot.slane %v2743, 4
        %v2746 = vshll.u32 %v2547, 16
        %v2748 = vrot.slane %v2746, 5
        %v2749 = vor.u32 %v2745, %v2748
        %v2750 = vrot.slane %v2749, 4
        %v2752 = vshll.u32 %v2548, 16
        %v2754 = vrot.slane %v2752, 5
        %v2755 = vsel %vm482, %v2750, %v2754
        %v2756 = vshrl.u32 %v2548, 16
        %v2758 = vrot.slane %v2756, 4
        %v2759 = vor.u32 %v2758, %v2754
        %v2760 = vrot.slane %v2759, 4
        %v2762 = vshll.u32 %v2549, 16
        %v2764 = vrot.slane %v2762, 5
        %v2765 = vsel %vm482, %v2760, %v2764
        %v2767 = vshrl.u32 %v2550, 16
        %v2769 = vrot.slane %v2767, 4
        %v2770 = vshll.u32 %v2550, 16
        %v2772 = vrot.slane %v2770, 5
        %v2773 = vor.u32 %v2769, %v2772
        %v2774 = vrot.slane %v2773, 4
        %v2776 = vshll.u32 %v2551, 16
        %v2778 = vrot.slane %v2776, 5
        %v2779 = vsel %vm482, %v2774, %v2778
        %v2780 = vshrl.u32 %v2551, 16
        %v2782 = vrot.slane %v2780, 4
        %v2783 = vor.u32 %v2782, %v2778
        %v2784 = vrot.slane %v2783, 4
        %v2786 = vshll.u32 %v2552, 16
        %v2788 = vrot.slane %v2786, 5
        %v2789 = vsel %vm482, %v2784, %v2788
        %v2791 = vshrl.u32 %v2553, 16
        %v2793 = vrot.slane %v2791, 4
        %v2794 = vshll.u32 %v2553, 16
        %v2796 = vrot.slane %v2794, 5
        %v2797 = vor.u32 %v2793, %v2796
        %v2798 = vrot.slane %v2797, 4
        %v2800 = vshll.u32 %v2554, 16
        %v2802 = vrot.slane %v2800, 5
        %v2803 = vsel %vm482, %v2798, %v2802
        %v2804 = vshrl.u32 %v2554, 16
        %v2806 = vrot.slane %v2804, 4
        %v2807 = vor.u32 %v2806, %v2802
        %v2808 = vrot.slane %v2807, 4
        %v2810 = vshll.u32 %v2555, 16
        %v2812 = vrot.slane %v2810, 5
        %v2813 = vsel %vm482, %v2808, %v2812
        %v2815 = vshrl.u32 %v2556, 16
        %v2817 = vrot.slane %v2815, 4
        %v2818 = vshll.u32 %v2556, 16
        %v2820 = vrot.slane %v2818, 5
        %v2821 = vor.u32 %v2817, %v2820
        %v2822 = vrot.slane %v2821, 4
        %v2824 = vshll.u32 %v2557, 16
        %v2826 = vrot.slane %v2824, 5
        %v2827 = vsel %vm482, %v2822, %v2826
        %v2828 = vshrl.u32 %v2557, 16
        %v2830 = vrot.slane %v2828, 4
        %v2831 = vor.u32 %v2830, %v2826
        %v2832 = vrot.slane %v2831, 4
        %v2834 = vshll.u32 %v2558, 16
        %v2836 = vrot.slane %v2834, 5
        %v2837 = vsel %vm482, %v2832, %v2836
        %v2839 = vshrl.u32 %v2559, 16
        %v2841 = vrot.slane %v2839, 4
        %v2842 = vshll.u32 %v2559, 16
        %v2844 = vrot.slane %v2842, 5
        %v2845 = vor.u32 %v2841, %v2844
        %v2846 = vrot.slane %v2845, 4
        %v2848 = vshll.u32 %v2560, 16
        %v2850 = vrot.slane %v2848, 5
        %v2851 = vsel %vm482, %v2846, %v2850
        %v2852 = vshrl.u32 %v2560, 16
        %v2854 = vrot.slane %v2852, 4
        %v2855 = vor.u32 %v2854, %v2850
        %v2856 = vrot.slane %v2855, 4
        %v2858 = vshll.u32 %v2561, 16
        %v2860 = vrot.slane %v2858, 5
        %v2861 = vsel %vm482, %v2856, %v2860
        %v2863 = vshrl.u32 %v2562, 16
        %v2865 = vrot.slane %v2863, 4
        %v2866 = vshll.u32 %v2562, 16
        %v2868 = vrot.slane %v2866, 5
        %v2869 = vor.u32 %v2865, %v2868
        %v2870 = vrot.slane %v2869, 4
        %v2872 = vshll.u32 %v2563, 16
        %v2874 = vrot.slane %v2872, 5
        %v2875 = vsel %vm482, %v2870, %v2874
        %v2876 = vshrl.u32 %v2563, 16
        %v2878 = vrot.slane %v2876, 4
        %v2879 = vor.u32 %v2878, %v2874
        %v2880 = vrot.slane %v2879, 4
        %v2882 = vshll.u32 %v2564, 16
        %v2884 = vrot.slane %v2882, 5
        %v2885 = vsel %vm482, %v2880, %v2884
        %v2887 = vshrl.u32 %v2565, 16
        %v2889 = vrot.slane %v2887, 4
        %v2890 = vshll.u32 %v2565, 16
        %v2892 = vrot.slane %v2890, 5
        %v2893 = vor.u32 %v2889, %v2892
        %v2894 = vrot.slane %v2893, 4
        %v2896 = vshll.u32 %v2566, 16
        %v2898 = vrot.slane %v2896, 5
        %v2899 = vsel %vm482, %v2894, %v2898
        %v2900 = vshrl.u32 %v2566, 16
        %v2902 = vrot.slane %v2900, 4
        %v2903 = vor.u32 %v2902, %v2898
        %v2904 = vrot.slane %v2903, 4
        %v2906 = vshll.u32 %v2567, 16
        %v2908 = vrot.slane %v2906, 5
        %v2909 = vsel %vm482, %v2904, %v2908
        %v2911 = vshrl.u32 %v2568, 16
        %v2913 = vrot.slane %v2911, 4
        %v2914 = vshll.u32 %v2568, 16
        %v2916 = vrot.slane %v2914, 5
        %v2917 = vor.u32 %v2913, %v2916
        %v2918 = vrot.slane %v2917, 4
        %v2920 = vshll.u32 %v2569, 16
        %v2922 = vrot.slane %v2920, 5
        %v2923 = vsel %vm482, %v2918, %v2922
        %v2924 = vshrl.u32 %v2569, 16
        %v2926 = vrot.slane %v2924, 4
        %v2927 = vor.u32 %v2926, %v2922
        %v2928 = vrot.slane %v2927, 4
        %v2930 = vshll.u32 %v2570, 16
        %v2932 = vrot.slane %v2930, 5
        %v2933 = vsel %vm482, %v2928, %v2932
        %v2935 = vshrl.u32 %v2571, 16
        %v2937 = vrot.slane %v2935, 4
        %v2938 = vshll.u32 %v2571, 16
        %v2940 = vrot.slane %v2938, 5
        %v2941 = vor.u32 %v2937, %v2940
        %v2942 = vrot.slane %v2941, 4
        %v2944 = vshll.u32 %v2572, 16
        %v2946 = vrot.slane %v2944, 5
        %v2947 = vsel %vm482, %v2942, %v2946
        %v2948 = vshrl.u32 %v2572, 16
        %v2950 = vrot.slane %v2948, 4
        %v2951 = vor.u32 %v2950, %v2946
        %v2952 = vrot.slane %v2951, 4
        %v2954 = vshll.u32 %v2573, 16
        %v2956 = vrot.slane %v2954, 5
        %v2957 = vsel %vm482, %v2952, %v2956
        %v2958 = vunpack.c.l.b16 %v2587
        %v2959 = vunpack.c.l.b16 %v2597
        %v2960 = vunpack.c.l.b16 %v2611
        %v2961 = vunpack.c.l.b16 %v2621
        %v2962 = vunpack.c.l.b16 %v2635
        %v2963 = vunpack.c.l.b16 %v2645
        %v2964 = vunpack.c.l.b16 %v2659
        %v2965 = vunpack.c.l.b16 %v2669
        %v2966 = vunpack.c.l.b16 %v2683
        %v2967 = vunpack.c.l.b16 %v2693
        %v2968 = vunpack.c.l.b16 %v2707
        %v2969 = vunpack.c.l.b16 %v2717
        %v2970 = vunpack.c.l.b16 %v2731
        %v2971 = vunpack.c.l.b16 %v2741
        %v2972 = vunpack.c.l.b16 %v2755
        %v2973 = vunpack.c.l.b16 %v2765
        %v2974 = vunpack.c.l.b16 %v2779
        %v2975 = vunpack.c.l.b16 %v2789
        %v2976 = vunpack.c.l.b16 %v2803
        %v2977 = vunpack.c.l.b16 %v2813
        %v2978 = vunpack.c.l.b16 %v2827
        %v2979 = vunpack.c.l.b16 %v2837
        %v2980 = vunpack.c.l.b16 %v2851
        %v2981 = vunpack.c.l.b16 %v2861
        %v2982 = vunpack.c.l.b16 %v2875
        %v2983 = vunpack.c.l.b16 %v2885
        %v2984 = vunpack.c.l.b16 %v2899
        %v2985 = vunpack.c.l.b16 %v2909
        %v2986 = vunpack.c.l.b16 %v2923
        %v2987 = vunpack.c.l.b16 %v2933
        %v2988 = vunpack.c.l.b16 %v2947
        %v2989 = vunpack.c.l.b16 %v2957
        %v2990 = vpack.c.b16 %v2959, %v2958
        %v2991 = vpack.c.b16 %v2961, %v2960
        %v2992 = vpack.c.b16 %v2963, %v2962
        %v2993 = vpack.c.b16 %v2965, %v2964
        %v2994 = vpack.c.b16 %v2967, %v2966
        %v2995 = vpack.c.b16 %v2969, %v2968
        %v2996 = vpack.c.b16 %v2971, %v2970
        %v2997 = vpack.c.b16 %v2973, %v2972
        %v2998 = vpack.c.b16 %v2975, %v2974
        %v2999 = vpack.c.b16 %v2977, %v2976
        %v3000 = vpack.c.b16 %v2979, %v2978
        %v3001 = vpack.c.b16 %v2981, %v2980
        %v3002 = vpack.c.b16 %v2983, %v2982
        %v3003 = vpack.c.b16 %v2985, %v2984
        %v3004 = vpack.c.b16 %v2987, %v2986
        %v3005 = vpack.c.b16 %v2989, %v2988
        %3006 = vrot.lane.b32.xlu0 %v2990, 28
        %v3007 = vpop.permute.xlu0 %3006
        %3008 = vrot.lane.b32.xlu0 %v2991, 28
        %v3009 = vpop.permute.xlu0 %3008
        %3010 = vrot.lane.b32.xlu0 %v2992, 28
        %v3011 = vpop.permute.xlu0 %3010
        %3012 = vrot.lane.b32.xlu0 %v2993, 28
        %v3013 = vpop.permute.xlu0 %3012
        %3014 = vrot.lane.b32.xlu0 %v2994, 28
        %v3015 = vpop.permute.xlu0 %3014
        %3016 = vrot.lane.b32.xlu0 %v2995, 28
        %v3017 = vpop.permute.xlu0 %3016
        %3018 = vrot.lane.b32.xlu0 %v2996, 28
        %v3019 = vpop.permute.xlu0 %3018
        %3020 = vrot.lane.b32.xlu0 %v2997, 28
        %v3021 = vpop.permute.xlu0 %3020
        %3022 = vrot.lane.b32.xlu0 %v2998, 28
        %v3023 = vpop.permute.xlu0 %3022
        %3024 = vrot.lane.b32.xlu0 %v2999, 28
        %v3025 = vpop.permute.xlu0 %3024
        %3026 = vrot.lane.b32.xlu0 %v3000, 28
        %v3027 = vpop.permute.xlu0 %3026
        %3028 = vrot.lane.b32.xlu0 %v3001, 28
        %v3029 = vpop.permute.xlu0 %3028
        %3030 = vrot.lane.b32.xlu0 %v3002, 28
        %v3031 = vpop.permute.xlu0 %3030
        %3032 = vrot.lane.b32.xlu0 %v3003, 28
        %v3033 = vpop.permute.xlu0 %3032
        %3034 = vrot.lane.b32.xlu0 %v3004, 28
        %v3035 = vpop.permute.xlu0 %3034
        %3036 = vrot.lane.b32.xlu0 %v3005, 28
        %v3037 = vpop.permute.xlu0 %3036
        %vm3054 = vcmask 261344
        %3055 = vst.msk [vmem:[#allocation2] sm:$0xff] %vm3054, %v3007
        %3056 = vst.msk [vmem:[#allocation2 + $0x8] sm:$0xff] %vm3054, %v3009
        %3057 = vst.msk [vmem:[#allocation2 + $0x10] sm:$0xff] %vm3054, %v3011
        %3058 = vst.msk [vmem:[#allocation2 + $0x18] sm:$0xff] %vm3054, %v3013
        %3059 = vst.msk [vmem:[#allocation2 + $0x20] sm:$0xff] %vm3054, %v3015
        %3060 = vst.msk [vmem:[#allocation2 + $0x28] sm:$0xff] %vm3054, %v3017
        %3061 = vst.msk [vmem:[#allocation2 + $0x30] sm:$0xff] %vm3054, %v3019
        %3062 = vst.msk [vmem:[#allocation2 + $0x38] sm:$0xff] %vm3054, %v3021
        %3063 = vst.msk [vmem:[#allocation2 + $0x40] sm:$0xff] %vm3054, %v3023
        %3064 = vst.msk [vmem:[#allocation2 + $0x48] sm:$0xff] %vm3054, %v3025
        %3065 = vst.msk [vmem:[#allocation2 + $0x50] sm:$0xff] %vm3054, %v3027
        %3066 = vst.msk [vmem:[#allocation2 + $0x58] sm:$0xff] %vm3054, %v3029
        %3067 = vst.msk [vmem:[#allocation2 + $0x60] sm:$0xff] %vm3054, %v3031
        %3068 = vst.msk [vmem:[#allocation2 + $0x68] sm:$0xff] %vm3054, %v3033
        %3069 = vst.msk [vmem:[#allocation2 + $0x70] sm:$0xff] %vm3054, %v3035
        %3070 = vst.msk [vmem:[#allocation2 + $0x78] sm:$0xff] %vm3054, %v3037
        %v3071 = vld [vmem:[%s2348] sm:$0xe]
        %v3072 = vld [vmem:[%s2348 + $0x4] sm:$0xf]
        %v3073 = vld [vmem:[%s2348 + $0x8] sm:$0x1]
        %v3074 = vld [vmem:[%s2348 + $0xc] sm:$0xe]
        %v3075 = vld [vmem:[%s2348 + $0x10] sm:$0xf]
        %v3076 = vld [vmem:[%s2348 + $0x14] sm:$0x1]
        %v3077 = vld [vmem:[%s2348 + $0x18] sm:$0xe]
        %v3078 = vld [vmem:[%s2348 + $0x1c] sm:$0xf]
        %v3079 = vld [vmem:[%s2348 + $0x20] sm:$0x1]
        %v3080 = vld [vmem:[%s2348 + $0x24] sm:$0xe]
        %v3081 = vld [vmem:[%s2348 + $0x28] sm:$0xf]
        %v3082 = vld [vmem:[%s2348 + $0x2c] sm:$0x1]
        %v3083 = vld [vmem:[%s2348 + $0x30] sm:$0xe]
        %v3084 = vld [vmem:[%s2348 + $0x34] sm:$0xf]
        %v3085 = vld [vmem:[%s2348 + $0x38] sm:$0x1]
        %v3086 = vld [vmem:[%s2348 + $0x3c] sm:$0xe]
        %v3087 = vld [vmem:[%s2348 + $0x40] sm:$0xf]
        %v3088 = vld [vmem:[%s2348 + $0x44] sm:$0x1]
        %v3089 = vld [vmem:[%s2348 + $0x48] sm:$0xe]
        %v3090 = vld [vmem:[%s2348 + $0x4c] sm:$0xf]
        %v3091 = vld [vmem:[%s2348 + $0x50] sm:$0x1]
        %v3092 = vld [vmem:[%s2348 + $0x54] sm:$0xe]
        %v3093 = vld [vmem:[%s2348 + $0x58] sm:$0xf]
        %v3094 = vld [vmem:[%s2348 + $0x5c] sm:$0x1]
        %v3095 = vld [vmem:[%s2348 + $0x60] sm:$0xe]
        %v3096 = vld [vmem:[%s2348 + $0x64] sm:$0xf]
        %v3097 = vld [vmem:[%s2348 + $0x68] sm:$0x1]
        %v3098 = vld [vmem:[%s2348 + $0x6c] sm:$0xe]
        %v3099 = vld [vmem:[%s2348 + $0x70] sm:$0xf]
        %v3100 = vld [vmem:[%s2348 + $0x74] sm:$0x1]
        %v3101 = vld [vmem:[%s2348 + $0x78] sm:$0xe]
        %v3102 = vld [vmem:[%s2348 + $0x7c] sm:$0xf]
        %v3103 = vld [vmem:[%s2348 + $0x80] sm:$0x1]
        %v3104 = vld [vmem:[%s2348 + $0x84] sm:$0xe]
        %v3105 = vld [vmem:[%s2348 + $0x88] sm:$0xf]
        %v3106 = vld [vmem:[%s2348 + $0x8c] sm:$0x1]
        %v3107 = vld [vmem:[%s2348 + $0x90] sm:$0xe]
        %v3108 = vld [vmem:[%s2348 + $0x94] sm:$0xf]
        %v3109 = vld [vmem:[%s2348 + $0x98] sm:$0x1]
        %v3110 = vld [vmem:[%s2348 + $0x9c] sm:$0xe]
        %v3111 = vld [vmem:[%s2348 + $0xa0] sm:$0xf]
        %v3112 = vld [vmem:[%s2348 + $0xa4] sm:$0x1]
        %v3113 = vld [vmem:[%s2348 + $0xa8] sm:$0xe]
        %v3114 = vld [vmem:[%s2348 + $0xac] sm:$0xf]
        %v3115 = vld [vmem:[%s2348 + $0xb0] sm:$0x1]
        %v3116 = vld [vmem:[%s2348 + $0xb4] sm:$0xe]
        %v3117 = vld [vmem:[%s2348 + $0xb8] sm:$0xf]
        %v3118 = vld [vmem:[%s2348 + $0xbc] sm:$0x1]
        %v3167 = vrot.slane %v3071, 5
        %v3168 = vrot.slane %v3167, 4
        %v3169 = vrot.slane %v3072, 5
        %v3170 = vsel %vm1078, %v3168, %v3169
        %v3171 = vrot.slane %v3169, 4
        %v3172 = vrot.slane %v3073, 5
        %v3173 = vsel %vm1078, %v3171, %v3172
        %v3174 = vrot.slane %v3074, 5
        %v3175 = vrot.slane %v3174, 4
        %v3176 = vrot.slane %v3075, 5
        %v3177 = vsel %vm1078, %v3175, %v3176
        %v3178 = vrot.slane %v3176, 4
        %v3179 = vrot.slane %v3076, 5
        %v3180 = vsel %vm1078, %v3178, %v3179
        %v3181 = vrot.slane %v3077, 5
        %v3182 = vrot.slane %v3181, 4
        %v3183 = vrot.slane %v3078, 5
        %v3184 = vsel %vm1078, %v3182, %v3183
        %v3185 = vrot.slane %v3183, 4
        %v3186 = vrot.slane %v3079, 5
        %v3187 = vsel %vm1078, %v3185, %v3186
        %v3188 = vrot.slane %v3080, 5
        %v3189 = vrot.slane %v3188, 4
        %v3190 = vrot.slane %v3081, 5
        %v3191 = vsel %vm1078, %v3189, %v3190
        %v3192 = vrot.slane %v3190, 4
        %v3193 = vrot.slane %v3082, 5
        %v3194 = vsel %vm1078, %v3192, %v3193
        %v3195 = vrot.slane %v3083, 5
        %v3196 = vrot.slane %v3195, 4
        %v3197 = vrot.slane %v3084, 5
        %v3198 = vsel %vm1078, %v3196, %v3197
        %v3199 = vrot.slane %v3197, 4
        %v3200 = vrot.slane %v3085, 5
        %v3201 = vsel %vm1078, %v3199, %v3200
        %v3202 = vrot.slane %v3086, 5
        %v3203 = vrot.slane %v3202, 4
        %v3204 = vrot.slane %v3087, 5
        %v3205 = vsel %vm1078, %v3203, %v3204
        %v3206 = vrot.slane %v3204, 4
        %v3207 = vrot.slane %v3088, 5
        %v3208 = vsel %vm1078, %v3206, %v3207
        %v3209 = vrot.slane %v3089, 5
        %v3210 = vrot.slane %v3209, 4
        %v3211 = vrot.slane %v3090, 5
        %v3212 = vsel %vm1078, %v3210, %v3211
        %v3213 = vrot.slane %v3211, 4
        %v3214 = vrot.slane %v3091, 5
        %v3215 = vsel %vm1078, %v3213, %v3214
        %v3216 = vrot.slane %v3092, 5
        %v3217 = vrot.slane %v3216, 4
        %v3218 = vrot.slane %v3093, 5
        %v3219 = vsel %vm1078, %v3217, %v3218
        %v3220 = vrot.slane %v3218, 4
        %v3221 = vrot.slane %v3094, 5
        %v3222 = vsel %vm1078, %v3220, %v3221
        %v3223 = vrot.slane %v3095, 5
        %v3224 = vrot.slane %v3223, 4
        %v3225 = vrot.slane %v3096, 5
        %v3226 = vsel %vm1078, %v3224, %v3225
        %v3227 = vrot.slane %v3225, 4
        %v3228 = vrot.slane %v3097, 5
        %v3229 = vsel %vm1078, %v3227, %v3228
        %v3230 = vrot.slane %v3098, 5
        %v3231 = vrot.slane %v3230, 4
        %v3232 = vrot.slane %v3099, 5
        %v3233 = vsel %vm1078, %v3231, %v3232
        %v3234 = vrot.slane %v3232, 4
        %v3235 = vrot.slane %v3100, 5
        %v3236 = vsel %vm1078, %v3234, %v3235
        %v3237 = vrot.slane %v3101, 5
        %v3238 = vrot.slane %v3237, 4
        %v3239 = vrot.slane %v3102, 5
        %v3240 = vsel %vm1078, %v3238, %v3239
        %v3241 = vrot.slane %v3239, 4
        %v3242 = vrot.slane %v3103, 5
        %v3243 = vsel %vm1078, %v3241, %v3242
        %v3244 = vrot.slane %v3104, 5
        %v3245 = vrot.slane %v3244, 4
        %v3246 = vrot.slane %v3105, 5
        %v3247 = vsel %vm1078, %v3245, %v3246
        %v3248 = vrot.slane %v3246, 4
        %v3249 = vrot.slane %v3106, 5
        %v3250 = vsel %vm1078, %v3248, %v3249
        %v3251 = vrot.slane %v3107, 5
        %v3252 = vrot.slane %v3251, 4
        %v3253 = vrot.slane %v3108, 5
        %v3254 = vsel %vm1078, %v3252, %v3253
        %v3255 = vrot.slane %v3253, 4
        %v3256 = vrot.slane %v3109, 5
        %v3257 = vsel %vm1078, %v3255, %v3256
        %v3258 = vrot.slane %v3110, 5
        %v3259 = vrot.slane %v3258, 4
        %v3260 = vrot.slane %v3111, 5
        %v3261 = vsel %vm1078, %v3259, %v3260
        %v3262 = vrot.slane %v3260, 4
        %v3263 = vrot.slane %v3112, 5
        %v3264 = vsel %vm1078, %v3262, %v3263
        %v3265 = vrot.slane %v3113, 5
        %v3266 = vrot.slane %v3265, 4
        %v3267 = vrot.slane %v3114, 5
        %v3268 = vsel %vm1078, %v3266, %v3267
        %v3269 = vrot.slane %v3267, 4
        %v3270 = vrot.slane %v3115, 5
        %v3271 = vsel %vm1078, %v3269, %v3270
        %v3272 = vrot.slane %v3116, 5
        %v3273 = vrot.slane %v3272, 4
        %v3274 = vrot.slane %v3117, 5
        %v3275 = vsel %vm1078, %v3273, %v3274
        %v3276 = vrot.slane %v3274, 4
        %v3277 = vrot.slane %v3118, 5
        %v3278 = vsel %vm1078, %v3276, %v3277
        %v3279 = vunpack.c.l.b16 %v3170
        %v3280 = vunpack.c.l.b16 %v3173
        %v3281 = vunpack.c.l.b16 %v3177
        %v3282 = vunpack.c.l.b16 %v3180
        %v3283 = vunpack.c.l.b16 %v3184
        %v3284 = vunpack.c.l.b16 %v3187
        %v3285 = vunpack.c.l.b16 %v3191
        %v3286 = vunpack.c.l.b16 %v3194
        %v3287 = vunpack.c.l.b16 %v3198
        %v3288 = vunpack.c.l.b16 %v3201
        %v3289 = vunpack.c.l.b16 %v3205
        %v3290 = vunpack.c.l.b16 %v3208
        %v3291 = vunpack.c.l.b16 %v3212
        %v3292 = vunpack.c.l.b16 %v3215
        %v3293 = vunpack.c.l.b16 %v3219
        %v3294 = vunpack.c.l.b16 %v3222
        %v3295 = vunpack.c.l.b16 %v3226
        %v3296 = vunpack.c.l.b16 %v3229
        %v3297 = vunpack.c.l.b16 %v3233
        %v3298 = vunpack.c.l.b16 %v3236
        %v3299 = vunpack.c.l.b16 %v3240
        %v3300 = vunpack.c.l.b16 %v3243
        %v3301 = vunpack.c.l.b16 %v3247
        %v3302 = vunpack.c.l.b16 %v3250
        %v3303 = vunpack.c.l.b16 %v3254
        %v3304 = vunpack.c.l.b16 %v3257
        %v3305 = vunpack.c.l.b16 %v3261
        %v3306 = vunpack.c.l.b16 %v3264
        %v3307 = vunpack.c.l.b16 %v3268
        %v3308 = vunpack.c.l.b16 %v3271
        %v3309 = vunpack.c.l.b16 %v3275
        %v3310 = vunpack.c.l.b16 %v3278
        %v3311 = vpack.c.b16 %v3280, %v3279
        %v3312 = vpack.c.b16 %v3282, %v3281
        %v3313 = vpack.c.b16 %v3284, %v3283
        %v3314 = vpack.c.b16 %v3286, %v3285
        %v3315 = vpack.c.b16 %v3288, %v3287
        %v3316 = vpack.c.b16 %v3290, %v3289
        %v3317 = vpack.c.b16 %v3292, %v3291
        %v3318 = vpack.c.b16 %v3294, %v3293
        %v3319 = vpack.c.b16 %v3296, %v3295
        %v3320 = vpack.c.b16 %v3298, %v3297
        %v3321 = vpack.c.b16 %v3300, %v3299
        %v3322 = vpack.c.b16 %v3302, %v3301
        %v3323 = vpack.c.b16 %v3304, %v3303
        %v3324 = vpack.c.b16 %v3306, %v3305
        %v3325 = vpack.c.b16 %v3308, %v3307
        %v3326 = vpack.c.b16 %v3310, %v3309
        %3327 = vrot.lane.b32.xlu0 %v3311, 32
        %v3328 = vpop.permute.xlu0 %3327
        %3329 = vrot.lane.b32.xlu0 %v3312, 32
        %v3330 = vpop.permute.xlu0 %3329
        %3331 = vrot.lane.b32.xlu0 %v3313, 32
        %v3332 = vpop.permute.xlu0 %3331
        %3333 = vrot.lane.b32.xlu0 %v3314, 32
        %v3334 = vpop.permute.xlu0 %3333
        %3335 = vrot.lane.b32.xlu0 %v3315, 32
        %v3336 = vpop.permute.xlu0 %3335
        %3337 = vrot.lane.b32.xlu0 %v3316, 32
        %v3338 = vpop.permute.xlu0 %3337
        %3339 = vrot.lane.b32.xlu0 %v3317, 32
        %v3340 = vpop.permute.xlu0 %3339
        %3341 = vrot.lane.b32.xlu0 %v3318, 32
        %v3342 = vpop.permute.xlu0 %3341
        %3343 = vrot.lane.b32.xlu0 %v3319, 32
        %v3344 = vpop.permute.xlu0 %3343
        %3345 = vrot.lane.b32.xlu0 %v3320, 32
        %v3346 = vpop.permute.xlu0 %3345
        %3347 = vrot.lane.b32.xlu0 %v3321, 32
        %v3348 = vpop.permute.xlu0 %3347
        %3349 = vrot.lane.b32.xlu0 %v3322, 32
        %v3350 = vpop.permute.xlu0 %3349
        %3351 = vrot.lane.b32.xlu0 %v3323, 32
        %v3352 = vpop.permute.xlu0 %3351
        %3353 = vrot.lane.b32.xlu0 %v3324, 32
        %v3354 = vpop.permute.xlu0 %3353
        %3355 = vrot.lane.b32.xlu0 %v3325, 32
        %v3356 = vpop.permute.xlu0 %3355
        %3357 = vrot.lane.b32.xlu0 %v3326, 32
        %v3358 = vpop.permute.xlu0 %3357
        %vm3375 = vcmask 294144
        %3376 = vst.msk [vmem:[#allocation2] sm:$0xff] %vm3375, %v3328
        %3377 = vst.msk [vmem:[#allocation2 + $0x8] sm:$0xff] %vm3375, %v3330
        %3378 = vst.msk [vmem:[#allocation2 + $0x10] sm:$0xff] %vm3375, %v3332
        %3379 = vst.msk [vmem:[#allocation2 + $0x18] sm:$0xff] %vm3375, %v3334
        %3380 = vst.msk [vmem:[#allocation2 + $0x20] sm:$0xff] %vm3375, %v3336
        %3381 = vst.msk [vmem:[#allocation2 + $0x28] sm:$0xff] %vm3375, %v3338
        %3382 = vst.msk [vmem:[#allocation2 + $0x30] sm:$0xff] %vm3375, %v3340
        %3383 = vst.msk [vmem:[#allocation2 + $0x38] sm:$0xff] %vm3375, %v3342
        %3384 = vst.msk [vmem:[#allocation2 + $0x40] sm:$0xff] %vm3375, %v3344
        %3385 = vst.msk [vmem:[#allocation2 + $0x48] sm:$0xff] %vm3375, %v3346
        %3386 = vst.msk [vmem:[#allocation2 + $0x50] sm:$0xff] %vm3375, %v3348
        %3387 = vst.msk [vmem:[#allocation2 + $0x58] sm:$0xff] %vm3375, %v3350
        %3388 = vst.msk [vmem:[#allocation2 + $0x60] sm:$0xff] %vm3375, %v3352
        %3389 = vst.msk [vmem:[#allocation2 + $0x68] sm:$0xff] %vm3375, %v3354
        %3390 = vst.msk [vmem:[#allocation2 + $0x70] sm:$0xff] %vm3375, %v3356
        %3391 = vst.msk [vmem:[#allocation2 + $0x78] sm:$0xff] %vm3375, %v3358
        %v3392 = vld [vmem:[#allocation2] sm:$0xff]
        %v3393 = vld [vmem:[#allocation2 + $0x8] sm:$0xff]
        %v3394 = vld [vmem:[#allocation2 + $0x10] sm:$0xff]
        %v3395 = vld [vmem:[#allocation2 + $0x18] sm:$0xff]
        %v3396 = vld [vmem:[#allocation2 + $0x20] sm:$0xff]
        %v3397 = vld [vmem:[#allocation2 + $0x28] sm:$0xff]
        %v3398 = vld [vmem:[#allocation2 + $0x30] sm:$0xff]
        %v3399 = vld [vmem:[#allocation2 + $0x38] sm:$0xff]
        %v3400 = vld [vmem:[#allocation2 + $0x40] sm:$0xff]
        %v3401 = vld [vmem:[#allocation2 + $0x48] sm:$0xff]
        %v3402 = vld [vmem:[#allocation2 + $0x50] sm:$0xff]
        %v3403 = vld [vmem:[#allocation2 + $0x58] sm:$0xff]
        %v3404 = vld [vmem:[#allocation2 + $0x60] sm:$0xff]
        %v3405 = vld [vmem:[#allocation2 + $0x68] sm:$0xff]
        %v3406 = vld [vmem:[#allocation2 + $0x70] sm:$0xff]
        %v3407 = vld [vmem:[#allocation2 + $0x78] sm:$0xff]
        %v3408 = vld [vmem:[#allocation6] sm:$0xf]
        %v3409 = vld [vmem:[#allocation6 + $0x4] sm:$0xf]
        %v3410 = vld [vmem:[#allocation6 + $0x8] sm:$0xf]
        %v3411 = vld [vmem:[#allocation6 + $0xc] sm:$0xf]
        %v3412 = vld [vmem:[#allocation6 + $0x10] sm:$0x3]
        %v3413 = vld [vmem:[#allocation8] sm:$0x1]
        %v3415 = vlaneseq
        %v3416 = vshrl.u32 %v3415, 7
        %v3417 = vsub.s32 0, %v3416
        %v3418 = vrot.slane %v3413, %v3417
        %v3425 = vunpack.c.l.b16 %v3408
        %v3426 = vunpack.c.l.b16 %v3409
        %v3427 = vunpack.c.l.b16 %v3410
        %v3428 = vunpack.c.l.b16 %v3411
        %v3429 = vunpack.c.l.b16 %v3412
        %v3430 = vpack.c.b16 %v3426, %v3425
        %v3431 = vpack.c.b16 %v3428, %v3427
        %v3432 = vpack.c.b16 %v3429, %v3429
        %vm3435 = vcmask 293888
        %v3437 = vsel %vm3435, %v3392, 0
        %v3440 = vsel %vm3435, %v3393, 0
        %v3443 = vsel %vm3435, %v3394, 0
        %v3446 = vsel %vm3435, %v3395, 0
        %v3449 = vsel %vm3435, %v3396, 0
        %v3452 = vsel %vm3435, %v3397, 0
        %v3455 = vsel %vm3435, %v3398, 0
        %v3458 = vsel %vm3435, %v3399, 0
        %v3461 = vsel %vm3435, %v3400, 0
        %v3464 = vsel %vm3435, %v3401, 0
        %v3467 = vsel %vm3435, %v3402, 0
        %v3470 = vsel %vm3435, %v3403, 0
        %v3473 = vsel %vm3435, %v3404, 0
        %v3476 = vsel %vm3435, %v3405, 0
        %v3479 = vsel %vm3435, %v3406, 0
        %v3482 = vsel %vm3435, %v3407, 0
        %vm3484 = vcmask 1041408
        %v3486 = vsel %vm3484, %v3432, 0
        %3488 = vmatprep.subr.bf16.mxu0 0
        %3489 = vmatpush1.bf16.msra.mxu0 %v3430
        %3490 = vmatprep.subr.bf16.mxu0 0
        %3491 = vmatpush1.bf16.msra.mxu0 %v3431
        %3492 = vmatprep.subr.bf16.mxu0 0
        %3493 = vmatpush1.bf16.msra.mxu0 %v3486
        %3494 = vmatprep.subr.bf16.mxu0 0
        %3495 = vmatpush1.bf16.msra.mxu0 0
        %3496 = vmatprep.subr.bf16.mxu0 0
        %3497 = vmatpush1.bf16.msra.mxu0 0
        %3498 = vmatprep.subr.bf16.mxu0 0
        %3499 = vmatpush1.bf16.msra.mxu0 0
        %3500 = vmatprep.subr.bf16.mxu0 0
        %3501 = vmatpush1.bf16.msra.mxu0 0
        %3502 = vmatprep.subr.bf16.mxu0 0
        %3503 = vmatpush1.bf16.msra.mxu0 0
        %3504 = vmatprep.subr.bf16.mxu0 0
        %3505 = vmatpush1.bf16.msra.mxu0 0
        %3506 = vmatprep.subr.bf16.mxu0 0
        %3507 = vmatpush1.bf16.msra.mxu0 0
        %3508 = vmatprep.subr.bf16.mxu0 0
        %3509 = vmatpush1.bf16.msra.mxu0 0
        %3510 = vmatprep.subr.bf16.mxu0 0
        %3511 = vmatpush1.bf16.msra.mxu0 0
        %3512 = vmatprep.subr.bf16.mxu0 0
        %3513 = vmatpush1.bf16.msra.mxu0 0
        %3514 = vmatprep.subr.bf16.mxu0 0
        %3515 = vmatpush1.bf16.msra.mxu0 0
        %3516 = vmatprep.subr.bf16.mxu0 0
        %3517 = vmatpush1.bf16.msra.mxu0 0
        %3518 = vmatprep.subr.bf16.mxu0 0
        %3519 = vmatpush1.bf16.msra.mxu0 0
        %3520 = vmatprep.mubr.bf16.mxu0 0
        %3521 = vmatmul.mubr.bf16.gmra.mrb[0].mxu0 %v3437
        %v3522 = vpop.f32.mrb[0].mxu0
        %v3523 = vadd.f32 %v3418, %v3522
        %v3524 = vpop.f32.mrb[0].mxu0
        %v3525 = vpop.f32.mrb[0].mxu0
        %v3526 = vadd.f32 %v3418, %v3525
        %v3527 = vpop.f32.mrb[0].mxu0
        %3528 = vmatprep.mubr.bf16.mxu0 0
        %3529 = vmatmul.mubr.bf16.gmra.mrb[0].mxu0 %v3440
        %v3530 = vpop.f32.mrb[0].mxu0
        %v3531 = vadd.f32 %v3418, %v3530
        %v3532 = vpop.f32.mrb[0].mxu0
        %v3533 = vpop.f32.mrb[0].mxu0
        %v3534 = vadd.f32 %v3418, %v3533
        %v3535 = vpop.f32.mrb[0].mxu0
        %3536 = vmatprep.mubr.bf16.mxu0 0
        %3537 = vmatmul.mubr.bf16.gmra.mrb[0].mxu0 %v3443
        %v3538 = vpop.f32.mrb[0].mxu0
        %v3539 = vadd.f32 %v3418, %v3538
        %v3540 = vpop.f32.mrb[0].mxu0
        %v3541 = vpop.f32.mrb[0].mxu0
        %v3542 = vadd.f32 %v3418, %v3541
        %v3543 = vpop.f32.mrb[0].mxu0
        %3544 = vmatprep.mubr.bf16.mxu0 0
        %3545 = vmatmul.mubr.bf16.gmra.mrb[0].mxu0 %v3446
        %v3546 = vpop.f32.mrb[0].mxu0
        %v3547 = vadd.f32 %v3418, %v3546
        %v3548 = vpop.f32.mrb[0].mxu0
        %v3549 = vpop.f32.mrb[0].mxu0
        %v3550 = vadd.f32 %v3418, %v3549
        %v3551 = vpop.f32.mrb[0].mxu0
        %3552 = vmatprep.mubr.bf16.mxu0 0
        %3553 = vmatmul.mubr.bf16.gmra.mrb[0].mxu0 %v3449
        %v3554 = vpop.f32.mrb[0].mxu0
        %v3555 = vadd.f32 %v3418, %v3554
        %v3556 = vpop.f32.mrb[0].mxu0
        %v3557 = vpop.f32.mrb[0].mxu0
        %v3558 = vadd.f32 %v3418, %v3557
        %v3559 = vpop.f32.mrb[0].mxu0
        %3560 = vmatprep.mubr.bf16.mxu0 0
        %3561 = vmatmul.mubr.bf16.gmra.mrb[0].mxu0 %v3452
        %v3562 = vpop.f32.mrb[0].mxu0
        %v3563 = vadd.f32 %v3418, %v3562
        %v3564 = vpop.f32.mrb[0].mxu0
        %v3565 = vpop.f32.mrb[0].mxu0
        %v3566 = vadd.f32 %v3418, %v3565
        %v3567 = vpop.f32.mrb[0].mxu0
        %3568 = vmatprep.mubr.bf16.mxu0 0
        %3569 = vmatmul.mubr.bf16.gmra.mrb[0].mxu0 %v3455
        %v3570 = vpop.f32.mrb[0].mxu0
        %v3571 = vadd.f32 %v3418, %v3570
        %v3572 = vpop.f32.mrb[0].mxu0
        %v3573 = vpop.f32.mrb[0].mxu0
        %v3574 = vadd.f32 %v3418, %v3573
        %v3575 = vpop.f32.mrb[0].mxu0
        %3576 = vmatprep.mubr.bf16.mxu0 0
        %3577 = vmatmul.mubr.bf16.gmra.mrb[0].mxu0 %v3458
        %v3578 = vpop.f32.mrb[0].mxu0
        %v3579 = vadd.f32 %v3418, %v3578
        %v3580 = vpop.f32.mrb[0].mxu0
        %v3581 = vpop.f32.mrb[0].mxu0
        %v3582 = vadd.f32 %v3418, %v3581
        %v3583 = vpop.f32.mrb[0].mxu0
        %3584 = vmatprep.mubr.bf16.mxu0 0
        %3585 = vmatmul.mubr.bf16.gmra.mrb[0].mxu0 %v3461
        %v3586 = vpop.f32.mrb[0].mxu0
        %v3587 = vadd.f32 %v3418, %v3586
        %v3588 = vpop.f32.mrb[0].mxu0
        %v3589 = vpop.f32.mrb[0].mxu0
        %v3590 = vadd.f32 %v3418, %v3589
        %v3591 = vpop.f32.mrb[0].mxu0
        %3592 = vmatprep.mubr.bf16.mxu0 0
        %3593 = vmatmul.mubr.bf16.gmra.mrb[0].mxu0 %v3464
        %v3594 = vpop.f32.mrb[0].mxu0
        %v3595 = vadd.f32 %v3418, %v3594
        %v3596 = vpop.f32.mrb[0].mxu0
        %v3597 = vpop.f32.mrb[0].mxu0
        %v3598 = vadd.f32 %v3418, %v3597
        %v3599 = vpop.f32.mrb[0].mxu0
        %3600 = vmatprep.mubr.bf16.mxu0 0
        %3601 = vmatmul.mubr.bf16.gmra.mrb[0].mxu0 %v3467
        %v3602 = vpop.f32.mrb[0].mxu0
        %v3603 = vadd.f32 %v3418, %v3602
        %v3604 = vpop.f32.mrb[0].mxu0
        %v3605 = vpop.f32.mrb[0].mxu0
        %v3606 = vadd.f32 %v3418, %v3605
        %v3607 = vpop.f32.mrb[0].mxu0
        %3608 = vmatprep.mubr.bf16.mxu0 0
        %3609 = vmatmul.mubr.bf16.gmra.mrb[0].mxu0 %v3470
        %v3610 = vpop.f32.mrb[0].mxu0
        %v3611 = vadd.f32 %v3418, %v3610
        %v3612 = vpop.f32.mrb[0].mxu0
        %v3613 = vpop.f32.mrb[0].mxu0
        %v3614 = vadd.f32 %v3418, %v3613
        %v3615 = vpop.f32.mrb[0].mxu0
        %3616 = vmatprep.mubr.bf16.mxu0 0
        %3617 = vmatmul.mubr.bf16.gmra.mrb[0].mxu0 %v3473
        %v3618 = vpop.f32.mrb[0].mxu0
        %v3619 = vadd.f32 %v3418, %v3618
        %v3620 = vpop.f32.mrb[0].mxu0
        %v3621 = vpop.f32.mrb[0].mxu0
        %v3622 = vadd.f32 %v3418, %v3621
        %v3623 = vpop.f32.mrb[0].mxu0
        %3624 = vmatprep.mubr.bf16.mxu0 0
        %3625 = vmatmul.mubr.bf16.gmra.mrb[0].mxu0 %v3476
        %v3626 = vpop.f32.mrb[0].mxu0
        %v3627 = vadd.f32 %v3418, %v3626
        %v3628 = vpop.f32.mrb[0].mxu0
        %v3629 = vpop.f32.mrb[0].mxu0
        %v3630 = vadd.f32 %v3418, %v3629
        %v3631 = vpop.f32.mrb[0].mxu0
        %3632 = vmatprep.mubr.bf16.mxu0 0
        %3633 = vmatmul.mubr.bf16.gmra.mrb[0].mxu0 %v3479
        %v3634 = vpop.f32.mrb[0].mxu0
        %v3635 = vadd.f32 %v3418, %v3634
        %v3636 = vpop.f32.mrb[0].mxu0
        %v3637 = vpop.f32.mrb[0].mxu0
        %v3638 = vadd.f32 %v3418, %v3637
        %v3639 = vpop.f32.mrb[0].mxu0
        %3640 = vmatprep.mubr.bf16.mxu0 0
        %3641 = vmatmul.mubr.bf16.gmra.mrb[0].mxu0 %v3482
        %v3642 = vpop.f32.mrb[0].mxu0
        %v3643 = vadd.f32 %v3418, %v3642
        %v3644 = vpop.f32.mrb[0].mxu0
        %v3645 = vpop.f32.mrb[0].mxu0
        %v3646 = vadd.f32 %v3418, %v3645
        %v3647 = vpop.f32.mrb[0].mxu0
        %3648 = vdwg.mxu0
        %v3649 = vsel %vm415, %v3523, 0.0
        %v3650 = vsel %vm415, %v3526, 0.0
        %v3651 = vadd.f32 %v3649, %v3650
        %v3652 = vsel %vm415, %v3531, 0.0
        %v3653 = vadd.f32 %v3651, %v3652
        %v3654 = vsel %vm415, %v3534, 0.0
        %v3655 = vadd.f32 %v3653, %v3654
        %v3656 = vsel %vm415, %v3539, 0.0
        %v3657 = vadd.f32 %v3655, %v3656
        %v3658 = vsel %vm415, %v3542, 0.0
        %v3659 = vadd.f32 %v3657, %v3658
        %v3660 = vsel %vm415, %v3547, 0.0
        %v3661 = vadd.f32 %v3659, %v3660
        %v3662 = vsel %vm415, %v3550, 0.0
        %v3663 = vadd.f32 %v3661, %v3662
        %v3664 = vsel %vm415, %v3555, 0.0
        %v3665 = vadd.f32 %v3663, %v3664
        %v3666 = vsel %vm415, %v3558, 0.0
        %v3667 = vadd.f32 %v3665, %v3666
        %v3668 = vsel %vm415, %v3563, 0.0
        %v3669 = vadd.f32 %v3667, %v3668
        %v3670 = vsel %vm415, %v3566, 0.0
        %v3671 = vadd.f32 %v3669, %v3670
        %v3672 = vsel %vm415, %v3571, 0.0
        %v3673 = vadd.f32 %v3671, %v3672
        %v3674 = vsel %vm415, %v3574, 0.0
        %v3675 = vadd.f32 %v3673, %v3674
        %v3676 = vsel %vm415, %v3579, 0.0
        %v3677 = vadd.f32 %v3675, %v3676
        %v3678 = vsel %vm415, %v3582, 0.0
        %v3679 = vadd.f32 %v3677, %v3678
        %v3680 = vsel %vm415, %v3587, 0.0
        %v3681 = vadd.f32 %v3679, %v3680
        %v3682 = vsel %vm415, %v3590, 0.0
        %v3683 = vadd.f32 %v3681, %v3682
        %v3684 = vsel %vm415, %v3595, 0.0
        %v3685 = vadd.f32 %v3683, %v3684
        %v3686 = vsel %vm415, %v3598, 0.0
        %v3687 = vadd.f32 %v3685, %v3686
        %v3688 = vsel %vm415, %v3603, 0.0
        %v3689 = vadd.f32 %v3687, %v3688
        %v3690 = vsel %vm415, %v3606, 0.0
        %v3691 = vadd.f32 %v3689, %v3690
        %v3692 = vsel %vm415, %v3611, 0.0
        %v3693 = vadd.f32 %v3691, %v3692
        %v3694 = vsel %vm415, %v3614, 0.0
        %v3695 = vadd.f32 %v3693, %v3694
        %v3696 = vsel %vm415, %v3619, 0.0
        %v3697 = vadd.f32 %v3695, %v3696
        %v3698 = vsel %vm415, %v3622, 0.0
        %v3699 = vadd.f32 %v3697, %v3698
        %v3700 = vsel %vm415, %v3627, 0.0
        %v3701 = vadd.f32 %v3699, %v3700
        %v3702 = vsel %vm415, %v3630, 0.0
        %v3703 = vadd.f32 %v3701, %v3702
        %v3704 = vsel %vm415, %v3635, 0.0
        %v3705 = vadd.f32 %v3703, %v3704
        %v3706 = vsel %vm415, %v3638, 0.0
        %v3707 = vadd.f32 %v3705, %v3706
        %v3708 = vsel %vm415, %v3643, 0.0
        %v3709 = vadd.f32 %v3707, %v3708
        %v3710 = vsel %vm415, %v3646, 0.0
        %v3711 = vadd.f32 %v3709, %v3710
        %v3712 = vrot.slane %v3711, 4
        %v3713 = vadd.f32 %v3711, %v3712
        %v3714 = vrot.slane %v3713, 2
        %v3715 = vadd.f32 %v3713, %v3714
        %v3716 = vrot.slane %v3715, 1
        %v3717 = vadd.f32 %v3715, %v3716
        %vm3718 = vcmask 24576
        %3719 = vst.msk [vmem:[%s279] sm:$0x1] %vm3718, %v3717
        %v3720 = vmul.f32 %v3523, %v3523
        %v3721 = vmul.f32 %v3526, %v3526
        %v3722 = vmul.f32 %v3531, %v3531
        %v3723 = vmul.f32 %v3534, %v3534
        %v3724 = vmul.f32 %v3539, %v3539
        %v3725 = vmul.f32 %v3542, %v3542
        %v3726 = vmul.f32 %v3547, %v3547
        %v3727 = vmul.f32 %v3550, %v3550
        %v3728 = vmul.f32 %v3555, %v3555
        %v3729 = vmul.f32 %v3558, %v3558
        %v3730 = vmul.f32 %v3563, %v3563
        %v3731 = vmul.f32 %v3566, %v3566
        %v3732 = vmul.f32 %v3571, %v3571
        %v3733 = vmul.f32 %v3574, %v3574
        %v3734 = vmul.f32 %v3579, %v3579
        %v3735 = vmul.f32 %v3582, %v3582
        %v3736 = vmul.f32 %v3587, %v3587
        %v3737 = vmul.f32 %v3590, %v3590
        %v3738 = vmul.f32 %v3595, %v3595
        %v3739 = vmul.f32 %v3598, %v3598
        %v3740 = vmul.f32 %v3603, %v3603
        %v3741 = vmul.f32 %v3606, %v3606
        %v3742 = vmul.f32 %v3611, %v3611
        %v3743 = vmul.f32 %v3614, %v3614
        %v3744 = vmul.f32 %v3619, %v3619
        %v3745 = vmul.f32 %v3622, %v3622
        %v3746 = vmul.f32 %v3627, %v3627
        %v3747 = vmul.f32 %v3630, %v3630
        %v3748 = vmul.f32 %v3635, %v3635
        %v3749 = vmul.f32 %v3638, %v3638
        %v3750 = vmul.f32 %v3643, %v3643
        %v3751 = vmul.f32 %v3646, %v3646
        %v3752 = vsel %vm415, %v3720, 0.0
        %v3753 = vsel %vm415, %v3721, 0.0
        %v3754 = vadd.f32 %v3752, %v3753
        %v3755 = vsel %vm415, %v3722, 0.0
        %v3756 = vadd.f32 %v3754, %v3755
        %v3757 = vsel %vm415, %v3723, 0.0
        %v3758 = vadd.f32 %v3756, %v3757
        %v3759 = vsel %vm415, %v3724, 0.0
        %v3760 = vadd.f32 %v3758, %v3759
        %v3761 = vsel %vm415, %v3725, 0.0
        %v3762 = vadd.f32 %v3760, %v3761
        %v3763 = vsel %vm415, %v3726, 0.0
        %v3764 = vadd.f32 %v3762, %v3763
        %v3765 = vsel %vm415, %v3727, 0.0
        %v3766 = vadd.f32 %v3764, %v3765
        %v3767 = vsel %vm415, %v3728, 0.0
        %v3768 = vadd.f32 %v3766, %v3767
        %v3769 = vsel %vm415, %v3729, 0.0
        %v3770 = vadd.f32 %v3768, %v3769
        %v3771 = vsel %vm415, %v3730, 0.0
        %v3772 = vadd.f32 %v3770, %v3771
        %v3773 = vsel %vm415, %v3731, 0.0
        %v3774 = vadd.f32 %v3772, %v3773
        %v3775 = vsel %vm415, %v3732, 0.0
        %v3776 = vadd.f32 %v3774, %v3775
        %v3777 = vsel %vm415, %v3733, 0.0
        %v3778 = vadd.f32 %v3776, %v3777
        %v3779 = vsel %vm415, %v3734, 0.0
        %v3780 = vadd.f32 %v3778, %v3779
        %v3781 = vsel %vm415, %v3735, 0.0
        %v3782 = vadd.f32 %v3780, %v3781
        %v3783 = vsel %vm415, %v3736, 0.0
        %v3784 = vadd.f32 %v3782, %v3783
        %v3785 = vsel %vm415, %v3737, 0.0
        %v3786 = vadd.f32 %v3784, %v3785
        %v3787 = vsel %vm415, %v3738, 0.0
        %v3788 = vadd.f32 %v3786, %v3787
        %v3789 = vsel %vm415, %v3739, 0.0
        %v3790 = vadd.f32 %v3788, %v3789
        %v3791 = vsel %vm415, %v3740, 0.0
        %v3792 = vadd.f32 %v3790, %v3791
        %v3793 = vsel %vm415, %v3741, 0.0
        %v3794 = vadd.f32 %v3792, %v3793
        %v3795 = vsel %vm415, %v3742, 0.0
        %v3796 = vadd.f32 %v3794, %v3795
        %v3797 = vsel %vm415, %v3743, 0.0
        %v3798 = vadd.f32 %v3796, %v3797
        %v3799 = vsel %vm415, %v3744, 0.0
        %v3800 = vadd.f32 %v3798, %v3799
        %v3801 = vsel %vm415, %v3745, 0.0
        %v3802 = vadd.f32 %v3800, %v3801
        %v3803 = vsel %vm415, %v3746, 0.0
        %v3804 = vadd.f32 %v3802, %v3803
        %v3805 = vsel %vm415, %v3747, 0.0
        %v3806 = vadd.f32 %v3804, %v3805
        %v3807 = vsel %vm415, %v3748, 0.0
        %v3808 = vadd.f32 %v3806, %v3807
        %v3809 = vsel %vm415, %v3749, 0.0
        %v3810 = vadd.f32 %v3808, %v3809
        %v3811 = vsel %vm415, %v3750, 0.0
        %v3812 = vadd.f32 %v3810, %v3811
        %v3813 = vsel %vm415, %v3751, 0.0
        %v3814 = vadd.f32 %v3812, %v3813
        %v3815 = vrot.slane %v3814, 4
        %v3816 = vadd.f32 %v3814, %v3815
        %v3817 = vrot.slane %v3816, 2
        %v3818 = vadd.f32 %v3816, %v3817
        %v3819 = vrot.slane %v3818, 1
        %v3820 = vadd.f32 %v3818, %v3819
        %3821 = vst.msk [vmem:[%s285] sm:$0x1] %vm3718, %v3820
        %vm3822 = vcmask 27648
        %3823 = vst.msk [vmem:[%s273] sm:$0xf] %vm3822, 0
        %3824 = vst.msk [vmem:[%s273 + $0x4] sm:$0xf] %vm3822, 0
        %3825 = vst.msk [vmem:[%s273 + $0x8] sm:$0x1] %vm3718, 0
        %3826 = vst.msk [vmem:[%s273 + $0xc] sm:$0xf] %vm3822, 0
        %3827 = vst.msk [vmem:[%s273 + $0x10] sm:$0xf] %vm3822, 0
        %3828 = vst.msk [vmem:[%s273 + $0x14] sm:$0x1] %vm3718, 0
        %3829 = vst.msk [vmem:[%s273 + $0x18] sm:$0xf] %vm3822, 0
        %3830 = vst.msk [vmem:[%s273 + $0x1c] sm:$0xf] %vm3822, 0
        %3831 = vst.msk [vmem:[%s273 + $0x20] sm:$0x1] %vm3718, 0
        %3832 = vst.msk [vmem:[%s273 + $0x24] sm:$0xf] %vm3822, 0
        %3833 = vst.msk [vmem:[%s273 + $0x28] sm:$0xf] %vm3822, 0
        %3834 = vst.msk [vmem:[%s273 + $0x2c] sm:$0x1] %vm3718, 0
        %3835 = vst.msk [vmem:[%s273 + $0x30] sm:$0xf] %vm3822, 0
        %3836 = vst.msk [vmem:[%s273 + $0x34] sm:$0xf] %vm3822, 0
        %3837 = vst.msk [vmem:[%s273 + $0x38] sm:$0x1] %vm3718, 0
        %3838 = vst.msk [vmem:[%s273 + $0x3c] sm:$0xf] %vm3822, 0
        %3839 = vst.msk [vmem:[%s273 + $0x40] sm:$0xf] %vm3822, 0
        %3840 = vst.msk [vmem:[%s273 + $0x44] sm:$0x1] %vm3718, 0
        %3841 = vst.msk [vmem:[%s273 + $0x48] sm:$0xf] %vm3822, 0
        %3842 = vst.msk [vmem:[%s273 + $0x4c] sm:$0xf] %vm3822, 0
        %3843 = vst.msk [vmem:[%s273 + $0x50] sm:$0x1] %vm3718, 0
        %3844 = vst.msk [vmem:[%s273 + $0x54] sm:$0xf] %vm3822, 0
        %3845 = vst.msk [vmem:[%s273 + $0x58] sm:$0xf] %vm3822, 0
        %3846 = vst.msk [vmem:[%s273 + $0x5c] sm:$0x1] %vm3718, 0
        %3847 = vst.msk [vmem:[%s273 + $0x60] sm:$0xf] %vm3822, 0
        %3848 = vst.msk [vmem:[%s273 + $0x64] sm:$0xf] %vm3822, 0
        %3849 = vst.msk [vmem:[%s273 + $0x68] sm:$0x1] %vm3718, 0
        %3850 = vst.msk [vmem:[%s273 + $0x6c] sm:$0xf] %vm3822, 0
        %3851 = vst.msk [vmem:[%s273 + $0x70] sm:$0xf] %vm3822, 0
        %3852 = vst.msk [vmem:[%s273 + $0x74] sm:$0x1] %vm3718, 0
        %3853 = vst.msk [vmem:[%s273 + $0x78] sm:$0xf] %vm3822, 0
        %3854 = vst.msk [vmem:[%s273 + $0x7c] sm:$0xf] %vm3822, 0
        %3855 = vst.msk [vmem:[%s273 + $0x80] sm:$0x1] %vm3718, 0
        %3856 = vst.msk [vmem:[%s273 + $0x84] sm:$0xf] %vm3822, 0
        %3857 = vst.msk [vmem:[%s273 + $0x88] sm:$0xf] %vm3822, 0
        %3858 = vst.msk [vmem:[%s273 + $0x8c] sm:$0x1] %vm3718, 0
        %3859 = vst.msk [vmem:[%s273 + $0x90] sm:$0xf] %vm3822, 0
        %3860 = vst.msk [vmem:[%s273 + $0x94] sm:$0xf] %vm3822, 0
        %3861 = vst.msk [vmem:[%s273 + $0x98] sm:$0x1] %vm3718, 0
        %3862 = vst.msk [vmem:[%s273 + $0x9c] sm:$0xf] %vm3822, 0
        %3863 = vst.msk [vmem:[%s273 + $0xa0] sm:$0xf] %vm3822, 0
        %3864 = vst.msk [vmem:[%s273 + $0xa4] sm:$0x1] %vm3718, 0
        %3865 = vst.msk [vmem:[%s273 + $0xa8] sm:$0xf] %vm3822, 0
        %3866 = vst.msk [vmem:[%s273 + $0xac] sm:$0xf] %vm3822, 0
        %3867 = vst.msk [vmem:[%s273 + $0xb0] sm:$0x1] %vm3718, 0
        %3868 = vst.msk [vmem:[%s273 + $0xb4] sm:$0xf] %vm3822, 0
        %3869 = vst.msk [vmem:[%s273 + $0xb8] sm:$0xf] %vm3822, 0
        %3870 = vst.msk [vmem:[%s273 + $0xbc] sm:$0x1] %vm3718, 0
        %3871 = vst.msk [vmem:[%s273 + $0xc0] sm:$0xf] %vm3822, 0
        %3872 = vst.msk [vmem:[%s273 + $0xc4] sm:$0xf] %vm3822, 0
        %3873 = vst.msk [vmem:[%s273 + $0xc8] sm:$0x1] %vm3718, 0
        %3874 = vst.msk [vmem:[%s273 + $0xcc] sm:$0xf] %vm3822, 0
        %3875 = vst.msk [vmem:[%s273 + $0xd0] sm:$0xf] %vm3822, 0
        %3876 = vst.msk [vmem:[%s273 + $0xd4] sm:$0x1] %vm3718, 0
        %v3877 = vpack.c.bf16 %v3526, %v3523
        %v3878 = vpack.c.bf16 %v3534, %v3531
        %v3879 = vpack.c.bf16 %v3542, %v3539
        %v3880 = vpack.c.bf16 %v3550, %v3547
        %v3881 = vpack.c.bf16 %v3558, %v3555
        %v3882 = vpack.c.bf16 %v3566, %v3563
        %v3883 = vpack.c.bf16 %v3574, %v3571
        %v3884 = vpack.c.bf16 %v3582, %v3579
        %v3885 = vpack.c.bf16 %v3590, %v3587
        %v3886 = vpack.c.bf16 %v3598, %v3595
        %v3887 = vpack.c.bf16 %v3606, %v3603
        %v3888 = vpack.c.bf16 %v3614, %v3611
        %v3889 = vpack.c.bf16 %v3622, %v3619
        %v3890 = vpack.c.bf16 %v3630, %v3627
        %v3891 = vpack.c.bf16 %v3638, %v3635
        %v3892 = vpack.c.bf16 %v3646, %v3643
        %v3909 = vunpack.c.l.b16 %v3877
        %v3910 = vunpack.c.h.b16 %v3877
        %v3911 = vunpack.c.l.b16 %v3878
        %v3912 = vunpack.c.h.b16 %v3878
        %v3913 = vunpack.c.l.b16 %v3879
        %v3914 = vunpack.c.h.b16 %v3879
        %v3915 = vunpack.c.l.b16 %v3880
        %v3916 = vunpack.c.h.b16 %v3880
        %v3917 = vunpack.c.l.b16 %v3881
        %v3918 = vunpack.c.h.b16 %v3881
        %v3919 = vunpack.c.l.b16 %v3882
        %v3920 = vunpack.c.h.b16 %v3882
        %v3921 = vunpack.c.l.b16 %v3883
        %v3922 = vunpack.c.h.b16 %v3883
        %v3923 = vunpack.c.l.b16 %v3884
        %v3924 = vunpack.c.h.b16 %v3884
        %v3925 = vunpack.c.l.b16 %v3885
        %v3926 = vunpack.c.h.b16 %v3885
        %v3927 = vunpack.c.l.b16 %v3886
        %v3928 = vunpack.c.h.b16 %v3886
        %v3929 = vunpack.c.l.b16 %v3887
        %v3930 = vunpack.c.h.b16 %v3887
        %v3931 = vunpack.c.l.b16 %v3888
        %v3932 = vunpack.c.h.b16 %v3888
        %v3933 = vunpack.c.l.b16 %v3889
        %v3934 = vunpack.c.h.b16 %v3889
        %v3935 = vunpack.c.l.b16 %v3890
        %v3936 = vunpack.c.h.b16 %v3890
        %v3937 = vunpack.c.l.b16 %v3891
        %v3938 = vunpack.c.h.b16 %v3891
        %v3939 = vunpack.c.l.b16 %v3892
        %v3940 = vunpack.c.h.b16 %v3892
        %v3941 = vpack.c.b16 %v3909, %v3909
        %v3942 = vpack.c.b16 %v3910, %v3910
        %v3943 = vpack.c.b16 %v3911, %v3911
        %v3944 = vpack.c.b16 %v3912, %v3912
        %v3945 = vpack.c.b16 %v3913, %v3913
        %v3946 = vpack.c.b16 %v3914, %v3914
        %v3947 = vpack.c.b16 %v3915, %v3915
        %v3948 = vpack.c.b16 %v3916, %v3916
        %v3949 = vpack.c.b16 %v3917, %v3917
        %v3950 = vpack.c.b16 %v3918, %v3918
        %v3951 = vpack.c.b16 %v3919, %v3919
        %v3952 = vpack.c.b16 %v3920, %v3920
        %v3953 = vpack.c.b16 %v3921, %v3921
        %v3954 = vpack.c.b16 %v3922, %v3922
        %v3955 = vpack.c.b16 %v3923, %v3923
        %v3956 = vpack.c.b16 %v3924, %v3924
        %v3957 = vpack.c.b16 %v3925, %v3925
        %v3958 = vpack.c.b16 %v3926, %v3926
        %v3959 = vpack.c.b16 %v3927, %v3927
        %v3960 = vpack.c.b16 %v3928, %v3928
        %v3961 = vpack.c.b16 %v3929, %v3929
        %v3962 = vpack.c.b16 %v3930, %v3930
        %v3963 = vpack.c.b16 %v3931, %v3931
        %v3964 = vpack.c.b16 %v3932, %v3932
        %v3965 = vpack.c.b16 %v3933, %v3933
        %v3966 = vpack.c.b16 %v3934, %v3934
        %v3967 = vpack.c.b16 %v3935, %v3935
        %v3968 = vpack.c.b16 %v3936, %v3936
        %v3969 = vpack.c.b16 %v3937, %v3937
        %v3970 = vpack.c.b16 %v3938, %v3938
        %v3971 = vpack.c.b16 %v3939, %v3939
        %v3972 = vpack.c.b16 %v3940, %v3940
        %vm3973 = vsmask.f32 256
        %vm3974 = vsmask.f32 4368
        %vm3975 = vmor %vm3973, %vm3974
        %v3977 = vshrl.u32 %v3941, 16
        %v3979 = vrot.slane %v3977, 7
        %v3980 = vshll.u32 %v3941, 16
        %v3982 = vor.u32 %v3979, %v3980
        %v3983 = vrot.slane %v3979, 4
        %v3985 = vshrl.u32 %v3942, 16
        %v3987 = vrot.slane %v3985, 7
        %v3988 = vshll.u32 %v3942, 16
        %v3990 = vor.u32 %v3987, %v3988
        %v3991 = vsel %vm3975, %v3983, %v3990
        %v3992 = vrot.slane %v3987, 4
        %v3994 = vshrl.u32 %v3943, 16
        %v3996 = vrot.slane %v3994, 7
        %v3997 = vshll.u32 %v3943, 16
        %v3999 = vor.u32 %v3996, %v3997
        %v4000 = vrot.slane %v3996, 4
        %v4002 = vshrl.u32 %v3944, 16
        %v4004 = vrot.slane %v4002, 7
        %v4005 = vshll.u32 %v3944, 16
        %v4007 = vor.u32 %v4004, %v4005
        %v4008 = vsel %vm3975, %v4000, %v4007
        %v4009 = vrot.slane %v4004, 4
        %v4011 = vshrl.u32 %v3945, 16
        %v4013 = vrot.slane %v4011, 7
        %v4014 = vshll.u32 %v3945, 16
        %v4016 = vor.u32 %v4013, %v4014
        %v4017 = vrot.slane %v4013, 4
        %v4019 = vshrl.u32 %v3946, 16
        %v4021 = vrot.slane %v4019, 7
        %v4022 = vshll.u32 %v3946, 16
        %v4024 = vor.u32 %v4021, %v4022
        %v4025 = vsel %vm3975, %v4017, %v4024
        %v4026 = vrot.slane %v4021, 4
        %v4028 = vshrl.u32 %v3947, 16
        %v4030 = vrot.slane %v4028, 7
        %v4031 = vshll.u32 %v3947, 16
        %v4033 = vor.u32 %v4030, %v4031
        %v4034 = vrot.slane %v4030, 4
        %v4036 = vshrl.u32 %v3948, 16
        %v4038 = vrot.slane %v4036, 7
        %v4039 = vshll.u32 %v3948, 16
        %v4041 = vor.u32 %v4038, %v4039
        %v4042 = vsel %vm3975, %v4034, %v4041
        %v4043 = vrot.slane %v4038, 4
        %v4045 = vshrl.u32 %v3949, 16
        %v4047 = vrot.slane %v4045, 7
        %v4048 = vshll.u32 %v3949, 16
        %v4050 = vor.u32 %v4047, %v4048
        %v4051 = vrot.slane %v4047, 4
        %v4053 = vshrl.u32 %v3950, 16
        %v4055 = vrot.slane %v4053, 7
        %v4056 = vshll.u32 %v3950, 16
        %v4058 = vor.u32 %v4055, %v4056
        %v4059 = vsel %vm3975, %v4051, %v4058
        %v4060 = vrot.slane %v4055, 4
        %v4062 = vshrl.u32 %v3951, 16
        %v4064 = vrot.slane %v4062, 7
        %v4065 = vshll.u32 %v3951, 16
        %v4067 = vor.u32 %v4064, %v4065
        %v4068 = vrot.slane %v4064, 4
        %v4070 = vshrl.u32 %v3952, 16
        %v4072 = vrot.slane %v4070, 7
        %v4073 = vshll.u32 %v3952, 16
        %v4075 = vor.u32 %v4072, %v4073
        %v4076 = vsel %vm3975, %v4068, %v4075
        %v4077 = vrot.slane %v4072, 4
        %v4079 = vshrl.u32 %v3953, 16
        %v4081 = vrot.slane %v4079, 7
        %v4082 = vshll.u32 %v3953, 16
        %v4084 = vor.u32 %v4081, %v4082
        %v4085 = vrot.slane %v4081, 4
        %v4087 = vshrl.u32 %v3954, 16
        %v4089 = vrot.slane %v4087, 7
        %v4090 = vshll.u32 %v3954, 16
        %v4092 = vor.u32 %v4089, %v4090
        %v4093 = vsel %vm3975, %v4085, %v4092
        %v4094 = vrot.slane %v4089, 4
        %v4096 = vshrl.u32 %v3955, 16
        %v4098 = vrot.slane %v4096, 7
        %v4099 = vshll.u32 %v3955, 16
        %v4101 = vor.u32 %v4098, %v4099
        %v4102 = vrot.slane %v4098, 4
        %v4104 = vshrl.u32 %v3956, 16
        %v4106 = vrot.slane %v4104, 7
        %v4107 = vshll.u32 %v3956, 16
        %v4109 = vor.u32 %v4106, %v4107
        %v4110 = vsel %vm3975, %v4102, %v4109
        %v4111 = vrot.slane %v4106, 4
        %v4113 = vshrl.u32 %v3957, 16
        %v4115 = vrot.slane %v4113, 7
        %v4116 = vshll.u32 %v3957, 16
        %v4118 = vor.u32 %v4115, %v4116
        %v4119 = vrot.slane %v4115, 4
        %v4121 = vshrl.u32 %v3958, 16
        %v4123 = vrot.slane %v4121, 7
        %v4124 = vshll.u32 %v3958, 16
        %v4126 = vor.u32 %v4123, %v4124
        %v4127 = vsel %vm3975, %v4119, %v4126
        %v4128 = vrot.slane %v4123, 4
        %v4130 = vshrl.u32 %v3959, 16
        %v4132 = vrot.slane %v4130, 7
        %v4133 = vshll.u32 %v3959, 16
        %v4135 = vor.u32 %v4132, %v4133
        %v4136 = vrot.slane %v4132, 4
        %v4138 = vshrl.u32 %v3960, 16
        %v4140 = vrot.slane %v4138, 7
        %v4141 = vshll.u32 %v3960, 16
        %v4143 = vor.u32 %v4140, %v4141
        %v4144 = vsel %vm3975, %v4136, %v4143
        %v4145 = vrot.slane %v4140, 4
        %v4147 = vshrl.u32 %v3961, 16
        %v4149 = vrot.slane %v4147, 7
        %v4150 = vshll.u32 %v3961, 16
        %v4152 = vor.u32 %v4149, %v4150
        %v4153 = vrot.slane %v4149, 4
        %v4155 = vshrl.u32 %v3962, 16
        %v4157 = vrot.slane %v4155, 7
        %v4158 = vshll.u32 %v3962, 16
        %v4160 = vor.u32 %v4157, %v4158
        %v4161 = vsel %vm3975, %v4153, %v4160
        %v4162 = vrot.slane %v4157, 4
        %v4164 = vshrl.u32 %v3963, 16
        %v4166 = vrot.slane %v4164, 7
        %v4167 = vshll.u32 %v3963, 16
        %v4169 = vor.u32 %v4166, %v4167
        %v4170 = vrot.slane %v4166, 4
        %v4172 = vshrl.u32 %v3964, 16
        %v4174 = vrot.slane %v4172, 7
        %v4175 = vshll.u32 %v3964, 16
        %v4177 = vor.u32 %v4174, %v4175
        %v4178 = vsel %vm3975, %v4170, %v4177
        %v4179 = vrot.slane %v4174, 4
        %v4181 = vshrl.u32 %v3965, 16
        %v4183 = vrot.slane %v4181, 7
        %v4184 = vshll.u32 %v3965, 16
        %v4186 = vor.u32 %v4183, %v4184
        %v4187 = vrot.slane %v4183, 4
        %v4189 = vshrl.u32 %v3966, 16
        %v4191 = vrot.slane %v4189, 7
        %v4192 = vshll.u32 %v3966, 16
        %v4194 = vor.u32 %v4191, %v4192
        %v4195 = vsel %vm3975, %v4187, %v4194
        %v4196 = vrot.slane %v4191, 4
        %v4198 = vshrl.u32 %v3967, 16
        %v4200 = vrot.slane %v4198, 7
        %v4201 = vshll.u32 %v3967, 16
        %v4203 = vor.u32 %v4200, %v4201
        %v4204 = vrot.slane %v4200, 4
        %v4206 = vshrl.u32 %v3968, 16
        %v4208 = vrot.slane %v4206, 7
        %v4209 = vshll.u32 %v3968, 16
        %v4211 = vor.u32 %v4208, %v4209
        %v4212 = vsel %vm3975, %v4204, %v4211
        %v4213 = vrot.slane %v4208, 4
        %v4215 = vshrl.u32 %v3969, 16
        %v4217 = vrot.slane %v4215, 7
        %v4218 = vshll.u32 %v3969, 16
        %v4220 = vor.u32 %v4217, %v4218
        %v4221 = vrot.slane %v4217, 4
        %v4223 = vshrl.u32 %v3970, 16
        %v4225 = vrot.slane %v4223, 7
        %v4226 = vshll.u32 %v3970, 16
        %v4228 = vor.u32 %v4225, %v4226
        %v4229 = vsel %vm3975, %v4221, %v4228
        %v4230 = vrot.slane %v4225, 4
        %v4232 = vshrl.u32 %v3971, 16
        %v4234 = vrot.slane %v4232, 7
        %v4235 = vshll.u32 %v3971, 16
        %v4237 = vor.u32 %v4234, %v4235
        %v4238 = vrot.slane %v4234, 4
        %v4240 = vshrl.u32 %v3972, 16
        %v4242 = vrot.slane %v4240, 7
        %v4243 = vshll.u32 %v3972, 16
        %v4245 = vor.u32 %v4242, %v4243
        %v4246 = vsel %vm3975, %v4238, %v4245
        %v4247 = vrot.slane %v4242, 4
        %s4296 = scalar_lea.vmem %s273, 12 [#allocation9]
        %vm4297 = vcmask 27648
        %vm4298 = vsmask.f32 7938
        %vm4299 = vmand %vm4297, %vm4298
        %v4300 = vld [vmem:[%s4296] sm:$0xf]
        %v4301 = vsel %vm4299, %v3982, %v4300
        %4302 = vst [vmem:[%s4296] sm:$0xf] %v4301
        %4303 = vst.msk [vmem:[%s4296 + $0x4] sm:$0xf] %vm3822, %v3991
        %vm4304 = vcmask 24576
        %vm4305 = vmand %vm4304, %vm3973
        %v4306 = vld [vmem:[%s4296 + $0x8] sm:$0x1]
        %v4307 = vsel %vm4305, %v3992, %v4306
        %4308 = vst [vmem:[%s4296 + $0x8] sm:$0x1] %v4307
        %v4309 = vld [vmem:[%s4296 + $0xc] sm:$0xf]
        %v4310 = vsel %vm4299, %v3999, %v4309
        %4311 = vst [vmem:[%s4296 + $0xc] sm:$0xf] %v4310
        %4312 = vst.msk [vmem:[%s4296 + $0x10] sm:$0xf] %vm3822, %v4008
        %v4313 = vld [vmem:[%s4296 + $0x14] sm:$0x1]
        %v4314 = vsel %vm4305, %v4009, %v4313
        %4315 = vst [vmem:[%s4296 + $0x14] sm:$0x1] %v4314
        %v4316 = vld [vmem:[%s4296 + $0x18] sm:$0xf]
        %v4317 = vsel %vm4299, %v4016, %v4316
        %4318 = vst [vmem:[%s4296 + $0x18] sm:$0xf] %v4317
        %4319 = vst.msk [vmem:[%s4296 + $0x1c] sm:$0xf] %vm3822, %v4025
        %v4320 = vld [vmem:[%s4296 + $0x20] sm:$0x1]
        %v4321 = vsel %vm4305, %v4026, %v4320
        %4322 = vst [vmem:[%s4296 + $0x20] sm:$0x1] %v4321
        %v4323 = vld [vmem:[%s4296 + $0x24] sm:$0xf]
        %v4324 = vsel %vm4299, %v4033, %v4323
        %4325 = vst [vmem:[%s4296 + $0x24] sm:$0xf] %v4324
        %4326 = vst.msk [vmem:[%s4296 + $0x28] sm:$0xf] %vm3822, %v4042
        %v4327 = vld [vmem:[%s4296 + $0x2c] sm:$0x1]
        %v4328 = vsel %vm4305, %v4043, %v4327
        %4329 = vst [vmem:[%s4296 + $0x2c] sm:$0x1] %v4328
        %v4330 = vld [vmem:[%s4296 + $0x30] sm:$0xf]
        %v4331 = vsel %vm4299, %v4050, %v4330
        %4332 = vst [vmem:[%s4296 + $0x30] sm:$0xf] %v4331
        %4333 = vst.msk [vmem:[%s4296 + $0x34] sm:$0xf] %vm3822, %v4059
        %v4334 = vld [vmem:[%s4296 + $0x38] sm:$0x1]
        %v4335 = vsel %vm4305, %v4060, %v4334
        %4336 = vst [vmem:[%s4296 + $0x38] sm:$0x1] %v4335
        %v4337 = vld [vmem:[%s4296 + $0x3c] sm:$0xf]
        %v4338 = vsel %vm4299, %v4067, %v4337
        %4339 = vst [vmem:[%s4296 + $0x3c] sm:$0xf] %v4338
        %4340 = vst.msk [vmem:[%s4296 + $0x40] sm:$0xf] %vm3822, %v4076
        %v4341 = vld [vmem:[%s4296 + $0x44] sm:$0x1]
        %v4342 = vsel %vm4305, %v4077, %v4341
        %4343 = vst [vmem:[%s4296 + $0x44] sm:$0x1] %v4342
        %v4344 = vld [vmem:[%s4296 + $0x48] sm:$0xf]
        %v4345 = vsel %vm4299, %v4084, %v4344
        %4346 = vst [vmem:[%s4296 + $0x48] sm:$0xf] %v4345
        %4347 = vst.msk [vmem:[%s4296 + $0x4c] sm:$0xf] %vm3822, %v4093
        %v4348 = vld [vmem:[%s4296 + $0x50] sm:$0x1]
        %v4349 = vsel %vm4305, %v4094, %v4348
        %4350 = vst [vmem:[%s4296 + $0x50] sm:$0x1] %v4349
        %v4351 = vld [vmem:[%s4296 + $0x54] sm:$0xf]
        %v4352 = vsel %vm4299, %v4101, %v4351
        %4353 = vst [vmem:[%s4296 + $0x54] sm:$0xf] %v4352
        %4354 = vst.msk [vmem:[%s4296 + $0x58] sm:$0xf] %vm3822, %v4110
        %v4355 = vld [vmem:[%s4296 + $0x5c] sm:$0x1]
        %v4356 = vsel %vm4305, %v4111, %v4355
        %4357 = vst [vmem:[%s4296 + $0x5c] sm:$0x1] %v4356
        %v4358 = vld [vmem:[%s4296 + $0x60] sm:$0xf]
        %v4359 = vsel %vm4299, %v4118, %v4358
        %4360 = vst [vmem:[%s4296 + $0x60] sm:$0xf] %v4359
        %4361 = vst.msk [vmem:[%s4296 + $0x64] sm:$0xf] %vm3822, %v4127
        %v4362 = vld [vmem:[%s4296 + $0x68] sm:$0x1]
        %v4363 = vsel %vm4305, %v4128, %v4362
        %4364 = vst [vmem:[%s4296 + $0x68] sm:$0x1] %v4363
        %v4365 = vld [vmem:[%s4296 + $0x6c] sm:$0xf]
        %v4366 = vsel %vm4299, %v4135, %v4365
        %4367 = vst [vmem:[%s4296 + $0x6c] sm:$0xf] %v4366
        %4368 = vst.msk [vmem:[%s4296 + $0x70] sm:$0xf] %vm3822, %v4144
        %v4369 = vld [vmem:[%s4296 + $0x74] sm:$0x1]
        %v4370 = vsel %vm4305, %v4145, %v4369
        %4371 = vst [vmem:[%s4296 + $0x74] sm:$0x1] %v4370
        %v4372 = vld [vmem:[%s4296 + $0x78] sm:$0xf]
        %v4373 = vsel %vm4299, %v4152, %v4372
        %4374 = vst [vmem:[%s4296 + $0x78] sm:$0xf] %v4373
        %4375 = vst.msk [vmem:[%s4296 + $0x7c] sm:$0xf] %vm3822, %v4161
        %v4376 = vld [vmem:[%s4296 + $0x80] sm:$0x1]
        %v4377 = vsel %vm4305, %v4162, %v4376
        %4378 = vst [vmem:[%s4296 + $0x80] sm:$0x1] %v4377
        %v4379 = vld [vmem:[%s4296 + $0x84] sm:$0xf]
        %v4380 = vsel %vm4299, %v4169, %v4379
        %4381 = vst [vmem:[%s4296 + $0x84] sm:$0xf] %v4380
        %4382 = vst.msk [vmem:[%s4296 + $0x88] sm:$0xf] %vm3822, %v4178
        %v4383 = vld [vmem:[%s4296 + $0x8c] sm:$0x1]
        %v4384 = vsel %vm4305, %v4179, %v4383
        %4385 = vst [vmem:[%s4296 + $0x8c] sm:$0x1] %v4384
        %v4386 = vld [vmem:[%s4296 + $0x90] sm:$0xf]
        %v4387 = vsel %vm4299, %v4186, %v4386
        %4388 = vst [vmem:[%s4296 + $0x90] sm:$0xf] %v4387
        %4389 = vst.msk [vmem:[%s4296 + $0x94] sm:$0xf] %vm3822, %v4195
        %v4390 = vld [vmem:[%s4296 + $0x98] sm:$0x1]
        %v4391 = vsel %vm4305, %v4196, %v4390
        %4392 = vst [vmem:[%s4296 + $0x98] sm:$0x1] %v4391
        %v4393 = vld [vmem:[%s4296 + $0x9c] sm:$0xf]
        %v4394 = vsel %vm4299, %v4203, %v4393
        %4395 = vst [vmem:[%s4296 + $0x9c] sm:$0xf] %v4394
        %4396 = vst.msk [vmem:[%s4296 + $0xa0] sm:$0xf] %vm3822, %v4212
        %v4397 = vld [vmem:[%s4296 + $0xa4] sm:$0x1]
        %v4398 = vsel %vm4305, %v4213, %v4397
        %4399 = vst [vmem:[%s4296 + $0xa4] sm:$0x1] %v4398
        %v4400 = vld [vmem:[%s4296 + $0xa8] sm:$0xf]
        %v4401 = vsel %vm4299, %v4220, %v4400
        %4402 = vst [vmem:[%s4296 + $0xa8] sm:$0xf] %v4401
        %4403 = vst.msk [vmem:[%s4296 + $0xac] sm:$0xf] %vm3822, %v4229
        %v4404 = vld [vmem:[%s4296 + $0xb0] sm:$0x1]
        %v4405 = vsel %vm4305, %v4230, %v4404
        %4406 = vst [vmem:[%s4296 + $0xb0] sm:$0x1] %v4405
        %v4407 = vld [vmem:[%s4296 + $0xb4] sm:$0xf]
        %v4408 = vsel %vm4299, %v4237, %v4407
        %4409 = vst [vmem:[%s4296 + $0xb4] sm:$0xf] %v4408
        %4410 = vst.msk [vmem:[%s4296 + $0xb8] sm:$0xf] %vm3822, %v4246
        %v4411 = vld [vmem:[%s4296 + $0xbc] sm:$0x1]
        %v4412 = vsel %vm4305, %v4247, %v4411
        %4413 = vst [vmem:[%s4296 + $0xbc] sm:$0x1] %v4412
        %s4414 = sand.u32 %s103, 1
        %s4415 = scalar_lea.sflag [#allocation5], %s4414
        %s4416 = sand.u32 %s103, 1
        %s4417 = smul.addr %s4416, 216
        %s4418 = scalar_lea.vmem [#allocation9], %s4417
        %s4419 = sand.u32 %s27, 1
        %s4420 = scalar_lea.sflag [#allocation11], %s4419
        %s4421 = sand.u32 %s129, 1
        %s4422 = scalar_lea.vmem [#allocation10], %s4421
        %s4423 = sand.u32 %s27, 1
        %s4424 = scalar_lea.sflag [#allocation11], %s4423
        %s4425 = sand.u32 %s155, 1
        %s4426 = scalar_lea.vmem [#allocation12], %s4425
        // Predicated region
        $region45: #{_lambda_.3} parent=31 // pred_check
          %p4427 = pneg %p113
        $region46: #{_lambda_.3} parent=31 // pred_check_branch
          %4429 = sbr.rel (%p4427) target = $region48
        $region47: #{_lambda_.3} parent=31 // pred_region
          %s4431 = ssub.s32 3456, 3456
          %4432 = vsyncadd %s4415, %s4431
          %s4433 = smul.addr %s27, 54
          %s4434 = smul.addr %s4433, 64
          %s4435 = scalar_lea.hbm %s3, %s4434
          %s4436 = sshll.u32 %s4418, 4
          %s4437 = int_to_ptr.vmem [resolvable:$true] %s4436
          %4442 = dma.vmem_to_hbm [thread:$0]  %s4437, 3456, %s4435, %s4415, 64, 64, 4
        $region48: #{_lambda_.3} parent=31 // pred_fallthru
          _
        // Predicated region
        $region49: #{_lambda_.3} parent=31 // pred_check
          %p4443 = pneg %p139
        $region50: #{_lambda_.3} parent=31 // pred_check_branch
          %4445 = sbr.rel (%p4443) target = $region52
        $region51: #{_lambda_.3} parent=31 // pred_region
          %s4447 = ssub.s32 16, 16
          %4448 = vsyncadd %s4420, %s4447
          %s4449 = smul.addr %s27, 16
          %s4450 = scalar_lea.hbm %s4, %s4449
          %s4452 = sshll.u32 %s4422, 4
          %s4453 = int_to_ptr.vmem [resolvable:$true] %s4452
          %4455 = dma.vmem_to_hbm [thread:$0]  %s4453, 16, %s4450, %s4420
        $region52: #{_lambda_.3} parent=31 // pred_fallthru
          _
        // Predicated region
        $region53: #{_lambda_.3} parent=31 // pred_check
          %p4456 = pneg %p165
        $region54: #{_lambda_.3} parent=31 // pred_check_branch
          %4458 = sbr.rel (%p4456) target = $region56
        $region55: #{_lambda_.3} parent=31 // pred_region
          %s4460 = ssub.s32 16, 16
          %4461 = vsyncadd %s4424, %s4460
          %s4462 = smul.addr %s27, 16
          %s4463 = scalar_lea.hbm %s5, %s4462
          %s4465 = sshll.u32 %s4426, 4
          %s4466 = int_to_ptr.vmem [resolvable:$true] %s4465
          %4468 = dma.vmem_to_hbm [thread:$0]  %s4466, 16, %s4463, %s4424
        $region56: #{_lambda_.3} parent=31 // pred_fallthru
          _
      $region32: #{_lambda_.3} parent=5 // pred_fallthru
        _
      %p4469 = scmp.le.s32.totalorder 2, %s22
      // Predicated region
      $region57: #{_lambda_.3} parent=5 // pred_check
        %p4470 = pneg %p4469
      $region58: #{_lambda_.3} parent=5 // pred_check_branch
        %4472 = sbr.rel (%p4470) target = $region60
      $region59: #{_lambda_.3} parent=5 // pred_region
        %s4473 = ssub.s32 %s22, 2
        // Predicated region
        $region61: #{_lambda_.3} parent=59 // pred_check
          %p4474 = pneg %p119
        $region62: #{_lambda_.3} parent=59 // pred_check_branch
          %4476 = sbr.rel (%p4474) target = $region64
        $region63: #{_lambda_.3} parent=59 // pred_region
          %s4477 = sand.u32 %s104, 1
          %s4478 = scalar_lea.sflag [#allocation5], %s4477
          %s4479 = sand.u32 %s104, 1
          %s4480 = smul.addr %s4479, 216
          %s4481 = scalar_lea.vmem [#allocation9], %s4480
          %4482 = dma.done %s4478, 3456
        $region64: #{_lambda_.3} parent=59 // pred_fallthru
          _
        // Predicated region
        $region65: #{_lambda_.3} parent=59 // pred_check
          %p4483 = pneg %p145
        $region66: #{_lambda_.3} parent=59 // pred_check_branch
          %4485 = sbr.rel (%p4483) target = $region68
        $region67: #{_lambda_.3} parent=59 // pred_region
          %s4486 = sand.u32 %s28, 1
          %s4487 = scalar_lea.sflag [#allocation11], %s4486
          %s4488 = sand.u32 %s130, 1
          %s4489 = scalar_lea.vmem [#allocation10], %s4488
          %4490 = dma.done %s4487, 16
        $region68: #{_lambda_.3} parent=59 // pred_fallthru
          _
        // Predicated region
        $region69: #{_lambda_.3} parent=59 // pred_check
          %p4491 = pneg %p171
        $region70: #{_lambda_.3} parent=59 // pred_check_branch
          %4493 = sbr.rel (%p4491) target = $region72
        $region71: #{_lambda_.3} parent=59 // pred_region
          %s4494 = sand.u32 %s28, 1
          %s4495 = scalar_lea.sflag [#allocation11], %s4494
          %s4496 = sand.u32 %s156, 1
          %s4497 = scalar_lea.vmem [#allocation12], %s4496
          %4498 = dma.done %s4495, 16
        $region72: #{_lambda_.3} parent=59 // pred_fallthru
          _
      $region60: #{_lambda_.3} parent=5 // pred_fallthru
        _
    $region6: #{_lambda_.3} parent=1 // loop_footer
      %s26 = sadd.s32 1, %s22
    $region7: #{_lambda_.3} parent=1 // loop_footer_branch
      %21 = sbr.rel target = $region3
    $region8: #{_lambda_.3} parent=1 // loop_exit
      _
    %4499 = vsyncpa [#allocation4], 1
    %s4500 = scalar_lea.sflag [#allocation4], 1
    %4501 = vsyncpa %s4500, 1
    %4502 = vsyncpa [#allocation7], 1
    %4503 = vsyncpa [#allocation5], 1
    %s4504 = scalar_lea.sflag [#allocation5], 1
    %4505 = vsyncpa %s4504, 1
    %4506 = vsyncpa [#allocation11], 1
    %s4507 = scalar_lea.sflag [#allocation11], 1
    %4508 = vsyncpa %s4507, 1

// kernel: _lambda_.4
$region0: #{_lambda_.4}
  #allocation0 [shape = 'u32[]', space=smem, size = 0x4, offset = 0x4, fixed_abs, tag = 'smem constant byte address 0x4 - core index']
  #allocation1 [shape = 'u32[144,128]{1,0:T(1,128)}', space=vmem, size = 0x12000, scoped, tag = 'internal scratch']
  #allocation2 [shape = 'bf16[18,18,4]{2,1,0:T(8,128)(2,1)}', space=vmem, size = 0x1b000, scoped, tag = 'scratch operand']
  #allocation3 [shape = 'bf16[256,36]{1,0:T(16,128)(2,1)}', space=vmem, size = 0x10000, scoped, tag = 'scratch operand']
  %s0 = inlined_call_operand.hbm [shape: bf16[2,18,18,4], index: 0, kind: input, shape index: {}]
  %s1 = inlined_call_operand.hbm [shape: f32[1,4], index: 1, kind: input, shape index: {}]
  %s2 = inlined_call_operand.hbm [shape: f32[1,4], index: 2, kind: input, shape index: {}]
  %s3 = inlined_call_operand.hbm [shape: bf16[36,4], index: 3, kind: input, shape index: {}]
  %s4 = inlined_call_operand.hbm [shape: f32[1,4], index: 4, kind: input, shape index: {}]
  %s5 = inlined_call_operand.hbm [shape: bf16[2,256,4], index: 5, kind: output, shape index: {0}]
  %s6 = inlined_call_operand.hbm [shape: f32[2,1,4], index: 6, kind: output, shape index: {1}]
  %s7 = inlined_call_operand.hbm [shape: f32[2,1,4], index: 7, kind: output, shape index: {2}]
  %8 = xla_tuple %s5, %s6, %s7
  %s9 = sld [smem:[#allocation0]]
  $region89: #{_lambda_.4} parent=0
    _
  %s11 = ssub.s32 1, %s9
  %s12 = scalar_select 0, %s11, %s9
  $region1: #{_lambda_.4} parent=0
    #allocation4 [shape = 'u8[221184]{0}', space=vmem, size = 0x36000, scoped, tag = 'input window, operand 0']
    #allocation5 [shape = 's32[2]{0}', space=sflag, size = 0x8, scoped, tag = 'scoped memory for _lambda_.4']
    #allocation6 [shape = 's32[2]{0}', space=sflag, size = 0x8, scoped, tag = 'scoped memory for _lambda_.4']
    #allocation7 [shape = 'u8[512]{0}', space=vmem, size = 0x400, scoped, tag = 'input window, operand 1, single buffered']
    #allocation8 [shape = 's32[1]{0}', space=sflag, size = 0x4, scoped, tag = 'scoped memory for _lambda_.4']
    #allocation9 [shape = 'u8[512]{0}', space=vmem, size = 0x400, scoped, tag = 'input window, operand 2, single buffered']
    #allocation10 [shape = 'u8[10240]{0}', space=vmem, size = 0x2800, scoped, tag = 'input window, operand 3, single buffered']
    #allocation11 [shape = 's32[1]{0}', space=sflag, size = 0x4, scoped, tag = 'scoped memory for _lambda_.4']
    #allocation12 [shape = 'u8[512]{0}', space=vmem, size = 0x400, scoped, tag = 'input window, operand 4, single buffered']
    #allocation13 [shape = 'u8[131072]{0}', space=vmem, size = 0x20000, scoped, tag = 'output window, operand 0']
    #allocation14 [shape = 'u8[1024]{0}', space=vmem, size = 0x400, scoped, tag = 'output window, operand 1']
    #allocation15 [shape = 's32[2]{0}', space=sflag, size = 0x8, scoped, tag = 'scoped memory for _lambda_.4']
    #allocation16 [shape = 'u8[1024]{0}', space=vmem, size = 0x400, scoped, tag = 'output window, operand 2']
    %13 = vsyncpa [#allocation5], 0
    %s14 = scalar_lea.sflag [#allocation5], 1
    %15 = vsyncpa %s14, 0
    %16 = vsyncpa [#allocation8], 0
    %17 = vsyncpa [#allocation11], 0
    %18 = vsyncpa [#allocation6], 0
    %s19 = scalar_lea.sflag [#allocation6], 1
    %20 = vsyncpa %s19, 0
    %21 = vsyncpa [#allocation15], 0
    %s22 = scalar_lea.sflag [#allocation15], 1
    %23 = vsyncpa %s22, 0
    loop: start=0, step=1, limit=4
    $region2: #{_lambda_.4} parent=1 // loop_pre_header
      _
    $region3: #{_lambda_.4} parent=1 // loop_header
      %s25 = sphi 0, %s29
      %p26 = scmp.ge.s32.totalorder %s25, 4
      %s35 = sphi 0, %s37
      %s38 = sphi 0, %s35
      %s39 = sphi 0, %s38
      %s55 = sphi 0, %s39
      %s59 = sphi 0, %s59
      %s61 = sphi 0, %s59
      %s62 = sphi 0, %s61
      %s76 = sphi 0, %s62
      %s80 = sphi 0, %s80
      %s82 = sphi 0, %s80
      %s83 = sphi 0, %s82
      %s97 = sphi 0, %s83
      %s101 = sphi 0, %s101
      %s103 = sphi 0, %s101
      %s104 = sphi 0, %s103
      %s118 = sphi 0, %s104
      %s122 = sphi 0, %s122
      %s124 = sphi 0, %s122
      %s125 = sphi 0, %s124
      %s139 = sphi 0, %s125
      %s145 = sphi 0, %s147
      %s148 = sphi 0, %s145
      %s149 = sphi 0, %s148
      %s165 = sphi 0, %s149
      %s171 = sphi 0, %s173
      %s174 = sphi 0, %s171
      %s175 = sphi 0, %s174
      %s191 = sphi 0, %s175
      %s197 = sphi 0, %s199
      %s200 = sphi 0, %s197
      %s201 = sphi 0, %s200
      %s217 = sphi 0, %s201
    $region4: #{_lambda_.4} parent=1 // loop_header_branch
      %28 = sbr.rel (%p26) target = $region8
    $region5: #{_lambda_.4} parent=1 // loop_body
      %s30 = ssub.s32 %s25, 1
      %s31 = ssub.s32 %s25, 2
      %s32 = sadd.s32 %s25, 1
      %s33 = ssub.s32 %s25, %s32
      %p34 = scmp.eq.s32.totalorder %s33, 0
      %s36 = sadd.s32 %s35, 1
      %s37 = scalar_select %p34, %s35, %s36
      %p40 = pneg %p34
      %p41 = scmp.eq.s32.totalorder %s25, 1
      %p42 = por %p40, %p41
      %p43 = scmp.ne.s32.totalorder %s35, %s38
      %p44 = scmp.eq.s32.totalorder %s25, 0
      %p45 = por %p43, %p44
      %p46 = scmp.ne.s32.totalorder %s35, %s38
      %p47 = scmp.eq.s32.totalorder %s30, 1
      %p48 = por %p46, %p47
      %p49 = scmp.ne.s32.totalorder %s38, %s39
      %p50 = scmp.eq.s32.totalorder %s30, 0
      %p51 = por %p49, %p50
      %p52 = scmp.ne.s32.totalorder %s38, %s39
      %p53 = scmp.eq.s32.totalorder %s31, 1
      %p54 = por %p52, %p53
      %p56 = scmp.ne.s32.totalorder %s39, %s55
      %p57 = scmp.eq.s32.totalorder %s31, 0
      %p58 = por %p56, %p57
      %s60 = sadd.s32 %s59, 1
      %p63 = scmp.eq.s32.totalorder %s25, 1
      %p64 = scmp.ne.s32.totalorder %s59, %s61
      %p65 = scmp.eq.s32.totalorder %s25, 0
      %p66 = por %p64, %p65
      %p67 = scmp.ne.s32.totalorder %s59, %s61
      %p68 = scmp.eq.s32.totalorder %s30, 1
      %p69 = por %p67, %p68
      %p70 = scmp.ne.s32.totalorder %s61, %s62
      %p71 = scmp.eq.s32.totalorder %s30, 0
      %p72 = por %p70, %p71
      %p73 = scmp.ne.s32.totalorder %s61, %s62
      %p74 = scmp.eq.s32.totalorder %s31, 1
      %p75 = por %p73, %p74
      %p77 = scmp.ne.s32.totalorder %s62, %s76
      %p78 = scmp.eq.s32.totalorder %s31, 0
      %p79 = por %p77, %p78
      %s81 = sadd.s32 %s80, 1
      %p84 = scmp.eq.s32.totalorder %s25, 1
      %p85 = scmp.ne.s32.totalorder %s80, %s82
      %p86 = scmp.eq.s32.totalorder %s25, 0
      %p87 = por %p85, %p86
      %p88 = scmp.ne.s32.totalorder %s80, %s82
      %p89 = scmp.eq.s32.totalorder %s30, 1
      %p90 = por %p88, %p89
      %p91 = scmp.ne.s32.totalorder %s82, %s83
      %p92 = scmp.eq.s32.totalorder %s30, 0
      %p93 = por %p91, %p92
      %p94 = scmp.ne.s32.totalorder %s82, %s83
      %p95 = scmp.eq.s32.totalorder %s31, 1
      %p96 = por %p94, %p95
      %p98 = scmp.ne.s32.totalorder %s83, %s97
      %p99 = scmp.eq.s32.totalorder %s31, 0
      %p100 = por %p98, %p99
      %s102 = sadd.s32 %s101, 1
      %p105 = scmp.eq.s32.totalorder %s25, 1
      %p106 = scmp.ne.s32.totalorder %s101, %s103
      %p107 = scmp.eq.s32.totalorder %s25, 0
      %p108 = por %p106, %p107
      %p109 = scmp.ne.s32.totalorder %s101, %s103
      %p110 = scmp.eq.s32.totalorder %s30, 1
      %p111 = por %p109, %p110
      %p112 = scmp.ne.s32.totalorder %s103, %s104
      %p113 = scmp.eq.s32.totalorder %s30, 0
      %p114 = por %p112, %p113
      %p115 = scmp.ne.s32.totalorder %s103, %s104
      %p116 = scmp.eq.s32.totalorder %s31, 1
      %p117 = por %p115, %p116
      %p119 = scmp.ne.s32.totalorder %s104, %s118
      %p120 = scmp.eq.s32.totalorder %s31, 0
      %p121 = por %p119, %p120
      %s123 = sadd.s32 %s122, 1
      %p126 = scmp.eq.s32.totalorder %s25, 1
      %p127 = scmp.ne.s32.totalorder %s122, %s124
      %p128 = scmp.eq.s32.totalorder %s25, 0
      %p129 = por %p127, %p128
      %p130 = scmp.ne.s32.totalorder %s122, %s124
      %p131 = scmp.eq.s32.totalorder %s30, 1
      %p132 = por %p130, %p131
      %p133 = scmp.ne.s32.totalorder %s124, %s125
      %p134 = scmp.eq.s32.totalorder %s30, 0
      %p135 = por %p133, %p134
      %p136 = scmp.ne.s32.totalorder %s124, %s125
      %p137 = scmp.eq.s32.totalorder %s31, 1
      %p138 = por %p136, %p137
      %p140 = scmp.ne.s32.totalorder %s125, %s139
      %p141 = scmp.eq.s32.totalorder %s31, 0
      %p142 = por %p140, %p141
      %s143 = ssub.s32 %s25, %s32
      %p144 = scmp.eq.s32.totalorder %s143, 0
      %s146 = sadd.s32 %s145, 1
      %s147 = scalar_select %p144, %s145, %s146
      %p150 = pneg %p144
      %p151 = scmp.eq.s32.totalorder %s25, 1
      %p152 = por %p150, %p151
      %p153 = scmp.ne.s32.totalorder %s145, %s148
      %p154 = scmp.eq.s32.totalorder %s25, 0
      %p155 = por %p153, %p154
      %p156 = scmp.ne.s32.totalorder %s145, %s148
      %p157 = scmp.eq.s32.totalorder %s30, 1
      %p158 = por %p156, %p157
      %p159 = scmp.ne.s32.totalorder %s148, %s149
      %p160 = scmp.eq.s32.totalorder %s30, 0
      %p161 = por %p159, %p160
      %p162 = scmp.ne.s32.totalorder %s148, %s149
      %p163 = scmp.eq.s32.totalorder %s31, 1
      %p164 = por %p162, %p163
      %p166 = scmp.ne.s32.totalorder %s149, %s165
      %p167 = scmp.eq.s32.totalorder %s31, 0
      %p168 = por %p166, %p167
      %s169 = ssub.s32 %s25, %s32
      %p170 = scmp.eq.s32.totalorder %s169, 0
      %s172 = sadd.s32 %s171, 1
      %s173 = scalar_select %p170, %s171, %s172
      %p176 = pneg %p170
      %p177 = scmp.eq.s32.totalorder %s25, 1
      %p178 = por %p176, %p177
      %p179 = scmp.ne.s32.totalorder %s171, %s174
      %p180 = scmp.eq.s32.totalorder %s25, 0
      %p181 = por %p179, %p180
      %p182 = scmp.ne.s32.totalorder %s171, %s174
      %p183 = scmp.eq.s32.totalorder %s30, 1
      %p184 = por %p182, %p183
      %p185 = scmp.ne.s32.totalorder %s174, %s175
      %p186 = scmp.eq.s32.totalorder %s30, 0
      %p187 = por %p185, %p186
      %p188 = scmp.ne.s32.totalorder %s174, %s175
      %p189 = scmp.eq.s32.totalorder %s31, 1
      %p190 = por %p188, %p189
      %p192 = scmp.ne.s32.totalorder %s175, %s191
      %p193 = scmp.eq.s32.totalorder %s31, 0
      %p194 = por %p192, %p193
      %s195 = ssub.s32 %s25, %s32
      %p196 = scmp.eq.s32.totalorder %s195, 0
      %s198 = sadd.s32 %s197, 1
      %s199 = scalar_select %p196, %s197, %s198
      %p202 = pneg %p196
      %p203 = scmp.eq.s32.totalorder %s25, 1
      %p204 = por %p202, %p203
      %p205 = scmp.ne.s32.totalorder %s197, %s200
      %p206 = scmp.eq.s32.totalorder %s25, 0
      %p207 = por %p205, %p206
      %p208 = scmp.ne.s32.totalorder %s197, %s200
      %p209 = scmp.eq.s32.totalorder %s30, 1
      %p210 = por %p208, %p209
      %p211 = scmp.ne.s32.totalorder %s200, %s201
      %p212 = scmp.eq.s32.totalorder %s30, 0
      %p213 = por %p211, %p212
      %p214 = scmp.ne.s32.totalorder %s200, %s201
      %p215 = scmp.eq.s32.totalorder %s31, 1
      %p216 = por %p214, %p215
      %p218 = scmp.ne.s32.totalorder %s201, %s217
      %p219 = scmp.eq.s32.totalorder %s31, 0
      %p220 = por %p218, %p219
      %p221 = scmp.le.s32.totalorder 1, %s25
      %p222 = scmp.lt.s32.totalorder %s25, 3
      %p223 = pnand %p221, %p222
      %p224 = pneg %p223
      // Predicated region
      $region9: #{_lambda_.4} parent=5 // pred_check
        _
      $region10: #{_lambda_.4} parent=5 // pred_check_branch
        %226 = sbr.rel (%p223) target = $region12
      $region11: #{_lambda_.4} parent=5 // pred_region
        %s227 = ssub.s32 %s25, 1
        // Predicated region
        $region13: #{_lambda_.4} parent=11 // pred_check
          %p228 = pneg %p72
        $region14: #{_lambda_.4} parent=11 // pred_check_branch
          %230 = sbr.rel (%p228) target = $region16
        $region15: #{_lambda_.4} parent=11 // pred_region
          %s232 = ssub.s32 16, 16
          %233 = vsyncadd [#allocation8], %s232
          %s235 = sshll.u32 [#allocation7], 4
          %s236 = int_to_ptr.vmem [resolvable:$true] %s235
          %238 = dma.hbm_to_vmem [thread:$0]  %s1, 16, %s236, [#allocation8]
        $region16: #{_lambda_.4} parent=11 // pred_fallthru
          _
        // Predicated region
        $region17: #{_lambda_.4} parent=11 // pred_check
          %p239 = pneg %p93
        $region18: #{_lambda_.4} parent=11 // pred_check_branch
          %241 = sbr.rel (%p239) target = $region20
        $region19: #{_lambda_.4} parent=11 // pred_region
          %s243 = ssub.s32 16, 16
          %244 = vsyncadd [#allocation8], %s243
          %s246 = sshll.u32 [#allocation9], 4
          %s247 = int_to_ptr.vmem [resolvable:$true] %s246
          %249 = dma.hbm_to_vmem [thread:$0]  %s2, 16, %s247, [#allocation8]
        $region20: #{_lambda_.4} parent=11 // pred_fallthru
          _
        // Predicated region
        $region21: #{_lambda_.4} parent=11 // pred_check
          %p250 = pneg %p114
        $region22: #{_lambda_.4} parent=11 // pred_check_branch
          %252 = sbr.rel (%p250) target = $region24
        $region23: #{_lambda_.4} parent=11 // pred_region
          %s254 = ssub.s32 320, 320
          %255 = vsyncadd [#allocation11], %s254
          %s256 = sshll.u32 [#allocation10], 4
          %s257 = int_to_ptr.vmem [resolvable:$true] %s256
          %262 = dma.hbm_to_vmem [thread:$0]  %s3, 320, %s257, [#allocation11], 64, 64, 4
        $region24: #{_lambda_.4} parent=11 // pred_fallthru
          _
        // Predicated region
        $region25: #{_lambda_.4} parent=11 // pred_check
          %p263 = pneg %p135
        $region26: #{_lambda_.4} parent=11 // pred_check_branch
          %265 = sbr.rel (%p263) target = $region28
        $region27: #{_lambda_.4} parent=11 // pred_region
          %s267 = ssub.s32 16, 16
          %268 = vsyncadd [#allocation11], %s267
          %s270 = sshll.u32 [#allocation12], 4
          %s271 = int_to_ptr.vmem [resolvable:$true] %s270
          %273 = dma.hbm_to_vmem [thread:$0]  %s4, 16, %s271, [#allocation11]
        $region28: #{_lambda_.4} parent=11 // pred_fallthru
          _
      $region12: #{_lambda_.4} parent=5 // pred_fallthru
        _
      %p274 = scmp.lt.s32.totalorder %s25, 2
      // Predicated region
      $region29: #{_lambda_.4} parent=5 // pred_check
        %p275 = pneg %p274
      $region30: #{_lambda_.4} parent=5 // pred_check_branch
        %277 = sbr.rel (%p275) target = $region32
      $region31: #{_lambda_.4} parent=5 // pred_region
        // Predicated region
        $region33: #{_lambda_.4} parent=31 // pred_check
          %p278 = pneg %p45
        $region34: #{_lambda_.4} parent=31 // pred_check_branch
          %280 = sbr.rel (%p278) target = $region36
        $region35: #{_lambda_.4} parent=31 // pred_region
          %s281 = sand.u32 %s35, 1
          %s282 = scalar_lea.sflag [#allocation5], %s281
          %s283 = sand.u32 %s35, 1
          %s284 = smul.addr %s283, 216
          %s285 = scalar_lea.vmem [#allocation4], %s284
          %s287 = ssub.s32 3456, 3456
          %288 = vsyncadd %s282, %s287
          %s289 = smul.addr %s25, 54
          %s290 = smul.addr %s289, 64
          %s291 = scalar_lea.hbm %s0, %s290
          %s292 = sshll.u32 %s285, 4
          %s293 = int_to_ptr.vmem [resolvable:$true] %s292
          %298 = dma.hbm_to_vmem [thread:$0]  %s291, 3456, %s293, %s282, 64, 64, 4
        $region36: #{_lambda_.4} parent=31 // pred_fallthru
          _
      $region32: #{_lambda_.4} parent=5 // pred_fallthru
        _
      %p299 = scmp.le.s32.totalorder 1, %s25
      %p300 = scmp.lt.s32.totalorder %s25, 3
      %p301 = pnand %p299, %p300
      %p302 = pneg %p301
      // Predicated region
      $region37: #{_lambda_.4} parent=5 // pred_check
        _
      $region38: #{_lambda_.4} parent=5 // pred_check_branch
        %304 = sbr.rel (%p301) target = $region40
      $region39: #{_lambda_.4} parent=5 // pred_region
        %s305 = ssub.s32 %s25, 1
        %s306 = sand.u32 %s38, 1
        %s307 = scalar_lea.sflag [#allocation5], %s306
        %s308 = sand.u32 %s38, 1
        %s309 = smul.addr %s308, 216
        %s310 = scalar_lea.vmem [#allocation4], %s309
        // Predicated region
        $region41: #{_lambda_.4} parent=39 // pred_check
          %p311 = pneg %p51
        $region42: #{_lambda_.4} parent=39 // pred_check_branch
          %313 = sbr.rel (%p311) target = $region44
        $region43: #{_lambda_.4} parent=39 // pred_region
          %314 = dma.done %s307, 3456
        $region44: #{_lambda_.4} parent=39 // pred_fallthru
          _
        // Predicated region
        $region45: #{_lambda_.4} parent=39 // pred_check
          %p315 = pneg %p72
        $region46: #{_lambda_.4} parent=39 // pred_check_branch
          %317 = sbr.rel (%p315) target = $region48
        $region47: #{_lambda_.4} parent=39 // pred_region
          %318 = dma.done [#allocation8], 16
        $region48: #{_lambda_.4} parent=39 // pred_fallthru
          _
        // Predicated region
        $region49: #{_lambda_.4} parent=39 // pred_check
          %p319 = pneg %p93
        $region50: #{_lambda_.4} parent=39 // pred_check_branch
          %321 = sbr.rel (%p319) target = $region52
        $region51: #{_lambda_.4} parent=39 // pred_region
          %322 = dma.done [#allocation8], 16
        $region52: #{_lambda_.4} parent=39 // pred_fallthru
          _
        // Predicated region
        $region53: #{_lambda_.4} parent=39 // pred_check
          %p323 = pneg %p114
        $region54: #{_lambda_.4} parent=39 // pred_check_branch
          %325 = sbr.rel (%p323) target = $region56
        $region55: #{_lambda_.4} parent=39 // pred_region
          %326 = dma.done [#allocation11], 320
        $region56: #{_lambda_.4} parent=39 // pred_fallthru
          _
        // Predicated region
        $region57: #{_lambda_.4} parent=39 // pred_check
          %p327 = pneg %p135
        $region58: #{_lambda_.4} parent=39 // pred_check_branch
          %329 = sbr.rel (%p327) target = $region60
        $region59: #{_lambda_.4} parent=39 // pred_region
          %330 = dma.done [#allocation11], 16
        $region60: #{_lambda_.4} parent=39 // pred_fallthru
          _
        %s331 = sand.u32 %s38, 1
        %s332 = scalar_lea.sflag [#allocation5], %s331
        %s333 = sand.u32 %s38, 1
        %s334 = smul.addr %s333, 216
        %s335 = scalar_lea.vmem [#allocation4], %s334
        %p336 = pneg %p51
        %p337 = pneg %p48
        %p338 = pneg %p72
        %p339 = pneg %p69
        %p340 = pneg %p93
        %p341 = pneg %p90
        %p342 = pneg %p114
        %p343 = pneg %p111
        %p344 = pneg %p135
        %p345 = pneg %p132
        %p346 = pneg %p161
        %p347 = pneg %p158
        %s348 = sand.u32 %s148, 1
        %s349 = scalar_lea.sflag [#allocation6], %s348
        %s350 = sand.u32 %s148, 1
        %s351 = smul.addr %s350, 128
        %s352 = scalar_lea.vmem [#allocation13], %s351
        %p353 = pneg %p187
        %p354 = pneg %p184
        %s355 = sand.u32 %s30, 1
        %s356 = scalar_lea.sflag [#allocation15], %s355
        %s357 = sand.u32 %s174, 1
        %s358 = scalar_lea.vmem [#allocation14], %s357
        %p359 = pneg %p213
        %p360 = pneg %p210
        %s361 = sand.u32 %s30, 1
        %s362 = scalar_lea.sflag [#allocation15], %s361
        %s363 = sand.u32 %s200, 1
        %s364 = scalar_lea.vmem [#allocation16], %s363
        %vm366 = vcmask 27648
        %367 = vst.msk [vmem:[#allocation2] sm:$0xf] %vm366, 0
        %368 = vst.msk [vmem:[#allocation2 + $0x4] sm:$0xf] %vm366, 0
        %vm369 = vcmask 24576
        %370 = vst.msk [vmem:[#allocation2 + $0x8] sm:$0x1] %vm369, 0
        %371 = vst.msk [vmem:[#allocation2 + $0xc] sm:$0xf] %vm366, 0
        %372 = vst.msk [vmem:[#allocation2 + $0x10] sm:$0xf] %vm366, 0
        %373 = vst.msk [vmem:[#allocation2 + $0x14] sm:$0x1] %vm369, 0
        %374 = vst.msk [vmem:[#allocation2 + $0x18] sm:$0xf] %vm366, 0
        %375 = vst.msk [vmem:[#allocation2 + $0x1c] sm:$0xf] %vm366, 0
        %376 = vst.msk [vmem:[#allocation2 + $0x20] sm:$0x1] %vm369, 0
        %377 = vst.msk [vmem:[#allocation2 + $0x24] sm:$0xf] %vm366, 0
        %378 = vst.msk [vmem:[#allocation2 + $0x28] sm:$0xf] %vm366, 0
        %379 = vst.msk [vmem:[#allocation2 + $0x2c] sm:$0x1] %vm369, 0
        %380 = vst.msk [vmem:[#allocation2 + $0x30] sm:$0xf] %vm366, 0
        %381 = vst.msk [vmem:[#allocation2 + $0x34] sm:$0xf] %vm366, 0
        %382 = vst.msk [vmem:[#allocation2 + $0x38] sm:$0x1] %vm369, 0
        %383 = vst.msk [vmem:[#allocation2 + $0x3c] sm:$0xf] %vm366, 0
        %384 = vst.msk [vmem:[#allocation2 + $0x40] sm:$0xf] %vm366, 0
        %385 = vst.msk [vmem:[#allocation2 + $0x44] sm:$0x1] %vm369, 0
        %386 = vst.msk [vmem:[#allocation2 + $0x48] sm:$0xf] %vm366, 0
        %387 = vst.msk [vmem:[#allocation2 + $0x4c] sm:$0xf] %vm366, 0
        %388 = vst.msk [vmem:[#allocation2 + $0x50] sm:$0x1] %vm369, 0
        %389 = vst.msk [vmem:[#allocation2 + $0x54] sm:$0xf] %vm366, 0
        %390 = vst.msk [vmem:[#allocation2 + $0x58] sm:$0xf] %vm366, 0
        %391 = vst.msk [vmem:[#allocation2 + $0x5c] sm:$0x1] %vm369, 0
        %392 = vst.msk [vmem:[#allocation2 + $0x60] sm:$0xf] %vm366, 0
        %393 = vst.msk [vmem:[#allocation2 + $0x64] sm:$0xf] %vm366, 0
        %394 = vst.msk [vmem:[#allocation2 + $0x68] sm:$0x1] %vm369, 0
        %395 = vst.msk [vmem:[#allocation2 + $0x6c] sm:$0xf] %vm366, 0
        %396 = vst.msk [vmem:[#allocation2 + $0x70] sm:$0xf] %vm366, 0
        %397 = vst.msk [vmem:[#allocation2 + $0x74] sm:$0x1] %vm369, 0
        %398 = vst.msk [vmem:[#allocation2 + $0x78] sm:$0xf] %vm366, 0
        %399 = vst.msk [vmem:[#allocation2 + $0x7c] sm:$0xf] %vm366, 0
        %400 = vst.msk [vmem:[#allocation2 + $0x80] sm:$0x1] %vm369, 0
        %401 = vst.msk [vmem:[#allocation2 + $0x84] sm:$0xf] %vm366, 0
        %402 = vst.msk [vmem:[#allocation2 + $0x88] sm:$0xf] %vm366, 0
        %403 = vst.msk [vmem:[#allocation2 + $0x8c] sm:$0x1] %vm369, 0
        %404 = vst.msk [vmem:[#allocation2 + $0x90] sm:$0xf] %vm366, 0
        %405 = vst.msk [vmem:[#allocation2 + $0x94] sm:$0xf] %vm366, 0
        %406 = vst.msk [vmem:[#allocation2 + $0x98] sm:$0x1] %vm369, 0
        %407 = vst.msk [vmem:[#allocation2 + $0x9c] sm:$0xf] %vm366, 0
        %408 = vst.msk [vmem:[#allocation2 + $0xa0] sm:$0xf] %vm366, 0
        %409 = vst.msk [vmem:[#allocation2 + $0xa4] sm:$0x1] %vm369, 0
        %410 = vst.msk [vmem:[#allocation2 + $0xa8] sm:$0xf] %vm366, 0
        %411 = vst.msk [vmem:[#allocation2 + $0xac] sm:$0xf] %vm366, 0
        %412 = vst.msk [vmem:[#allocation2 + $0xb0] sm:$0x1] %vm369, 0
        %413 = vst.msk [vmem:[#allocation2 + $0xb4] sm:$0xf] %vm366, 0
        %414 = vst.msk [vmem:[#allocation2 + $0xb8] sm:$0xf] %vm366, 0
        %415 = vst.msk [vmem:[#allocation2 + $0xbc] sm:$0x1] %vm369, 0
        %416 = vst.msk [vmem:[#allocation2 + $0xc0] sm:$0xf] %vm366, 0
        %417 = vst.msk [vmem:[#allocation2 + $0xc4] sm:$0xf] %vm366, 0
        %418 = vst.msk [vmem:[#allocation2 + $0xc8] sm:$0x1] %vm369, 0
        %419 = vst.msk [vmem:[#allocation2 + $0xcc] sm:$0xf] %vm366, 0
        %420 = vst.msk [vmem:[#allocation2 + $0xd0] sm:$0xf] %vm366, 0
        %421 = vst.msk [vmem:[#allocation2 + $0xd4] sm:$0x1] %vm369, 0
        %s422 = scalar_lea.vmem %s310, 12 [#allocation4]
        %v423 = vld [vmem:[%s422] sm:$0xf]
        %v424 = vld [vmem:[%s422 + $0x4] sm:$0xf]
        %v425 = vld [vmem:[%s422 + $0x8] sm:$0x1]
        %v426 = vld [vmem:[%s422 + $0xc] sm:$0xf]
        %v427 = vld [vmem:[%s422 + $0x10] sm:$0xf]
        %v428 = vld [vmem:[%s422 + $0x14] sm:$0x1]
        %v429 = vld [vmem:[%s422 + $0x18] sm:$0xf]
        %v430 = vld [vmem:[%s422 + $0x1c] sm:$0xf]
        %v431 = vld [vmem:[%s422 + $0x20] sm:$0x1]
        %v432 = vld [vmem:[%s422 + $0x24] sm:$0xf]
        %v433 = vld [vmem:[%s422 + $0x28] sm:$0xf]
        %v434 = vld [vmem:[%s422 + $0x2c] sm:$0x1]
        %v435 = vld [vmem:[%s422 + $0x30] sm:$0xf]
        %v436 = vld [vmem:[%s422 + $0x34] sm:$0xf]
        %v437 = vld [vmem:[%s422 + $0x38] sm:$0x1]
        %v438 = vld [vmem:[%s422 + $0x3c] sm:$0xf]
        %v439 = vld [vmem:[%s422 + $0x40] sm:$0xf]
        %v440 = vld [vmem:[%s422 + $0x44] sm:$0x1]
        %v441 = vld [vmem:[%s422 + $0x48] sm:$0xf]
        %v442 = vld [vmem:[%s422 + $0x4c] sm:$0xf]
        %v443 = vld [vmem:[%s422 + $0x50] sm:$0x1]
        %v444 = vld [vmem:[%s422 + $0x54] sm:$0xf]
        %v445 = vld [vmem:[%s422 + $0x58] sm:$0xf]
        %v446 = vld [vmem:[%s422 + $0x5c] sm:$0x1]
        %v447 = vld [vmem:[%s422 + $0x60] sm:$0xf]
        %v448 = vld [vmem:[%s422 + $0x64] sm:$0xf]
        %v449 = vld [vmem:[%s422 + $0x68] sm:$0x1]
        %v450 = vld [vmem:[%s422 + $0x6c] sm:$0xf]
        %v451 = vld [vmem:[%s422 + $0x70] sm:$0xf]
        %v452 = vld [vmem:[%s422 + $0x74] sm:$0x1]
        %v453 = vld [vmem:[%s422 + $0x78] sm:$0xf]
        %v454 = vld [vmem:[%s422 + $0x7c] sm:$0xf]
        %v455 = vld [vmem:[%s422 + $0x80] sm:$0x1]
        %v456 = vld [vmem:[%s422 + $0x84] sm:$0xf]
        %v457 = vld [vmem:[%s422 + $0x88] sm:$0xf]
        %v458 = vld [vmem:[%s422 + $0x8c] sm:$0x1]
        %v459 = vld [vmem:[%s422 + $0x90] sm:$0xf]
        %v460 = vld [vmem:[%s422 + $0x94] sm:$0xf]
        %v461 = vld [vmem:[%s422 + $0x98] sm:$0x1]
        %v462 = vld [vmem:[%s422 + $0x9c] sm:$0xf]
        %v463 = vld [vmem:[%s422 + $0xa0] sm:$0xf]
        %v464 = vld [vmem:[%s422 + $0xa4] sm:$0x1]
        %v465 = vld [vmem:[%s422 + $0xa8] sm:$0xf]
        %v466 = vld [vmem:[%s422 + $0xac] sm:$0xf]
        %v467 = vld [vmem:[%s422 + $0xb0] sm:$0x1]
        %v468 = vld [vmem:[%s422 + $0xb4] sm:$0xf]
        %v469 = vld [vmem:[%s422 + $0xb8] sm:$0xf]
        %v470 = vld [vmem:[%s422 + $0xbc] sm:$0x1]
        %v471 = vunpack.c.l.bf16 %v423
        %v472 = vunpack.c.l.bf16 %v424
        %v473 = vunpack.c.l.bf16 %v425
        %v474 = vunpack.c.l.bf16 %v426
        %v475 = vunpack.c.l.bf16 %v427
        %v476 = vunpack.c.l.bf16 %v428
        %v477 = vunpack.c.l.bf16 %v429
        %v478 = vunpack.c.l.bf16 %v430
        %v479 = vunpack.c.l.bf16 %v431
        %v480 = vunpack.c.l.bf16 %v432
        %v481 = vunpack.c.l.bf16 %v433
        %v482 = vunpack.c.l.bf16 %v434
        %v483 = vunpack.c.l.bf16 %v435
        %v484 = vunpack.c.l.bf16 %v436
        %v485 = vunpack.c.l.bf16 %v437
        %v486 = vunpack.c.l.bf16 %v438
        %v487 = vunpack.c.l.bf16 %v439
        %v488 = vunpack.c.l.bf16 %v440
        %v489 = vunpack.c.l.bf16 %v441
        %v490 = vunpack.c.l.bf16 %v442
        %v491 = vunpack.c.l.bf16 %v443
        %v492 = vunpack.c.l.bf16 %v444
        %v493 = vunpack.c.l.bf16 %v445
        %v494 = vunpack.c.l.bf16 %v446
        %v495 = vunpack.c.l.bf16 %v447
        %v496 = vunpack.c.l.bf16 %v448
        %v497 = vunpack.c.l.bf16 %v449
        %v498 = vunpack.c.l.bf16 %v450
        %v499 = vunpack.c.l.bf16 %v451
        %v500 = vunpack.c.l.bf16 %v452
        %v501 = vunpack.c.l.bf16 %v453
        %v502 = vunpack.c.l.bf16 %v454
        %v503 = vunpack.c.l.bf16 %v455
        %v504 = vunpack.c.l.bf16 %v456
        %v505 = vunpack.c.l.bf16 %v457
        %v506 = vunpack.c.l.bf16 %v458
        %v507 = vunpack.c.l.bf16 %v459
        %v508 = vunpack.c.l.bf16 %v460
        %v509 = vunpack.c.l.bf16 %v461
        %v510 = vunpack.c.l.bf16 %v462
        %v511 = vunpack.c.l.bf16 %v463
        %v512 = vunpack.c.l.bf16 %v464
        %v513 = vunpack.c.l.bf16 %v465
        %v514 = vunpack.c.l.bf16 %v466
        %v515 = vunpack.c.l.bf16 %v467
        %v516 = vunpack.c.l.bf16 %v468
        %v517 = vunpack.c.l.bf16 %v469
        %v518 = vunpack.c.l.bf16 %v470
        %v519 = vld [vmem:[#allocation7] sm:$0x1]
        %v520 = vld [vmem:[#allocation9] sm:$0x1]
        %v522 = vlaneseq
        %v523 = vshrl.u32 %v522, 7
        %v524 = vsub.s32 0, %v523
        %v525 = vrot.slane %v519, %v524
        %v527 = vmul.f32 %v471, %v525
        %v528 = vmul.f32 %v472, %v525
        %v529 = vmul.f32 %v473, %v525
        %v530 = vmul.f32 %v474, %v525
        %v531 = vmul.f32 %v475, %v525
        %v532 = vmul.f32 %v476, %v525
        %v533 = vmul.f32 %v477, %v525
        %v534 = vmul.f32 %v478, %v525
        %v535 = vmul.f32 %v479, %v525
        %v536 = vmul.f32 %v480, %v525
        %v537 = vmul.f32 %v481, %v525
        %v538 = vmul.f32 %v482, %v525
        %v539 = vmul.f32 %v483, %v525
        %v540 = vmul.f32 %v484, %v525
        %v541 = vmul.f32 %v485, %v525
        %v542 = vmul.f32 %v486, %v525
        %v543 = vmul.f32 %v487, %v525
        %v544 = vmul.f32 %v488, %v525
        %v545 = vmul.f32 %v489, %v525
        %v546 = vmul.f32 %v490, %v525
        %v547 = vmul.f32 %v491, %v525
        %v548 = vmul.f32 %v492, %v525
        %v549 = vmul.f32 %v493, %v525
        %v550 = vmul.f32 %v494, %v525
        %v551 = vmul.f32 %v495, %v525
        %v552 = vmul.f32 %v496, %v525
        %v553 = vmul.f32 %v497, %v525
        %v554 = vmul.f32 %v498, %v525
        %v555 = vmul.f32 %v499, %v525
        %v556 = vmul.f32 %v500, %v525
        %v557 = vmul.f32 %v501, %v525
        %v558 = vmul.f32 %v502, %v525
        %v559 = vmul.f32 %v503, %v525
        %v560 = vmul.f32 %v504, %v525
        %v561 = vmul.f32 %v505, %v525
        %v562 = vmul.f32 %v506, %v525
        %v563 = vmul.f32 %v507, %v525
        %v564 = vmul.f32 %v508, %v525
        %v565 = vmul.f32 %v509, %v525
        %v566 = vmul.f32 %v510, %v525
        %v567 = vmul.f32 %v511, %v525
        %v568 = vmul.f32 %v512, %v525
        %v569 = vmul.f32 %v513, %v525
        %v570 = vmul.f32 %v514, %v525
        %v571 = vmul.f32 %v515, %v525
        %v572 = vmul.f32 %v516, %v525
        %v573 = vmul.f32 %v517, %v525
        %v574 = vmul.f32 %v518, %v525
        %v576 = vlaneseq
        %v577 = vshrl.u32 %v576, 7
        %v578 = vsub.s32 0, %v577
        %v579 = vrot.slane %v520, %v578
        %v581 = vadd.f32 %v527, %v579
        %v582 = vadd.f32 %v528, %v579
        %v583 = vadd.f32 %v529, %v579
        %v584 = vadd.f32 %v530, %v579
        %v585 = vadd.f32 %v531, %v579
        %v586 = vadd.f32 %v532, %v579
        %v587 = vadd.f32 %v533, %v579
        %v588 = vadd.f32 %v534, %v579
        %v589 = vadd.f32 %v535, %v579
        %v590 = vadd.f32 %v536, %v579
        %v591 = vadd.f32 %v537, %v579
        %v592 = vadd.f32 %v538, %v579
        %v593 = vadd.f32 %v539, %v579
        %v594 = vadd.f32 %v540, %v579
        %v595 = vadd.f32 %v541, %v579
        %v596 = vadd.f32 %v542, %v579
        %v597 = vadd.f32 %v543, %v579
        %v598 = vadd.f32 %v544, %v579
        %v599 = vadd.f32 %v545, %v579
        %v600 = vadd.f32 %v546, %v579
        %v601 = vadd.f32 %v547, %v579
        %v602 = vadd.f32 %v548, %v579
        %v603 = vadd.f32 %v549, %v579
        %v604 = vadd.f32 %v550, %v579
        %v605 = vadd.f32 %v551, %v579
        %v606 = vadd.f32 %v552, %v579
        %v607 = vadd.f32 %v553, %v579
        %v608 = vadd.f32 %v554, %v579
        %v609 = vadd.f32 %v555, %v579
        %v610 = vadd.f32 %v556, %v579
        %v611 = vadd.f32 %v557, %v579
        %v612 = vadd.f32 %v558, %v579
        %v613 = vadd.f32 %v559, %v579
        %v614 = vadd.f32 %v560, %v579
        %v615 = vadd.f32 %v561, %v579
        %v616 = vadd.f32 %v562, %v579
        %v617 = vadd.f32 %v563, %v579
        %v618 = vadd.f32 %v564, %v579
        %v619 = vadd.f32 %v565, %v579
        %v620 = vadd.f32 %v566, %v579
        %v621 = vadd.f32 %v567, %v579
        %v622 = vadd.f32 %v568, %v579
        %v623 = vadd.f32 %v569, %v579
        %v624 = vadd.f32 %v570, %v579
        %v625 = vadd.f32 %v571, %v579
        %v626 = vadd.f32 %v572, %v579
        %v627 = vadd.f32 %v573, %v579
        %v628 = vadd.f32 %v574, %v579
        %v629 = vmax.f32 %v581, 0.0
        %v630 = vmax.f32 %v582, 0.0
        %v631 = vmax.f32 %v583, 0.0
        %v632 = vmax.f32 %v584, 0.0
        %v633 = vmax.f32 %v585, 0.0
        %v634 = vmax.f32 %v586, 0.0
        %v635 = vmax.f32 %v587, 0.0
        %v636 = vmax.f32 %v588, 0.0
        %v637 = vmax.f32 %v589, 0.0
        %v638 = vmax.f32 %v590, 0.0
        %v639 = vmax.f32 %v591, 0.0
        %v640 = vmax.f32 %v592, 0.0
        %v641 = vmax.f32 %v593, 0.0
        %v642 = vmax.f32 %v594, 0.0
        %v643 = vmax.f32 %v595, 0.0
        %v644 = vmax.f32 %v596, 0.0
        %v645 = vmax.f32 %v597, 0.0
        %v646 = vmax.f32 %v598, 0.0
        %v647 = vmax.f32 %v599, 0.0
        %v648 = vmax.f32 %v600, 0.0
        %v649 = vmax.f32 %v601, 0.0
        %v650 = vmax.f32 %v602, 0.0
        %v651 = vmax.f32 %v603, 0.0
        %v652 = vmax.f32 %v604, 0.0
        %v653 = vmax.f32 %v605, 0.0
        %v654 = vmax.f32 %v606, 0.0
        %v655 = vmax.f32 %v607, 0.0
        %v656 = vmax.f32 %v608, 0.0
        %v657 = vmax.f32 %v609, 0.0
        %v658 = vmax.f32 %v610, 0.0
        %v659 = vmax.f32 %v611, 0.0
        %v660 = vmax.f32 %v612, 0.0
        %v661 = vmax.f32 %v613, 0.0
        %v662 = vmax.f32 %v614, 0.0
        %v663 = vmax.f32 %v615, 0.0
        %v664 = vmax.f32 %v616, 0.0
        %v665 = vmax.f32 %v617, 0.0
        %v666 = vmax.f32 %v618, 0.0
        %v667 = vmax.f32 %v619, 0.0
        %v668 = vmax.f32 %v620, 0.0
        %v669 = vmax.f32 %v621, 0.0
        %v670 = vmax.f32 %v622, 0.0
        %v671 = vmax.f32 %v623, 0.0
        %v672 = vmax.f32 %v624, 0.0
        %v673 = vmax.f32 %v625, 0.0
        %v674 = vmax.f32 %v626, 0.0
        %v675 = vmax.f32 %v627, 0.0
        %v676 = vmax.f32 %v628, 0.0
        %v677 = vpack.c.bf16 %v630, %v629
        %v678 = vpack.c.bf16 %v631, %v631
        %v679 = vpack.c.bf16 %v633, %v632
        %v680 = vpack.c.bf16 %v634, %v634
        %v681 = vpack.c.bf16 %v636, %v635
        %v682 = vpack.c.bf16 %v637, %v637
        %v683 = vpack.c.bf16 %v639, %v638
        %v684 = vpack.c.bf16 %v640, %v640
        %v685 = vpack.c.bf16 %v642, %v641
        %v686 = vpack.c.bf16 %v643, %v643
        %v687 = vpack.c.bf16 %v645, %v644
        %v688 = vpack.c.bf16 %v646, %v646
        %v689 = vpack.c.bf16 %v648, %v647
        %v690 = vpack.c.bf16 %v649, %v649
        %v691 = vpack.c.bf16 %v651, %v650
        %v692 = vpack.c.bf16 %v652, %v652
        %v693 = vpack.c.bf16 %v654, %v653
        %v694 = vpack.c.bf16 %v655, %v655
        %v695 = vpack.c.bf16 %v657, %v656
        %v696 = vpack.c.bf16 %v658, %v658
        %v697 = vpack.c.bf16 %v660, %v659
        %v698 = vpack.c.bf16 %v661, %v661
        %v699 = vpack.c.bf16 %v663, %v662
        %v700 = vpack.c.bf16 %v664, %v664
        %v701 = vpack.c.bf16 %v666, %v665
        %v702 = vpack.c.bf16 %v667, %v667
        %v703 = vpack.c.bf16 %v669, %v668
        %v704 = vpack.c.bf16 %v670, %v670
        %v705 = vpack.c.bf16 %v672, %v671
        %v706 = vpack.c.bf16 %v673, %v673
        %v707 = vpack.c.bf16 %v675, %v674
        %v708 = vpack.c.bf16 %v676, %v676
        %v741 = vunpack.c.l.b16 %v677
        %v742 = vunpack.c.h.b16 %v677
        %v743 = vunpack.c.l.b16 %v678
        %v744 = vunpack.c.l.b16 %v679
        %v745 = vunpack.c.h.b16 %v679
        %v746 = vunpack.c.l.b16 %v680
        %v747 = vunpack.c.l.b16 %v681
        %v748 = vunpack.c.h.b16 %v681
        %v749 = vunpack.c.l.b16 %v682
        %v750 = vunpack.c.l.b16 %v683
        %v751 = vunpack.c.h.b16 %v683
        %v752 = vunpack.c.l.b16 %v684
        %v753 = vunpack.c.l.b16 %v685
        %v754 = vunpack.c.h.b16 %v685
        %v755 = vunpack.c.l.b16 %v686
        %v756 = vunpack.c.l.b16 %v687
        %v757 = vunpack.c.h.b16 %v687
        %v758 = vunpack.c.l.b16 %v688
        %v759 = vunpack.c.l.b16 %v689
        %v760 = vunpack.c.h.b16 %v689
        %v761 = vunpack.c.l.b16 %v690
        %v762 = vunpack.c.l.b16 %v691
        %v763 = vunpack.c.h.b16 %v691
        %v764 = vunpack.c.l.b16 %v692
        %v765 = vunpack.c.l.b16 %v693
        %v766 = vunpack.c.h.b16 %v693
        %v767 = vunpack.c.l.b16 %v694
        %v768 = vunpack.c.l.b16 %v695
        %v769 = vunpack.c.h.b16 %v695
        %v770 = vunpack.c.l.b16 %v696
        %v771 = vunpack.c.l.b16 %v697
        %v772 = vunpack.c.h.b16 %v697
        %v773 = vunpack.c.l.b16 %v698
        %v774 = vunpack.c.l.b16 %v699
        %v775 = vunpack.c.h.b16 %v699
        %v776 = vunpack.c.l.b16 %v700
        %v777 = vunpack.c.l.b16 %v701
        %v778 = vunpack.c.h.b16 %v701
        %v779 = vunpack.c.l.b16 %v702
        %v780 = vunpack.c.l.b16 %v703
        %v781 = vunpack.c.h.b16 %v703
        %v782 = vunpack.c.l.b16 %v704
        %v783 = vunpack.c.l.b16 %v705
        %v784 = vunpack.c.h.b16 %v705
        %v785 = vunpack.c.l.b16 %v706
        %v786 = vunpack.c.l.b16 %v707
        %v787 = vunpack.c.h.b16 %v707
        %v788 = vunpack.c.l.b16 %v708
        %v789 = vpack.c.b16 %v741, %v741
        %v790 = vpack.c.b16 %v742, %v742
        %v791 = vpack.c.b16 %v743, %v743
        %v792 = vpack.c.b16 %v744, %v744
        %v793 = vpack.c.b16 %v745, %v745
        %v794 = vpack.c.b16 %v746, %v746
        %v795 = vpack.c.b16 %v747, %v747
        %v796 = vpack.c.b16 %v748, %v748
        %v797 = vpack.c.b16 %v749, %v749
        %v798 = vpack.c.b16 %v750, %v750
        %v799 = vpack.c.b16 %v751, %v751
        %v800 = vpack.c.b16 %v752, %v752
        %v801 = vpack.c.b16 %v753, %v753
        %v802 = vpack.c.b16 %v754, %v754
        %v803 = vpack.c.b16 %v755, %v755
        %v804 = vpack.c.b16 %v756, %v756
        %v805 = vpack.c.b16 %v757, %v757
        %v806 = vpack.c.b16 %v758, %v758
        %v807 = vpack.c.b16 %v759, %v759
        %v808 = vpack.c.b16 %v760, %v760
        %v809 = vpack.c.b16 %v761, %v761
        %v810 = vpack.c.b16 %v762, %v762
        %v811 = vpack.c.b16 %v763, %v763
        %v812 = vpack.c.b16 %v764, %v764
        %v813 = vpack.c.b16 %v765, %v765
        %v814 = vpack.c.b16 %v766, %v766
        %v815 = vpack.c.b16 %v767, %v767
        %v816 = vpack.c.b16 %v768, %v768
        %v817 = vpack.c.b16 %v769, %v769
        %v818 = vpack.c.b16 %v770, %v770
        %v819 = vpack.c.b16 %v771, %v771
        %v820 = vpack.c.b16 %v772, %v772
        %v821 = vpack.c.b16 %v773, %v773
        %v822 = vpack.c.b16 %v774, %v774
        %v823 = vpack.c.b16 %v775, %v775
        %v824 = vpack.c.b16 %v776, %v776
        %v825 = vpack.c.b16 %v777, %v777
        %v826 = vpack.c.b16 %v778, %v778
        %v827 = vpack.c.b16 %v779, %v779
        %v828 = vpack.c.b16 %v780, %v780
        %v829 = vpack.c.b16 %v781, %v781
        %v830 = vpack.c.b16 %v782, %v782
        %v831 = vpack.c.b16 %v783, %v783
        %v832 = vpack.c.b16 %v784, %v784
        %v833 = vpack.c.b16 %v785, %v785
        %v834 = vpack.c.b16 %v786, %v786
        %v835 = vpack.c.b16 %v787, %v787
        %v836 = vpack.c.b16 %v788, %v788
        %s885 = scalar_lea.vmem [#allocation2], 12
        %vm886 = vcmask 27648
        %vm887 = vsmask.f32 7938
        %vm888 = vmand %vm886, %vm887
        %v889 = vld [vmem:[%s885] sm:$0xf]
        %v890 = vsel %vm888, %v789, %v889
        %891 = vst [vmem:[%s885] sm:$0xf] %v890
        %892 = vst.msk [vmem:[%s885 + $0x4] sm:$0xf] %vm366, %v790
        %vm893 = vcmask 24576
        %vm894 = vsmask.f32 256
        %vm895 = vmand %vm893, %vm894
        %v896 = vld [vmem:[%s885 + $0x8] sm:$0x1]
        %v897 = vsel %vm895, %v791, %v896
        %898 = vst [vmem:[%s885 + $0x8] sm:$0x1] %v897
        %v899 = vld [vmem:[%s885 + $0xc] sm:$0xf]
        %v900 = vsel %vm888, %v792, %v899
        %901 = vst [vmem:[%s885 + $0xc] sm:$0xf] %v900
        %902 = vst.msk [vmem:[%s885 + $0x10] sm:$0xf] %vm366, %v793
        %v903 = vld [vmem:[%s885 + $0x14] sm:$0x1]
        %v904 = vsel %vm895, %v794, %v903
        %905 = vst [vmem:[%s885 + $0x14] sm:$0x1] %v904
        %v906 = vld [vmem:[%s885 + $0x18] sm:$0xf]
        %v907 = vsel %vm888, %v795, %v906
        %908 = vst [vmem:[%s885 + $0x18] sm:$0xf] %v907
        %909 = vst.msk [vmem:[%s885 + $0x1c] sm:$0xf] %vm366, %v796
        %v910 = vld [vmem:[%s885 + $0x20] sm:$0x1]
        %v911 = vsel %vm895, %v797, %v910
        %912 = vst [vmem:[%s885 + $0x20] sm:$0x1] %v911
        %v913 = vld [vmem:[%s885 + $0x24] sm:$0xf]
        %v914 = vsel %vm888, %v798, %v913
        %915 = vst [vmem:[%s885 + $0x24] sm:$0xf] %v914
        %916 = vst.msk [vmem:[%s885 + $0x28] sm:$0xf] %vm366, %v799
        %v917 = vld [vmem:[%s885 + $0x2c] sm:$0x1]
        %v918 = vsel %vm895, %v800, %v917
        %919 = vst [vmem:[%s885 + $0x2c] sm:$0x1] %v918
        %v920 = vld [vmem:[%s885 + $0x30] sm:$0xf]
        %v921 = vsel %vm888, %v801, %v920
        %922 = vst [vmem:[%s885 + $0x30] sm:$0xf] %v921
        %923 = vst.msk [vmem:[%s885 + $0x34] sm:$0xf] %vm366, %v802
        %v924 = vld [vmem:[%s885 + $0x38] sm:$0x1]
        %v925 = vsel %vm895, %v803, %v924
        %926 = vst [vmem:[%s885 + $0x38] sm:$0x1] %v925
        %v927 = vld [vmem:[%s885 + $0x3c] sm:$0xf]
        %v928 = vsel %vm888, %v804, %v927
        %929 = vst [vmem:[%s885 + $0x3c] sm:$0xf] %v928
        %930 = vst.msk [vmem:[%s885 + $0x40] sm:$0xf] %vm366, %v805
        %v931 = vld [vmem:[%s885 + $0x44] sm:$0x1]
        %v932 = vsel %vm895, %v806, %v931
        %933 = vst [vmem:[%s885 + $0x44] sm:$0x1] %v932
        %v934 = vld [vmem:[%s885 + $0x48] sm:$0xf]
        %v935 = vsel %vm888, %v807, %v934
        %936 = vst [vmem:[%s885 + $0x48] sm:$0xf] %v935
        %937 = vst.msk [vmem:[%s885 + $0x4c] sm:$0xf] %vm366, %v808
        %v938 = vld [vmem:[%s885 + $0x50] sm:$0x1]
        %v939 = vsel %vm895, %v809, %v938
        %940 = vst [vmem:[%s885 + $0x50] sm:$0x1] %v939
        %v941 = vld [vmem:[%s885 + $0x54] sm:$0xf]
        %v942 = vsel %vm888, %v810, %v941
        %943 = vst [vmem:[%s885 + $0x54] sm:$0xf] %v942
        %944 = vst.msk [vmem:[%s885 + $0x58] sm:$0xf] %vm366, %v811
        %v945 = vld [vmem:[%s885 + $0x5c] sm:$0x1]
        %v946 = vsel %vm895, %v812, %v945
        %947 = vst [vmem:[%s885 + $0x5c] sm:$0x1] %v946
        %v948 = vld [vmem:[%s885 + $0x60] sm:$0xf]
        %v949 = vsel %vm888, %v813, %v948
        %950 = vst [vmem:[%s885 + $0x60] sm:$0xf] %v949
        %951 = vst.msk [vmem:[%s885 + $0x64] sm:$0xf] %vm366, %v814
        %v952 = vld [vmem:[%s885 + $0x68] sm:$0x1]
        %v953 = vsel %vm895, %v815, %v952
        %954 = vst [vmem:[%s885 + $0x68] sm:$0x1] %v953
        %v955 = vld [vmem:[%s885 + $0x6c] sm:$0xf]
        %v956 = vsel %vm888, %v816, %v955
        %957 = vst [vmem:[%s885 + $0x6c] sm:$0xf] %v956
        %958 = vst.msk [vmem:[%s885 + $0x70] sm:$0xf] %vm366, %v817
        %v959 = vld [vmem:[%s885 + $0x74] sm:$0x1]
        %v960 = vsel %vm895, %v818, %v959
        %961 = vst [vmem:[%s885 + $0x74] sm:$0x1] %v960
        %v962 = vld [vmem:[%s885 + $0x78] sm:$0xf]
        %v963 = vsel %vm888, %v819, %v962
        %964 = vst [vmem:[%s885 + $0x78] sm:$0xf] %v963
        %965 = vst.msk [vmem:[%s885 + $0x7c] sm:$0xf] %vm366, %v820
        %v966 = vld [vmem:[%s885 + $0x80] sm:$0x1]
        %v967 = vsel %vm895, %v821, %v966
        %968 = vst [vmem:[%s885 + $0x80] sm:$0x1] %v967
        %v969 = vld [vmem:[%s885 + $0x84] sm:$0xf]
        %v970 = vsel %vm888, %v822, %v969
        %971 = vst [vmem:[%s885 + $0x84] sm:$0xf] %v970
        %972 = vst.msk [vmem:[%s885 + $0x88] sm:$0xf] %vm366, %v823
        %v973 = vld [vmem:[%s885 + $0x8c] sm:$0x1]
        %v974 = vsel %vm895, %v824, %v973
        %975 = vst [vmem:[%s885 + $0x8c] sm:$0x1] %v974
        %v976 = vld [vmem:[%s885 + $0x90] sm:$0xf]
        %v977 = vsel %vm888, %v825, %v976
        %978 = vst [vmem:[%s885 + $0x90] sm:$0xf] %v977
        %979 = vst.msk [vmem:[%s885 + $0x94] sm:$0xf] %vm366, %v826
        %v980 = vld [vmem:[%s885 + $0x98] sm:$0x1]
        %v981 = vsel %vm895, %v827, %v980
        %982 = vst [vmem:[%s885 + $0x98] sm:$0x1] %v981
        %v983 = vld [vmem:[%s885 + $0x9c] sm:$0xf]
        %v984 = vsel %vm888, %v828, %v983
        %985 = vst [vmem:[%s885 + $0x9c] sm:$0xf] %v984
        %986 = vst.msk [vmem:[%s885 + $0xa0] sm:$0xf] %vm366, %v829
        %v987 = vld [vmem:[%s885 + $0xa4] sm:$0x1]
        %v988 = vsel %vm895, %v830, %v987
        %989 = vst [vmem:[%s885 + $0xa4] sm:$0x1] %v988
        %v990 = vld [vmem:[%s885 + $0xa8] sm:$0xf]
        %v991 = vsel %vm888, %v831, %v990
        %992 = vst [vmem:[%s885 + $0xa8] sm:$0xf] %v991
        %993 = vst.msk [vmem:[%s885 + $0xac] sm:$0xf] %vm366, %v832
        %v994 = vld [vmem:[%s885 + $0xb0] sm:$0x1]
        %v995 = vsel %vm895, %v833, %v994
        %996 = vst [vmem:[%s885 + $0xb0] sm:$0x1] %v995
        %v997 = vld [vmem:[%s885 + $0xb4] sm:$0xf]
        %v998 = vsel %vm888, %v834, %v997
        %999 = vst [vmem:[%s885 + $0xb4] sm:$0xf] %v998
        %1000 = vst.msk [vmem:[%s885 + $0xb8] sm:$0xf] %vm366, %v835
        %v1001 = vld [vmem:[%s885 + $0xbc] sm:$0x1]
        %v1002 = vsel %vm895, %v836, %v1001
        %1003 = vst [vmem:[%s885 + $0xbc] sm:$0x1] %v1002
        %v1004 = vld [vmem:[#allocation2] sm:$0xf]
        %v1005 = vld [vmem:[#allocation2 + $0x4] sm:$0xf]
        %v1006 = vld [vmem:[#allocation2 + $0xc] sm:$0xf]
        %v1007 = vld [vmem:[#allocation2 + $0x10] sm:$0xf]
        %v1008 = vld [vmem:[#allocation2 + $0x18] sm:$0xf]
        %v1009 = vld [vmem:[#allocation2 + $0x1c] sm:$0xf]
        %v1010 = vld [vmem:[#allocation2 + $0x24] sm:$0xf]
        %v1011 = vld [vmem:[#allocation2 + $0x28] sm:$0xf]
        %v1012 = vld [vmem:[#allocation2 + $0x30] sm:$0xf]
        %v1013 = vld [vmem:[#allocation2 + $0x34] sm:$0xf]
        %v1014 = vld [vmem:[#allocation2 + $0x3c] sm:$0xf]
        %v1015 = vld [vmem:[#allocation2 + $0x40] sm:$0xf]
        %v1016 = vld [vmem:[#allocation2 + $0x48] sm:$0xf]
        %v1017 = vld [vmem:[#allocation2 + $0x4c] sm:$0xf]
        %v1018 = vld [vmem:[#allocation2 + $0x54] sm:$0xf]
        %v1019 = vld [vmem:[#allocation2 + $0x58] sm:$0xf]
        %v1020 = vld [vmem:[#allocation2 + $0x60] sm:$0xf]
        %v1021 = vld [vmem:[#allocation2 + $0x64] sm:$0xf]
        %v1022 = vld [vmem:[#allocation2 + $0x6c] sm:$0xf]
        %v1023 = vld [vmem:[#allocation2 + $0x70] sm:$0xf]
        %v1024 = vld [vmem:[#allocation2 + $0x78] sm:$0xf]
        %v1025 = vld [vmem:[#allocation2 + $0x7c] sm:$0xf]
        %v1026 = vld [vmem:[#allocation2 + $0x84] sm:$0xf]
        %v1027 = vld [vmem:[#allocation2 + $0x88] sm:$0xf]
        %v1028 = vld [vmem:[#allocation2 + $0x90] sm:$0xf]
        %v1029 = vld [vmem:[#allocation2 + $0x94] sm:$0xf]
        %v1030 = vld [vmem:[#allocation2 + $0x9c] sm:$0xf]
        %v1031 = vld [vmem:[#allocation2 + $0xa0] sm:$0xf]
        %v1032 = vld [vmem:[#allocation2 + $0xa8] sm:$0xf]
        %v1033 = vld [vmem:[#allocation2 + $0xac] sm:$0xf]
        %v1034 = vld [vmem:[#allocation2 + $0xb4] sm:$0xf]
        %v1035 = vld [vmem:[#allocation2 + $0xb8] sm:$0xf]
        %v1068 = vunpack.c.l.b16 %v1004
        %v1069 = vunpack.c.l.b16 %v1005
        %v1070 = vunpack.c.l.b16 %v1006
        %v1071 = vunpack.c.l.b16 %v1007
        %v1072 = vunpack.c.l.b16 %v1008
        %v1073 = vunpack.c.l.b16 %v1009
        %v1074 = vunpack.c.l.b16 %v1010
        %v1075 = vunpack.c.l.b16 %v1011
        %v1076 = vunpack.c.l.b16 %v1012
        %v1077 = vunpack.c.l.b16 %v1013
        %v1078 = vunpack.c.l.b16 %v1014
        %v1079 = vunpack.c.l.b16 %v1015
        %v1080 = vunpack.c.l.b16 %v1016
        %v1081 = vunpack.c.l.b16 %v1017
        %v1082 = vunpack.c.l.b16 %v1018
        %v1083 = vunpack.c.l.b16 %v1019
        %v1084 = vunpack.c.l.b16 %v1020
        %v1085 = vunpack.c.l.b16 %v1021
        %v1086 = vunpack.c.l.b16 %v1022
        %v1087 = vunpack.c.l.b16 %v1023
        %v1088 = vunpack.c.l.b16 %v1024
        %v1089 = vunpack.c.l.b16 %v1025
        %v1090 = vunpack.c.l.b16 %v1026
        %v1091 = vunpack.c.l.b16 %v1027
        %v1092 = vunpack.c.l.b16 %v1028
        %v1093 = vunpack.c.l.b16 %v1029
        %v1094 = vunpack.c.l.b16 %v1030
        %v1095 = vunpack.c.l.b16 %v1031
        %v1096 = vunpack.c.l.b16 %v1032
        %v1097 = vunpack.c.l.b16 %v1033
        %v1098 = vunpack.c.l.b16 %v1034
        %v1099 = vunpack.c.l.b16 %v1035
        %v1100 = vpack.c.b16 %v1069, %v1068
        %v1101 = vpack.c.b16 %v1071, %v1070
        %v1102 = vpack.c.b16 %v1073, %v1072
        %v1103 = vpack.c.b16 %v1075, %v1074
        %v1104 = vpack.c.b16 %v1077, %v1076
        %v1105 = vpack.c.b16 %v1079, %v1078
        %v1106 = vpack.c.b16 %v1081, %v1080
        %v1107 = vpack.c.b16 %v1083, %v1082
        %v1108 = vpack.c.b16 %v1085, %v1084
        %v1109 = vpack.c.b16 %v1087, %v1086
        %v1110 = vpack.c.b16 %v1089, %v1088
        %v1111 = vpack.c.b16 %v1091, %v1090
        %v1112 = vpack.c.b16 %v1093, %v1092
        %v1113 = vpack.c.b16 %v1095, %v1094
        %v1114 = vpack.c.b16 %v1097, %v1096
        %v1115 = vpack.c.b16 %v1099, %v1098
        %vm1132 = vcmask 31744
        %1133 = vst.msk [vmem:[#allocation3] sm:$0xff] %vm1132, %v1100
        %1134 = vst.msk [vmem:[#allocation3 + $0x8] sm:$0xff] %vm1132, %v1101
        %1135 = vst.msk [vmem:[#allocation3 + $0x10] sm:$0xff] %vm1132, %v1102
        %1136 = vst.msk [vmem:[#allocation3 + $0x18] sm:$0xff] %vm1132, %v1103
        %1137 = vst.msk [vmem:[#allocation3 + $0x20] sm:$0xff] %vm1132, %v1104
        %1138 = vst.msk [vmem:[#allocation3 + $0x28] sm:$0xff] %vm1132, %v1105
        %1139 = vst.msk [vmem:[#allocation3 + $0x30] sm:$0xff] %vm1132, %v1106
        %1140 = vst.msk [vmem:[#allocation3 + $0x38] sm:$0xff] %vm1132, %v1107
        %1141 = vst.msk [vmem:[#allocation3 + $0x40] sm:$0xff] %vm1132, %v1108
        %1142 = vst.msk [vmem:[#allocation3 + $0x48] sm:$0xff] %vm1132, %v1109
        %1143 = vst.msk [vmem:[#allocation3 + $0x50] sm:$0xff] %vm1132, %v1110
        %1144 = vst.msk [vmem:[#allocation3 + $0x58] sm:$0xff] %vm1132, %v1111
        %1145 = vst.msk [vmem:[#allocation3 + $0x60] sm:$0xff] %vm1132, %v1112
        %1146 = vst.msk [vmem:[#allocation3 + $0x68] sm:$0xff] %vm1132, %v1113
        %1147 = vst.msk [vmem:[#allocation3 + $0x70] sm:$0xff] %vm1132, %v1114
        %1148 = vst.msk [vmem:[#allocation3 + $0x78] sm:$0xff] %vm1132, %v1115
        %v1149 = vld [vmem:[#allocation2] sm:$0xf]
        %v1150 = vld [vmem:[#allocation2 + $0x4] sm:$0xf]
        %v1151 = vld [vmem:[#allocation2 + $0x8] sm:$0x1]
        %v1152 = vld [vmem:[#allocation2 + $0xc] sm:$0xf]
        %v1153 = vld [vmem:[#allocation2 + $0x10] sm:$0xf]
        %v1154 = vld [vmem:[#allocation2 + $0x14] sm:$0x1]
        %v1155 = vld [vmem:[#allocation2 + $0x18] sm:$0xf]
        %v1156 = vld [vmem:[#allocation2 + $0x1c] sm:$0xf]
        %v1157 = vld [vmem:[#allocation2 + $0x20] sm:$0x1]
        %v1158 = vld [vmem:[#allocation2 + $0x24] sm:$0xf]
        %v1159 = vld [vmem:[#allocation2 + $0x28] sm:$0xf]
        %v1160 = vld [vmem:[#allocation2 + $0x2c] sm:$0x1]
        %v1161 = vld [vmem:[#allocation2 + $0x30] sm:$0xf]
        %v1162 = vld [vmem:[#allocation2 + $0x34] sm:$0xf]
        %v1163 = vld [vmem:[#allocation2 + $0x38] sm:$0x1]
        %v1164 = vld [vmem:[#allocation2 + $0x3c] sm:$0xf]
        %v1165 = vld [vmem:[#allocation2 + $0x40] sm:$0xf]
        %v1166 = vld [vmem:[#allocation2 + $0x44] sm:$0x1]
        %v1167 = vld [vmem:[#allocation2 + $0x48] sm:$0xf]
        %v1168 = vld [vmem:[#allocation2 + $0x4c] sm:$0xf]
        %v1169 = vld [vmem:[#allocation2 + $0x50] sm:$0x1]
        %v1170 = vld [vmem:[#allocation2 + $0x54] sm:$0xf]
        %v1171 = vld [vmem:[#allocation2 + $0x58] sm:$0xf]
        %v1172 = vld [vmem:[#allocation2 + $0x5c] sm:$0x1]
        %v1173 = vld [vmem:[#allocation2 + $0x60] sm:$0xf]
        %v1174 = vld [vmem:[#allocation2 + $0x64] sm:$0xf]
        %v1175 = vld [vmem:[#allocation2 + $0x68] sm:$0x1]
        %v1176 = vld [vmem:[#allocation2 + $0x6c] sm:$0xf]
        %v1177 = vld [vmem:[#allocation2 + $0x70] sm:$0xf]
        %v1178 = vld [vmem:[#allocation2 + $0x74] sm:$0x1]
        %v1179 = vld [vmem:[#allocation2 + $0x78] sm:$0xf]
        %v1180 = vld [vmem:[#allocation2 + $0x7c] sm:$0xf]
        %v1181 = vld [vmem:[#allocation2 + $0x80] sm:$0x1]
        %v1182 = vld [vmem:[#allocation2 + $0x84] sm:$0xf]
        %v1183 = vld [vmem:[#allocation2 + $0x88] sm:$0xf]
        %v1184 = vld [vmem:[#allocation2 + $0x8c] sm:$0x1]
        %v1185 = vld [vmem:[#allocation2 + $0x90] sm:$0xf]
        %v1186 = vld [vmem:[#allocation2 + $0x94] sm:$0xf]
        %v1187 = vld [vmem:[#allocation2 + $0x98] sm:$0x1]
        %v1188 = vld [vmem:[#allocation2 + $0x9c] sm:$0xf]
        %v1189 = vld [vmem:[#allocation2 + $0xa0] sm:$0xf]
        %v1190 = vld [vmem:[#allocation2 + $0xa4] sm:$0x1]
        %v1191 = vld [vmem:[#allocation2 + $0xa8] sm:$0xf]
        %v1192 = vld [vmem:[#allocation2 + $0xac] sm:$0xf]
        %v1193 = vld [vmem:[#allocation2 + $0xb0] sm:$0x1]
        %v1194 = vld [vmem:[#allocation2 + $0xb4] sm:$0xf]
        %v1195 = vld [vmem:[#allocation2 + $0xb8] sm:$0xf]
        %v1196 = vld [vmem:[#allocation2 + $0xbc] sm:$0x1]
        %vm1197 = vsmask.f32 3328
        %vm1198 = vsmask.f32 7440
        %vm1199 = vmor %vm1197, %vm1198
        %v1201 = vshrl.u32 %v1149, 16
        %v1203 = vrot.slane %v1201, 4
        %v1204 = vshll.u32 %v1149, 16
        %v1206 = vrot.slane %v1204, 5
        %v1207 = vor.u32 %v1203, %v1206
        %v1208 = vrot.slane %v1207, 4
        %v1210 = vshll.u32 %v1150, 16
        %v1212 = vrot.slane %v1210, 5
        %v1213 = vsel %vm1199, %v1208, %v1212
        %v1214 = vshrl.u32 %v1150, 16
        %v1216 = vrot.slane %v1214, 4
        %v1217 = vor.u32 %v1216, %v1212
        %v1218 = vrot.slane %v1217, 4
        %v1220 = vshll.u32 %v1151, 16
        %v1222 = vrot.slane %v1220, 5
        %v1223 = vsel %vm1199, %v1218, %v1222
        %v1225 = vshrl.u32 %v1152, 16
        %v1227 = vrot.slane %v1225, 4
        %v1228 = vshll.u32 %v1152, 16
        %v1230 = vrot.slane %v1228, 5
        %v1231 = vor.u32 %v1227, %v1230
        %v1232 = vrot.slane %v1231, 4
        %v1234 = vshll.u32 %v1153, 16
        %v1236 = vrot.slane %v1234, 5
        %v1237 = vsel %vm1199, %v1232, %v1236
        %v1238 = vshrl.u32 %v1153, 16
        %v1240 = vrot.slane %v1238, 4
        %v1241 = vor.u32 %v1240, %v1236
        %v1242 = vrot.slane %v1241, 4
        %v1244 = vshll.u32 %v1154, 16
        %v1246 = vrot.slane %v1244, 5
        %v1247 = vsel %vm1199, %v1242, %v1246
        %v1249 = vshrl.u32 %v1155, 16
        %v1251 = vrot.slane %v1249, 4
        %v1252 = vshll.u32 %v1155, 16
        %v1254 = vrot.slane %v1252, 5
        %v1255 = vor.u32 %v1251, %v1254
        %v1256 = vrot.slane %v1255, 4
        %v1258 = vshll.u32 %v1156, 16
        %v1260 = vrot.slane %v1258, 5
        %v1261 = vsel %vm1199, %v1256, %v1260
        %v1262 = vshrl.u32 %v1156, 16
        %v1264 = vrot.slane %v1262, 4
        %v1265 = vor.u32 %v1264, %v1260
        %v1266 = vrot.slane %v1265, 4
        %v1268 = vshll.u32 %v1157, 16
        %v1270 = vrot.slane %v1268, 5
        %v1271 = vsel %vm1199, %v1266, %v1270
        %v1273 = vshrl.u32 %v1158, 16
        %v1275 = vrot.slane %v1273, 4
        %v1276 = vshll.u32 %v1158, 16
        %v1278 = vrot.slane %v1276, 5
        %v1279 = vor.u32 %v1275, %v1278
        %v1280 = vrot.slane %v1279, 4
        %v1282 = vshll.u32 %v1159, 16
        %v1284 = vrot.slane %v1282, 5
        %v1285 = vsel %vm1199, %v1280, %v1284
        %v1286 = vshrl.u32 %v1159, 16
        %v1288 = vrot.slane %v1286, 4
        %v1289 = vor.u32 %v1288, %v1284
        %v1290 = vrot.slane %v1289, 4
        %v1292 = vshll.u32 %v1160, 16
        %v1294 = vrot.slane %v1292, 5
        %v1295 = vsel %vm1199, %v1290, %v1294
        %v1297 = vshrl.u32 %v1161, 16
        %v1299 = vrot.slane %v1297, 4
        %v1300 = vshll.u32 %v1161, 16
        %v1302 = vrot.slane %v1300, 5
        %v1303 = vor.u32 %v1299, %v1302
        %v1304 = vrot.slane %v1303, 4
        %v1306 = vshll.u32 %v1162, 16
        %v1308 = vrot.slane %v1306, 5
        %v1309 = vsel %vm1199, %v1304, %v1308
        %v1310 = vshrl.u32 %v1162, 16
        %v1312 = vrot.slane %v1310, 4
        %v1313 = vor.u32 %v1312, %v1308
        %v1314 = vrot.slane %v1313, 4
        %v1316 = vshll.u32 %v1163, 16
        %v1318 = vrot.slane %v1316, 5
        %v1319 = vsel %vm1199, %v1314, %v1318
        %v1321 = vshrl.u32 %v1164, 16
        %v1323 = vrot.slane %v1321, 4
        %v1324 = vshll.u32 %v1164, 16
        %v1326 = vrot.slane %v1324, 5
        %v1327 = vor.u32 %v1323, %v1326
        %v1328 = vrot.slane %v1327, 4
        %v1330 = vshll.u32 %v1165, 16
        %v1332 = vrot.slane %v1330, 5
        %v1333 = vsel %vm1199, %v1328, %v1332
        %v1334 = vshrl.u32 %v1165, 16
        %v1336 = vrot.slane %v1334, 4
        %v1337 = vor.u32 %v1336, %v1332
        %v1338 = vrot.slane %v1337, 4
        %v1340 = vshll.u32 %v1166, 16
        %v1342 = vrot.slane %v1340, 5
        %v1343 = vsel %vm1199, %v1338, %v1342
        %v1345 = vshrl.u32 %v1167, 16
        %v1347 = vrot.slane %v1345, 4
        %v1348 = vshll.u32 %v1167, 16
        %v1350 = vrot.slane %v1348, 5
        %v1351 = vor.u32 %v1347, %v1350
        %v1352 = vrot.slane %v1351, 4
        %v1354 = vshll.u32 %v1168, 16
        %v1356 = vrot.slane %v1354, 5
        %v1357 = vsel %vm1199, %v1352, %v1356
        %v1358 = vshrl.u32 %v1168, 16
        %v1360 = vrot.slane %v1358, 4
        %v1361 = vor.u32 %v1360, %v1356
        %v1362 = vrot.slane %v1361, 4
        %v1364 = vshll.u32 %v1169, 16
        %v1366 = vrot.slane %v1364, 5
        %v1367 = vsel %vm1199, %v1362, %v1366
        %v1369 = vshrl.u32 %v1170, 16
        %v1371 = vrot.slane %v1369, 4
        %v1372 = vshll.u32 %v1170, 16
        %v1374 = vrot.slane %v1372, 5
        %v1375 = vor.u32 %v1371, %v1374
        %v1376 = vrot.slane %v1375, 4
        %v1378 = vshll.u32 %v1171, 16
        %v1380 = vrot.slane %v1378, 5
        %v1381 = vsel %vm1199, %v1376, %v1380
        %v1382 = vshrl.u32 %v1171, 16
        %v1384 = vrot.slane %v1382, 4
        %v1385 = vor.u32 %v1384, %v1380
        %v1386 = vrot.slane %v1385, 4
        %v1388 = vshll.u32 %v1172, 16
        %v1390 = vrot.slane %v1388, 5
        %v1391 = vsel %vm1199, %v1386, %v1390
        %v1393 = vshrl.u32 %v1173, 16
        %v1395 = vrot.slane %v1393, 4
        %v1396 = vshll.u32 %v1173, 16
        %v1398 = vrot.slane %v1396, 5
        %v1399 = vor.u32 %v1395, %v1398
        %v1400 = vrot.slane %v1399, 4
        %v1402 = vshll.u32 %v1174, 16
        %v1404 = vrot.slane %v1402, 5
        %v1405 = vsel %vm1199, %v1400, %v1404
        %v1406 = vshrl.u32 %v1174, 16
        %v1408 = vrot.slane %v1406, 4
        %v1409 = vor.u32 %v1408, %v1404
        %v1410 = vrot.slane %v1409, 4
        %v1412 = vshll.u32 %v1175, 16
        %v1414 = vrot.slane %v1412, 5
        %v1415 = vsel %vm1199, %v1410, %v1414
        %v1417 = vshrl.u32 %v1176, 16
        %v1419 = vrot.slane %v1417, 4
        %v1420 = vshll.u32 %v1176, 16
        %v1422 = vrot.slane %v1420, 5
        %v1423 = vor.u32 %v1419, %v1422
        %v1424 = vrot.slane %v1423, 4
        %v1426 = vshll.u32 %v1177, 16
        %v1428 = vrot.slane %v1426, 5
        %v1429 = vsel %vm1199, %v1424, %v1428
        %v1430 = vshrl.u32 %v1177, 16
        %v1432 = vrot.slane %v1430, 4
        %v1433 = vor.u32 %v1432, %v1428
        %v1434 = vrot.slane %v1433, 4
        %v1436 = vshll.u32 %v1178, 16
        %v1438 = vrot.slane %v1436, 5
        %v1439 = vsel %vm1199, %v1434, %v1438
        %v1441 = vshrl.u32 %v1179, 16
        %v1443 = vrot.slane %v1441, 4
        %v1444 = vshll.u32 %v1179, 16
        %v1446 = vrot.slane %v1444, 5
        %v1447 = vor.u32 %v1443, %v1446
        %v1448 = vrot.slane %v1447, 4
        %v1450 = vshll.u32 %v1180, 16
        %v1452 = vrot.slane %v1450, 5
        %v1453 = vsel %vm1199, %v1448, %v1452
        %v1454 = vshrl.u32 %v1180, 16
        %v1456 = vrot.slane %v1454, 4
        %v1457 = vor.u32 %v1456, %v1452
        %v1458 = vrot.slane %v1457, 4
        %v1460 = vshll.u32 %v1181, 16
        %v1462 = vrot.slane %v1460, 5
        %v1463 = vsel %vm1199, %v1458, %v1462
        %v1465 = vshrl.u32 %v1182, 16
        %v1467 = vrot.slane %v1465, 4
        %v1468 = vshll.u32 %v1182, 16
        %v1470 = vrot.slane %v1468, 5
        %v1471 = vor.u32 %v1467, %v1470
        %v1472 = vrot.slane %v1471, 4
        %v1474 = vshll.u32 %v1183, 16
        %v1476 = vrot.slane %v1474, 5
        %v1477 = vsel %vm1199, %v1472, %v1476
        %v1478 = vshrl.u32 %v1183, 16
        %v1480 = vrot.slane %v1478, 4
        %v1481 = vor.u32 %v1480, %v1476
        %v1482 = vrot.slane %v1481, 4
        %v1484 = vshll.u32 %v1184, 16
        %v1486 = vrot.slane %v1484, 5
        %v1487 = vsel %vm1199, %v1482, %v1486
        %v1489 = vshrl.u32 %v1185, 16
        %v1491 = vrot.slane %v1489, 4
        %v1492 = vshll.u32 %v1185, 16
        %v1494 = vrot.slane %v1492, 5
        %v1495 = vor.u32 %v1491, %v1494
        %v1496 = vrot.slane %v1495, 4
        %v1498 = vshll.u32 %v1186, 16
        %v1500 = vrot.slane %v1498, 5
        %v1501 = vsel %vm1199, %v1496, %v1500
        %v1502 = vshrl.u32 %v1186, 16
        %v1504 = vrot.slane %v1502, 4
        %v1505 = vor.u32 %v1504, %v1500
        %v1506 = vrot.slane %v1505, 4
        %v1508 = vshll.u32 %v1187, 16
        %v1510 = vrot.slane %v1508, 5
        %v1511 = vsel %vm1199, %v1506, %v1510
        %v1513 = vshrl.u32 %v1188, 16
        %v1515 = vrot.slane %v1513, 4
        %v1516 = vshll.u32 %v1188, 16
        %v1518 = vrot.slane %v1516, 5
        %v1519 = vor.u32 %v1515, %v1518
        %v1520 = vrot.slane %v1519, 4
        %v1522 = vshll.u32 %v1189, 16
        %v1524 = vrot.slane %v1522, 5
        %v1525 = vsel %vm1199, %v1520, %v1524
        %v1526 = vshrl.u32 %v1189, 16
        %v1528 = vrot.slane %v1526, 4
        %v1529 = vor.u32 %v1528, %v1524
        %v1530 = vrot.slane %v1529, 4
        %v1532 = vshll.u32 %v1190, 16
        %v1534 = vrot.slane %v1532, 5
        %v1535 = vsel %vm1199, %v1530, %v1534
        %v1537 = vshrl.u32 %v1191, 16
        %v1539 = vrot.slane %v1537, 4
        %v1540 = vshll.u32 %v1191, 16
        %v1542 = vrot.slane %v1540, 5
        %v1543 = vor.u32 %v1539, %v1542
        %v1544 = vrot.slane %v1543, 4
        %v1546 = vshll.u32 %v1192, 16
        %v1548 = vrot.slane %v1546, 5
        %v1549 = vsel %vm1199, %v1544, %v1548
        %v1550 = vshrl.u32 %v1192, 16
        %v1552 = vrot.slane %v1550, 4
        %v1553 = vor.u32 %v1552, %v1548
        %v1554 = vrot.slane %v1553, 4
        %v1556 = vshll.u32 %v1193, 16
        %v1558 = vrot.slane %v1556, 5
        %v1559 = vsel %vm1199, %v1554, %v1558
        %v1561 = vshrl.u32 %v1194, 16
        %v1563 = vrot.slane %v1561, 4
        %v1564 = vshll.u32 %v1194, 16
        %v1566 = vrot.slane %v1564, 5
        %v1567 = vor.u32 %v1563, %v1566
        %v1568 = vrot.slane %v1567, 4
        %v1570 = vshll.u32 %v1195, 16
        %v1572 = vrot.slane %v1570, 5
        %v1573 = vsel %vm1199, %v1568, %v1572
        %v1574 = vshrl.u32 %v1195, 16
        %v1576 = vrot.slane %v1574, 4
        %v1577 = vor.u32 %v1576, %v1572
        %v1578 = vrot.slane %v1577, 4
        %v1580 = vshll.u32 %v1196, 16
        %v1582 = vrot.slane %v1580, 5
        %v1583 = vsel %vm1199, %v1578, %v1582
        %v1584 = vunpack.c.l.b16 %v1213
        %v1585 = vunpack.c.l.b16 %v1223
        %v1586 = vunpack.c.l.b16 %v1237
        %v1587 = vunpack.c.l.b16 %v1247
        %v1588 = vunpack.c.l.b16 %v1261
        %v1589 = vunpack.c.l.b16 %v1271
        %v1590 = vunpack.c.l.b16 %v1285
        %v1591 = vunpack.c.l.b16 %v1295
        %v1592 = vunpack.c.l.b16 %v1309
        %v1593 = vunpack.c.l.b16 %v1319
        %v1594 = vunpack.c.l.b16 %v1333
        %v1595 = vunpack.c.l.b16 %v1343
        %v1596 = vunpack.c.l.b16 %v1357
        %v1597 = vunpack.c.l.b16 %v1367
        %v1598 = vunpack.c.l.b16 %v1381
        %v1599 = vunpack.c.l.b16 %v1391
        %v1600 = vunpack.c.l.b16 %v1405
        %v1601 = vunpack.c.l.b16 %v1415
        %v1602 = vunpack.c.l.b16 %v1429
        %v1603 = vunpack.c.l.b16 %v1439
        %v1604 = vunpack.c.l.b16 %v1453
        %v1605 = vunpack.c.l.b16 %v1463
        %v1606 = vunpack.c.l.b16 %v1477
        %v1607 = vunpack.c.l.b16 %v1487
        %v1608 = vunpack.c.l.b16 %v1501
        %v1609 = vunpack.c.l.b16 %v1511
        %v1610 = vunpack.c.l.b16 %v1525
        %v1611 = vunpack.c.l.b16 %v1535
        %v1612 = vunpack.c.l.b16 %v1549
        %v1613 = vunpack.c.l.b16 %v1559
        %v1614 = vunpack.c.l.b16 %v1573
        %v1615 = vunpack.c.l.b16 %v1583
        %v1616 = vpack.c.b16 %v1585, %v1584
        %v1617 = vpack.c.b16 %v1587, %v1586
        %v1618 = vpack.c.b16 %v1589, %v1588
        %v1619 = vpack.c.b16 %v1591, %v1590
        %v1620 = vpack.c.b16 %v1593, %v1592
        %v1621 = vpack.c.b16 %v1595, %v1594
        %v1622 = vpack.c.b16 %v1597, %v1596
        %v1623 = vpack.c.b16 %v1599, %v1598
        %v1624 = vpack.c.b16 %v1601, %v1600
        %v1625 = vpack.c.b16 %v1603, %v1602
        %v1626 = vpack.c.b16 %v1605, %v1604
        %v1627 = vpack.c.b16 %v1607, %v1606
        %v1628 = vpack.c.b16 %v1609, %v1608
        %v1629 = vpack.c.b16 %v1611, %v1610
        %v1630 = vpack.c.b16 %v1613, %v1612
        %v1631 = vpack.c.b16 %v1615, %v1614
        %1632 = vrot.lane.b32.xlu0 %v1616, 4
        %v1633 = vpop.permute.xlu0 %1632
        %1634 = vrot.lane.b32.xlu0 %v1617, 4
        %v1635 = vpop.permute.xlu0 %1634
        %1636 = vrot.lane.b32.xlu0 %v1618, 4
        %v1637 = vpop.permute.xlu0 %1636
        %1638 = vrot.lane.b32.xlu0 %v1619, 4
        %v1639 = vpop.permute.xlu0 %1638
        %1640 = vrot.lane.b32.xlu0 %v1620, 4
        %v1641 = vpop.permute.xlu0 %1640
        %1642 = vrot.lane.b32.xlu0 %v1621, 4
        %v1643 = vpop.permute.xlu0 %1642
        %1644 = vrot.lane.b32.xlu0 %v1622, 4
        %v1645 = vpop.permute.xlu0 %1644
        %1646 = vrot.lane.b32.xlu0 %v1623, 4
        %v1647 = vpop.permute.xlu0 %1646
        %1648 = vrot.lane.b32.xlu0 %v1624, 4
        %v1649 = vpop.permute.xlu0 %1648
        %1650 = vrot.lane.b32.xlu0 %v1625, 4
        %v1651 = vpop.permute.xlu0 %1650
        %1652 = vrot.lane.b32.xlu0 %v1626, 4
        %v1653 = vpop.permute.xlu0 %1652
        %1654 = vrot.lane.b32.xlu0 %v1627, 4
        %v1655 = vpop.permute.xlu0 %1654
        %1656 = vrot.lane.b32.xlu0 %v1628, 4
        %v1657 = vpop.permute.xlu0 %1656
        %1658 = vrot.lane.b32.xlu0 %v1629, 4
        %v1659 = vpop.permute.xlu0 %1658
        %1660 = vrot.lane.b32.xlu0 %v1630, 4
        %v1661 = vpop.permute.xlu0 %1660
        %1662 = vrot.lane.b32.xlu0 %v1631, 4
        %v1663 = vpop.permute.xlu0 %1662
        %vm1680 = vcmask 64544
        %1681 = vst.msk [vmem:[#allocation3] sm:$0xff] %vm1680, %v1633
        %1682 = vst.msk [vmem:[#allocation3 + $0x8] sm:$0xff] %vm1680, %v1635
        %1683 = vst.msk [vmem:[#allocation3 + $0x10] sm:$0xff] %vm1680, %v1637
        %1684 = vst.msk [vmem:[#allocation3 + $0x18] sm:$0xff] %vm1680, %v1639
        %1685 = vst.msk [vmem:[#allocation3 + $0x20] sm:$0xff] %vm1680, %v1641
        %1686 = vst.msk [vmem:[#allocation3 + $0x28] sm:$0xff] %vm1680, %v1643
        %1687 = vst.msk [vmem:[#allocation3 + $0x30] sm:$0xff] %vm1680, %v1645
        %1688 = vst.msk [vmem:[#allocation3 + $0x38] sm:$0xff] %vm1680, %v1647
        %1689 = vst.msk [vmem:[#allocation3 + $0x40] sm:$0xff] %vm1680, %v1649
        %1690 = vst.msk [vmem:[#allocation3 + $0x48] sm:$0xff] %vm1680, %v1651
        %1691 = vst.msk [vmem:[#allocation3 + $0x50] sm:$0xff] %vm1680, %v1653
        %1692 = vst.msk [vmem:[#allocation3 + $0x58] sm:$0xff] %vm1680, %v1655
        %1693 = vst.msk [vmem:[#allocation3 + $0x60] sm:$0xff] %vm1680, %v1657
        %1694 = vst.msk [vmem:[#allocation3 + $0x68] sm:$0xff] %vm1680, %v1659
        %1695 = vst.msk [vmem:[#allocation3 + $0x70] sm:$0xff] %vm1680, %v1661
        %1696 = vst.msk [vmem:[#allocation3 + $0x78] sm:$0xff] %vm1680, %v1663
        %v1697 = vld [vmem:[#allocation2] sm:$0xe]
        %v1698 = vld [vmem:[#allocation2 + $0x4] sm:$0xf]
        %v1699 = vld [vmem:[#allocation2 + $0x8] sm:$0x1]
        %v1700 = vld [vmem:[#allocation2 + $0xc] sm:$0xe]
        %v1701 = vld [vmem:[#allocation2 + $0x10] sm:$0xf]
        %v1702 = vld [vmem:[#allocation2 + $0x14] sm:$0x1]
        %v1703 = vld [vmem:[#allocation2 + $0x18] sm:$0xe]
        %v1704 = vld [vmem:[#allocation2 + $0x1c] sm:$0xf]
        %v1705 = vld [vmem:[#allocation2 + $0x20] sm:$0x1]
        %v1706 = vld [vmem:[#allocation2 + $0x24] sm:$0xe]
        %v1707 = vld [vmem:[#allocation2 + $0x28] sm:$0xf]
        %v1708 = vld [vmem:[#allocation2 + $0x2c] sm:$0x1]
        %v1709 = vld [vmem:[#allocation2 + $0x30] sm:$0xe]
        %v1710 = vld [vmem:[#allocation2 + $0x34] sm:$0xf]
        %v1711 = vld [vmem:[#allocation2 + $0x38] sm:$0x1]
        %v1712 = vld [vmem:[#allocation2 + $0x3c] sm:$0xe]
        %v1713 = vld [vmem:[#allocation2 + $0x40] sm:$0xf]
        %v1714 = vld [vmem:[#allocation2 + $0x44] sm:$0x1]
        %v1715 = vld [vmem:[#allocation2 + $0x48] sm:$0xe]
        %v1716 = vld [vmem:[#allocation2 + $0x4c] sm:$0xf]
        %v1717 = vld [vmem:[#allocation2 + $0x50] sm:$0x1]
        %v1718 = vld [vmem:[#allocation2 + $0x54] sm:$0xe]
        %v1719 = vld [vmem:[#allocation2 + $0x58] sm:$0xf]
        %v1720 = vld [vmem:[#allocation2 + $0x5c] sm:$0x1]
        %v1721 = vld [vmem:[#allocation2 + $0x60] sm:$0xe]
        %v1722 = vld [vmem:[#allocation2 + $0x64] sm:$0xf]
        %v1723 = vld [vmem:[#allocation2 + $0x68] sm:$0x1]
        %v1724 = vld [vmem:[#allocation2 + $0x6c] sm:$0xe]
        %v1725 = vld [vmem:[#allocation2 + $0x70] sm:$0xf]
        %v1726 = vld [vmem:[#allocation2 + $0x74] sm:$0x1]
        %v1727 = vld [vmem:[#allocation2 + $0x78] sm:$0xe]
        %v1728 = vld [vmem:[#allocation2 + $0x7c] sm:$0xf]
        %v1729 = vld [vmem:[#allocation2 + $0x80] sm:$0x1]
        %v1730 = vld [vmem:[#allocation2 + $0x84] sm:$0xe]
        %v1731 = vld [vmem:[#allocation2 + $0x88] sm:$0xf]
        %v1732 = vld [vmem:[#allocation2 + $0x8c] sm:$0x1]
        %v1733 = vld [vmem:[#allocation2 + $0x90] sm:$0xe]
        %v1734 = vld [vmem:[#allocation2 + $0x94] sm:$0xf]
        %v1735 = vld [vmem:[#allocation2 + $0x98] sm:$0x1]
        %v1736 = vld [vmem:[#allocation2 + $0x9c] sm:$0xe]
        %v1737 = vld [vmem:[#allocation2 + $0xa0] sm:$0xf]
        %v1738 = vld [vmem:[#allocation2 + $0xa4] sm:$0x1]
        %v1739 = vld [vmem:[#allocation2 + $0xa8] sm:$0xe]
        %v1740 = vld [vmem:[#allocation2 + $0xac] sm:$0xf]
        %v1741 = vld [vmem:[#allocation2 + $0xb0] sm:$0x1]
        %v1742 = vld [vmem:[#allocation2 + $0xb4] sm:$0xe]
        %v1743 = vld [vmem:[#allocation2 + $0xb8] sm:$0xf]
        %v1744 = vld [vmem:[#allocation2 + $0xbc] sm:$0x1]
        %vm1793 = vcmask 1042432
        %vm1794 = vcmask 1046532
        %vm1795 = vmor %vm1793, %vm1794
        %v1796 = vrot.slane %v1697, 5
        %v1797 = vrot.slane %v1796, 4
        %v1798 = vrot.slane %v1698, 5
        %v1799 = vsel %vm1795, %v1797, %v1798
        %v1800 = vrot.slane %v1798, 4
        %v1801 = vrot.slane %v1699, 5
        %v1802 = vsel %vm1795, %v1800, %v1801
        %v1803 = vrot.slane %v1700, 5
        %v1804 = vrot.slane %v1803, 4
        %v1805 = vrot.slane %v1701, 5
        %v1806 = vsel %vm1795, %v1804, %v1805
        %v1807 = vrot.slane %v1805, 4
        %v1808 = vrot.slane %v1702, 5
        %v1809 = vsel %vm1795, %v1807, %v1808
        %v1810 = vrot.slane %v1703, 5
        %v1811 = vrot.slane %v1810, 4
        %v1812 = vrot.slane %v1704, 5
        %v1813 = vsel %vm1795, %v1811, %v1812
        %v1814 = vrot.slane %v1812, 4
        %v1815 = vrot.slane %v1705, 5
        %v1816 = vsel %vm1795, %v1814, %v1815
        %v1817 = vrot.slane %v1706, 5
        %v1818 = vrot.slane %v1817, 4
        %v1819 = vrot.slane %v1707, 5
        %v1820 = vsel %vm1795, %v1818, %v1819
        %v1821 = vrot.slane %v1819, 4
        %v1822 = vrot.slane %v1708, 5
        %v1823 = vsel %vm1795, %v1821, %v1822
        %v1824 = vrot.slane %v1709, 5
        %v1825 = vrot.slane %v1824, 4
        %v1826 = vrot.slane %v1710, 5
        %v1827 = vsel %vm1795, %v1825, %v1826
        %v1828 = vrot.slane %v1826, 4
        %v1829 = vrot.slane %v1711, 5
        %v1830 = vsel %vm1795, %v1828, %v1829
        %v1831 = vrot.slane %v1712, 5
        %v1832 = vrot.slane %v1831, 4
        %v1833 = vrot.slane %v1713, 5
        %v1834 = vsel %vm1795, %v1832, %v1833
        %v1835 = vrot.slane %v1833, 4
        %v1836 = vrot.slane %v1714, 5
        %v1837 = vsel %vm1795, %v1835, %v1836
        %v1838 = vrot.slane %v1715, 5
        %v1839 = vrot.slane %v1838, 4
        %v1840 = vrot.slane %v1716, 5
        %v1841 = vsel %vm1795, %v1839, %v1840
        %v1842 = vrot.slane %v1840, 4
        %v1843 = vrot.slane %v1717, 5
        %v1844 = vsel %vm1795, %v1842, %v1843
        %v1845 = vrot.slane %v1718, 5
        %v1846 = vrot.slane %v1845, 4
        %v1847 = vrot.slane %v1719, 5
        %v1848 = vsel %vm1795, %v1846, %v1847
        %v1849 = vrot.slane %v1847, 4
        %v1850 = vrot.slane %v1720, 5
        %v1851 = vsel %vm1795, %v1849, %v1850
        %v1852 = vrot.slane %v1721, 5
        %v1853 = vrot.slane %v1852, 4
        %v1854 = vrot.slane %v1722, 5
        %v1855 = vsel %vm1795, %v1853, %v1854
        %v1856 = vrot.slane %v1854, 4
        %v1857 = vrot.slane %v1723, 5
        %v1858 = vsel %vm1795, %v1856, %v1857
        %v1859 = vrot.slane %v1724, 5
        %v1860 = vrot.slane %v1859, 4
        %v1861 = vrot.slane %v1725, 5
        %v1862 = vsel %vm1795, %v1860, %v1861
        %v1863 = vrot.slane %v1861, 4
        %v1864 = vrot.slane %v1726, 5
        %v1865 = vsel %vm1795, %v1863, %v1864
        %v1866 = vrot.slane %v1727, 5
        %v1867 = vrot.slane %v1866, 4
        %v1868 = vrot.slane %v1728, 5
        %v1869 = vsel %vm1795, %v1867, %v1868
        %v1870 = vrot.slane %v1868, 4
        %v1871 = vrot.slane %v1729, 5
        %v1872 = vsel %vm1795, %v1870, %v1871
        %v1873 = vrot.slane %v1730, 5
        %v1874 = vrot.slane %v1873, 4
        %v1875 = vrot.slane %v1731, 5
        %v1876 = vsel %vm1795, %v1874, %v1875
        %v1877 = vrot.slane %v1875, 4
        %v1878 = vrot.slane %v1732, 5
        %v1879 = vsel %vm1795, %v1877, %v1878
        %v1880 = vrot.slane %v1733, 5
        %v1881 = vrot.slane %v1880, 4
        %v1882 = vrot.slane %v1734, 5
        %v1883 = vsel %vm1795, %v1881, %v1882
        %v1884 = vrot.slane %v1882, 4
        %v1885 = vrot.slane %v1735, 5
        %v1886 = vsel %vm1795, %v1884, %v1885
        %v1887 = vrot.slane %v1736, 5
        %v1888 = vrot.slane %v1887, 4
        %v1889 = vrot.slane %v1737, 5
        %v1890 = vsel %vm1795, %v1888, %v1889
        %v1891 = vrot.slane %v1889, 4
        %v1892 = vrot.slane %v1738, 5
        %v1893 = vsel %vm1795, %v1891, %v1892
        %v1894 = vrot.slane %v1739, 5
        %v1895 = vrot.slane %v1894, 4
        %v1896 = vrot.slane %v1740, 5
        %v1897 = vsel %vm1795, %v1895, %v1896
        %v1898 = vrot.slane %v1896, 4
        %v1899 = vrot.slane %v1741, 5
        %v1900 = vsel %vm1795, %v1898, %v1899
        %v1901 = vrot.slane %v1742, 5
        %v1902 = vrot.slane %v1901, 4
        %v1903 = vrot.slane %v1743, 5
        %v1904 = vsel %vm1795, %v1902, %v1903
        %v1905 = vrot.slane %v1903, 4
        %v1906 = vrot.slane %v1744, 5
        %v1907 = vsel %vm1795, %v1905, %v1906
        %v1908 = vunpack.c.l.b16 %v1799
        %v1909 = vunpack.c.l.b16 %v1802
        %v1910 = vunpack.c.l.b16 %v1806
        %v1911 = vunpack.c.l.b16 %v1809
        %v1912 = vunpack.c.l.b16 %v1813
        %v1913 = vunpack.c.l.b16 %v1816
        %v1914 = vunpack.c.l.b16 %v1820
        %v1915 = vunpack.c.l.b16 %v1823
        %v1916 = vunpack.c.l.b16 %v1827
        %v1917 = vunpack.c.l.b16 %v1830
        %v1918 = vunpack.c.l.b16 %v1834
        %v1919 = vunpack.c.l.b16 %v1837
        %v1920 = vunpack.c.l.b16 %v1841
        %v1921 = vunpack.c.l.b16 %v1844
        %v1922 = vunpack.c.l.b16 %v1848
        %v1923 = vunpack.c.l.b16 %v1851
        %v1924 = vunpack.c.l.b16 %v1855
        %v1925 = vunpack.c.l.b16 %v1858
        %v1926 = vunpack.c.l.b16 %v1862
        %v1927 = vunpack.c.l.b16 %v1865
        %v1928 = vunpack.c.l.b16 %v1869
        %v1929 = vunpack.c.l.b16 %v1872
        %v1930 = vunpack.c.l.b16 %v1876
        %v1931 = vunpack.c.l.b16 %v1879
        %v1932 = vunpack.c.l.b16 %v1883
        %v1933 = vunpack.c.l.b16 %v1886
        %v1934 = vunpack.c.l.b16 %v1890
        %v1935 = vunpack.c.l.b16 %v1893
        %v1936 = vunpack.c.l.b16 %v1897
        %v1937 = vunpack.c.l.b16 %v1900
        %v1938 = vunpack.c.l.b16 %v1904
        %v1939 = vunpack.c.l.b16 %v1907
        %v1940 = vpack.c.b16 %v1909, %v1908
        %v1941 = vpack.c.b16 %v1911, %v1910
        %v1942 = vpack.c.b16 %v1913, %v1912
        %v1943 = vpack.c.b16 %v1915, %v1914
        %v1944 = vpack.c.b16 %v1917, %v1916
        %v1945 = vpack.c.b16 %v1919, %v1918
        %v1946 = vpack.c.b16 %v1921, %v1920
        %v1947 = vpack.c.b16 %v1923, %v1922
        %v1948 = vpack.c.b16 %v1925, %v1924
        %v1949 = vpack.c.b16 %v1927, %v1926
        %v1950 = vpack.c.b16 %v1929, %v1928
        %v1951 = vpack.c.b16 %v1931, %v1930
        %v1952 = vpack.c.b16 %v1933, %v1932
        %v1953 = vpack.c.b16 %v1935, %v1934
        %v1954 = vpack.c.b16 %v1937, %v1936
        %v1955 = vpack.c.b16 %v1939, %v1938
        %1956 = vrot.lane.b32.xlu0 %v1940, 8
        %v1957 = vpop.permute.xlu0 %1956
        %1958 = vrot.lane.b32.xlu0 %v1941, 8
        %v1959 = vpop.permute.xlu0 %1958
        %1960 = vrot.lane.b32.xlu0 %v1942, 8
        %v1961 = vpop.permute.xlu0 %1960
        %1962 = vrot.lane.b32.xlu0 %v1943, 8
        %v1963 = vpop.permute.xlu0 %1962
        %1964 = vrot.lane.b32.xlu0 %v1944, 8
        %v1965 = vpop.permute.xlu0 %1964
        %1966 = vrot.lane.b32.xlu0 %v1945, 8
        %v1967 = vpop.permute.xlu0 %1966
        %1968 = vrot.lane.b32.xlu0 %v1946, 8
        %v1969 = vpop.permute.xlu0 %1968
        %1970 = vrot.lane.b32.xlu0 %v1947, 8
        %v1971 = vpop.permute.xlu0 %1970
        %1972 = vrot.lane.b32.xlu0 %v1948, 8
        %v1973 = vpop.permute.xlu0 %1972
        %1974 = vrot.lane.b32.xlu0 %v1949, 8
        %v1975 = vpop.permute.xlu0 %1974
        %1976 = vrot.lane.b32.xlu0 %v1950, 8
        %v1977 = vpop.permute.xlu0 %1976
        %1978 = vrot.lane.b32.xlu0 %v1951, 8
        %v1979 = vpop.permute.xlu0 %1978
        %1980 = vrot.lane.b32.xlu0 %v1952, 8
        %v1981 = vpop.permute.xlu0 %1980
        %1982 = vrot.lane.b32.xlu0 %v1953, 8
        %v1983 = vpop.permute.xlu0 %1982
        %1984 = vrot.lane.b32.xlu0 %v1954, 8
        %v1985 = vpop.permute.xlu0 %1984
        %1986 = vrot.lane.b32.xlu0 %v1955, 8
        %v1987 = vpop.permute.xlu0 %1986
        %vm2004 = vcmask 97344
        %2005 = vst.msk [vmem:[#allocation3] sm:$0xff] %vm2004, %v1957
        %2006 = vst.msk [vmem:[#allocation3 + $0x8] sm:$0xff] %vm2004, %v1959
        %2007 = vst.msk [vmem:[#allocation3 + $0x10] sm:$0xff] %vm2004, %v1961
        %2008 = vst.msk [vmem:[#allocation3 + $0x18] sm:$0xff] %vm2004, %v1963
        %2009 = vst.msk [vmem:[#allocation3 + $0x20] sm:$0xff] %vm2004, %v1965
        %2010 = vst.msk [vmem:[#allocation3 + $0x28] sm:$0xff] %vm2004, %v1967
        %2011 = vst.msk [vmem:[#allocation3 + $0x30] sm:$0xff] %vm2004, %v1969
        %2012 = vst.msk [vmem:[#allocation3 + $0x38] sm:$0xff] %vm2004, %v1971
        %2013 = vst.msk [vmem:[#allocation3 + $0x40] sm:$0xff] %vm2004, %v1973
        %2014 = vst.msk [vmem:[#allocation3 + $0x48] sm:$0xff] %vm2004, %v1975
        %2015 = vst.msk [vmem:[#allocation3 + $0x50] sm:$0xff] %vm2004, %v1977
        %2016 = vst.msk [vmem:[#allocation3 + $0x58] sm:$0xff] %vm2004, %v1979
        %2017 = vst.msk [vmem:[#allocation3 + $0x60] sm:$0xff] %vm2004, %v1981
        %2018 = vst.msk [vmem:[#allocation3 + $0x68] sm:$0xff] %vm2004, %v1983
        %2019 = vst.msk [vmem:[#allocation3 + $0x70] sm:$0xff] %vm2004, %v1985
        %2020 = vst.msk [vmem:[#allocation3 + $0x78] sm:$0xff] %vm2004, %v1987
        %v2021 = vld [vmem:[%s885] sm:$0xf]
        %v2022 = vld [vmem:[%s885 + $0x4] sm:$0xf]
        %v2023 = vld [vmem:[%s885 + $0xc] sm:$0xf]
        %v2024 = vld [vmem:[%s885 + $0x10] sm:$0xf]
        %v2025 = vld [vmem:[%s885 + $0x18] sm:$0xf]
        %v2026 = vld [vmem:[%s885 + $0x1c] sm:$0xf]
        %v2027 = vld [vmem:[%s885 + $0x24] sm:$0xf]
        %v2028 = vld [vmem:[%s885 + $0x28] sm:$0xf]
        %v2029 = vld [vmem:[%s885 + $0x30] sm:$0xf]
        %v2030 = vld [vmem:[%s885 + $0x34] sm:$0xf]
        %v2031 = vld [vmem:[%s885 + $0x3c] sm:$0xf]
        %v2032 = vld [vmem:[%s885 + $0x40] sm:$0xf]
        %v2033 = vld [vmem:[%s885 + $0x48] sm:$0xf]
        %v2034 = vld [vmem:[%s885 + $0x4c] sm:$0xf]
        %v2035 = vld [vmem:[%s885 + $0x54] sm:$0xf]
        %v2036 = vld [vmem:[%s885 + $0x58] sm:$0xf]
        %v2037 = vld [vmem:[%s885 + $0x60] sm:$0xf]
        %v2038 = vld [vmem:[%s885 + $0x64] sm:$0xf]
        %v2039 = vld [vmem:[%s885 + $0x6c] sm:$0xf]
        %v2040 = vld [vmem:[%s885 + $0x70] sm:$0xf]
        %v2041 = vld [vmem:[%s885 + $0x78] sm:$0xf]
        %v2042 = vld [vmem:[%s885 + $0x7c] sm:$0xf]
        %v2043 = vld [vmem:[%s885 + $0x84] sm:$0xf]
        %v2044 = vld [vmem:[%s885 + $0x88] sm:$0xf]
        %v2045 = vld [vmem:[%s885 + $0x90] sm:$0xf]
        %v2046 = vld [vmem:[%s885 + $0x94] sm:$0xf]
        %v2047 = vld [vmem:[%s885 + $0x9c] sm:$0xf]
        %v2048 = vld [vmem:[%s885 + $0xa0] sm:$0xf]
        %v2049 = vld [vmem:[%s885 + $0xa8] sm:$0xf]
        %v2050 = vld [vmem:[%s885 + $0xac] sm:$0xf]
        %v2051 = vld [vmem:[%s885 + $0xb4] sm:$0xf]
        %v2052 = vld [vmem:[%s885 + $0xb8] sm:$0xf]
        %v2085 = vunpack.c.l.b16 %v2021
        %v2086 = vunpack.c.l.b16 %v2022
        %v2087 = vunpack.c.l.b16 %v2023
        %v2088 = vunpack.c.l.b16 %v2024
        %v2089 = vunpack.c.l.b16 %v2025
        %v2090 = vunpack.c.l.b16 %v2026
        %v2091 = vunpack.c.l.b16 %v2027
        %v2092 = vunpack.c.l.b16 %v2028
        %v2093 = vunpack.c.l.b16 %v2029
        %v2094 = vunpack.c.l.b16 %v2030
        %v2095 = vunpack.c.l.b16 %v2031
        %v2096 = vunpack.c.l.b16 %v2032
        %v2097 = vunpack.c.l.b16 %v2033
        %v2098 = vunpack.c.l.b16 %v2034
        %v2099 = vunpack.c.l.b16 %v2035
        %v2100 = vunpack.c.l.b16 %v2036
        %v2101 = vunpack.c.l.b16 %v2037
        %v2102 = vunpack.c.l.b16 %v2038
        %v2103 = vunpack.c.l.b16 %v2039
        %v2104 = vunpack.c.l.b16 %v2040
        %v2105 = vunpack.c.l.b16 %v2041
        %v2106 = vunpack.c.l.b16 %v2042
        %v2107 = vunpack.c.l.b16 %v2043
        %v2108 = vunpack.c.l.b16 %v2044
        %v2109 = vunpack.c.l.b16 %v2045
        %v2110 = vunpack.c.l.b16 %v2046
        %v2111 = vunpack.c.l.b16 %v2047
        %v2112 = vunpack.c.l.b16 %v2048
        %v2113 = vunpack.c.l.b16 %v2049
        %v2114 = vunpack.c.l.b16 %v2050
        %v2115 = vunpack.c.l.b16 %v2051
        %v2116 = vunpack.c.l.b16 %v2052
        %v2117 = vpack.c.b16 %v2086, %v2085
        %v2118 = vpack.c.b16 %v2088, %v2087
        %v2119 = vpack.c.b16 %v2090, %v2089
        %v2120 = vpack.c.b16 %v2092, %v2091
        %v2121 = vpack.c.b16 %v2094, %v2093
        %v2122 = vpack.c.b16 %v2096, %v2095
        %v2123 = vpack.c.b16 %v2098, %v2097
        %v2124 = vpack.c.b16 %v2100, %v2099
        %v2125 = vpack.c.b16 %v2102, %v2101
        %v2126 = vpack.c.b16 %v2104, %v2103
        %v2127 = vpack.c.b16 %v2106, %v2105
        %v2128 = vpack.c.b16 %v2108, %v2107
        %v2129 = vpack.c.b16 %v2110, %v2109
        %v2130 = vpack.c.b16 %v2112, %v2111
        %v2131 = vpack.c.b16 %v2114, %v2113
        %v2132 = vpack.c.b16 %v2116, %v2115
        %2133 = vrot.lane.b32.xlu0 %v2117, 12
        %v2134 = vpop.permute.xlu0 %2133
        %2135 = vrot.lane.b32.xlu0 %v2118, 12
        %v2136 = vpop.permute.xlu0 %2135
        %2137 = vrot.lane.b32.xlu0 %v2119, 12
        %v2138 = vpop.permute.xlu0 %2137
        %2139 = vrot.lane.b32.xlu0 %v2120, 12
        %v2140 = vpop.permute.xlu0 %2139
        %2141 = vrot.lane.b32.xlu0 %v2121, 12
        %v2142 = vpop.permute.xlu0 %2141
        %2143 = vrot.lane.b32.xlu0 %v2122, 12
        %v2144 = vpop.permute.xlu0 %2143
        %2145 = vrot.lane.b32.xlu0 %v2123, 12
        %v2146 = vpop.permute.xlu0 %2145
        %2147 = vrot.lane.b32.xlu0 %v2124, 12
        %v2148 = vpop.permute.xlu0 %2147
        %2149 = vrot.lane.b32.xlu0 %v2125, 12
        %v2150 = vpop.permute.xlu0 %2149
        %2151 = vrot.lane.b32.xlu0 %v2126, 12
        %v2152 = vpop.permute.xlu0 %2151
        %2153 = vrot.lane.b32.xlu0 %v2127, 12
        %v2154 = vpop.permute.xlu0 %2153
        %2155 = vrot.lane.b32.xlu0 %v2128, 12
        %v2156 = vpop.permute.xlu0 %2155
        %2157 = vrot.lane.b32.xlu0 %v2129, 12
        %v2158 = vpop.permute.xlu0 %2157
        %2159 = vrot.lane.b32.xlu0 %v2130, 12
        %v2160 = vpop.permute.xlu0 %2159
        %2161 = vrot.lane.b32.xlu0 %v2131, 12
        %v2162 = vpop.permute.xlu0 %2161
        %2163 = vrot.lane.b32.xlu0 %v2132, 12
        %v2164 = vpop.permute.xlu0 %2163
        %vm2181 = vcmask 130144
        %2182 = vst.msk [vmem:[#allocation3] sm:$0xff] %vm2181, %v2134
        %2183 = vst.msk [vmem:[#allocation3 + $0x8] sm:$0xff] %vm2181, %v2136
        %2184 = vst.msk [vmem:[#allocation3 + $0x10] sm:$0xff] %vm2181, %v2138
        %2185 = vst.msk [vmem:[#allocation3 + $0x18] sm:$0xff] %vm2181, %v2140
        %2186 = vst.msk [vmem:[#allocation3 + $0x20] sm:$0xff] %vm2181, %v2142
        %2187 = vst.msk [vmem:[#allocation3 + $0x28] sm:$0xff] %vm2181, %v2144
        %2188 = vst.msk [vmem:[#allocation3 + $0x30] sm:$0xff] %vm2181, %v2146
        %2189 = vst.msk [vmem:[#allocation3 + $0x38] sm:$0xff] %vm2181, %v2148
        %2190 = vst.msk [vmem:[#allocation3 + $0x40] sm:$0xff] %vm2181, %v2150
        %2191 = vst.msk [vmem:[#allocation3 + $0x48] sm:$0xff] %vm2181, %v2152
        %2192 = vst.msk [vmem:[#allocation3 + $0x50] sm:$0xff] %vm2181, %v2154
        %2193 = vst.msk [vmem:[#allocation3 + $0x58] sm:$0xff] %vm2181, %v2156
        %2194 = vst.msk [vmem:[#allocation3 + $0x60] sm:$0xff] %vm2181, %v2158
        %2195 = vst.msk [vmem:[#allocation3 + $0x68] sm:$0xff] %vm2181, %v2160
        %2196 = vst.msk [vmem:[#allocation3 + $0x70] sm:$0xff] %vm2181, %v2162
        %2197 = vst.msk [vmem:[#allocation3 + $0x78] sm:$0xff] %vm2181, %v2164
        %v2198 = vld [vmem:[%s885] sm:$0xf]
        %v2199 = vld [vmem:[%s885 + $0x4] sm:$0xf]
        %v2200 = vld [vmem:[%s885 + $0x8] sm:$0x1]
        %v2201 = vld [vmem:[%s885 + $0xc] sm:$0xf]
        %v2202 = vld [vmem:[%s885 + $0x10] sm:$0xf]
        %v2203 = vld [vmem:[%s885 + $0x14] sm:$0x1]
        %v2204 = vld [vmem:[%s885 + $0x18] sm:$0xf]
        %v2205 = vld [vmem:[%s885 + $0x1c] sm:$0xf]
        %v2206 = vld [vmem:[%s885 + $0x20] sm:$0x1]
        %v2207 = vld [vmem:[%s885 + $0x24] sm:$0xf]
        %v2208 = vld [vmem:[%s885 + $0x28] sm:$0xf]
        %v2209 = vld [vmem:[%s885 + $0x2c] sm:$0x1]
        %v2210 = vld [vmem:[%s885 + $0x30] sm:$0xf]
        %v2211 = vld [vmem:[%s885 + $0x34] sm:$0xf]
        %v2212 = vld [vmem:[%s885 + $0x38] sm:$0x1]
        %v2213 = vld [vmem:[%s885 + $0x3c] sm:$0xf]
        %v2214 = vld [vmem:[%s885 + $0x40] sm:$0xf]
        %v2215 = vld [vmem:[%s885 + $0x44] sm:$0x1]
        %v2216 = vld [vmem:[%s885 + $0x48] sm:$0xf]
        %v2217 = vld [vmem:[%s885 + $0x4c] sm:$0xf]
        %v2218 = vld [vmem:[%s885 + $0x50] sm:$0x1]
        %v2219 = vld [vmem:[%s885 + $0x54] sm:$0xf]
        %v2220 = vld [vmem:[%s885 + $0x58] sm:$0xf]
        %v2221 = vld [vmem:[%s885 + $0x5c] sm:$0x1]
        %v2222 = vld [vmem:[%s885 + $0x60] sm:$0xf]
        %v2223 = vld [vmem:[%s885 + $0x64] sm:$0xf]
        %v2224 = vld [vmem:[%s885 + $0x68] sm:$0x1]
        %v2225 = vld [vmem:[%s885 + $0x6c] sm:$0xf]
        %v2226 = vld [vmem:[%s885 + $0x70] sm:$0xf]
        %v2227 = vld [vmem:[%s885 + $0x74] sm:$0x1]
        %v2228 = vld [vmem:[%s885 + $0x78] sm:$0xf]
        %v2229 = vld [vmem:[%s885 + $0x7c] sm:$0xf]
        %v2230 = vld [vmem:[%s885 + $0x80] sm:$0x1]
        %v2231 = vld [vmem:[%s885 + $0x84] sm:$0xf]
        %v2232 = vld [vmem:[%s885 + $0x88] sm:$0xf]
        %v2233 = vld [vmem:[%s885 + $0x8c] sm:$0x1]
        %v2234 = vld [vmem:[%s885 + $0x90] sm:$0xf]
        %v2235 = vld [vmem:[%s885 + $0x94] sm:$0xf]
        %v2236 = vld [vmem:[%s885 + $0x98] sm:$0x1]
        %v2237 = vld [vmem:[%s885 + $0x9c] sm:$0xf]
        %v2238 = vld [vmem:[%s885 + $0xa0] sm:$0xf]
        %v2239 = vld [vmem:[%s885 + $0xa4] sm:$0x1]
        %v2240 = vld [vmem:[%s885 + $0xa8] sm:$0xf]
        %v2241 = vld [vmem:[%s885 + $0xac] sm:$0xf]
        %v2242 = vld [vmem:[%s885 + $0xb0] sm:$0x1]
        %v2243 = vld [vmem:[%s885 + $0xb4] sm:$0xf]
        %v2244 = vld [vmem:[%s885 + $0xb8] sm:$0xf]
        %v2245 = vld [vmem:[%s885 + $0xbc] sm:$0x1]
        %v2247 = vshrl.u32 %v2198, 16
        %v2249 = vrot.slane %v2247, 4
        %v2250 = vshll.u32 %v2198, 16
        %v2252 = vrot.slane %v2250, 5
        %v2253 = vor.u32 %v2249, %v2252
        %v2254 = vrot.slane %v2253, 4
        %v2256 = vshll.u32 %v2199, 16
        %v2258 = vrot.slane %v2256, 5
        %v2259 = vsel %vm1199, %v2254, %v2258
        %v2260 = vshrl.u32 %v2199, 16
        %v2262 = vrot.slane %v2260, 4
        %v2263 = vor.u32 %v2262, %v2258
        %v2264 = vrot.slane %v2263, 4
        %v2266 = vshll.u32 %v2200, 16
        %v2268 = vrot.slane %v2266, 5
        %v2269 = vsel %vm1199, %v2264, %v2268
        %v2271 = vshrl.u32 %v2201, 16
        %v2273 = vrot.slane %v2271, 4
        %v2274 = vshll.u32 %v2201, 16
        %v2276 = vrot.slane %v2274, 5
        %v2277 = vor.u32 %v2273, %v2276
        %v2278 = vrot.slane %v2277, 4
        %v2280 = vshll.u32 %v2202, 16
        %v2282 = vrot.slane %v2280, 5
        %v2283 = vsel %vm1199, %v2278, %v2282
        %v2284 = vshrl.u32 %v2202, 16
        %v2286 = vrot.slane %v2284, 4
        %v2287 = vor.u32 %v2286, %v2282
        %v2288 = vrot.slane %v2287, 4
        %v2290 = vshll.u32 %v2203, 16
        %v2292 = vrot.slane %v2290, 5
        %v2293 = vsel %vm1199, %v2288, %v2292
        %v2295 = vshrl.u32 %v2204, 16
        %v2297 = vrot.slane %v2295, 4
        %v2298 = vshll.u32 %v2204, 16
        %v2300 = vrot.slane %v2298, 5
        %v2301 = vor.u32 %v2297, %v2300
        %v2302 = vrot.slane %v2301, 4
        %v2304 = vshll.u32 %v2205, 16
        %v2306 = vrot.slane %v2304, 5
        %v2307 = vsel %vm1199, %v2302, %v2306
        %v2308 = vshrl.u32 %v2205, 16
        %v2310 = vrot.slane %v2308, 4
        %v2311 = vor.u32 %v2310, %v2306
        %v2312 = vrot.slane %v2311, 4
        %v2314 = vshll.u32 %v2206, 16
        %v2316 = vrot.slane %v2314, 5
        %v2317 = vsel %vm1199, %v2312, %v2316
        %v2319 = vshrl.u32 %v2207, 16
        %v2321 = vrot.slane %v2319, 4
        %v2322 = vshll.u32 %v2207, 16
        %v2324 = vrot.slane %v2322, 5
        %v2325 = vor.u32 %v2321, %v2324
        %v2326 = vrot.slane %v2325, 4
        %v2328 = vshll.u32 %v2208, 16
        %v2330 = vrot.slane %v2328, 5
        %v2331 = vsel %vm1199, %v2326, %v2330
        %v2332 = vshrl.u32 %v2208, 16
        %v2334 = vrot.slane %v2332, 4
        %v2335 = vor.u32 %v2334, %v2330
        %v2336 = vrot.slane %v2335, 4
        %v2338 = vshll.u32 %v2209, 16
        %v2340 = vrot.slane %v2338, 5
        %v2341 = vsel %vm1199, %v2336, %v2340
        %v2343 = vshrl.u32 %v2210, 16
        %v2345 = vrot.slane %v2343, 4
        %v2346 = vshll.u32 %v2210, 16
        %v2348 = vrot.slane %v2346, 5
        %v2349 = vor.u32 %v2345, %v2348
        %v2350 = vrot.slane %v2349, 4
        %v2352 = vshll.u32 %v2211, 16
        %v2354 = vrot.slane %v2352, 5
        %v2355 = vsel %vm1199, %v2350, %v2354
        %v2356 = vshrl.u32 %v2211, 16
        %v2358 = vrot.slane %v2356, 4
        %v2359 = vor.u32 %v2358, %v2354
        %v2360 = vrot.slane %v2359, 4
        %v2362 = vshll.u32 %v2212, 16
        %v2364 = vrot.slane %v2362, 5
        %v2365 = vsel %vm1199, %v2360, %v2364
        %v2367 = vshrl.u32 %v2213, 16
        %v2369 = vrot.slane %v2367, 4
        %v2370 = vshll.u32 %v2213, 16
        %v2372 = vrot.slane %v2370, 5
        %v2373 = vor.u32 %v2369, %v2372
        %v2374 = vrot.slane %v2373, 4
        %v2376 = vshll.u32 %v2214, 16
        %v2378 = vrot.slane %v2376, 5
        %v2379 = vsel %vm1199, %v2374, %v2378
        %v2380 = vshrl.u32 %v2214, 16
        %v2382 = vrot.slane %v2380, 4
        %v2383 = vor.u32 %v2382, %v2378
        %v2384 = vrot.slane %v2383, 4
        %v2386 = vshll.u32 %v2215, 16
        %v2388 = vrot.slane %v2386, 5
        %v2389 = vsel %vm1199, %v2384, %v2388
        %v2391 = vshrl.u32 %v2216, 16
        %v2393 = vrot.slane %v2391, 4
        %v2394 = vshll.u32 %v2216, 16
        %v2396 = vrot.slane %v2394, 5
        %v2397 = vor.u32 %v2393, %v2396
        %v2398 = vrot.slane %v2397, 4
        %v2400 = vshll.u32 %v2217, 16
        %v2402 = vrot.slane %v2400, 5
        %v2403 = vsel %vm1199, %v2398, %v2402
        %v2404 = vshrl.u32 %v2217, 16
        %v2406 = vrot.slane %v2404, 4
        %v2407 = vor.u32 %v2406, %v2402
        %v2408 = vrot.slane %v2407, 4
        %v2410 = vshll.u32 %v2218, 16
        %v2412 = vrot.slane %v2410, 5
        %v2413 = vsel %vm1199, %v2408, %v2412
        %v2415 = vshrl.u32 %v2219, 16
        %v2417 = vrot.slane %v2415, 4
        %v2418 = vshll.u32 %v2219, 16
        %v2420 = vrot.slane %v2418, 5
        %v2421 = vor.u32 %v2417, %v2420
        %v2422 = vrot.slane %v2421, 4
        %v2424 = vshll.u32 %v2220, 16
        %v2426 = vrot.slane %v2424, 5
        %v2427 = vsel %vm1199, %v2422, %v2426
        %v2428 = vshrl.u32 %v2220, 16
        %v2430 = vrot.slane %v2428, 4
        %v2431 = vor.u32 %v2430, %v2426
        %v2432 = vrot.slane %v2431, 4
        %v2434 = vshll.u32 %v2221, 16
        %v2436 = vrot.slane %v2434, 5
        %v2437 = vsel %vm1199, %v2432, %v2436
        %v2439 = vshrl.u32 %v2222, 16
        %v2441 = vrot.slane %v2439, 4
        %v2442 = vshll.u32 %v2222, 16
        %v2444 = vrot.slane %v2442, 5
        %v2445 = vor.u32 %v2441, %v2444
        %v2446 = vrot.slane %v2445, 4
        %v2448 = vshll.u32 %v2223, 16
        %v2450 = vrot.slane %v2448, 5
        %v2451 = vsel %vm1199, %v2446, %v2450
        %v2452 = vshrl.u32 %v2223, 16
        %v2454 = vrot.slane %v2452, 4
        %v2455 = vor.u32 %v2454, %v2450
        %v2456 = vrot.slane %v2455, 4
        %v2458 = vshll.u32 %v2224, 16
        %v2460 = vrot.slane %v2458, 5
        %v2461 = vsel %vm1199, %v2456, %v2460
        %v2463 = vshrl.u32 %v2225, 16
        %v2465 = vrot.slane %v2463, 4
        %v2466 = vshll.u32 %v2225, 16
        %v2468 = vrot.slane %v2466, 5
        %v2469 = vor.u32 %v2465, %v2468
        %v2470 = vrot.slane %v2469, 4
        %v2472 = vshll.u32 %v2226, 16
        %v2474 = vrot.slane %v2472, 5
        %v2475 = vsel %vm1199, %v2470, %v2474
        %v2476 = vshrl.u32 %v2226, 16
        %v2478 = vrot.slane %v2476, 4
        %v2479 = vor.u32 %v2478, %v2474
        %v2480 = vrot.slane %v2479, 4
        %v2482 = vshll.u32 %v2227, 16
        %v2484 = vrot.slane %v2482, 5
        %v2485 = vsel %vm1199, %v2480, %v2484
        %v2487 = vshrl.u32 %v2228, 16
        %v2489 = vrot.slane %v2487, 4
        %v2490 = vshll.u32 %v2228, 16
        %v2492 = vrot.slane %v2490, 5
        %v2493 = vor.u32 %v2489, %v2492
        %v2494 = vrot.slane %v2493, 4
        %v2496 = vshll.u32 %v2229, 16
        %v2498 = vrot.slane %v2496, 5
        %v2499 = vsel %vm1199, %v2494, %v2498
        %v2500 = vshrl.u32 %v2229, 16
        %v2502 = vrot.slane %v2500, 4
        %v2503 = vor.u32 %v2502, %v2498
        %v2504 = vrot.slane %v2503, 4
        %v2506 = vshll.u32 %v2230, 16
        %v2508 = vrot.slane %v2506, 5
        %v2509 = vsel %vm1199, %v2504, %v2508
        %v2511 = vshrl.u32 %v2231, 16
        %v2513 = vrot.slane %v2511, 4
        %v2514 = vshll.u32 %v2231, 16
        %v2516 = vrot.slane %v2514, 5
        %v2517 = vor.u32 %v2513, %v2516
        %v2518 = vrot.slane %v2517, 4
        %v2520 = vshll.u32 %v2232, 16
        %v2522 = vrot.slane %v2520, 5
        %v2523 = vsel %vm1199, %v2518, %v2522
        %v2524 = vshrl.u32 %v2232, 16
        %v2526 = vrot.slane %v2524, 4
        %v2527 = vor.u32 %v2526, %v2522
        %v2528 = vrot.slane %v2527, 4
        %v2530 = vshll.u32 %v2233, 16
        %v2532 = vrot.slane %v2530, 5
        %v2533 = vsel %vm1199, %v2528, %v2532
        %v2535 = vshrl.u32 %v2234, 16
        %v2537 = vrot.slane %v2535, 4
        %v2538 = vshll.u32 %v2234, 16
        %v2540 = vrot.slane %v2538, 5
        %v2541 = vor.u32 %v2537, %v2540
        %v2542 = vrot.slane %v2541, 4
        %v2544 = vshll.u32 %v2235, 16
        %v2546 = vrot.slane %v2544, 5
        %v2547 = vsel %vm1199, %v2542, %v2546
        %v2548 = vshrl.u32 %v2235, 16
        %v2550 = vrot.slane %v2548, 4
        %v2551 = vor.u32 %v2550, %v2546
        %v2552 = vrot.slane %v2551, 4
        %v2554 = vshll.u32 %v2236, 16
        %v2556 = vrot.slane %v2554, 5
        %v2557 = vsel %vm1199, %v2552, %v2556
        %v2559 = vshrl.u32 %v2237, 16
        %v2561 = vrot.slane %v2559, 4
        %v2562 = vshll.u32 %v2237, 16
        %v2564 = vrot.slane %v2562, 5
        %v2565 = vor.u32 %v2561, %v2564
        %v2566 = vrot.slane %v2565, 4
        %v2568 = vshll.u32 %v2238, 16
        %v2570 = vrot.slane %v2568, 5
        %v2571 = vsel %vm1199, %v2566, %v2570
        %v2572 = vshrl.u32 %v2238, 16
        %v2574 = vrot.slane %v2572, 4
        %v2575 = vor.u32 %v2574, %v2570
        %v2576 = vrot.slane %v2575, 4
        %v2578 = vshll.u32 %v2239, 16
        %v2580 = vrot.slane %v2578, 5
        %v2581 = vsel %vm1199, %v2576, %v2580
        %v2583 = vshrl.u32 %v2240, 16
        %v2585 = vrot.slane %v2583, 4
        %v2586 = vshll.u32 %v2240, 16
        %v2588 = vrot.slane %v2586, 5
        %v2589 = vor.u32 %v2585, %v2588
        %v2590 = vrot.slane %v2589, 4
        %v2592 = vshll.u32 %v2241, 16
        %v2594 = vrot.slane %v2592, 5
        %v2595 = vsel %vm1199, %v2590, %v2594
        %v2596 = vshrl.u32 %v2241, 16
        %v2598 = vrot.slane %v2596, 4
        %v2599 = vor.u32 %v2598, %v2594
        %v2600 = vrot.slane %v2599, 4
        %v2602 = vshll.u32 %v2242, 16
        %v2604 = vrot.slane %v2602, 5
        %v2605 = vsel %vm1199, %v2600, %v2604
        %v2607 = vshrl.u32 %v2243, 16
        %v2609 = vrot.slane %v2607, 4
        %v2610 = vshll.u32 %v2243, 16
        %v2612 = vrot.slane %v2610, 5
        %v2613 = vor.u32 %v2609, %v2612
        %v2614 = vrot.slane %v2613, 4
        %v2616 = vshll.u32 %v2244, 16
        %v2618 = vrot.slane %v2616, 5
        %v2619 = vsel %vm1199, %v2614, %v2618
        %v2620 = vshrl.u32 %v2244, 16
        %v2622 = vrot.slane %v2620, 4
        %v2623 = vor.u32 %v2622, %v2618
        %v2624 = vrot.slane %v2623, 4
        %v2626 = vshll.u32 %v2245, 16
        %v2628 = vrot.slane %v2626, 5
        %v2629 = vsel %vm1199, %v2624, %v2628
        %v2630 = vunpack.c.l.b16 %v2259
        %v2631 = vunpack.c.l.b16 %v2269
        %v2632 = vunpack.c.l.b16 %v2283
        %v2633 = vunpack.c.l.b16 %v2293
        %v2634 = vunpack.c.l.b16 %v2307
        %v2635 = vunpack.c.l.b16 %v2317
        %v2636 = vunpack.c.l.b16 %v2331
        %v2637 = vunpack.c.l.b16 %v2341
        %v2638 = vunpack.c.l.b16 %v2355
        %v2639 = vunpack.c.l.b16 %v2365
        %v2640 = vunpack.c.l.b16 %v2379
        %v2641 = vunpack.c.l.b16 %v2389
        %v2642 = vunpack.c.l.b16 %v2403
        %v2643 = vunpack.c.l.b16 %v2413
        %v2644 = vunpack.c.l.b16 %v2427
        %v2645 = vunpack.c.l.b16 %v2437
        %v2646 = vunpack.c.l.b16 %v2451
        %v2647 = vunpack.c.l.b16 %v2461
        %v2648 = vunpack.c.l.b16 %v2475
        %v2649 = vunpack.c.l.b16 %v2485
        %v2650 = vunpack.c.l.b16 %v2499
        %v2651 = vunpack.c.l.b16 %v2509
        %v2652 = vunpack.c.l.b16 %v2523
        %v2653 = vunpack.c.l.b16 %v2533
        %v2654 = vunpack.c.l.b16 %v2547
        %v2655 = vunpack.c.l.b16 %v2557
        %v2656 = vunpack.c.l.b16 %v2571
        %v2657 = vunpack.c.l.b16 %v2581
        %v2658 = vunpack.c.l.b16 %v2595
        %v2659 = vunpack.c.l.b16 %v2605
        %v2660 = vunpack.c.l.b16 %v2619
        %v2661 = vunpack.c.l.b16 %v2629
        %v2662 = vpack.c.b16 %v2631, %v2630
        %v2663 = vpack.c.b16 %v2633, %v2632
        %v2664 = vpack.c.b16 %v2635, %v2634
        %v2665 = vpack.c.b16 %v2637, %v2636
        %v2666 = vpack.c.b16 %v2639, %v2638
        %v2667 = vpack.c.b16 %v2641, %v2640
        %v2668 = vpack.c.b16 %v2643, %v2642
        %v2669 = vpack.c.b16 %v2645, %v2644
        %v2670 = vpack.c.b16 %v2647, %v2646
        %v2671 = vpack.c.b16 %v2649, %v2648
        %v2672 = vpack.c.b16 %v2651, %v2650
        %v2673 = vpack.c.b16 %v2653, %v2652
        %v2674 = vpack.c.b16 %v2655, %v2654
        %v2675 = vpack.c.b16 %v2657, %v2656
        %v2676 = vpack.c.b16 %v2659, %v2658
        %v2677 = vpack.c.b16 %v2661, %v2660
        %2678 = vrot.lane.b32.xlu0 %v2662, 16
        %v2679 = vpop.permute.xlu0 %2678
        %2680 = vrot.lane.b32.xlu0 %v2663, 16
        %v2681 = vpop.permute.xlu0 %2680
        %2682 = vrot.lane.b32.xlu0 %v2664, 16
        %v2683 = vpop.permute.xlu0 %2682
        %2684 = vrot.lane.b32.xlu0 %v2665, 16
        %v2685 = vpop.permute.xlu0 %2684
        %2686 = vrot.lane.b32.xlu0 %v2666, 16
        %v2687 = vpop.permute.xlu0 %2686
        %2688 = vrot.lane.b32.xlu0 %v2667, 16
        %v2689 = vpop.permute.xlu0 %2688
        %2690 = vrot.lane.b32.xlu0 %v2668, 16
        %v2691 = vpop.permute.xlu0 %2690
        %2692 = vrot.lane.b32.xlu0 %v2669, 16
        %v2693 = vpop.permute.xlu0 %2692
        %2694 = vrot.lane.b32.xlu0 %v2670, 16
        %v2695 = vpop.permute.xlu0 %2694
        %2696 = vrot.lane.b32.xlu0 %v2671, 16
        %v2697 = vpop.permute.xlu0 %2696
        %2698 = vrot.lane.b32.xlu0 %v2672, 16
        %v2699 = vpop.permute.xlu0 %2698
        %2700 = vrot.lane.b32.xlu0 %v2673, 16
        %v2701 = vpop.permute.xlu0 %2700
        %2702 = vrot.lane.b32.xlu0 %v2674, 16
        %v2703 = vpop.permute.xlu0 %2702
        %2704 = vrot.lane.b32.xlu0 %v2675, 16
        %v2705 = vpop.permute.xlu0 %2704
        %2706 = vrot.lane.b32.xlu0 %v2676, 16
        %v2707 = vpop.permute.xlu0 %2706
        %2708 = vrot.lane.b32.xlu0 %v2677, 16
        %v2709 = vpop.permute.xlu0 %2708
        %vm2726 = vcmask 162944
        %2727 = vst.msk [vmem:[#allocation3] sm:$0xff] %vm2726, %v2679
        %2728 = vst.msk [vmem:[#allocation3 + $0x8] sm:$0xff] %vm2726, %v2681
        %2729 = vst.msk [vmem:[#allocation3 + $0x10] sm:$0xff] %vm2726, %v2683
        %2730 = vst.msk [vmem:[#allocation3 + $0x18] sm:$0xff] %vm2726, %v2685
        %2731 = vst.msk [vmem:[#allocation3 + $0x20] sm:$0xff] %vm2726, %v2687
        %2732 = vst.msk [vmem:[#allocation3 + $0x28] sm:$0xff] %vm2726, %v2689
        %2733 = vst.msk [vmem:[#allocation3 + $0x30] sm:$0xff] %vm2726, %v2691
        %2734 = vst.msk [vmem:[#allocation3 + $0x38] sm:$0xff] %vm2726, %v2693
        %2735 = vst.msk [vmem:[#allocation3 + $0x40] sm:$0xff] %vm2726, %v2695
        %2736 = vst.msk [vmem:[#allocation3 + $0x48] sm:$0xff] %vm2726, %v2697
        %2737 = vst.msk [vmem:[#allocation3 + $0x50] sm:$0xff] %vm2726, %v2699
        %2738 = vst.msk [vmem:[#allocation3 + $0x58] sm:$0xff] %vm2726, %v2701
        %2739 = vst.msk [vmem:[#allocation3 + $0x60] sm:$0xff] %vm2726, %v2703
        %2740 = vst.msk [vmem:[#allocation3 + $0x68] sm:$0xff] %vm2726, %v2705
        %2741 = vst.msk [vmem:[#allocation3 + $0x70] sm:$0xff] %vm2726, %v2707
        %2742 = vst.msk [vmem:[#allocation3 + $0x78] sm:$0xff] %vm2726, %v2709
        %v2743 = vld [vmem:[%s885] sm:$0xe]
        %v2744 = vld [vmem:[%s885 + $0x4] sm:$0xf]
        %v2745 = vld [vmem:[%s885 + $0x8] sm:$0x1]
        %v2746 = vld [vmem:[%s885 + $0xc] sm:$0xe]
        %v2747 = vld [vmem:[%s885 + $0x10] sm:$0xf]
        %v2748 = vld [vmem:[%s885 + $0x14] sm:$0x1]
        %v2749 = vld [vmem:[%s885 + $0x18] sm:$0xe]
        %v2750 = vld [vmem:[%s885 + $0x1c] sm:$0xf]
        %v2751 = vld [vmem:[%s885 + $0x20] sm:$0x1]
        %v2752 = vld [vmem:[%s885 + $0x24] sm:$0xe]
        %v2753 = vld [vmem:[%s885 + $0x28] sm:$0xf]
        %v2754 = vld [vmem:[%s885 + $0x2c] sm:$0x1]
        %v2755 = vld [vmem:[%s885 + $0x30] sm:$0xe]
        %v2756 = vld [vmem:[%s885 + $0x34] sm:$0xf]
        %v2757 = vld [vmem:[%s885 + $0x38] sm:$0x1]
        %v2758 = vld [vmem:[%s885 + $0x3c] sm:$0xe]
        %v2759 = vld [vmem:[%s885 + $0x40] sm:$0xf]
        %v2760 = vld [vmem:[%s885 + $0x44] sm:$0x1]
        %v2761 = vld [vmem:[%s885 + $0x48] sm:$0xe]
        %v2762 = vld [vmem:[%s885 + $0x4c] sm:$0xf]
        %v2763 = vld [vmem:[%s885 + $0x50] sm:$0x1]
        %v2764 = vld [vmem:[%s885 + $0x54] sm:$0xe]
        %v2765 = vld [vmem:[%s885 + $0x58] sm:$0xf]
        %v2766 = vld [vmem:[%s885 + $0x5c] sm:$0x1]
        %v2767 = vld [vmem:[%s885 + $0x60] sm:$0xe]
        %v2768 = vld [vmem:[%s885 + $0x64] sm:$0xf]
        %v2769 = vld [vmem:[%s885 + $0x68] sm:$0x1]
        %v2770 = vld [vmem:[%s885 + $0x6c] sm:$0xe]
        %v2771 = vld [vmem:[%s885 + $0x70] sm:$0xf]
        %v2772 = vld [vmem:[%s885 + $0x74] sm:$0x1]
        %v2773 = vld [vmem:[%s885 + $0x78] sm:$0xe]
        %v2774 = vld [vmem:[%s885 + $0x7c] sm:$0xf]
        %v2775 = vld [vmem:[%s885 + $0x80] sm:$0x1]
        %v2776 = vld [vmem:[%s885 + $0x84] sm:$0xe]
        %v2777 = vld [vmem:[%s885 + $0x88] sm:$0xf]
        %v2778 = vld [vmem:[%s885 + $0x8c] sm:$0x1]
        %v2779 = vld [vmem:[%s885 + $0x90] sm:$0xe]
        %v2780 = vld [vmem:[%s885 + $0x94] sm:$0xf]
        %v2781 = vld [vmem:[%s885 + $0x98] sm:$0x1]
        %v2782 = vld [vmem:[%s885 + $0x9c] sm:$0xe]
        %v2783 = vld [vmem:[%s885 + $0xa0] sm:$0xf]
        %v2784 = vld [vmem:[%s885 + $0xa4] sm:$0x1]
        %v2785 = vld [vmem:[%s885 + $0xa8] sm:$0xe]
        %v2786 = vld [vmem:[%s885 + $0xac] sm:$0xf]
        %v2787 = vld [vmem:[%s885 + $0xb0] sm:$0x1]
        %v2788 = vld [vmem:[%s885 + $0xb4] sm:$0xe]
        %v2789 = vld [vmem:[%s885 + $0xb8] sm:$0xf]
        %v2790 = vld [vmem:[%s885 + $0xbc] sm:$0x1]
        %v2839 = vrot.slane %v2743, 5
        %v2840 = vrot.slane %v2839, 4
        %v2841 = vrot.slane %v2744, 5
        %v2842 = vsel %vm1795, %v2840, %v2841
        %v2843 = vrot.slane %v2841, 4
        %v2844 = vrot.slane %v2745, 5
        %v2845 = vsel %vm1795, %v2843, %v2844
        %v2846 = vrot.slane %v2746, 5
        %v2847 = vrot.slane %v2846, 4
        %v2848 = vrot.slane %v2747, 5
        %v2849 = vsel %vm1795, %v2847, %v2848
        %v2850 = vrot.slane %v2848, 4
        %v2851 = vrot.slane %v2748, 5
        %v2852 = vsel %vm1795, %v2850, %v2851
        %v2853 = vrot.slane %v2749, 5
        %v2854 = vrot.slane %v2853, 4
        %v2855 = vrot.slane %v2750, 5
        %v2856 = vsel %vm1795, %v2854, %v2855
        %v2857 = vrot.slane %v2855, 4
        %v2858 = vrot.slane %v2751, 5
        %v2859 = vsel %vm1795, %v2857, %v2858
        %v2860 = vrot.slane %v2752, 5
        %v2861 = vrot.slane %v2860, 4
        %v2862 = vrot.slane %v2753, 5
        %v2863 = vsel %vm1795, %v2861, %v2862
        %v2864 = vrot.slane %v2862, 4
        %v2865 = vrot.slane %v2754, 5
        %v2866 = vsel %vm1795, %v2864, %v2865
        %v2867 = vrot.slane %v2755, 5
        %v2868 = vrot.slane %v2867, 4
        %v2869 = vrot.slane %v2756, 5
        %v2870 = vsel %vm1795, %v2868, %v2869
        %v2871 = vrot.slane %v2869, 4
        %v2872 = vrot.slane %v2757, 5
        %v2873 = vsel %vm1795, %v2871, %v2872
        %v2874 = vrot.slane %v2758, 5
        %v2875 = vrot.slane %v2874, 4
        %v2876 = vrot.slane %v2759, 5
        %v2877 = vsel %vm1795, %v2875, %v2876
        %v2878 = vrot.slane %v2876, 4
        %v2879 = vrot.slane %v2760, 5
        %v2880 = vsel %vm1795, %v2878, %v2879
        %v2881 = vrot.slane %v2761, 5
        %v2882 = vrot.slane %v2881, 4
        %v2883 = vrot.slane %v2762, 5
        %v2884 = vsel %vm1795, %v2882, %v2883
        %v2885 = vrot.slane %v2883, 4
        %v2886 = vrot.slane %v2763, 5
        %v2887 = vsel %vm1795, %v2885, %v2886
        %v2888 = vrot.slane %v2764, 5
        %v2889 = vrot.slane %v2888, 4
        %v2890 = vrot.slane %v2765, 5
        %v2891 = vsel %vm1795, %v2889, %v2890
        %v2892 = vrot.slane %v2890, 4
        %v2893 = vrot.slane %v2766, 5
        %v2894 = vsel %vm1795, %v2892, %v2893
        %v2895 = vrot.slane %v2767, 5
        %v2896 = vrot.slane %v2895, 4
        %v2897 = vrot.slane %v2768, 5
        %v2898 = vsel %vm1795, %v2896, %v2897
        %v2899 = vrot.slane %v2897, 4
        %v2900 = vrot.slane %v2769, 5
        %v2901 = vsel %vm1795, %v2899, %v2900
        %v2902 = vrot.slane %v2770, 5
        %v2903 = vrot.slane %v2902, 4
        %v2904 = vrot.slane %v2771, 5
        %v2905 = vsel %vm1795, %v2903, %v2904
        %v2906 = vrot.slane %v2904, 4
        %v2907 = vrot.slane %v2772, 5
        %v2908 = vsel %vm1795, %v2906, %v2907
        %v2909 = vrot.slane %v2773, 5
        %v2910 = vrot.slane %v2909, 4
        %v2911 = vrot.slane %v2774, 5
        %v2912 = vsel %vm1795, %v2910, %v2911
        %v2913 = vrot.slane %v2911, 4
        %v2914 = vrot.slane %v2775, 5
        %v2915 = vsel %vm1795, %v2913, %v2914
        %v2916 = vrot.slane %v2776, 5
        %v2917 = vrot.slane %v2916, 4
        %v2918 = vrot.slane %v2777, 5
        %v2919 = vsel %vm1795, %v2917, %v2918
        %v2920 = vrot.slane %v2918, 4
        %v2921 = vrot.slane %v2778, 5
        %v2922 = vsel %vm1795, %v2920, %v2921
        %v2923 = vrot.slane %v2779, 5
        %v2924 = vrot.slane %v2923, 4
        %v2925 = vrot.slane %v2780, 5
        %v2926 = vsel %vm1795, %v2924, %v2925
        %v2927 = vrot.slane %v2925, 4
        %v2928 = vrot.slane %v2781, 5
        %v2929 = vsel %vm1795, %v2927, %v2928
        %v2930 = vrot.slane %v2782, 5
        %v2931 = vrot.slane %v2930, 4
        %v2932 = vrot.slane %v2783, 5
        %v2933 = vsel %vm1795, %v2931, %v2932
        %v2934 = vrot.slane %v2932, 4
        %v2935 = vrot.slane %v2784, 5
        %v2936 = vsel %vm1795, %v2934, %v2935
        %v2937 = vrot.slane %v2785, 5
        %v2938 = vrot.slane %v2937, 4
        %v2939 = vrot.slane %v2786, 5
        %v2940 = vsel %vm1795, %v2938, %v2939
        %v2941 = vrot.slane %v2939, 4
        %v2942 = vrot.slane %v2787, 5
        %v2943 = vsel %vm1795, %v2941, %v2942
        %v2944 = vrot.slane %v2788, 5
        %v2945 = vrot.slane %v2944, 4
        %v2946 = vrot.slane %v2789, 5
        %v2947 = vsel %vm1795, %v2945, %v2946
        %v2948 = vrot.slane %v2946, 4
        %v2949 = vrot.slane %v2790, 5
        %v2950 = vsel %vm1795, %v2948, %v2949
        %v2951 = vunpack.c.l.b16 %v2842
        %v2952 = vunpack.c.l.b16 %v2845
        %v2953 = vunpack.c.l.b16 %v2849
        %v2954 = vunpack.c.l.b16 %v2852
        %v2955 = vunpack.c.l.b16 %v2856
        %v2956 = vunpack.c.l.b16 %v2859
        %v2957 = vunpack.c.l.b16 %v2863
        %v2958 = vunpack.c.l.b16 %v2866
        %v2959 = vunpack.c.l.b16 %v2870
        %v2960 = vunpack.c.l.b16 %v2873
        %v2961 = vunpack.c.l.b16 %v2877
        %v2962 = vunpack.c.l.b16 %v2880
        %v2963 = vunpack.c.l.b16 %v2884
        %v2964 = vunpack.c.l.b16 %v2887
        %v2965 = vunpack.c.l.b16 %v2891
        %v2966 = vunpack.c.l.b16 %v2894
        %v2967 = vunpack.c.l.b16 %v2898
        %v2968 = vunpack.c.l.b16 %v2901
        %v2969 = vunpack.c.l.b16 %v2905
        %v2970 = vunpack.c.l.b16 %v2908
        %v2971 = vunpack.c.l.b16 %v2912
        %v2972 = vunpack.c.l.b16 %v2915
        %v2973 = vunpack.c.l.b16 %v2919
        %v2974 = vunpack.c.l.b16 %v2922
        %v2975 = vunpack.c.l.b16 %v2926
        %v2976 = vunpack.c.l.b16 %v2929
        %v2977 = vunpack.c.l.b16 %v2933
        %v2978 = vunpack.c.l.b16 %v2936
        %v2979 = vunpack.c.l.b16 %v2940
        %v2980 = vunpack.c.l.b16 %v2943
        %v2981 = vunpack.c.l.b16 %v2947
        %v2982 = vunpack.c.l.b16 %v2950
        %v2983 = vpack.c.b16 %v2952, %v2951
        %v2984 = vpack.c.b16 %v2954, %v2953
        %v2985 = vpack.c.b16 %v2956, %v2955
        %v2986 = vpack.c.b16 %v2958, %v2957
        %v2987 = vpack.c.b16 %v2960, %v2959
        %v2988 = vpack.c.b16 %v2962, %v2961
        %v2989 = vpack.c.b16 %v2964, %v2963
        %v2990 = vpack.c.b16 %v2966, %v2965
        %v2991 = vpack.c.b16 %v2968, %v2967
        %v2992 = vpack.c.b16 %v2970, %v2969
        %v2993 = vpack.c.b16 %v2972, %v2971
        %v2994 = vpack.c.b16 %v2974, %v2973
        %v2995 = vpack.c.b16 %v2976, %v2975
        %v2996 = vpack.c.b16 %v2978, %v2977
        %v2997 = vpack.c.b16 %v2980, %v2979
        %v2998 = vpack.c.b16 %v2982, %v2981
        %2999 = vrot.lane.b32.xlu0 %v2983, 20
        %v3000 = vpop.permute.xlu0 %2999
        %3001 = vrot.lane.b32.xlu0 %v2984, 20
        %v3002 = vpop.permute.xlu0 %3001
        %3003 = vrot.lane.b32.xlu0 %v2985, 20
        %v3004 = vpop.permute.xlu0 %3003
        %3005 = vrot.lane.b32.xlu0 %v2986, 20
        %v3006 = vpop.permute.xlu0 %3005
        %3007 = vrot.lane.b32.xlu0 %v2987, 20
        %v3008 = vpop.permute.xlu0 %3007
        %3009 = vrot.lane.b32.xlu0 %v2988, 20
        %v3010 = vpop.permute.xlu0 %3009
        %3011 = vrot.lane.b32.xlu0 %v2989, 20
        %v3012 = vpop.permute.xlu0 %3011
        %3013 = vrot.lane.b32.xlu0 %v2990, 20
        %v3014 = vpop.permute.xlu0 %3013
        %3015 = vrot.lane.b32.xlu0 %v2991, 20
        %v3016 = vpop.permute.xlu0 %3015
        %3017 = vrot.lane.b32.xlu0 %v2992, 20
        %v3018 = vpop.permute.xlu0 %3017
        %3019 = vrot.lane.b32.xlu0 %v2993, 20
        %v3020 = vpop.permute.xlu0 %3019
        %3021 = vrot.lane.b32.xlu0 %v2994, 20
        %v3022 = vpop.permute.xlu0 %3021
        %3023 = vrot.lane.b32.xlu0 %v2995, 20
        %v3024 = vpop.permute.xlu0 %3023
        %3025 = vrot.lane.b32.xlu0 %v2996, 20
        %v3026 = vpop.permute.xlu0 %3025
        %3027 = vrot.lane.b32.xlu0 %v2997, 20
        %v3028 = vpop.permute.xlu0 %3027
        %3029 = vrot.lane.b32.xlu0 %v2998, 20
        %v3030 = vpop.permute.xlu0 %3029
        %vm3047 = vcmask 195744
        %3048 = vst.msk [vmem:[#allocation3] sm:$0xff] %vm3047, %v3000
        %3049 = vst.msk [vmem:[#allocation3 + $0x8] sm:$0xff] %vm3047, %v3002
        %3050 = vst.msk [vmem:[#allocation3 + $0x10] sm:$0xff] %vm3047, %v3004
        %3051 = vst.msk [vmem:[#allocation3 + $0x18] sm:$0xff] %vm3047, %v3006
        %3052 = vst.msk [vmem:[#allocation3 + $0x20] sm:$0xff] %vm3047, %v3008
        %3053 = vst.msk [vmem:[#allocation3 + $0x28] sm:$0xff] %vm3047, %v3010
        %3054 = vst.msk [vmem:[#allocation3 + $0x30] sm:$0xff] %vm3047, %v3012
        %3055 = vst.msk [vmem:[#allocation3 + $0x38] sm:$0xff] %vm3047, %v3014
        %3056 = vst.msk [vmem:[#allocation3 + $0x40] sm:$0xff] %vm3047, %v3016
        %3057 = vst.msk [vmem:[#allocation3 + $0x48] sm:$0xff] %vm3047, %v3018
        %3058 = vst.msk [vmem:[#allocation3 + $0x50] sm:$0xff] %vm3047, %v3020
        %3059 = vst.msk [vmem:[#allocation3 + $0x58] sm:$0xff] %vm3047, %v3022
        %3060 = vst.msk [vmem:[#allocation3 + $0x60] sm:$0xff] %vm3047, %v3024
        %3061 = vst.msk [vmem:[#allocation3 + $0x68] sm:$0xff] %vm3047, %v3026
        %3062 = vst.msk [vmem:[#allocation3 + $0x70] sm:$0xff] %vm3047, %v3028
        %3063 = vst.msk [vmem:[#allocation3 + $0x78] sm:$0xff] %vm3047, %v3030
        %s3064 = scalar_lea.vmem [#allocation2], 24
        %v3065 = vld [vmem:[%s3064] sm:$0xf]
        %v3066 = vld [vmem:[%s3064 + $0x4] sm:$0xf]
        %v3067 = vld [vmem:[%s3064 + $0xc] sm:$0xf]
        %v3068 = vld [vmem:[%s3064 + $0x10] sm:$0xf]
        %v3069 = vld [vmem:[%s3064 + $0x18] sm:$0xf]
        %v3070 = vld [vmem:[%s3064 + $0x1c] sm:$0xf]
        %v3071 = vld [vmem:[%s3064 + $0x24] sm:$0xf]
        %v3072 = vld [vmem:[%s3064 + $0x28] sm:$0xf]
        %v3073 = vld [vmem:[%s3064 + $0x30] sm:$0xf]
        %v3074 = vld [vmem:[%s3064 + $0x34] sm:$0xf]
        %v3075 = vld [vmem:[%s3064 + $0x3c] sm:$0xf]
        %v3076 = vld [vmem:[%s3064 + $0x40] sm:$0xf]
        %v3077 = vld [vmem:[%s3064 + $0x48] sm:$0xf]
        %v3078 = vld [vmem:[%s3064 + $0x4c] sm:$0xf]
        %v3079 = vld [vmem:[%s3064 + $0x54] sm:$0xf]
        %v3080 = vld [vmem:[%s3064 + $0x58] sm:$0xf]
        %v3081 = vld [vmem:[%s3064 + $0x60] sm:$0xf]
        %v3082 = vld [vmem:[%s3064 + $0x64] sm:$0xf]
        %v3083 = vld [vmem:[%s3064 + $0x6c] sm:$0xf]
        %v3084 = vld [vmem:[%s3064 + $0x70] sm:$0xf]
        %v3085 = vld [vmem:[%s3064 + $0x78] sm:$0xf]
        %v3086 = vld [vmem:[%s3064 + $0x7c] sm:$0xf]
        %v3087 = vld [vmem:[%s3064 + $0x84] sm:$0xf]
        %v3088 = vld [vmem:[%s3064 + $0x88] sm:$0xf]
        %v3089 = vld [vmem:[%s3064 + $0x90] sm:$0xf]
        %v3090 = vld [vmem:[%s3064 + $0x94] sm:$0xf]
        %v3091 = vld [vmem:[%s3064 + $0x9c] sm:$0xf]
        %v3092 = vld [vmem:[%s3064 + $0xa0] sm:$0xf]
        %v3093 = vld [vmem:[%s3064 + $0xa8] sm:$0xf]
        %v3094 = vld [vmem:[%s3064 + $0xac] sm:$0xf]
        %v3095 = vld [vmem:[%s3064 + $0xb4] sm:$0xf]
        %v3096 = vld [vmem:[%s3064 + $0xb8] sm:$0xf]
        %v3129 = vunpack.c.l.b16 %v3065
        %v3130 = vunpack.c.l.b16 %v3066
        %v3131 = vunpack.c.l.b16 %v3067
        %v3132 = vunpack.c.l.b16 %v3068
        %v3133 = vunpack.c.l.b16 %v3069
        %v3134 = vunpack.c.l.b16 %v3070
        %v3135 = vunpack.c.l.b16 %v3071
        %v3136 = vunpack.c.l.b16 %v3072
        %v3137 = vunpack.c.l.b16 %v3073
        %v3138 = vunpack.c.l.b16 %v3074
        %v3139 = vunpack.c.l.b16 %v3075
        %v3140 = vunpack.c.l.b16 %v3076
        %v3141 = vunpack.c.l.b16 %v3077
        %v3142 = vunpack.c.l.b16 %v3078
        %v3143 = vunpack.c.l.b16 %v3079
        %v3144 = vunpack.c.l.b16 %v3080
        %v3145 = vunpack.c.l.b16 %v3081
        %v3146 = vunpack.c.l.b16 %v3082
        %v3147 = vunpack.c.l.b16 %v3083
        %v3148 = vunpack.c.l.b16 %v3084
        %v3149 = vunpack.c.l.b16 %v3085
        %v3150 = vunpack.c.l.b16 %v3086
        %v3151 = vunpack.c.l.b16 %v3087
        %v3152 = vunpack.c.l.b16 %v3088
        %v3153 = vunpack.c.l.b16 %v3089
        %v3154 = vunpack.c.l.b16 %v3090
        %v3155 = vunpack.c.l.b16 %v3091
        %v3156 = vunpack.c.l.b16 %v3092
        %v3157 = vunpack.c.l.b16 %v3093
        %v3158 = vunpack.c.l.b16 %v3094
        %v3159 = vunpack.c.l.b16 %v3095
        %v3160 = vunpack.c.l.b16 %v3096
        %v3161 = vpack.c.b16 %v3130, %v3129
        %v3162 = vpack.c.b16 %v3132, %v3131
        %v3163 = vpack.c.b16 %v3134, %v3133
        %v3164 = vpack.c.b16 %v3136, %v3135
        %v3165 = vpack.c.b16 %v3138, %v3137
        %v3166 = vpack.c.b16 %v3140, %v3139
        %v3167 = vpack.c.b16 %v3142, %v3141
        %v3168 = vpack.c.b16 %v3144, %v3143
        %v3169 = vpack.c.b16 %v3146, %v3145
        %v3170 = vpack.c.b16 %v3148, %v3147
        %v3171 = vpack.c.b16 %v3150, %v3149
        %v3172 = vpack.c.b16 %v3152, %v3151
        %v3173 = vpack.c.b16 %v3154, %v3153
        %v3174 = vpack.c.b16 %v3156, %v3155
        %v3175 = vpack.c.b16 %v3158, %v3157
        %v3176 = vpack.c.b16 %v3160, %v3159
        %3177 = vrot.lane.b32.xlu0 %v3161, 24
        %v3178 = vpop.permute.xlu0 %3177
        %3179 = vrot.lane.b32.xlu0 %v3162, 24
        %v3180 = vpop.permute.xlu0 %3179
        %3181 = vrot.lane.b32.xlu0 %v3163, 24
        %v3182 = vpop.permute.xlu0 %3181
        %3183 = vrot.lane.b32.xlu0 %v3164, 24
        %v3184 = vpop.permute.xlu0 %3183
        %3185 = vrot.lane.b32.xlu0 %v3165, 24
        %v3186 = vpop.permute.xlu0 %3185
        %3187 = vrot.lane.b32.xlu0 %v3166, 24
        %v3188 = vpop.permute.xlu0 %3187
        %3189 = vrot.lane.b32.xlu0 %v3167, 24
        %v3190 = vpop.permute.xlu0 %3189
        %3191 = vrot.lane.b32.xlu0 %v3168, 24
        %v3192 = vpop.permute.xlu0 %3191
        %3193 = vrot.lane.b32.xlu0 %v3169, 24
        %v3194 = vpop.permute.xlu0 %3193
        %3195 = vrot.lane.b32.xlu0 %v3170, 24
        %v3196 = vpop.permute.xlu0 %3195
        %3197 = vrot.lane.b32.xlu0 %v3171, 24
        %v3198 = vpop.permute.xlu0 %3197
        %3199 = vrot.lane.b32.xlu0 %v3172, 24
        %v3200 = vpop.permute.xlu0 %3199
        %3201 = vrot.lane.b32.xlu0 %v3173, 24
        %v3202 = vpop.permute.xlu0 %3201
        %3203 = vrot.lane.b32.xlu0 %v3174, 24
        %v3204 = vpop.permute.xlu0 %3203
        %3205 = vrot.lane.b32.xlu0 %v3175, 24
        %v3206 = vpop.permute.xlu0 %3205
        %3207 = vrot.lane.b32.xlu0 %v3176, 24
        %v3208 = vpop.permute.xlu0 %3207
        %vm3225 = vcmask 228544
        %3226 = vst.msk [vmem:[#allocation3] sm:$0xff] %vm3225, %v3178
        %3227 = vst.msk [vmem:[#allocation3 + $0x8] sm:$0xff] %vm3225, %v3180
        %3228 = vst.msk [vmem:[#allocation3 + $0x10] sm:$0xff] %vm3225, %v3182
        %3229 = vst.msk [vmem:[#allocation3 + $0x18] sm:$0xff] %vm3225, %v3184
        %3230 = vst.msk [vmem:[#allocation3 + $0x20] sm:$0xff] %vm3225, %v3186
        %3231 = vst.msk [vmem:[#allocation3 + $0x28] sm:$0xff] %vm3225, %v3188
        %3232 = vst.msk [vmem:[#allocation3 + $0x30] sm:$0xff] %vm3225, %v3190
        %3233 = vst.msk [vmem:[#allocation3 + $0x38] sm:$0xff] %vm3225, %v3192
        %3234 = vst.msk [vmem:[#allocation3 + $0x40] sm:$0xff] %vm3225, %v3194
        %3235 = vst.msk [vmem:[#allocation3 + $0x48] sm:$0xff] %vm3225, %v3196
        %3236 = vst.msk [vmem:[#allocation3 + $0x50] sm:$0xff] %vm3225, %v3198
        %3237 = vst.msk [vmem:[#allocation3 + $0x58] sm:$0xff] %vm3225, %v3200
        %3238 = vst.msk [vmem:[#allocation3 + $0x60] sm:$0xff] %vm3225, %v3202
        %3239 = vst.msk [vmem:[#allocation3 + $0x68] sm:$0xff] %vm3225, %v3204
        %3240 = vst.msk [vmem:[#allocation3 + $0x70] sm:$0xff] %vm3225, %v3206
        %3241 = vst.msk [vmem:[#allocation3 + $0x78] sm:$0xff] %vm3225, %v3208
        %v3242 = vld [vmem:[%s3064] sm:$0xf]
        %v3243 = vld [vmem:[%s3064 + $0x4] sm:$0xf]
        %v3244 = vld [vmem:[%s3064 + $0x8] sm:$0x1]
        %v3245 = vld [vmem:[%s3064 + $0xc] sm:$0xf]
        %v3246 = vld [vmem:[%s3064 + $0x10] sm:$0xf]
        %v3247 = vld [vmem:[%s3064 + $0x14] sm:$0x1]
        %v3248 = vld [vmem:[%s3064 + $0x18] sm:$0xf]
        %v3249 = vld [vmem:[%s3064 + $0x1c] sm:$0xf]
        %v3250 = vld [vmem:[%s3064 + $0x20] sm:$0x1]
        %v3251 = vld [vmem:[%s3064 + $0x24] sm:$0xf]
        %v3252 = vld [vmem:[%s3064 + $0x28] sm:$0xf]
        %v3253 = vld [vmem:[%s3064 + $0x2c] sm:$0x1]
        %v3254 = vld [vmem:[%s3064 + $0x30] sm:$0xf]
        %v3255 = vld [vmem:[%s3064 + $0x34] sm:$0xf]
        %v3256 = vld [vmem:[%s3064 + $0x38] sm:$0x1]
        %v3257 = vld [vmem:[%s3064 + $0x3c] sm:$0xf]
        %v3258 = vld [vmem:[%s3064 + $0x40] sm:$0xf]
        %v3259 = vld [vmem:[%s3064 + $0x44] sm:$0x1]
        %v3260 = vld [vmem:[%s3064 + $0x48] sm:$0xf]
        %v3261 = vld [vmem:[%s3064 + $0x4c] sm:$0xf]
        %v3262 = vld [vmem:[%s3064 + $0x50] sm:$0x1]
        %v3263 = vld [vmem:[%s3064 + $0x54] sm:$0xf]
        %v3264 = vld [vmem:[%s3064 + $0x58] sm:$0xf]
        %v3265 = vld [vmem:[%s3064 + $0x5c] sm:$0x1]
        %v3266 = vld [vmem:[%s3064 + $0x60] sm:$0xf]
        %v3267 = vld [vmem:[%s3064 + $0x64] sm:$0xf]
        %v3268 = vld [vmem:[%s3064 + $0x68] sm:$0x1]
        %v3269 = vld [vmem:[%s3064 + $0x6c] sm:$0xf]
        %v3270 = vld [vmem:[%s3064 + $0x70] sm:$0xf]
        %v3271 = vld [vmem:[%s3064 + $0x74] sm:$0x1]
        %v3272 = vld [vmem:[%s3064 + $0x78] sm:$0xf]
        %v3273 = vld [vmem:[%s3064 + $0x7c] sm:$0xf]
        %v3274 = vld [vmem:[%s3064 + $0x80] sm:$0x1]
        %v3275 = vld [vmem:[%s3064 + $0x84] sm:$0xf]
        %v3276 = vld [vmem:[%s3064 + $0x88] sm:$0xf]
        %v3277 = vld [vmem:[%s3064 + $0x8c] sm:$0x1]
        %v3278 = vld [vmem:[%s3064 + $0x90] sm:$0xf]
        %v3279 = vld [vmem:[%s3064 + $0x94] sm:$0xf]
        %v3280 = vld [vmem:[%s3064 + $0x98] sm:$0x1]
        %v3281 = vld [vmem:[%s3064 + $0x9c] sm:$0xf]
        %v3282 = vld [vmem:[%s3064 + $0xa0] sm:$0xf]
        %v3283 = vld [vmem:[%s3064 + $0xa4] sm:$0x1]
        %v3284 = vld [vmem:[%s3064 + $0xa8] sm:$0xf]
        %v3285 = vld [vmem:[%s3064 + $0xac] sm:$0xf]
        %v3286 = vld [vmem:[%s3064 + $0xb0] sm:$0x1]
        %v3287 = vld [vmem:[%s3064 + $0xb4] sm:$0xf]
        %v3288 = vld [vmem:[%s3064 + $0xb8] sm:$0xf]
        %v3289 = vld [vmem:[%s3064 + $0xbc] sm:$0x1]
        %v3291 = vshrl.u32 %v3242, 16
        %v3293 = vrot.slane %v3291, 4
        %v3294 = vshll.u32 %v3242, 16
        %v3296 = vrot.slane %v3294, 5
        %v3297 = vor.u32 %v3293, %v3296
        %v3298 = vrot.slane %v3297, 4
        %v3300 = vshll.u32 %v3243, 16
        %v3302 = vrot.slane %v3300, 5
        %v3303 = vsel %vm1199, %v3298, %v3302
        %v3304 = vshrl.u32 %v3243, 16
        %v3306 = vrot.slane %v3304, 4
        %v3307 = vor.u32 %v3306, %v3302
        %v3308 = vrot.slane %v3307, 4
        %v3310 = vshll.u32 %v3244, 16
        %v3312 = vrot.slane %v3310, 5
        %v3313 = vsel %vm1199, %v3308, %v3312
        %v3315 = vshrl.u32 %v3245, 16
        %v3317 = vrot.slane %v3315, 4
        %v3318 = vshll.u32 %v3245, 16
        %v3320 = vrot.slane %v3318, 5
        %v3321 = vor.u32 %v3317, %v3320
        %v3322 = vrot.slane %v3321, 4
        %v3324 = vshll.u32 %v3246, 16
        %v3326 = vrot.slane %v3324, 5
        %v3327 = vsel %vm1199, %v3322, %v3326
        %v3328 = vshrl.u32 %v3246, 16
        %v3330 = vrot.slane %v3328, 4
        %v3331 = vor.u32 %v3330, %v3326
        %v3332 = vrot.slane %v3331, 4
        %v3334 = vshll.u32 %v3247, 16
        %v3336 = vrot.slane %v3334, 5
        %v3337 = vsel %vm1199, %v3332, %v3336
        %v3339 = vshrl.u32 %v3248, 16
        %v3341 = vrot.slane %v3339, 4
        %v3342 = vshll.u32 %v3248, 16
        %v3344 = vrot.slane %v3342, 5
        %v3345 = vor.u32 %v3341, %v3344
        %v3346 = vrot.slane %v3345, 4
        %v3348 = vshll.u32 %v3249, 16
        %v3350 = vrot.slane %v3348, 5
        %v3351 = vsel %vm1199, %v3346, %v3350
        %v3352 = vshrl.u32 %v3249, 16
        %v3354 = vrot.slane %v3352, 4
        %v3355 = vor.u32 %v3354, %v3350
        %v3356 = vrot.slane %v3355, 4
        %v3358 = vshll.u32 %v3250, 16
        %v3360 = vrot.slane %v3358, 5
        %v3361 = vsel %vm1199, %v3356, %v3360
        %v3363 = vshrl.u32 %v3251, 16
        %v3365 = vrot.slane %v3363, 4
        %v3366 = vshll.u32 %v3251, 16
        %v3368 = vrot.slane %v3366, 5
        %v3369 = vor.u32 %v3365, %v3368
        %v3370 = vrot.slane %v3369, 4
        %v3372 = vshll.u32 %v3252, 16
        %v3374 = vrot.slane %v3372, 5
        %v3375 = vsel %vm1199, %v3370, %v3374
        %v3376 = vshrl.u32 %v3252, 16
        %v3378 = vrot.slane %v3376, 4
        %v3379 = vor.u32 %v3378, %v3374
        %v3380 = vrot.slane %v3379, 4
        %v3382 = vshll.u32 %v3253, 16
        %v3384 = vrot.slane %v3382, 5
        %v3385 = vsel %vm1199, %v3380, %v3384
        %v3387 = vshrl.u32 %v3254, 16
        %v3389 = vrot.slane %v3387, 4
        %v3390 = vshll.u32 %v3254, 16
        %v3392 = vrot.slane %v3390, 5
        %v3393 = vor.u32 %v3389, %v3392
        %v3394 = vrot.slane %v3393, 4
        %v3396 = vshll.u32 %v3255, 16
        %v3398 = vrot.slane %v3396, 5
        %v3399 = vsel %vm1199, %v3394, %v3398
        %v3400 = vshrl.u32 %v3255, 16
        %v3402 = vrot.slane %v3400, 4
        %v3403 = vor.u32 %v3402, %v3398
        %v3404 = vrot.slane %v3403, 4
        %v3406 = vshll.u32 %v3256, 16
        %v3408 = vrot.slane %v3406, 5
        %v3409 = vsel %vm1199, %v3404, %v3408
        %v3411 = vshrl.u32 %v3257, 16
        %v3413 = vrot.slane %v3411, 4
        %v3414 = vshll.u32 %v3257, 16
        %v3416 = vrot.slane %v3414, 5
        %v3417 = vor.u32 %v3413, %v3416
        %v3418 = vrot.slane %v3417, 4
        %v3420 = vshll.u32 %v3258, 16
        %v3422 = vrot.slane %v3420, 5
        %v3423 = vsel %vm1199, %v3418, %v3422
        %v3424 = vshrl.u32 %v3258, 16
        %v3426 = vrot.slane %v3424, 4
        %v3427 = vor.u32 %v3426, %v3422
        %v3428 = vrot.slane %v3427, 4
        %v3430 = vshll.u32 %v3259, 16
        %v3432 = vrot.slane %v3430, 5
        %v3433 = vsel %vm1199, %v3428, %v3432
        %v3435 = vshrl.u32 %v3260, 16
        %v3437 = vrot.slane %v3435, 4
        %v3438 = vshll.u32 %v3260, 16
        %v3440 = vrot.slane %v3438, 5
        %v3441 = vor.u32 %v3437, %v3440
        %v3442 = vrot.slane %v3441, 4
        %v3444 = vshll.u32 %v3261, 16
        %v3446 = vrot.slane %v3444, 5
        %v3447 = vsel %vm1199, %v3442, %v3446
        %v3448 = vshrl.u32 %v3261, 16
        %v3450 = vrot.slane %v3448, 4
        %v3451 = vor.u32 %v3450, %v3446
        %v3452 = vrot.slane %v3451, 4
        %v3454 = vshll.u32 %v3262, 16
        %v3456 = vrot.slane %v3454, 5
        %v3457 = vsel %vm1199, %v3452, %v3456
        %v3459 = vshrl.u32 %v3263, 16
        %v3461 = vrot.slane %v3459, 4
        %v3462 = vshll.u32 %v3263, 16
        %v3464 = vrot.slane %v3462, 5
        %v3465 = vor.u32 %v3461, %v3464
        %v3466 = vrot.slane %v3465, 4
        %v3468 = vshll.u32 %v3264, 16
        %v3470 = vrot.slane %v3468, 5
        %v3471 = vsel %vm1199, %v3466, %v3470
        %v3472 = vshrl.u32 %v3264, 16
        %v3474 = vrot.slane %v3472, 4
        %v3475 = vor.u32 %v3474, %v3470
        %v3476 = vrot.slane %v3475, 4
        %v3478 = vshll.u32 %v3265, 16
        %v3480 = vrot.slane %v3478, 5
        %v3481 = vsel %vm1199, %v3476, %v3480
        %v3483 = vshrl.u32 %v3266, 16
        %v3485 = vrot.slane %v3483, 4
        %v3486 = vshll.u32 %v3266, 16
        %v3488 = vrot.slane %v3486, 5
        %v3489 = vor.u32 %v3485, %v3488
        %v3490 = vrot.slane %v3489, 4
        %v3492 = vshll.u32 %v3267, 16
        %v3494 = vrot.slane %v3492, 5
        %v3495 = vsel %vm1199, %v3490, %v3494
        %v3496 = vshrl.u32 %v3267, 16
        %v3498 = vrot.slane %v3496, 4
        %v3499 = vor.u32 %v3498, %v3494
        %v3500 = vrot.slane %v3499, 4
        %v3502 = vshll.u32 %v3268, 16
        %v3504 = vrot.slane %v3502, 5
        %v3505 = vsel %vm1199, %v3500, %v3504
        %v3507 = vshrl.u32 %v3269, 16
        %v3509 = vrot.slane %v3507, 4
        %v3510 = vshll.u32 %v3269, 16
        %v3512 = vrot.slane %v3510, 5
        %v3513 = vor.u32 %v3509, %v3512
        %v3514 = vrot.slane %v3513, 4
        %v3516 = vshll.u32 %v3270, 16
        %v3518 = vrot.slane %v3516, 5
        %v3519 = vsel %vm1199, %v3514, %v3518
        %v3520 = vshrl.u32 %v3270, 16
        %v3522 = vrot.slane %v3520, 4
        %v3523 = vor.u32 %v3522, %v3518
        %v3524 = vrot.slane %v3523, 4
        %v3526 = vshll.u32 %v3271, 16
        %v3528 = vrot.slane %v3526, 5
        %v3529 = vsel %vm1199, %v3524, %v3528
        %v3531 = vshrl.u32 %v3272, 16
        %v3533 = vrot.slane %v3531, 4
        %v3534 = vshll.u32 %v3272, 16
        %v3536 = vrot.slane %v3534, 5
        %v3537 = vor.u32 %v3533, %v3536
        %v3538 = vrot.slane %v3537, 4
        %v3540 = vshll.u32 %v3273, 16
        %v3542 = vrot.slane %v3540, 5
        %v3543 = vsel %vm1199, %v3538, %v3542
        %v3544 = vshrl.u32 %v3273, 16
        %v3546 = vrot.slane %v3544, 4
        %v3547 = vor.u32 %v3546, %v3542
        %v3548 = vrot.slane %v3547, 4
        %v3550 = vshll.u32 %v3274, 16
        %v3552 = vrot.slane %v3550, 5
        %v3553 = vsel %vm1199, %v3548, %v3552
        %v3555 = vshrl.u32 %v3275, 16
        %v3557 = vrot.slane %v3555, 4
        %v3558 = vshll.u32 %v3275, 16
        %v3560 = vrot.slane %v3558, 5
        %v3561 = vor.u32 %v3557, %v3560
        %v3562 = vrot.slane %v3561, 4
        %v3564 = vshll.u32 %v3276, 16
        %v3566 = vrot.slane %v3564, 5
        %v3567 = vsel %vm1199, %v3562, %v3566
        %v3568 = vshrl.u32 %v3276, 16
        %v3570 = vrot.slane %v3568, 4
        %v3571 = vor.u32 %v3570, %v3566
        %v3572 = vrot.slane %v3571, 4
        %v3574 = vshll.u32 %v3277, 16
        %v3576 = vrot.slane %v3574, 5
        %v3577 = vsel %vm1199, %v3572, %v3576
        %v3579 = vshrl.u32 %v3278, 16
        %v3581 = vrot.slane %v3579, 4
        %v3582 = vshll.u32 %v3278, 16
        %v3584 = vrot.slane %v3582, 5
        %v3585 = vor.u32 %v3581, %v3584
        %v3586 = vrot.slane %v3585, 4
        %v3588 = vshll.u32 %v3279, 16
        %v3590 = vrot.slane %v3588, 5
        %v3591 = vsel %vm1199, %v3586, %v3590
        %v3592 = vshrl.u32 %v3279, 16
        %v3594 = vrot.slane %v3592, 4
        %v3595 = vor.u32 %v3594, %v3590
        %v3596 = vrot.slane %v3595, 4
        %v3598 = vshll.u32 %v3280, 16
        %v3600 = vrot.slane %v3598, 5
        %v3601 = vsel %vm1199, %v3596, %v3600
        %v3603 = vshrl.u32 %v3281, 16
        %v3605 = vrot.slane %v3603, 4
        %v3606 = vshll.u32 %v3281, 16
        %v3608 = vrot.slane %v3606, 5
        %v3609 = vor.u32 %v3605, %v3608
        %v3610 = vrot.slane %v3609, 4
        %v3612 = vshll.u32 %v3282, 16
        %v3614 = vrot.slane %v3612, 5
        %v3615 = vsel %vm1199, %v3610, %v3614
        %v3616 = vshrl.u32 %v3282, 16
        %v3618 = vrot.slane %v3616, 4
        %v3619 = vor.u32 %v3618, %v3614
        %v3620 = vrot.slane %v3619, 4
        %v3622 = vshll.u32 %v3283, 16
        %v3624 = vrot.slane %v3622, 5
        %v3625 = vsel %vm1199, %v3620, %v3624
        %v3627 = vshrl.u32 %v3284, 16
        %v3629 = vrot.slane %v3627, 4
        %v3630 = vshll.u32 %v3284, 16
        %v3632 = vrot.slane %v3630, 5
        %v3633 = vor.u32 %v3629, %v3632
        %v3634 = vrot.slane %v3633, 4
        %v3636 = vshll.u32 %v3285, 16
        %v3638 = vrot.slane %v3636, 5
        %v3639 = vsel %vm1199, %v3634, %v3638
        %v3640 = vshrl.u32 %v3285, 16
        %v3642 = vrot.slane %v3640, 4
        %v3643 = vor.u32 %v3642, %v3638
        %v3644 = vrot.slane %v3643, 4
        %v3646 = vshll.u32 %v3286, 16
        %v3648 = vrot.slane %v3646, 5
        %v3649 = vsel %vm1199, %v3644, %v3648
        %v3651 = vshrl.u32 %v3287, 16
        %v3653 = vrot.slane %v3651, 4
        %v3654 = vshll.u32 %v3287, 16
        %v3656 = vrot.slane %v3654, 5
        %v3657 = vor.u32 %v3653, %v3656
        %v3658 = vrot.slane %v3657, 4
        %v3660 = vshll.u32 %v3288, 16
        %v3662 = vrot.slane %v3660, 5
        %v3663 = vsel %vm1199, %v3658, %v3662
        %v3664 = vshrl.u32 %v3288, 16
        %v3666 = vrot.slane %v3664, 4
        %v3667 = vor.u32 %v3666, %v3662
        %v3668 = vrot.slane %v3667, 4
        %v3670 = vshll.u32 %v3289, 16
        %v3672 = vrot.slane %v3670, 5
        %v3673 = vsel %vm1199, %v3668, %v3672
        %v3674 = vunpack.c.l.b16 %v3303
        %v3675 = vunpack.c.l.b16 %v3313
        %v3676 = vunpack.c.l.b16 %v3327
        %v3677 = vunpack.c.l.b16 %v3337
        %v3678 = vunpack.c.l.b16 %v3351
        %v3679 = vunpack.c.l.b16 %v3361
        %v3680 = vunpack.c.l.b16 %v3375
        %v3681 = vunpack.c.l.b16 %v3385
        %v3682 = vunpack.c.l.b16 %v3399
        %v3683 = vunpack.c.l.b16 %v3409
        %v3684 = vunpack.c.l.b16 %v3423
        %v3685 = vunpack.c.l.b16 %v3433
        %v3686 = vunpack.c.l.b16 %v3447
        %v3687 = vunpack.c.l.b16 %v3457
        %v3688 = vunpack.c.l.b16 %v3471
        %v3689 = vunpack.c.l.b16 %v3481
        %v3690 = vunpack.c.l.b16 %v3495
        %v3691 = vunpack.c.l.b16 %v3505
        %v3692 = vunpack.c.l.b16 %v3519
        %v3693 = vunpack.c.l.b16 %v3529
        %v3694 = vunpack.c.l.b16 %v3543
        %v3695 = vunpack.c.l.b16 %v3553
        %v3696 = vunpack.c.l.b16 %v3567
        %v3697 = vunpack.c.l.b16 %v3577
        %v3698 = vunpack.c.l.b16 %v3591
        %v3699 = vunpack.c.l.b16 %v3601
        %v3700 = vunpack.c.l.b16 %v3615
        %v3701 = vunpack.c.l.b16 %v3625
        %v3702 = vunpack.c.l.b16 %v3639
        %v3703 = vunpack.c.l.b16 %v3649
        %v3704 = vunpack.c.l.b16 %v3663
        %v3705 = vunpack.c.l.b16 %v3673
        %v3706 = vpack.c.b16 %v3675, %v3674
        %v3707 = vpack.c.b16 %v3677, %v3676
        %v3708 = vpack.c.b16 %v3679, %v3678
        %v3709 = vpack.c.b16 %v3681, %v3680
        %v3710 = vpack.c.b16 %v3683, %v3682
        %v3711 = vpack.c.b16 %v3685, %v3684
        %v3712 = vpack.c.b16 %v3687, %v3686
        %v3713 = vpack.c.b16 %v3689, %v3688
        %v3714 = vpack.c.b16 %v3691, %v3690
        %v3715 = vpack.c.b16 %v3693, %v3692
        %v3716 = vpack.c.b16 %v3695, %v3694
        %v3717 = vpack.c.b16 %v3697, %v3696
        %v3718 = vpack.c.b16 %v3699, %v3698
        %v3719 = vpack.c.b16 %v3701, %v3700
        %v3720 = vpack.c.b16 %v3703, %v3702
        %v3721 = vpack.c.b16 %v3705, %v3704
        %3722 = vrot.lane.b32.xlu0 %v3706, 28
        %v3723 = vpop.permute.xlu0 %3722
        %3724 = vrot.lane.b32.xlu0 %v3707, 28
        %v3725 = vpop.permute.xlu0 %3724
        %3726 = vrot.lane.b32.xlu0 %v3708, 28
        %v3727 = vpop.permute.xlu0 %3726
        %3728 = vrot.lane.b32.xlu0 %v3709, 28
        %v3729 = vpop.permute.xlu0 %3728
        %3730 = vrot.lane.b32.xlu0 %v3710, 28
        %v3731 = vpop.permute.xlu0 %3730
        %3732 = vrot.lane.b32.xlu0 %v3711, 28
        %v3733 = vpop.permute.xlu0 %3732
        %3734 = vrot.lane.b32.xlu0 %v3712, 28
        %v3735 = vpop.permute.xlu0 %3734
        %3736 = vrot.lane.b32.xlu0 %v3713, 28
        %v3737 = vpop.permute.xlu0 %3736
        %3738 = vrot.lane.b32.xlu0 %v3714, 28
        %v3739 = vpop.permute.xlu0 %3738
        %3740 = vrot.lane.b32.xlu0 %v3715, 28
        %v3741 = vpop.permute.xlu0 %3740
        %3742 = vrot.lane.b32.xlu0 %v3716, 28
        %v3743 = vpop.permute.xlu0 %3742
        %3744 = vrot.lane.b32.xlu0 %v3717, 28
        %v3745 = vpop.permute.xlu0 %3744
        %3746 = vrot.lane.b32.xlu0 %v3718, 28
        %v3747 = vpop.permute.xlu0 %3746
        %3748 = vrot.lane.b32.xlu0 %v3719, 28
        %v3749 = vpop.permute.xlu0 %3748
        %3750 = vrot.lane.b32.xlu0 %v3720, 28
        %v3751 = vpop.permute.xlu0 %3750
        %3752 = vrot.lane.b32.xlu0 %v3721, 28
        %v3753 = vpop.permute.xlu0 %3752
        %vm3770 = vcmask 261344
        %3771 = vst.msk [vmem:[#allocation3] sm:$0xff] %vm3770, %v3723
        %3772 = vst.msk [vmem:[#allocation3 + $0x8] sm:$0xff] %vm3770, %v3725
        %3773 = vst.msk [vmem:[#allocation3 + $0x10] sm:$0xff] %vm3770, %v3727
        %3774 = vst.msk [vmem:[#allocation3 + $0x18] sm:$0xff] %vm3770, %v3729
        %3775 = vst.msk [vmem:[#allocation3 + $0x20] sm:$0xff] %vm3770, %v3731
        %3776 = vst.msk [vmem:[#allocation3 + $0x28] sm:$0xff] %vm3770, %v3733
        %3777 = vst.msk [vmem:[#allocation3 + $0x30] sm:$0xff] %vm3770, %v3735
        %3778 = vst.msk [vmem:[#allocation3 + $0x38] sm:$0xff] %vm3770, %v3737
        %3779 = vst.msk [vmem:[#allocation3 + $0x40] sm:$0xff] %vm3770, %v3739
        %3780 = vst.msk [vmem:[#allocation3 + $0x48] sm:$0xff] %vm3770, %v3741
        %3781 = vst.msk [vmem:[#allocation3 + $0x50] sm:$0xff] %vm3770, %v3743
        %3782 = vst.msk [vmem:[#allocation3 + $0x58] sm:$0xff] %vm3770, %v3745
        %3783 = vst.msk [vmem:[#allocation3 + $0x60] sm:$0xff] %vm3770, %v3747
        %3784 = vst.msk [vmem:[#allocation3 + $0x68] sm:$0xff] %vm3770, %v3749
        %3785 = vst.msk [vmem:[#allocation3 + $0x70] sm:$0xff] %vm3770, %v3751
        %3786 = vst.msk [vmem:[#allocation3 + $0x78] sm:$0xff] %vm3770, %v3753
        %v3787 = vld [vmem:[%s3064] sm:$0xe]
        %v3788 = vld [vmem:[%s3064 + $0x4] sm:$0xf]
        %v3789 = vld [vmem:[%s3064 + $0x8] sm:$0x1]
        %v3790 = vld [vmem:[%s3064 + $0xc] sm:$0xe]
        %v3791 = vld [vmem:[%s3064 + $0x10] sm:$0xf]
        %v3792 = vld [vmem:[%s3064 + $0x14] sm:$0x1]
        %v3793 = vld [vmem:[%s3064 + $0x18] sm:$0xe]
        %v3794 = vld [vmem:[%s3064 + $0x1c] sm:$0xf]
        %v3795 = vld [vmem:[%s3064 + $0x20] sm:$0x1]
        %v3796 = vld [vmem:[%s3064 + $0x24] sm:$0xe]
        %v3797 = vld [vmem:[%s3064 + $0x28] sm:$0xf]
        %v3798 = vld [vmem:[%s3064 + $0x2c] sm:$0x1]
        %v3799 = vld [vmem:[%s3064 + $0x30] sm:$0xe]
        %v3800 = vld [vmem:[%s3064 + $0x34] sm:$0xf]
        %v3801 = vld [vmem:[%s3064 + $0x38] sm:$0x1]
        %v3802 = vld [vmem:[%s3064 + $0x3c] sm:$0xe]
        %v3803 = vld [vmem:[%s3064 + $0x40] sm:$0xf]
        %v3804 = vld [vmem:[%s3064 + $0x44] sm:$0x1]
        %v3805 = vld [vmem:[%s3064 + $0x48] sm:$0xe]
        %v3806 = vld [vmem:[%s3064 + $0x4c] sm:$0xf]
        %v3807 = vld [vmem:[%s3064 + $0x50] sm:$0x1]
        %v3808 = vld [vmem:[%s3064 + $0x54] sm:$0xe]
        %v3809 = vld [vmem:[%s3064 + $0x58] sm:$0xf]
        %v3810 = vld [vmem:[%s3064 + $0x5c] sm:$0x1]
        %v3811 = vld [vmem:[%s3064 + $0x60] sm:$0xe]
        %v3812 = vld [vmem:[%s3064 + $0x64] sm:$0xf]
        %v3813 = vld [vmem:[%s3064 + $0x68] sm:$0x1]
        %v3814 = vld [vmem:[%s3064 + $0x6c] sm:$0xe]
        %v3815 = vld [vmem:[%s3064 + $0x70] sm:$0xf]
        %v3816 = vld [vmem:[%s3064 + $0x74] sm:$0x1]
        %v3817 = vld [vmem:[%s3064 + $0x78] sm:$0xe]
        %v3818 = vld [vmem:[%s3064 + $0x7c] sm:$0xf]
        %v3819 = vld [vmem:[%s3064 + $0x80] sm:$0x1]
        %v3820 = vld [vmem:[%s3064 + $0x84] sm:$0xe]
        %v3821 = vld [vmem:[%s3064 + $0x88] sm:$0xf]
        %v3822 = vld [vmem:[%s3064 + $0x8c] sm:$0x1]
        %v3823 = vld [vmem:[%s3064 + $0x90] sm:$0xe]
        %v3824 = vld [vmem:[%s3064 + $0x94] sm:$0xf]
        %v3825 = vld [vmem:[%s3064 + $0x98] sm:$0x1]
        %v3826 = vld [vmem:[%s3064 + $0x9c] sm:$0xe]
        %v3827 = vld [vmem:[%s3064 + $0xa0] sm:$0xf]
        %v3828 = vld [vmem:[%s3064 + $0xa4] sm:$0x1]
        %v3829 = vld [vmem:[%s3064 + $0xa8] sm:$0xe]
        %v3830 = vld [vmem:[%s3064 + $0xac] sm:$0xf]
        %v3831 = vld [vmem:[%s3064 + $0xb0] sm:$0x1]
        %v3832 = vld [vmem:[%s3064 + $0xb4] sm:$0xe]
        %v3833 = vld [vmem:[%s3064 + $0xb8] sm:$0xf]
        %v3834 = vld [vmem:[%s3064 + $0xbc] sm:$0x1]
        %v3883 = vrot.slane %v3787, 5
        %v3884 = vrot.slane %v3883, 4
        %v3885 = vrot.slane %v3788, 5
        %v3886 = vsel %vm1795, %v3884, %v3885
        %v3887 = vrot.slane %v3885, 4
        %v3888 = vrot.slane %v3789, 5
        %v3889 = vsel %vm1795, %v3887, %v3888
        %v3890 = vrot.slane %v3790, 5
        %v3891 = vrot.slane %v3890, 4
        %v3892 = vrot.slane %v3791, 5
        %v3893 = vsel %vm1795, %v3891, %v3892
        %v3894 = vrot.slane %v3892, 4
        %v3895 = vrot.slane %v3792, 5
        %v3896 = vsel %vm1795, %v3894, %v3895
        %v3897 = vrot.slane %v3793, 5
        %v3898 = vrot.slane %v3897, 4
        %v3899 = vrot.slane %v3794, 5
        %v3900 = vsel %vm1795, %v3898, %v3899
        %v3901 = vrot.slane %v3899, 4
        %v3902 = vrot.slane %v3795, 5
        %v3903 = vsel %vm1795, %v3901, %v3902
        %v3904 = vrot.slane %v3796, 5
        %v3905 = vrot.slane %v3904, 4
        %v3906 = vrot.slane %v3797, 5
        %v3907 = vsel %vm1795, %v3905, %v3906
        %v3908 = vrot.slane %v3906, 4
        %v3909 = vrot.slane %v3798, 5
        %v3910 = vsel %vm1795, %v3908, %v3909
        %v3911 = vrot.slane %v3799, 5
        %v3912 = vrot.slane %v3911, 4
        %v3913 = vrot.slane %v3800, 5
        %v3914 = vsel %vm1795, %v3912, %v3913
        %v3915 = vrot.slane %v3913, 4
        %v3916 = vrot.slane %v3801, 5
        %v3917 = vsel %vm1795, %v3915, %v3916
        %v3918 = vrot.slane %v3802, 5
        %v3919 = vrot.slane %v3918, 4
        %v3920 = vrot.slane %v3803, 5
        %v3921 = vsel %vm1795, %v3919, %v3920
        %v3922 = vrot.slane %v3920, 4
        %v3923 = vrot.slane %v3804, 5
        %v3924 = vsel %vm1795, %v3922, %v3923
        %v3925 = vrot.slane %v3805, 5
        %v3926 = vrot.slane %v3925, 4
        %v3927 = vrot.slane %v3806, 5
        %v3928 = vsel %vm1795, %v3926, %v3927
        %v3929 = vrot.slane %v3927, 4
        %v3930 = vrot.slane %v3807, 5
        %v3931 = vsel %vm1795, %v3929, %v3930
        %v3932 = vrot.slane %v3808, 5
        %v3933 = vrot.slane %v3932, 4
        %v3934 = vrot.slane %v3809, 5
        %v3935 = vsel %vm1795, %v3933, %v3934
        %v3936 = vrot.slane %v3934, 4
        %v3937 = vrot.slane %v3810, 5
        %v3938 = vsel %vm1795, %v3936, %v3937
        %v3939 = vrot.slane %v3811, 5
        %v3940 = vrot.slane %v3939, 4
        %v3941 = vrot.slane %v3812, 5
        %v3942 = vsel %vm1795, %v3940, %v3941
        %v3943 = vrot.slane %v3941, 4
        %v3944 = vrot.slane %v3813, 5
        %v3945 = vsel %vm1795, %v3943, %v3944
        %v3946 = vrot.slane %v3814, 5
        %v3947 = vrot.slane %v3946, 4
        %v3948 = vrot.slane %v3815, 5
        %v3949 = vsel %vm1795, %v3947, %v3948
        %v3950 = vrot.slane %v3948, 4
        %v3951 = vrot.slane %v3816, 5
        %v3952 = vsel %vm1795, %v3950, %v3951
        %v3953 = vrot.slane %v3817, 5
        %v3954 = vrot.slane %v3953, 4
        %v3955 = vrot.slane %v3818, 5
        %v3956 = vsel %vm1795, %v3954, %v3955
        %v3957 = vrot.slane %v3955, 4
        %v3958 = vrot.slane %v3819, 5
        %v3959 = vsel %vm1795, %v3957, %v3958
        %v3960 = vrot.slane %v3820, 5
        %v3961 = vrot.slane %v3960, 4
        %v3962 = vrot.slane %v3821, 5
        %v3963 = vsel %vm1795, %v3961, %v3962
        %v3964 = vrot.slane %v3962, 4
        %v3965 = vrot.slane %v3822, 5
        %v3966 = vsel %vm1795, %v3964, %v3965
        %v3967 = vrot.slane %v3823, 5
        %v3968 = vrot.slane %v3967, 4
        %v3969 = vrot.slane %v3824, 5
        %v3970 = vsel %vm1795, %v3968, %v3969
        %v3971 = vrot.slane %v3969, 4
        %v3972 = vrot.slane %v3825, 5
        %v3973 = vsel %vm1795, %v3971, %v3972
        %v3974 = vrot.slane %v3826, 5
        %v3975 = vrot.slane %v3974, 4
        %v3976 = vrot.slane %v3827, 5
        %v3977 = vsel %vm1795, %v3975, %v3976
        %v3978 = vrot.slane %v3976, 4
        %v3979 = vrot.slane %v3828, 5
        %v3980 = vsel %vm1795, %v3978, %v3979
        %v3981 = vrot.slane %v3829, 5
        %v3982 = vrot.slane %v3981, 4
        %v3983 = vrot.slane %v3830, 5
        %v3984 = vsel %vm1795, %v3982, %v3983
        %v3985 = vrot.slane %v3983, 4
        %v3986 = vrot.slane %v3831, 5
        %v3987 = vsel %vm1795, %v3985, %v3986
        %v3988 = vrot.slane %v3832, 5
        %v3989 = vrot.slane %v3988, 4
        %v3990 = vrot.slane %v3833, 5
        %v3991 = vsel %vm1795, %v3989, %v3990
        %v3992 = vrot.slane %v3990, 4
        %v3993 = vrot.slane %v3834, 5
        %v3994 = vsel %vm1795, %v3992, %v3993
        %v3995 = vunpack.c.l.b16 %v3886
        %v3996 = vunpack.c.l.b16 %v3889
        %v3997 = vunpack.c.l.b16 %v3893
        %v3998 = vunpack.c.l.b16 %v3896
        %v3999 = vunpack.c.l.b16 %v3900
        %v4000 = vunpack.c.l.b16 %v3903
        %v4001 = vunpack.c.l.b16 %v3907
        %v4002 = vunpack.c.l.b16 %v3910
        %v4003 = vunpack.c.l.b16 %v3914
        %v4004 = vunpack.c.l.b16 %v3917
        %v4005 = vunpack.c.l.b16 %v3921
        %v4006 = vunpack.c.l.b16 %v3924
        %v4007 = vunpack.c.l.b16 %v3928
        %v4008 = vunpack.c.l.b16 %v3931
        %v4009 = vunpack.c.l.b16 %v3935
        %v4010 = vunpack.c.l.b16 %v3938
        %v4011 = vunpack.c.l.b16 %v3942
        %v4012 = vunpack.c.l.b16 %v3945
        %v4013 = vunpack.c.l.b16 %v3949
        %v4014 = vunpack.c.l.b16 %v3952
        %v4015 = vunpack.c.l.b16 %v3956
        %v4016 = vunpack.c.l.b16 %v3959
        %v4017 = vunpack.c.l.b16 %v3963
        %v4018 = vunpack.c.l.b16 %v3966
        %v4019 = vunpack.c.l.b16 %v3970
        %v4020 = vunpack.c.l.b16 %v3973
        %v4021 = vunpack.c.l.b16 %v3977
        %v4022 = vunpack.c.l.b16 %v3980
        %v4023 = vunpack.c.l.b16 %v3984
        %v4024 = vunpack.c.l.b16 %v3987
        %v4025 = vunpack.c.l.b16 %v3991
        %v4026 = vunpack.c.l.b16 %v3994
        %v4027 = vpack.c.b16 %v3996, %v3995
        %v4028 = vpack.c.b16 %v3998, %v3997
        %v4029 = vpack.c.b16 %v4000, %v3999
        %v4030 = vpack.c.b16 %v4002, %v4001
        %v4031 = vpack.c.b16 %v4004, %v4003
        %v4032 = vpack.c.b16 %v4006, %v4005
        %v4033 = vpack.c.b16 %v4008, %v4007
        %v4034 = vpack.c.b16 %v4010, %v4009
        %v4035 = vpack.c.b16 %v4012, %v4011
        %v4036 = vpack.c.b16 %v4014, %v4013
        %v4037 = vpack.c.b16 %v4016, %v4015
        %v4038 = vpack.c.b16 %v4018, %v4017
        %v4039 = vpack.c.b16 %v4020, %v4019
        %v4040 = vpack.c.b16 %v4022, %v4021
        %v4041 = vpack.c.b16 %v4024, %v4023
        %v4042 = vpack.c.b16 %v4026, %v4025
        %4043 = vrot.lane.b32.xlu0 %v4027, 32
        %v4044 = vpop.permute.xlu0 %4043
        %4045 = vrot.lane.b32.xlu0 %v4028, 32
        %v4046 = vpop.permute.xlu0 %4045
        %4047 = vrot.lane.b32.xlu0 %v4029, 32
        %v4048 = vpop.permute.xlu0 %4047
        %4049 = vrot.lane.b32.xlu0 %v4030, 32
        %v4050 = vpop.permute.xlu0 %4049
        %4051 = vrot.lane.b32.xlu0 %v4031, 32
        %v4052 = vpop.permute.xlu0 %4051
        %4053 = vrot.lane.b32.xlu0 %v4032, 32
        %v4054 = vpop.permute.xlu0 %4053
        %4055 = vrot.lane.b32.xlu0 %v4033, 32
        %v4056 = vpop.permute.xlu0 %4055
        %4057 = vrot.lane.b32.xlu0 %v4034, 32
        %v4058 = vpop.permute.xlu0 %4057
        %4059 = vrot.lane.b32.xlu0 %v4035, 32
        %v4060 = vpop.permute.xlu0 %4059
        %4061 = vrot.lane.b32.xlu0 %v4036, 32
        %v4062 = vpop.permute.xlu0 %4061
        %4063 = vrot.lane.b32.xlu0 %v4037, 32
        %v4064 = vpop.permute.xlu0 %4063
        %4065 = vrot.lane.b32.xlu0 %v4038, 32
        %v4066 = vpop.permute.xlu0 %4065
        %4067 = vrot.lane.b32.xlu0 %v4039, 32
        %v4068 = vpop.permute.xlu0 %4067
        %4069 = vrot.lane.b32.xlu0 %v4040, 32
        %v4070 = vpop.permute.xlu0 %4069
        %4071 = vrot.lane.b32.xlu0 %v4041, 32
        %v4072 = vpop.permute.xlu0 %4071
        %4073 = vrot.lane.b32.xlu0 %v4042, 32
        %v4074 = vpop.permute.xlu0 %4073
        %vm4091 = vcmask 294144
        %4092 = vst.msk [vmem:[#allocation3] sm:$0xff] %vm4091, %v4044
        %4093 = vst.msk [vmem:[#allocation3 + $0x8] sm:$0xff] %vm4091, %v4046
        %4094 = vst.msk [vmem:[#allocation3 + $0x10] sm:$0xff] %vm4091, %v4048
        %4095 = vst.msk [vmem:[#allocation3 + $0x18] sm:$0xff] %vm4091, %v4050
        %4096 = vst.msk [vmem:[#allocation3 + $0x20] sm:$0xff] %vm4091, %v4052
        %4097 = vst.msk [vmem:[#allocation3 + $0x28] sm:$0xff] %vm4091, %v4054
        %4098 = vst.msk [vmem:[#allocation3 + $0x30] sm:$0xff] %vm4091, %v4056
        %4099 = vst.msk [vmem:[#allocation3 + $0x38] sm:$0xff] %vm4091, %v4058
        %4100 = vst.msk [vmem:[#allocation3 + $0x40] sm:$0xff] %vm4091, %v4060
        %4101 = vst.msk [vmem:[#allocation3 + $0x48] sm:$0xff] %vm4091, %v4062
        %4102 = vst.msk [vmem:[#allocation3 + $0x50] sm:$0xff] %vm4091, %v4064
        %4103 = vst.msk [vmem:[#allocation3 + $0x58] sm:$0xff] %vm4091, %v4066
        %4104 = vst.msk [vmem:[#allocation3 + $0x60] sm:$0xff] %vm4091, %v4068
        %4105 = vst.msk [vmem:[#allocation3 + $0x68] sm:$0xff] %vm4091, %v4070
        %4106 = vst.msk [vmem:[#allocation3 + $0x70] sm:$0xff] %vm4091, %v4072
        %4107 = vst.msk [vmem:[#allocation3 + $0x78] sm:$0xff] %vm4091, %v4074
        %v4108 = vld [vmem:[#allocation3] sm:$0xff]
        %v4109 = vld [vmem:[#allocation3 + $0x8] sm:$0xff]
        %v4110 = vld [vmem:[#allocation3 + $0x10] sm:$0xff]
        %v4111 = vld [vmem:[#allocation3 + $0x18] sm:$0xff]
        %v4112 = vld [vmem:[#allocation3 + $0x20] sm:$0xff]
        %v4113 = vld [vmem:[#allocation3 + $0x28] sm:$0xff]
        %v4114 = vld [vmem:[#allocation3 + $0x30] sm:$0xff]
        %v4115 = vld [vmem:[#allocation3 + $0x38] sm:$0xff]
        %v4116 = vld [vmem:[#allocation3 + $0x40] sm:$0xff]
        %v4117 = vld [vmem:[#allocation3 + $0x48] sm:$0xff]
        %v4118 = vld [vmem:[#allocation3 + $0x50] sm:$0xff]
        %v4119 = vld [vmem:[#allocation3 + $0x58] sm:$0xff]
        %v4120 = vld [vmem:[#allocation3 + $0x60] sm:$0xff]
        %v4121 = vld [vmem:[#allocation3 + $0x68] sm:$0xff]
        %v4122 = vld [vmem:[#allocation3 + $0x70] sm:$0xff]
        %v4123 = vld [vmem:[#allocation3 + $0x78] sm:$0xff]
        %v4124 = vld [vmem:[#allocation10] sm:$0xf]
        %v4125 = vld [vmem:[#allocation10 + $0x4] sm:$0xf]
        %v4126 = vld [vmem:[#allocation10 + $0x8] sm:$0xf]
        %v4127 = vld [vmem:[#allocation10 + $0xc] sm:$0xf]
        %v4128 = vld [vmem:[#allocation10 + $0x10] sm:$0x3]
        %v4129 = vld [vmem:[#allocation12] sm:$0x1]
        %v4131 = vlaneseq
        %v4132 = vshrl.u32 %v4131, 7
        %v4133 = vsub.s32 0, %v4132
        %v4134 = vrot.slane %v4129, %v4133
        %v4141 = vunpack.c.l.b16 %v4124
        %v4142 = vunpack.c.l.b16 %v4125
        %v4143 = vunpack.c.l.b16 %v4126
        %v4144 = vunpack.c.l.b16 %v4127
        %v4145 = vunpack.c.l.b16 %v4128
        %v4146 = vpack.c.b16 %v4142, %v4141
        %v4147 = vpack.c.b16 %v4144, %v4143
        %v4148 = vpack.c.b16 %v4145, %v4145
        %vm4151 = vcmask 293888
        %v4153 = vsel %vm4151, %v4108, 0
        %v4156 = vsel %vm4151, %v4109, 0
        %v4159 = vsel %vm4151, %v4110, 0
        %v4162 = vsel %vm4151, %v4111, 0
        %v4165 = vsel %vm4151, %v4112, 0
        %v4168 = vsel %vm4151, %v4113, 0
        %v4171 = vsel %vm4151, %v4114, 0
        %v4174 = vsel %vm4151, %v4115, 0
        %v4177 = vsel %vm4151, %v4116, 0
        %v4180 = vsel %vm4151, %v4117, 0
        %v4183 = vsel %vm4151, %v4118, 0
        %v4186 = vsel %vm4151, %v4119, 0
        %v4189 = vsel %vm4151, %v4120, 0
        %v4192 = vsel %vm4151, %v4121, 0
        %v4195 = vsel %vm4151, %v4122, 0
        %v4198 = vsel %vm4151, %v4123, 0
        %vm4200 = vcmask 1041408
        %v4202 = vsel %vm4200, %v4148, 0
        %4204 = vmatprep.subr.bf16.mxu0 0
        %4205 = vmatpush1.bf16.msra.mxu0 %v4146
        %4206 = vmatprep.subr.bf16.mxu0 0
        %4207 = vmatpush1.bf16.msra.mxu0 %v4147
        %4208 = vmatprep.subr.bf16.mxu0 0
        %4209 = vmatpush1.bf16.msra.mxu0 %v4202
        %4210 = vmatprep.subr.bf16.mxu0 0
        %4211 = vmatpush1.bf16.msra.mxu0 0
        %4212 = vmatprep.subr.bf16.mxu0 0
        %4213 = vmatpush1.bf16.msra.mxu0 0
        %4214 = vmatprep.subr.bf16.mxu0 0
        %4215 = vmatpush1.bf16.msra.mxu0 0
        %4216 = vmatprep.subr.bf16.mxu0 0
        %4217 = vmatpush1.bf16.msra.mxu0 0
        %4218 = vmatprep.subr.bf16.mxu0 0
        %4219 = vmatpush1.bf16.msra.mxu0 0
        %4220 = vmatprep.subr.bf16.mxu0 0
        %4221 = vmatpush1.bf16.msra.mxu0 0
        %4222 = vmatprep.subr.bf16.mxu0 0
        %4223 = vmatpush1.bf16.msra.mxu0 0
        %4224 = vmatprep.subr.bf16.mxu0 0
        %4225 = vmatpush1.bf16.msra.mxu0 0
        %4226 = vmatprep.subr.bf16.mxu0 0
        %4227 = vmatpush1.bf16.msra.mxu0 0
        %4228 = vmatprep.subr.bf16.mxu0 0
        %4229 = vmatpush1.bf16.msra.mxu0 0
        %4230 = vmatprep.subr.bf16.mxu0 0
        %4231 = vmatpush1.bf16.msra.mxu0 0
        %4232 = vmatprep.subr.bf16.mxu0 0
        %4233 = vmatpush1.bf16.msra.mxu0 0
        %4234 = vmatprep.subr.bf16.mxu0 0
        %4235 = vmatpush1.bf16.msra.mxu0 0
        %4236 = vmatprep.mubr.bf16.mxu0 0
        %4237 = vmatmul.mubr.bf16.gmra.mrb[0].mxu0 %v4153
        %v4238 = vpop.f32.mrb[0].mxu0
        %v4239 = vadd.f32 %v4134, %v4238
        %v4240 = vpop.f32.mrb[0].mxu0
        %v4241 = vpop.f32.mrb[0].mxu0
        %v4242 = vadd.f32 %v4134, %v4241
        %v4243 = vpop.f32.mrb[0].mxu0
        %4244 = vmatprep.mubr.bf16.mxu0 0
        %4245 = vmatmul.mubr.bf16.gmra.mrb[0].mxu0 %v4156
        %v4246 = vpop.f32.mrb[0].mxu0
        %v4247 = vadd.f32 %v4134, %v4246
        %v4248 = vpop.f32.mrb[0].mxu0
        %v4249 = vpop.f32.mrb[0].mxu0
        %v4250 = vadd.f32 %v4134, %v4249
        %v4251 = vpop.f32.mrb[0].mxu0
        %4252 = vmatprep.mubr.bf16.mxu0 0
        %4253 = vmatmul.mubr.bf16.gmra.mrb[0].mxu0 %v4159
        %v4254 = vpop.f32.mrb[0].mxu0
        %v4255 = vadd.f32 %v4134, %v4254
        %v4256 = vpop.f32.mrb[0].mxu0
        %v4257 = vpop.f32.mrb[0].mxu0
        %v4258 = vadd.f32 %v4134, %v4257
        %v4259 = vpop.f32.mrb[0].mxu0
        %4260 = vmatprep.mubr.bf16.mxu0 0
        %4261 = vmatmul.mubr.bf16.gmra.mrb[0].mxu0 %v4162
        %v4262 = vpop.f32.mrb[0].mxu0
        %v4263 = vadd.f32 %v4134, %v4262
        %v4264 = vpop.f32.mrb[0].mxu0
        %v4265 = vpop.f32.mrb[0].mxu0
        %v4266 = vadd.f32 %v4134, %v4265
        %v4267 = vpop.f32.mrb[0].mxu0
        %4268 = vmatprep.mubr.bf16.mxu0 0
        %4269 = vmatmul.mubr.bf16.gmra.mrb[0].mxu0 %v4165
        %v4270 = vpop.f32.mrb[0].mxu0
        %v4271 = vadd.f32 %v4134, %v4270
        %v4272 = vpop.f32.mrb[0].mxu0
        %v4273 = vpop.f32.mrb[0].mxu0
        %v4274 = vadd.f32 %v4134, %v4273
        %v4275 = vpop.f32.mrb[0].mxu0
        %4276 = vmatprep.mubr.bf16.mxu0 0
        %4277 = vmatmul.mubr.bf16.gmra.mrb[0].mxu0 %v4168
        %v4278 = vpop.f32.mrb[0].mxu0
        %v4279 = vadd.f32 %v4134, %v4278
        %v4280 = vpop.f32.mrb[0].mxu0
        %v4281 = vpop.f32.mrb[0].mxu0
        %v4282 = vadd.f32 %v4134, %v4281
        %v4283 = vpop.f32.mrb[0].mxu0
        %4284 = vmatprep.mubr.bf16.mxu0 0
        %4285 = vmatmul.mubr.bf16.gmra.mrb[0].mxu0 %v4171
        %v4286 = vpop.f32.mrb[0].mxu0
        %v4287 = vadd.f32 %v4134, %v4286
        %v4288 = vpop.f32.mrb[0].mxu0
        %v4289 = vpop.f32.mrb[0].mxu0
        %v4290 = vadd.f32 %v4134, %v4289
        %v4291 = vpop.f32.mrb[0].mxu0
        %4292 = vmatprep.mubr.bf16.mxu0 0
        %4293 = vmatmul.mubr.bf16.gmra.mrb[0].mxu0 %v4174
        %v4294 = vpop.f32.mrb[0].mxu0
        %v4295 = vadd.f32 %v4134, %v4294
        %v4296 = vpop.f32.mrb[0].mxu0
        %v4297 = vpop.f32.mrb[0].mxu0
        %v4298 = vadd.f32 %v4134, %v4297
        %v4299 = vpop.f32.mrb[0].mxu0
        %4300 = vmatprep.mubr.bf16.mxu0 0
        %4301 = vmatmul.mubr.bf16.gmra.mrb[0].mxu0 %v4177
        %v4302 = vpop.f32.mrb[0].mxu0
        %v4303 = vadd.f32 %v4134, %v4302
        %v4304 = vpop.f32.mrb[0].mxu0
        %v4305 = vpop.f32.mrb[0].mxu0
        %v4306 = vadd.f32 %v4134, %v4305
        %v4307 = vpop.f32.mrb[0].mxu0
        %4308 = vmatprep.mubr.bf16.mxu0 0
        %4309 = vmatmul.mubr.bf16.gmra.mrb[0].mxu0 %v4180
        %v4310 = vpop.f32.mrb[0].mxu0
        %v4311 = vadd.f32 %v4134, %v4310
        %v4312 = vpop.f32.mrb[0].mxu0
        %v4313 = vpop.f32.mrb[0].mxu0
        %v4314 = vadd.f32 %v4134, %v4313
        %v4315 = vpop.f32.mrb[0].mxu0
        %4316 = vmatprep.mubr.bf16.mxu0 0
        %4317 = vmatmul.mubr.bf16.gmra.mrb[0].mxu0 %v4183
        %v4318 = vpop.f32.mrb[0].mxu0
        %v4319 = vadd.f32 %v4134, %v4318
        %v4320 = vpop.f32.mrb[0].mxu0
        %v4321 = vpop.f32.mrb[0].mxu0
        %v4322 = vadd.f32 %v4134, %v4321
        %v4323 = vpop.f32.mrb[0].mxu0
        %4324 = vmatprep.mubr.bf16.mxu0 0
        %4325 = vmatmul.mubr.bf16.gmra.mrb[0].mxu0 %v4186
        %v4326 = vpop.f32.mrb[0].mxu0
        %v4327 = vadd.f32 %v4134, %v4326
        %v4328 = vpop.f32.mrb[0].mxu0
        %v4329 = vpop.f32.mrb[0].mxu0
        %v4330 = vadd.f32 %v4134, %v4329
        %v4331 = vpop.f32.mrb[0].mxu0
        %4332 = vmatprep.mubr.bf16.mxu0 0
        %4333 = vmatmul.mubr.bf16.gmra.mrb[0].mxu0 %v4189
        %v4334 = vpop.f32.mrb[0].mxu0
        %v4335 = vadd.f32 %v4134, %v4334
        %v4336 = vpop.f32.mrb[0].mxu0
        %v4337 = vpop.f32.mrb[0].mxu0
        %v4338 = vadd.f32 %v4134, %v4337
        %v4339 = vpop.f32.mrb[0].mxu0
        %4340 = vmatprep.mubr.bf16.mxu0 0
        %4341 = vmatmul.mubr.bf16.gmra.mrb[0].mxu0 %v4192
        %v4342 = vpop.f32.mrb[0].mxu0
        %v4343 = vadd.f32 %v4134, %v4342
        %v4344 = vpop.f32.mrb[0].mxu0
        %v4345 = vpop.f32.mrb[0].mxu0
        %v4346 = vadd.f32 %v4134, %v4345
        %v4347 = vpop.f32.mrb[0].mxu0
        %4348 = vmatprep.mubr.bf16.mxu0 0
        %4349 = vmatmul.mubr.bf16.gmra.mrb[0].mxu0 %v4195
        %v4350 = vpop.f32.mrb[0].mxu0
        %v4351 = vadd.f32 %v4134, %v4350
        %v4352 = vpop.f32.mrb[0].mxu0
        %v4353 = vpop.f32.mrb[0].mxu0
        %v4354 = vadd.f32 %v4134, %v4353
        %v4355 = vpop.f32.mrb[0].mxu0
        %4356 = vmatprep.mubr.bf16.mxu0 0
        %4357 = vmatmul.mubr.bf16.gmra.mrb[0].mxu0 %v4198
        %v4358 = vpop.f32.mrb[0].mxu0
        %v4359 = vadd.f32 %v4134, %v4358
        %v4360 = vpop.f32.mrb[0].mxu0
        %v4361 = vpop.f32.mrb[0].mxu0
        %v4362 = vadd.f32 %v4134, %v4361
        %v4363 = vpop.f32.mrb[0].mxu0
        %4364 = vdwg.mxu0
        %v4365 = vsel %vm1132, %v4239, 0.0
        %v4366 = vsel %vm1132, %v4242, 0.0
        %v4367 = vadd.f32 %v4365, %v4366
        %v4368 = vsel %vm1132, %v4247, 0.0
        %v4369 = vadd.f32 %v4367, %v4368
        %v4370 = vsel %vm1132, %v4250, 0.0
        %v4371 = vadd.f32 %v4369, %v4370
        %v4372 = vsel %vm1132, %v4255, 0.0
        %v4373 = vadd.f32 %v4371, %v4372
        %v4374 = vsel %vm1132, %v4258, 0.0
        %v4375 = vadd.f32 %v4373, %v4374
        %v4376 = vsel %vm1132, %v4263, 0.0
        %v4377 = vadd.f32 %v4375, %v4376
        %v4378 = vsel %vm1132, %v4266, 0.0
        %v4379 = vadd.f32 %v4377, %v4378
        %v4380 = vsel %vm1132, %v4271, 0.0
        %v4381 = vadd.f32 %v4379, %v4380
        %v4382 = vsel %vm1132, %v4274, 0.0
        %v4383 = vadd.f32 %v4381, %v4382
        %v4384 = vsel %vm1132, %v4279, 0.0
        %v4385 = vadd.f32 %v4383, %v4384
        %v4386 = vsel %vm1132, %v4282, 0.0
        %v4387 = vadd.f32 %v4385, %v4386
        %v4388 = vsel %vm1132, %v4287, 0.0
        %v4389 = vadd.f32 %v4387, %v4388
        %v4390 = vsel %vm1132, %v4290, 0.0
        %v4391 = vadd.f32 %v4389, %v4390
        %v4392 = vsel %vm1132, %v4295, 0.0
        %v4393 = vadd.f32 %v4391, %v4392
        %v4394 = vsel %vm1132, %v4298, 0.0
        %v4395 = vadd.f32 %v4393, %v4394
        %v4396 = vsel %vm1132, %v4303, 0.0
        %v4397 = vadd.f32 %v4395, %v4396
        %v4398 = vsel %vm1132, %v4306, 0.0
        %v4399 = vadd.f32 %v4397, %v4398
        %v4400 = vsel %vm1132, %v4311, 0.0
        %v4401 = vadd.f32 %v4399, %v4400
        %v4402 = vsel %vm1132, %v4314, 0.0
        %v4403 = vadd.f32 %v4401, %v4402
        %v4404 = vsel %vm1132, %v4319, 0.0
        %v4405 = vadd.f32 %v4403, %v4404
        %v4406 = vsel %vm1132, %v4322, 0.0
        %v4407 = vadd.f32 %v4405, %v4406
        %v4408 = vsel %vm1132, %v4327, 0.0
        %v4409 = vadd.f32 %v4407, %v4408
        %v4410 = vsel %vm1132, %v4330, 0.0
        %v4411 = vadd.f32 %v4409, %v4410
        %v4412 = vsel %vm1132, %v4335, 0.0
        %v4413 = vadd.f32 %v4411, %v4412
        %v4414 = vsel %vm1132, %v4338, 0.0
        %v4415 = vadd.f32 %v4413, %v4414
        %v4416 = vsel %vm1132, %v4343, 0.0
        %v4417 = vadd.f32 %v4415, %v4416
        %v4418 = vsel %vm1132, %v4346, 0.0
        %v4419 = vadd.f32 %v4417, %v4418
        %v4420 = vsel %vm1132, %v4351, 0.0
        %v4421 = vadd.f32 %v4419, %v4420
        %v4422 = vsel %vm1132, %v4354, 0.0
        %v4423 = vadd.f32 %v4421, %v4422
        %v4424 = vsel %vm1132, %v4359, 0.0
        %v4425 = vadd.f32 %v4423, %v4424
        %v4426 = vsel %vm1132, %v4362, 0.0
        %v4427 = vadd.f32 %v4425, %v4426
        %v4428 = vrot.slane %v4427, 4
        %v4429 = vadd.f32 %v4427, %v4428
        %v4430 = vrot.slane %v4429, 2
        %v4431 = vadd.f32 %v4429, %v4430
        %v4432 = vrot.slane %v4431, 1
        %v4433 = vadd.f32 %v4431, %v4432
        %4434 = vst.msk [vmem:[%s358] sm:$0x1] %vm369, %v4433
        %v4435 = vmul.f32 %v4239, %v4239
        %v4436 = vmul.f32 %v4242, %v4242
        %v4437 = vmul.f32 %v4247, %v4247
        %v4438 = vmul.f32 %v4250, %v4250
        %v4439 = vmul.f32 %v4255, %v4255
        %v4440 = vmul.f32 %v4258, %v4258
        %v4441 = vmul.f32 %v4263, %v4263
        %v4442 = vmul.f32 %v4266, %v4266
        %v4443 = vmul.f32 %v4271, %v4271
        %v4444 = vmul.f32 %v4274, %v4274
        %v4445 = vmul.f32 %v4279, %v4279
        %v4446 = vmul.f32 %v4282, %v4282
        %v4447 = vmul.f32 %v4287, %v4287
        %v4448 = vmul.f32 %v4290, %v4290
        %v4449 = vmul.f32 %v4295, %v4295
        %v4450 = vmul.f32 %v4298, %v4298
        %v4451 = vmul.f32 %v4303, %v4303
        %v4452 = vmul.f32 %v4306, %v4306
        %v4453 = vmul.f32 %v4311, %v4311
        %v4454 = vmul.f32 %v4314, %v4314
        %v4455 = vmul.f32 %v4319, %v4319
        %v4456 = vmul.f32 %v4322, %v4322
        %v4457 = vmul.f32 %v4327, %v4327
        %v4458 = vmul.f32 %v4330, %v4330
        %v4459 = vmul.f32 %v4335, %v4335
        %v4460 = vmul.f32 %v4338, %v4338
        %v4461 = vmul.f32 %v4343, %v4343
        %v4462 = vmul.f32 %v4346, %v4346
        %v4463 = vmul.f32 %v4351, %v4351
        %v4464 = vmul.f32 %v4354, %v4354
        %v4465 = vmul.f32 %v4359, %v4359
        %v4466 = vmul.f32 %v4362, %v4362
        %v4467 = vsel %vm1132, %v4435, 0.0
        %v4468 = vsel %vm1132, %v4436, 0.0
        %v4469 = vadd.f32 %v4467, %v4468
        %v4470 = vsel %vm1132, %v4437, 0.0
        %v4471 = vadd.f32 %v4469, %v4470
        %v4472 = vsel %vm1132, %v4438, 0.0
        %v4473 = vadd.f32 %v4471, %v4472
        %v4474 = vsel %vm1132, %v4439, 0.0
        %v4475 = vadd.f32 %v4473, %v4474
        %v4476 = vsel %vm1132, %v4440, 0.0
        %v4477 = vadd.f32 %v4475, %v4476
        %v4478 = vsel %vm1132, %v4441, 0.0
        %v4479 = vadd.f32 %v4477, %v4478
        %v4480 = vsel %vm1132, %v4442, 0.0
        %v4481 = vadd.f32 %v4479, %v4480
        %v4482 = vsel %vm1132, %v4443, 0.0
        %v4483 = vadd.f32 %v4481, %v4482
        %v4484 = vsel %vm1132, %v4444, 0.0
        %v4485 = vadd.f32 %v4483, %v4484
        %v4486 = vsel %vm1132, %v4445, 0.0
        %v4487 = vadd.f32 %v4485, %v4486
        %v4488 = vsel %vm1132, %v4446, 0.0
        %v4489 = vadd.f32 %v4487, %v4488
        %v4490 = vsel %vm1132, %v4447, 0.0
        %v4491 = vadd.f32 %v4489, %v4490
        %v4492 = vsel %vm1132, %v4448, 0.0
        %v4493 = vadd.f32 %v4491, %v4492
        %v4494 = vsel %vm1132, %v4449, 0.0
        %v4495 = vadd.f32 %v4493, %v4494
        %v4496 = vsel %vm1132, %v4450, 0.0
        %v4497 = vadd.f32 %v4495, %v4496
        %v4498 = vsel %vm1132, %v4451, 0.0
        %v4499 = vadd.f32 %v4497, %v4498
        %v4500 = vsel %vm1132, %v4452, 0.0
        %v4501 = vadd.f32 %v4499, %v4500
        %v4502 = vsel %vm1132, %v4453, 0.0
        %v4503 = vadd.f32 %v4501, %v4502
        %v4504 = vsel %vm1132, %v4454, 0.0
        %v4505 = vadd.f32 %v4503, %v4504
        %v4506 = vsel %vm1132, %v4455, 0.0
        %v4507 = vadd.f32 %v4505, %v4506
        %v4508 = vsel %vm1132, %v4456, 0.0
        %v4509 = vadd.f32 %v4507, %v4508
        %v4510 = vsel %vm1132, %v4457, 0.0
        %v4511 = vadd.f32 %v4509, %v4510
        %v4512 = vsel %vm1132, %v4458, 0.0
        %v4513 = vadd.f32 %v4511, %v4512
        %v4514 = vsel %vm1132, %v4459, 0.0
        %v4515 = vadd.f32 %v4513, %v4514
        %v4516 = vsel %vm1132, %v4460, 0.0
        %v4517 = vadd.f32 %v4515, %v4516
        %v4518 = vsel %vm1132, %v4461, 0.0
        %v4519 = vadd.f32 %v4517, %v4518
        %v4520 = vsel %vm1132, %v4462, 0.0
        %v4521 = vadd.f32 %v4519, %v4520
        %v4522 = vsel %vm1132, %v4463, 0.0
        %v4523 = vadd.f32 %v4521, %v4522
        %v4524 = vsel %vm1132, %v4464, 0.0
        %v4525 = vadd.f32 %v4523, %v4524
        %v4526 = vsel %vm1132, %v4465, 0.0
        %v4527 = vadd.f32 %v4525, %v4526
        %v4528 = vsel %vm1132, %v4466, 0.0
        %v4529 = vadd.f32 %v4527, %v4528
        %v4530 = vrot.slane %v4529, 4
        %v4531 = vadd.f32 %v4529, %v4530
        %v4532 = vrot.slane %v4531, 2
        %v4533 = vadd.f32 %v4531, %v4532
        %v4534 = vrot.slane %v4533, 1
        %v4535 = vadd.f32 %v4533, %v4534
        %4536 = vst.msk [vmem:[%s364] sm:$0x1] %vm369, %v4535
        %v4537 = vpack.c.bf16 %v4242, %v4239
        %v4538 = vpack.c.bf16 %v4250, %v4247
        %v4539 = vpack.c.bf16 %v4258, %v4255
        %v4540 = vpack.c.bf16 %v4266, %v4263
        %v4541 = vpack.c.bf16 %v4274, %v4271
        %v4542 = vpack.c.bf16 %v4282, %v4279
        %v4543 = vpack.c.bf16 %v4290, %v4287
        %v4544 = vpack.c.bf16 %v4298, %v4295
        %v4545 = vpack.c.bf16 %v4306, %v4303
        %v4546 = vpack.c.bf16 %v4314, %v4311
        %v4547 = vpack.c.bf16 %v4322, %v4319
        %v4548 = vpack.c.bf16 %v4330, %v4327
        %v4549 = vpack.c.bf16 %v4338, %v4335
        %v4550 = vpack.c.bf16 %v4346, %v4343
        %v4551 = vpack.c.bf16 %v4354, %v4351
        %v4552 = vpack.c.bf16 %v4362, %v4359
        %v4569 = vunpack.c.l.b16 %v4537
        %v4570 = vunpack.c.h.b16 %v4537
        %v4571 = vunpack.c.l.b16 %v4538
        %v4572 = vunpack.c.h.b16 %v4538
        %v4573 = vunpack.c.l.b16 %v4539
        %v4574 = vunpack.c.h.b16 %v4539
        %v4575 = vunpack.c.l.b16 %v4540
        %v4576 = vunpack.c.h.b16 %v4540
        %v4577 = vunpack.c.l.b16 %v4541
        %v4578 = vunpack.c.h.b16 %v4541
        %v4579 = vunpack.c.l.b16 %v4542
        %v4580 = vunpack.c.h.b16 %v4542
        %v4581 = vunpack.c.l.b16 %v4543
        %v4582 = vunpack.c.h.b16 %v4543
        %v4583 = vunpack.c.l.b16 %v4544
        %v4584 = vunpack.c.h.b16 %v4544
        %v4585 = vunpack.c.l.b16 %v4545
        %v4586 = vunpack.c.h.b16 %v4545
        %v4587 = vunpack.c.l.b16 %v4546
        %v4588 = vunpack.c.h.b16 %v4546
        %v4589 = vunpack.c.l.b16 %v4547
        %v4590 = vunpack.c.h.b16 %v4547
        %v4591 = vunpack.c.l.b16 %v4548
        %v4592 = vunpack.c.h.b16 %v4548
        %v4593 = vunpack.c.l.b16 %v4549
        %v4594 = vunpack.c.h.b16 %v4549
        %v4595 = vunpack.c.l.b16 %v4550
        %v4596 = vunpack.c.h.b16 %v4550
        %v4597 = vunpack.c.l.b16 %v4551
        %v4598 = vunpack.c.h.b16 %v4551
        %v4599 = vunpack.c.l.b16 %v4552
        %v4600 = vunpack.c.h.b16 %v4552
        %v4601 = vpack.c.b16 %v4569, %v4569
        %v4602 = vpack.c.b16 %v4570, %v4570
        %v4603 = vpack.c.b16 %v4571, %v4571
        %v4604 = vpack.c.b16 %v4572, %v4572
        %v4605 = vpack.c.b16 %v4573, %v4573
        %v4606 = vpack.c.b16 %v4574, %v4574
        %v4607 = vpack.c.b16 %v4575, %v4575
        %v4608 = vpack.c.b16 %v4576, %v4576
        %v4609 = vpack.c.b16 %v4577, %v4577
        %v4610 = vpack.c.b16 %v4578, %v4578
        %v4611 = vpack.c.b16 %v4579, %v4579
        %v4612 = vpack.c.b16 %v4580, %v4580
        %v4613 = vpack.c.b16 %v4581, %v4581
        %v4614 = vpack.c.b16 %v4582, %v4582
        %v4615 = vpack.c.b16 %v4583, %v4583
        %v4616 = vpack.c.b16 %v4584, %v4584
        %v4617 = vpack.c.b16 %v4585, %v4585
        %v4618 = vpack.c.b16 %v4586, %v4586
        %v4619 = vpack.c.b16 %v4587, %v4587
        %v4620 = vpack.c.b16 %v4588, %v4588
        %v4621 = vpack.c.b16 %v4589, %v4589
        %v4622 = vpack.c.b16 %v4590, %v4590
        %v4623 = vpack.c.b16 %v4591, %v4591
        %v4624 = vpack.c.b16 %v4592, %v4592
        %v4625 = vpack.c.b16 %v4593, %v4593
        %v4626 = vpack.c.b16 %v4594, %v4594
        %v4627 = vpack.c.b16 %v4595, %v4595
        %v4628 = vpack.c.b16 %v4596, %v4596
        %v4629 = vpack.c.b16 %v4597, %v4597
        %v4630 = vpack.c.b16 %v4598, %v4598
        %v4631 = vpack.c.b16 %v4599, %v4599
        %v4632 = vpack.c.b16 %v4600, %v4600
        %4665 = vst.msk [vmem:[%s352] sm:$0xf] %vm366, %v4601
        %4666 = vst.msk [vmem:[%s352 + $0x4] sm:$0xf] %vm366, %v4602
        %4667 = vst.msk [vmem:[%s352 + $0x8] sm:$0xf] %vm366, %v4603
        %4668 = vst.msk [vmem:[%s352 + $0xc] sm:$0xf] %vm366, %v4604
        %4669 = vst.msk [vmem:[%s352 + $0x10] sm:$0xf] %vm366, %v4605
        %4670 = vst.msk [vmem:[%s352 + $0x14] sm:$0xf] %vm366, %v4606
        %4671 = vst.msk [vmem:[%s352 + $0x18] sm:$0xf] %vm366, %v4607
        %4672 = vst.msk [vmem:[%s352 + $0x1c] sm:$0xf] %vm366, %v4608
        %4673 = vst.msk [vmem:[%s352 + $0x20] sm:$0xf] %vm366, %v4609
        %4674 = vst.msk [vmem:[%s352 + $0x24] sm:$0xf] %vm366, %v4610
        %4675 = vst.msk [vmem:[%s352 + $0x28] sm:$0xf] %vm366, %v4611
        %4676 = vst.msk [vmem:[%s352 + $0x2c] sm:$0xf] %vm366, %v4612
        %4677 = vst.msk [vmem:[%s352 + $0x30] sm:$0xf] %vm366, %v4613
        %4678 = vst.msk [vmem:[%s352 + $0x34] sm:$0xf] %vm366, %v4614
        %4679 = vst.msk [vmem:[%s352 + $0x38] sm:$0xf] %vm366, %v4615
        %4680 = vst.msk [vmem:[%s352 + $0x3c] sm:$0xf] %vm366, %v4616
        %4681 = vst.msk [vmem:[%s352 + $0x40] sm:$0xf] %vm366, %v4617
        %4682 = vst.msk [vmem:[%s352 + $0x44] sm:$0xf] %vm366, %v4618
        %4683 = vst.msk [vmem:[%s352 + $0x48] sm:$0xf] %vm366, %v4619
        %4684 = vst.msk [vmem:[%s352 + $0x4c] sm:$0xf] %vm366, %v4620
        %4685 = vst.msk [vmem:[%s352 + $0x50] sm:$0xf] %vm366, %v4621
        %4686 = vst.msk [vmem:[%s352 + $0x54] sm:$0xf] %vm366, %v4622
        %4687 = vst.msk [vmem:[%s352 + $0x58] sm:$0xf] %vm366, %v4623
        %4688 = vst.msk [vmem:[%s352 + $0x5c] sm:$0xf] %vm366, %v4624
        %4689 = vst.msk [vmem:[%s352 + $0x60] sm:$0xf] %vm366, %v4625
        %4690 = vst.msk [vmem:[%s352 + $0x64] sm:$0xf] %vm366, %v4626
        %4691 = vst.msk [vmem:[%s352 + $0x68] sm:$0xf] %vm366, %v4627
        %4692 = vst.msk [vmem:[%s352 + $0x6c] sm:$0xf] %vm366, %v4628
        %4693 = vst.msk [vmem:[%s352 + $0x70] sm:$0xf] %vm366, %v4629
        %4694 = vst.msk [vmem:[%s352 + $0x74] sm:$0xf] %vm366, %v4630
        %4695 = vst.msk [vmem:[%s352 + $0x78] sm:$0xf] %vm366, %v4631
        %4696 = vst.msk [vmem:[%s352 + $0x7c] sm:$0xf] %vm366, %v4632
        %s4697 = sand.u32 %s148, 1
        %s4698 = scalar_lea.sflag [#allocation6], %s4697
        %s4699 = sand.u32 %s148, 1
        %s4700 = smul.addr %s4699, 128
        %s4701 = scalar_lea.vmem [#allocation13], %s4700
        %s4702 = sand.u32 %s30, 1
        %s4703 = scalar_lea.sflag [#allocation15], %s4702
        %s4704 = sand.u32 %s174, 1
        %s4705 = scalar_lea.vmem [#allocation14], %s4704
        %s4706 = sand.u32 %s30, 1
        %s4707 = scalar_lea.sflag [#allocation15], %s4706
        %s4708 = sand.u32 %s200, 1
        %s4709 = scalar_lea.vmem [#allocation16], %s4708
        // Predicated region
        $region61: #{_lambda_.4} parent=39 // pred_check
          %p4710 = pneg %p158
        $region62: #{_lambda_.4} parent=39 // pred_check_branch
          %4712 = sbr.rel (%p4710) target = $region64
        $region63: #{_lambda_.4} parent=39 // pred_region
          %s4714 = ssub.s32 2048, 2048
          %4715 = vsyncadd %s4698, %s4714
          %s4716 = smul.addr %s30, 32
          %s4717 = smul.addr %s4716, 64
          %s4718 = scalar_lea.hbm %s5, %s4717
          %s4719 = sshll.u32 %s4701, 4
          %s4720 = int_to_ptr.vmem [resolvable:$true] %s4719
          %4725 = dma.vmem_to_hbm [thread:$0]  %s4720, 2048, %s4718, %s4698, 64, 64, 4
        $region64: #{_lambda_.4} parent=39 // pred_fallthru
          _
        // Predicated region
        $region65: #{_lambda_.4} parent=39 // pred_check
          %p4726 = pneg %p184
        $region66: #{_lambda_.4} parent=39 // pred_check_branch
          %4728 = sbr.rel (%p4726) target = $region68
        $region67: #{_lambda_.4} parent=39 // pred_region
          %s4730 = ssub.s32 16, 16
          %4731 = vsyncadd %s4703, %s4730
          %s4732 = smul.addr %s30, 16
          %s4733 = scalar_lea.hbm %s6, %s4732
          %s4735 = sshll.u32 %s4705, 4
          %s4736 = int_to_ptr.vmem [resolvable:$true] %s4735
          %4738 = dma.vmem_to_hbm [thread:$0]  %s4736, 16, %s4733, %s4703
        $region68: #{_lambda_.4} parent=39 // pred_fallthru
          _
        // Predicated region
        $region69: #{_lambda_.4} parent=39 // pred_check
          %p4739 = pneg %p210
        $region70: #{_lambda_.4} parent=39 // pred_check_branch
          %4741 = sbr.rel (%p4739) target = $region72
        $region71: #{_lambda_.4} parent=39 // pred_region
          %s4743 = ssub.s32 16, 16
          %4744 = vsyncadd %s4707, %s4743
          %s4745 = smul.addr %s30, 16
          %s4746 = scalar_lea.hbm %s7, %s4745
          %s4748 = sshll.u32 %s4709, 4
          %s4749 = int_to_ptr.vmem [resolvable:$true] %s4748
          %4751 = dma.vmem_to_hbm [thread:$0]  %s4749, 16, %s4746, %s4707
        $region72: #{_lambda_.4} parent=39 // pred_fallthru
          _
      $region40: #{_lambda_.4} parent=5 // pred_fallthru
        _
      %p4752 = scmp.le.s32.totalorder 2, %s25
      // Predicated region
      $region73: #{_lambda_.4} parent=5 // pred_check
        %p4753 = pneg %p4752
      $region74: #{_lambda_.4} parent=5 // pred_check_branch
        %4755 = sbr.rel (%p4753) target = $region76
      $region75: #{_lambda_.4} parent=5 // pred_region
        %s4756 = ssub.s32 %s25, 2
        // Predicated region
        $region77: #{_lambda_.4} parent=75 // pred_check
          %p4757 = pneg %p164
        $region78: #{_lambda_.4} parent=75 // pred_check_branch
          %4759 = sbr.rel (%p4757) target = $region80
        $region79: #{_lambda_.4} parent=75 // pred_region
          %s4760 = sand.u32 %s149, 1
          %s4761 = scalar_lea.sflag [#allocation6], %s4760
          %s4762 = sand.u32 %s149, 1
          %s4763 = smul.addr %s4762, 128
          %s4764 = scalar_lea.vmem [#allocation13], %s4763
          %4765 = dma.done %s4761, 2048
        $region80: #{_lambda_.4} parent=75 // pred_fallthru
          _
        // Predicated region
        $region81: #{_lambda_.4} parent=75 // pred_check
          %p4766 = pneg %p190
        $region82: #{_lambda_.4} parent=75 // pred_check_branch
          %4768 = sbr.rel (%p4766) target = $region84
        $region83: #{_lambda_.4} parent=75 // pred_region
          %s4769 = sand.u32 %s31, 1
          %s4770 = scalar_lea.sflag [#allocation15], %s4769
          %s4771 = sand.u32 %s175, 1
          %s4772 = scalar_lea.vmem [#allocation14], %s4771
          %4773 = dma.done %s4770, 16
        $region84: #{_lambda_.4} parent=75 // pred_fallthru
          _
        // Predicated region
        $region85: #{_lambda_.4} parent=75 // pred_check
          %p4774 = pneg %p216
        $region86: #{_lambda_.4} parent=75 // pred_check_branch
          %4776 = sbr.rel (%p4774) target = $region88
        $region87: #{_lambda_.4} parent=75 // pred_region
          %s4777 = sand.u32 %s31, 1
          %s4778 = scalar_lea.sflag [#allocation15], %s4777
          %s4779 = sand.u32 %s201, 1
          %s4780 = scalar_lea.vmem [#allocation16], %s4779
          %4781 = dma.done %s4778, 16
        $region88: #{_lambda_.4} parent=75 // pred_fallthru
          _
      $region76: #{_lambda_.4} parent=5 // pred_fallthru
        _
    $region6: #{_lambda_.4} parent=1 // loop_footer
      %s29 = sadd.s32 1, %s25
    $region7: #{_lambda_.4} parent=1 // loop_footer_branch
      %24 = sbr.rel target = $region3
    $region8: #{_lambda_.4} parent=1 // loop_exit
      _
    %4782 = vsyncpa [#allocation5], 1
    %s4783 = scalar_lea.sflag [#allocation5], 1
    %4784 = vsyncpa %s4783, 1
    %4785 = vsyncpa [#allocation8], 1
    %4786 = vsyncpa [#allocation11], 1
    %4787 = vsyncpa [#allocation6], 1
    %s4788 = scalar_lea.sflag [#allocation6], 1
    %4789 = vsyncpa %s4788, 1
    %4790 = vsyncpa [#allocation15], 1
    %s4791 = scalar_lea.sflag [#allocation15], 1
    %4792 = vsyncpa %s4791, 1

</llo_original>
